<compile_context>
chip_gen: v7x
topology: tpu7x:2x2x1
jax: 0.10.0
libtpu: 0.0.40
codegen_flags: <defaults>
</compile_context>

<pallas_src>
import functools
import math

import jax
import jax.numpy as jnp
from jax.experimental import pallas as pl
from jax.experimental.pallas import tpu as pltpu

MXU_DTYPE = jnp.bfloat16     # matmul-input dtype
ACT_DTYPE = jnp.bfloat16     # inter-kernel activation dtype in HBM
WGT_DTYPE = jnp.bfloat16     # weight dtype in HBM
LN_EPS = 1e-5                # PyTorch LayerNorm default eps


def _tpu_config():
    """Generation-aware VMEM budget / GEMM tile preferences."""
    try:
        info = pltpu.get_tpu_info()
        vmem_bytes = int(getattr(info, "vmem_capacity_bytes", 64 * 1024 * 1024))
    except Exception:
        vmem_bytes = 64 * 1024 * 1024
    if vmem_bytes <= 64 * 1024 * 1024:     # v7x-class core (64 MiB VMEM)
        return {"vmem_limit": 48 * 1024 * 1024, "tn": 512, "tk": 512}
    return {"vmem_limit": 96 * 1024 * 1024, "tn": 1024, "tk": 1024}   # v5e / v6e


_CFG = _tpu_config()


def _fit_tile(dim, pref, align=128):
    """Largest tile <= pref that divides dim; prefers `align`-multiples; never returns a
    block larger than pref for big dims (avoids silently blowing VMEM)."""
    if dim <= pref:
        return dim
    t = (pref // align) * align
    while t >= align:
        if dim % t == 0:
            return t
        t -= align
    for t in range(pref, 0, -1):
        if dim % t == 0:
            return t
    return dim


# --------------------------------------------------------------------------
# Tiled GEMM (+ optional fused ReLU); bf16 inputs, f32 accumulator
# --------------------------------------------------------------------------

def _linear_kernel(x_ref, w_ref, b_ref, o_ref, acc_ref, *, activation, nk):
    @pl.when(pl.program_id(2) == 0)
    def _init():
        acc_ref[...] = jnp.zeros_like(acc_ref)

    acc_ref[...] += jnp.dot(x_ref[...].astype(MXU_DTYPE),
                            w_ref[...].astype(MXU_DTYPE),
                            preferred_element_type=jnp.float32)

    @pl.when(pl.program_id(2) == nk - 1)
    def _finalize():
        y = acc_ref[...] + b_ref[...]
        if activation == "relu":
            y = jnp.maximum(y, 0.0)
        o_ref[...] = y.astype(o_ref.dtype)


def linear(x, w, b, activation=None, out_dtype=None, tm=256, tn=None, tk=None):
    """x: (M, K) bf16, w: (K, N) bf16, b: (N,) f32 -> (M, N) in out_dtype."""
    M, K = x.shape
    N = w.shape[1]
    tm = _fit_tile(M, tm, align=8)
    tn = _fit_tile(N, tn if tn is not None else _CFG["tn"], align=128)
    tk = _fit_tile(K, tk if tk is not None else _CFG["tk"], align=128)
    nk = K // tk
    out_dtype = out_dtype or ACT_DTYPE
    return pl.pallas_call(
        functools.partial(_linear_kernel, activation=activation, nk=nk),
        out_shape=jax.ShapeDtypeStruct((M, N), out_dtype),
        grid=(M // tm, N // tn, nk),
        in_specs=[
            pl.BlockSpec((tm, tk), lambda i, j, k: (i, k)),
            pl.BlockSpec((tk, tn), lambda i, j, k: (k, j)),
            pl.BlockSpec((1, tn), lambda i, j, k: (0, j)),
        ],
        out_specs=pl.BlockSpec((tm, tn), lambda i, j, k: (i, j)),
        scratch_shapes=[pltpu.VMEM((tm, tn), jnp.float32)],
        compiler_params=pltpu.CompilerParams(
            dimension_semantics=("parallel", "parallel", "arbitrary"),
            vmem_limit_bytes=_CFG["vmem_limit"]),
        cost_estimate=pl.CostEstimate(
            flops=2 * M * N * K, transcendentals=0,
            bytes_accessed=2 * (M * K + K * N)
            + jnp.dtype(out_dtype).itemsize * M * N),
    )(x, w, b.reshape(1, N))


# --------------------------------------------------------------------------
# Tiled GEMM with fused bias + residual-add + LayerNorm (+ optional 2nd LN) epilogue
# --------------------------------------------------------------------------

def _linear_add_ln_kernel(x_ref, w_ref, b_ref, r_ref, g_ref, bt_ref, *rest,
                          nk, eps, has_ln2):
    if has_ln2:
        g2_ref, b2_ref, o_ref, acc_ref = rest
    else:
        o_ref, acc_ref = rest

    @pl.when(pl.program_id(1) == 0)
    def _init():
        acc_ref[...] = jnp.zeros_like(acc_ref)

    acc_ref[...] += jnp.dot(x_ref[...].astype(MXU_DTYPE),
                            w_ref[...].astype(MXU_DTYPE),
                            preferred_element_type=jnp.float32)

    @pl.when(pl.program_id(1) == nk - 1)
    def _finalize():
        h = acc_ref[...] + b_ref[...] + r_ref[...].astype(jnp.float32)

        def ln(t, g, bt):
            mu = jnp.mean(t, axis=-1, keepdims=True)
            var = jnp.mean((t - mu) ** 2, axis=-1, keepdims=True)
            return (t - mu) * jax.lax.rsqrt(var + eps) * g + bt

        y = ln(h, g_ref[...], bt_ref[...])
        if has_ln2:
            y = ln(y, g2_ref[...], b2_ref[...])      # fused final encoder/decoder norm
        o_ref[...] = y.astype(o_ref.dtype)


def linear_add_layernorm(x, w, b, residual, gamma, beta, *, ln2=None,
                         eps=LN_EPS, tm=256, tk=None):
    """LN(residual + (x @ w + b)) [optionally LN2(.)]; full output width per block."""
    M, K = x.shape
    N = w.shape[1]
    tm = _fit_tile(M, tm, align=8)
    tk = _fit_tile(K, tk if tk is not None else _CFG["tk"], align=128)
    nk = K // tk
    has_ln2 = ln2 is not None

    args = [x, w, b.reshape(1, N), residual,
            gamma.reshape(1, N), beta.reshape(1, N)]
    in_specs = [
        pl.BlockSpec((tm, tk), lambda i, k: (i, k)),
        pl.BlockSpec((tk, N), lambda i, k: (k, 0)),
        pl.BlockSpec((1, N), lambda i, k: (0, 0)),
        pl.BlockSpec((tm, N), lambda i, k: (i, 0)),
        pl.BlockSpec((1, N), lambda i, k: (0, 0)),
        pl.BlockSpec((1, N), lambda i, k: (0, 0)),
    ]
    if has_ln2:
        g2, b2 = ln2
        args += [g2.reshape(1, N), b2.reshape(1, N)]
        in_specs += [pl.BlockSpec((1, N), lambda i, k: (0, 0)),
                     pl.BlockSpec((1, N), lambda i, k: (0, 0))]

    return pl.pallas_call(
        functools.partial(_linear_add_ln_kernel, nk=nk, eps=eps, has_ln2=has_ln2),
        out_shape=jax.ShapeDtypeStruct((M, N), ACT_DTYPE),
        grid=(M // tm, nk),
        in_specs=in_specs,
        out_specs=pl.BlockSpec((tm, N), lambda i, k: (i, 0)),
        scratch_shapes=[pltpu.VMEM((tm, N), jnp.float32)],
        compiler_params=pltpu.CompilerParams(
            dimension_semantics=("parallel", "arbitrary"),
            vmem_limit_bytes=_CFG["vmem_limit"]),
        cost_estimate=pl.CostEstimate(
            flops=2 * M * N * K, transcendentals=0,
            bytes_accessed=2 * (M * K + K * N + 2 * M * N)),
    )(*args)


# --------------------------------------------------------------------------
# Embedding scale + positional encoding add
# --------------------------------------------------------------------------

def _embed_pe_kernel(e_ref, pe_ref, o_ref, *, scale):
    o_ref[...] = (e_ref[...].astype(jnp.float32) * scale
                  + pe_ref[...]).astype(o_ref.dtype)


def embed_scale_pe(emb, pe, scale):
    B, S, d = emb.shape
    return pl.pallas_call(
        functools.partial(_embed_pe_kernel, scale=scale),
        out_shape=jax.ShapeDtypeStruct((B, S, d), ACT_DTYPE),
        grid=(B,),
        in_specs=[
            pl.BlockSpec((1, S, d), lambda b: (b, 0, 0)),
            pl.BlockSpec((1, S, d), lambda b: (0, 0, 0)),
        ],
        out_specs=pl.BlockSpec((1, S, d), lambda b: (b, 0, 0)),
        compiler_params=pltpu.CompilerParams(dimension_semantics=("parallel",)),
    )(emb, pe)


# --------------------------------------------------------------------------
# Fused multi-head attention + out-projection + residual + LayerNorm
#   grid = (B, Sq // tq); inputs pre-split per head: (B, H, S, dh)
#   per-head context is written to a VMEM scratch (bounded live ranges),
#   then one full-depth (tq, d) @ (d, d) out-projection + LN epilogue.
# --------------------------------------------------------------------------

def _mha_kernel(q_ref, k_ref, v_ref, wo_ref, bo_ref, r_ref, g_ref, bt_ref,
                o_ref, ctx_ref, *, nhead, causal, eps):
    tq, dh = q_ref.shape[2], q_ref.shape[3]
    sk = k_ref.shape[2]
    scale = 1.0 / math.sqrt(dh)

    if causal:
        q0 = pl.program_id(1) * tq
        row = jax.lax.broadcasted_iota(jnp.int32, (tq, sk), 0) + q0
        col = jax.lax.broadcasted_iota(jnp.int32, (tq, sk), 1)
        neg = jnp.where(col > row, jnp.float32(-1e30), jnp.float32(0.0))

    for h in range(nhead):          # each head's score/ctx tiles die at the scratch store
        qh = q_ref[0, h]            # (tq, dh) bf16
        kh = k_ref[0, h]            # (sk, dh) bf16
        vh = v_ref[0, h]            # (sk, dh) bf16
        s = jax.lax.dot_general(qh, kh, (((1,), (1,)), ((), ())),
                                preferred_element_type=jnp.float32) * scale
        if causal:
            s = s + neg
        m = jnp.max(s, axis=-1, keepdims=True)
        p = jnp.exp(s - m)
        p = p * pl.reciprocal(jnp.sum(p, axis=-1, keepdims=True), approx=True)
        ctx_ref[:, h * dh:(h + 1) * dh] = jnp.dot(
            p.astype(MXU_DTYPE), vh, preferred_element_type=jnp.float32)

    # full-depth out-projection fused with bias + residual + LayerNorm
    attn = jnp.dot(ctx_ref[...].astype(MXU_DTYPE), wo_ref[...],
                   preferred_element_type=jnp.float32)
    hres = attn + bo_ref[...] + r_ref[0].astype(jnp.float32)
    mu = jnp.mean(hres, axis=-1, keepdims=True)
    var = jnp.mean((hres - mu) ** 2, axis=-1, keepdims=True)
    o_ref[0] = ((hres - mu) * jax.lax.rsqrt(var + eps) * g_ref[...]
                + bt_ref[...]).astype(o_ref.dtype)


def _mha(q, k, v, wo, bo, residual, gamma, beta, *, causal, eps):
    B, H, Sq, dh = q.shape
    Sk = k.shape[2]
    d = H * dh
    tq = _fit_tile(Sq, 256, align=8)
    nq = Sq // tq
    return pl.pallas_call(
        functools.partial(_mha_kernel, nhead=H, causal=causal, eps=eps),
        out_shape=jax.ShapeDtypeStruct((B, Sq, d), ACT_DTYPE),
        grid=(B, nq),
        in_specs=[
            pl.BlockSpec((1, H, tq, dh), lambda b, qi: (b, 0, qi, 0)),
            pl.BlockSpec((1, H, Sk, dh), lambda b, qi: (b, 0, 0, 0)),
            pl.BlockSpec((1, H, Sk, dh), lambda b, qi: (b, 0, 0, 0)),
            pl.BlockSpec((d, d), lambda b, qi: (0, 0)),
            pl.BlockSpec((1, d), lambda b, qi: (0, 0)),
            pl.BlockSpec((1, tq, d), lambda b, qi: (b, qi, 0)),
            pl.BlockSpec((1, d), lambda b, qi: (0, 0)),
            pl.BlockSpec((1, d), lambda b, qi: (0, 0)),
        ],
        out_specs=pl.BlockSpec((1, tq, d), lambda b, qi: (b, qi, 0)),
        scratch_shapes=[pltpu.VMEM((tq, d), jnp.float32)],
        compiler_params=pltpu.CompilerParams(
            dimension_semantics=("parallel", "parallel"),
            vmem_limit_bytes=_CFG["vmem_limit"]),
    )(q, k, v, wo, bo.reshape(1, d), residual,
      gamma.reshape(1, d), beta.reshape(1, d))


def mha_self_fused(qkv, wo, bo, residual, gamma, beta, *, nhead, causal,
                   eps=LN_EPS):
    """qkv: (B, S, 3d) packed; returns LN(residual + out_proj(attn))."""
    B, S, d3 = qkv.shape
    d = d3 // 3
    dh = d // nhead
    qkv_h = qkv.reshape(B, S, 3, nhead, dh).transpose(0, 2, 3, 1, 4)  # (B,3,H,S,dh)
    return _mha(qkv_h[:, 0], qkv_h[:, 1], qkv_h[:, 2], wo, bo,
                residual, gamma, beta, causal=causal, eps=eps)


def mha_cross_fused(q, kv, wo, bo, residual, gamma, beta, *, nhead, eps=LN_EPS):
    """q: (B, Sq, d); kv: (B, Sk, 2d) packed [k|v]."""
    B, Sq, d = q.shape
    Sk = kv.shape[1]
    dh = d // nhead
    q_h = q.reshape(B, Sq, nhead, dh).transpose(0, 2, 1, 3)            # (B,H,Sq,dh)
    kv_h = kv.reshape(B, Sk, 2, nhead, dh).transpose(0, 2, 3, 1, 4)    # (B,2,H,Sk,dh)
    return _mha(q_h, kv_h[:, 0], kv_h[:, 1], wo, bo,
                residual, gamma, beta, causal=False, eps=eps)


# --------------------------------------------------------------------------
# Model glue (plain JAX: embedding gather, head-split layout plumbing)
# --------------------------------------------------------------------------

def positional_encoding(seq_len, d_model):
    position = jnp.arange(seq_len, dtype=jnp.float32)[:, None]
    div_term = jnp.exp(jnp.arange(0, d_model, 2, dtype=jnp.float32)
                       * (-math.log(10000.0) / d_model))
    pe = jnp.zeros((seq_len, d_model), jnp.float32)
    pe = pe.at[:, 0::2].set(jnp.sin(position * div_term))
    pe = pe.at[:, 1::2].set(jnp.cos(position * div_term))
    return pe[None]                                # (1, S, d)


def transformer_chatbot_forward(params, src, tgt, *, d_model, nhead):
    B, Ss = src.shape
    _, St = tgt.shape
    emb_scale = math.sqrt(float(d_model))

    src_emb = embed_scale_pe(jnp.take(params["emb"], src, axis=0),
                             positional_encoding(Ss, d_model), emb_scale)
    tgt_emb = embed_scale_pe(jnp.take(params["emb"], tgt, axis=0),
                             positional_encoding(St, d_model), emb_scale)

    # ---- encoder (post-norm TransformerEncoderLayer, activation=relu) ----
    n_enc = len(params["enc"])
    x = src_emb.reshape(B * Ss, d_model)
    for li, lp in enumerate(params["enc"]):
        qkv = linear(x, lp["sa"]["wqkv"], lp["sa"]["bqkv"])             # fused QKV GEMM
        x = mha_self_fused(qkv.reshape(B, Ss, 3 * d_model),
                           lp["sa"]["wo"], lp["sa"]["bo"],
                           x.reshape(B, Ss, d_model),
                           lp["ln1"]["g"], lp["ln1"]["b"],
                           nhead=nhead, causal=False).reshape(B * Ss, d_model)
        h = linear(x, lp["ff"]["w1"], lp["ff"]["b1"], activation="relu")
        ln2 = ((params["enc_norm"]["g"], params["enc_norm"]["b"])
               if li == n_enc - 1 else None)                            # fuse final enc norm
        x = linear_add_layernorm(h, lp["ff"]["w2"], lp["ff"]["b2"], x,
                                 lp["ln2"]["g"], lp["ln2"]["b"], ln2=ln2)
    memory = x                                                          # already enc-normed

    # ---- decoder (causal self-attn, cross-attn, FFN; post-norm) ----
    n_dec = len(params["dec"])
    y = tgt_emb.reshape(B * St, d_model)
    for li, lp in enumerate(params["dec"]):
        qkv = linear(y, lp["sa"]["wqkv"], lp["sa"]["bqkv"])
        y = mha_self_fused(qkv.reshape(B, St, 3 * d_model),
                           lp["sa"]["wo"], lp["sa"]["bo"],
                           y.reshape(B, St, d_model),
                           lp["ln1"]["g"], lp["ln1"]["b"],
                           nhead=nhead, causal=True).reshape(B * St, d_model)
        q = linear(y, lp["ca"]["wq"], lp["ca"]["bq"])
        kv = linear(memory, lp["ca"]["wkv"], lp["ca"]["bkv"])           # fused K|V GEMM
        y = mha_cross_fused(q.reshape(B, St, d_model),
                            kv.reshape(B, Ss, 2 * d_model),
                            lp["ca"]["wo"], lp["ca"]["bo"],
                            y.reshape(B, St, d_model),
                            lp["ln2"]["g"], lp["ln2"]["b"],
                            nhead=nhead).reshape(B * St, d_model)
        h = linear(y, lp["ff"]["w1"], lp["ff"]["b1"], activation="relu")
        ln3b = ((params["dec_norm"]["g"], params["dec_norm"]["b"])
                if li == n_dec - 1 else None)                           # fuse final dec norm
        y = linear_add_layernorm(h, lp["ff"]["w2"], lp["ff"]["b2"], y,
                                 lp["ln3"]["g"], lp["ln3"]["b"], ln2=ln3b)

    # ---- fc_out: (B*St, d) -> (B, St, vocab), f32 logits ----
    logits = linear(y, params["fc_w"], params["fc_b"], out_dtype=jnp.float32)
    vocab = params["fc_w"].shape[1]
    return logits.reshape(B, St, vocab)


# --------------------------------------------------------------------------
# Deterministic parameter init (synthetic; fused-weight layouts, bf16 weights)
# --------------------------------------------------------------------------

def init_params(key, vocab_size, d_model, nhead, num_layers, dim_ff):
    keys = iter(jax.random.split(key, 1024))

    def w(shape, scale=0.02):
        return (scale * jax.random.normal(next(keys), shape,
                                          jnp.float32)).astype(WGT_DTYPE)

    def zeros(shape):
        return jnp.zeros(shape, jnp.float32)

    def ones(shape):
        return jnp.ones(shape, jnp.float32)

    def mha_self():
        return dict(wqkv=w((d_model, 3 * d_model)), bqkv=zeros((3 * d_model,)),
                    wo=w((d_model, d_model)), bo=zeros((d_model,)))

    def mha_cross():
        return dict(wq=w((d_model, d_model)), bq=zeros((d_model,)),
                    wkv=w((d_model, 2 * d_model)), bkv=zeros((2 * d_model,)),
                    wo=w((d_model, d_model)), bo=zeros((d_model,)))

    def ln():
        return dict(g=ones((d_model,)), b=zeros((d_model,)))

    def ffn():
        return dict(w1=w((d_model, dim_ff)), b1=zeros((dim_ff,)),
                    w2=w((dim_ff, d_model)), b2=zeros((d_model,)))

    enc = [dict(sa=mha_self(), ln1=ln(), ff=ffn(), ln2=ln())
           for _ in range(num_layers)]
    dec = [dict(sa=mha_self(), ln1=ln(), ca=mha_cross(), ln2=ln(),
                ff=ffn(), ln3=ln())
           for _ in range(num_layers)]

    return dict(emb=w((vocab_size, d_model), scale=1.0),
                enc=enc, enc_norm=ln(),
                dec=dec, dec_norm=ln(),
                fc_w=w((d_model, vocab_size)), fc_b=zeros((vocab_size,)))


# --------------------------------------------------------------------------
# Main
# --------------------------------------------------------------------------

if __name__ == "__main__":
    # Lane-dense small config (128-multiples on d_model / ffn / vocab).
    vocab_size = 128
    d_model = 128
    nhead = 4
    num_layers = 2
    dim_feedforward = 256
    B, S_src, S_tgt = 2, 16, 16

    key = jax.random.PRNGKey(0)
    k_src, k_tgt, k_par = jax.random.split(key, 3)
    src = jax.random.randint(k_src, (B, S_src), 0, vocab_size, dtype=jnp.int32)
    tgt = jax.random.randint(k_tgt, (B, S_tgt), 0, vocab_size, dtype=jnp.int32)

    params = init_params(k_par, vocab_size, d_model, nhead, num_layers,
                         dim_feedforward)

    fwd = jax.jit(functools.partial(transformer_chatbot_forward,
                                    d_model=d_model, nhead=nhead))
    out = fwd(params, src, tgt)
    out = jax.block_until_ready(out)

    assert out.shape == (B, S_tgt, vocab_size), out.shape
    assert out.dtype == jnp.float32
    assert bool(jnp.all(jnp.isfinite(out)))
    print("KERNEL_OK")
</pallas_src>

<mosaic_0001>
module attributes {stable_mosaic.version = 11 : i64} {
  func.func @_embed_pe_kernel(%arg0: i32, %arg1: memref<1x16x128xbf16, #tpu.memory_space<vmem>>, %arg2: memref<1x16x128xf32, #tpu.memory_space<vmem>>, %arg3: memref<1x16x128xbf16, #tpu.memory_space<vmem>>) attributes {dimension_semantics = [#tpu.dimension_semantics<parallel>], iteration_bounds = array<i64: 2>, scalar_prefetch = 0 : i64, scratch_operands = 0 : i64, tpu.core_type = #tpu.core_type<tc>, window_params = [{transform_indices = @transform_0, window_bounds = array<i64: 1, 16, 128>}, {pipeline_mode = #tpu.pipeline_mode<synchronous>, transform_indices = @transform_1, window_bounds = array<i64: 1, 16, 128>}, {transform_indices = @transform_2, window_bounds = array<i64: 1, 16, 128>}]} {
    %c0 = arith.constant 0 : index
    %c0_0 = arith.constant 0 : index
    %c0_1 = arith.constant 0 : index
    %0 = vector.load %arg1[%c0, %c0_0, %c0_1] : memref<1x16x128xbf16, #tpu.memory_space<vmem>>, vector<1x16x128xbf16>
    %1 = arith.extf %0 : vector<1x16x128xbf16> to vector<1x16x128xf32>
    %cst = arith.constant 11.3137083 : f32
    %2 = vector.broadcast %cst : f32 to vector<1x16x128xf32>
    %3 = arith.mulf %1, %2 : vector<1x16x128xf32>
    %c0_2 = arith.constant 0 : index
    %c0_3 = arith.constant 0 : index
    %c0_4 = arith.constant 0 : index
    %4 = vector.load %arg2[%c0_2, %c0_3, %c0_4] : memref<1x16x128xf32, #tpu.memory_space<vmem>>, vector<1x16x128xf32>
    %5 = arith.addf %3, %4 : vector<1x16x128xf32>
    %6 = arith.truncf %5 : vector<1x16x128xf32> to vector<1x16x128xbf16>
    %c0_5 = arith.constant 0 : index
    %c0_6 = arith.constant 0 : index
    %c0_7 = arith.constant 0 : index
    %7 = vector.load %arg3[%c0_5, %c0_6, %c0_7] : memref<1x16x128xbf16, #tpu.memory_space<vmem>>, vector<1x16x128xbf16>
    tpu.vector_store %arg3[%c0_5, %c0_6, %c0_7], %6 {strides = array<i32>} : memref<1x16x128xbf16, #tpu.memory_space<vmem>>, vector<1x16x128xbf16>,
    return
  }
  func.func @transform_0(%arg0: i32) -> (i32, i32, i32) {
    %c0_i32 = arith.constant 0 : i32
    %c0_i32_0 = arith.constant 0 : i32
    %c0_i32_1 = arith.constant 0 : i32
    return %arg0, %c0_i32, %c0_i32_0 : i32, i32, i32
  }
  func.func @transform_1(%arg0: i32) -> (i32, i32, i32) {
    %c0_i32 = arith.constant 0 : i32
    %c0_i32_0 = arith.constant 0 : i32
    %c0_i32_1 = arith.constant 0 : i32
    %c0_i32_2 = arith.constant 0 : i32
    return %c0_i32, %c0_i32_0, %c0_i32_1 : i32, i32, i32
  }
  func.func @transform_2(%arg0: i32) -> (i32, i32, i32) {
    %c0_i32 = arith.constant 0 : i32
    %c0_i32_0 = arith.constant 0 : i32
    %c0_i32_1 = arith.constant 0 : i32
    return %arg0, %c0_i32, %c0_i32_0 : i32, i32, i32
  }
}

module attributes {stable_mosaic.version = 11 : i64} {
  func.func @_linear_kernel(%arg0: i32, %arg1: i32, %arg2: i32, %arg3: memref<32x128xbf16, #tpu.memory_space<vmem>>, %arg4: memref<128x384xbf16, #tpu.memory_space<vmem>>, %arg5: memref<1x384xf32, #tpu.memory_space<vmem>>, %arg6: memref<32x384xbf16, #tpu.memory_space<vmem>>, %arg7: memref<32x384xf32, #tpu.memory_space<vmem>>) attributes {dimension_semantics = [#tpu.dimension_semantics<parallel>, #tpu.dimension_semantics<parallel>, #tpu.dimension_semantics<arbitrary>], iteration_bounds = array<i64: 1, 1, 1>, scalar_prefetch = 0 : i64, scratch_operands = 1 : i64, tpu.core_type = #tpu.core_type<tc>, window_params = [{transform_indices = @transform_0, window_bounds = array<i64: 32, 128>}, {transform_indices = @transform_1, window_bounds = array<i64: 128, 384>}, {transform_indices = @transform_2, window_bounds = array<i64: 1, 384>}, {transform_indices = @transform_3, window_bounds = array<i64: 32, 384>}]} {
    %c0_i32 = arith.constant 0 : i32
    %0 = arith.cmpi eq, %arg2, %c0_i32 : i32
    %1 = arith.extui %0 : i1 to i32
    %c0_i32_0 = arith.constant 0 : i32
    %2 = arith.cmpi ne, %1, %c0_i32_0 : i32
    scf.if %2 {
      %cst_10 = arith.constant 0.000000e+00 : f32
      %12 = vector.broadcast %cst_10 : f32 to vector<32x384xf32>
      %c0_11 = arith.constant 0 : index
      %c0_12 = arith.constant 0 : index
      %13 = vector.load %arg7[%c0_11, %c0_12] : memref<32x384xf32, #tpu.memory_space<vmem>>, vector<32x384xf32>
      tpu.vector_store %arg7[%c0_11, %c0_12], %12 {strides = array<i32>} : memref<32x384xf32, #tpu.memory_space<vmem>>, vector<32x384xf32>,
    } else {
    }
    %c0 = arith.constant 0 : index
    %c0_1 = arith.constant 0 : index
    %3 = vector.load %arg7[%c0, %c0_1] : memref<32x384xf32, #tpu.memory_space<vmem>>, vector<32x384xf32>
    %c0_2 = arith.constant 0 : index
    %c0_3 = arith.constant 0 : index
    %4 = vector.load %arg3[%c0_2, %c0_3] : memref<32x128xbf16, #tpu.memory_space<vmem>>, vector<32x128xbf16>
    %c0_4 = arith.constant 0 : index
    %c0_5 = arith.constant 0 : index
    %5 = vector.load %arg4[%c0_4, %c0_5] : memref<128x384xbf16, #tpu.memory_space<vmem>>, vector<128x384xbf16>
    %cst = arith.constant dense<0.000000e+00> : vector<32x384xf32>
    %6 = tpu.matmul %4, %5, %cst {dimension_numbers = #tpu.dot_dimension_numbers<[1], [0], [0], [1], [0, 0, 1, 1], [], []>} : vector<32x128xbf16>, vector<128x384xbf16>, vector<32x384xf32> -> vector<32x384xf32>
    %7 = arith.addf %3, %6 : vector<32x384xf32>
    %c0_6 = arith.constant 0 : index
    %c0_7 = arith.constant 0 : index
    %8 = vector.load %arg7[%c0_6, %c0_7] : memref<32x384xf32, #tpu.memory_space<vmem>>, vector<32x384xf32>
    tpu.vector_store %arg7[%c0_6, %c0_7], %7 {strides = array<i32>} : memref<32x384xf32, #tpu.memory_space<vmem>>, vector<32x384xf32>,
    %c0_i32_8 = arith.constant 0 : i32
    %9 = arith.cmpi eq, %arg2, %c0_i32_8 : i32
    %10 = arith.extui %9 : i1 to i32
    %c0_i32_9 = arith.constant 0 : i32
    %11 = arith.cmpi ne, %10, %c0_i32_9 : i32
    scf.if %11 {
      %c0_10 = arith.constant 0 : index
      %c0_11 = arith.constant 0 : index
      %12 = vector.load %arg7[%c0_10, %c0_11] : memref<32x384xf32, #tpu.memory_space<vmem>>, vector<32x384xf32>
      %c0_12 = arith.constant 0 : index
      %c0_13 = arith.constant 0 : index
      %13 = vector.load %arg5[%c0_12, %c0_13] : memref<1x384xf32, #tpu.memory_space<vmem>>, vector<1x384xf32>
      %14 = vector.broadcast %13 : vector<1x384xf32> to vector<32x384xf32>
      %15 = arith.addf %12, %14 : vector<32x384xf32>
      %16 = arith.truncf %15 : vector<32x384xf32> to vector<32x384xbf16>
      %c0_14 = arith.constant 0 : index
      %c0_15 = arith.constant 0 : index
      %17 = vector.load %arg6[%c0_14, %c0_15] : memref<32x384xbf16, #tpu.memory_space<vmem>>, vector<32x384xbf16>
      tpu.vector_store %arg6[%c0_14, %c0_15], %16 {strides = array<i32>} : memref<32x384xbf16, #tpu.memory_space<vmem>>, vector<32x384xbf16>,
    } else {
    }
    return
  }
  func.func @transform_0(%arg0: i32, %arg1: i32, %arg2: i32) -> (i32, i32) {
    %c0_i32 = arith.constant 0 : i32
    return %arg0, %arg2 : i32, i32
  }
  func.func @transform_1(%arg0: i32, %arg1: i32, %arg2: i32) -> (i32, i32) {
    %c0_i32 = arith.constant 0 : i32
    return %arg2, %arg1 : i32, i32
  }
  func.func @transform_2(%arg0: i32, %arg1: i32, %arg2: i32) -> (i32, i32) {
    %c0_i32 = arith.constant 0 : i32
    %c0_i32_0 = arith.constant 0 : i32
    return %c0_i32, %arg1 : i32, i32
  }
  func.func @transform_3(%arg0: i32, %arg1: i32, %arg2: i32) -> (i32, i32) {
    %c0_i32 = arith.constant 0 : i32
    return %arg0, %arg1 : i32, i32
  }
}

module attributes {stable_mosaic.version = 11 : i64} {
  func.func @_linear_kernel(%arg0: i32, %arg1: i32, %arg2: i32, %arg3: memref<32x128xbf16, #tpu.memory_space<vmem>>, %arg4: memref<128x128xbf16, #tpu.memory_space<vmem>>, %arg5: memref<1x128xf32, #tpu.memory_space<vmem>>, %arg6: memref<32x128xbf16, #tpu.memory_space<vmem>>, %arg7: memref<32x128xf32, #tpu.memory_space<vmem>>) attributes {dimension_semantics = [#tpu.dimension_semantics<parallel>, #tpu.dimension_semantics<parallel>, #tpu.dimension_semantics<arbitrary>], iteration_bounds = array<i64: 1, 1, 1>, scalar_prefetch = 0 : i64, scratch_operands = 1 : i64, tpu.core_type = #tpu.core_type<tc>, window_params = [{transform_indices = @transform_0, window_bounds = array<i64: 32, 128>}, {transform_indices = @transform_1, window_bounds = array<i64: 128, 128>}, {transform_indices = @transform_2, window_bounds = array<i64: 1, 128>}, {transform_indices = @transform_3, window_bounds = array<i64: 32, 128>}]} {
    %c0_i32 = arith.constant 0 : i32
    %0 = arith.cmpi eq, %arg2, %c0_i32 : i32
    %1 = arith.extui %0 : i1 to i32
    %c0_i32_0 = arith.constant 0 : i32
    %2 = arith.cmpi ne, %1, %c0_i32_0 : i32
    scf.if %2 {
      %cst_10 = arith.constant 0.000000e+00 : f32
      %12 = vector.broadcast %cst_10 : f32 to vector<32x128xf32>
      %c0_11 = arith.constant 0 : index
      %c0_12 = arith.constant 0 : index
      %13 = vector.load %arg7[%c0_11, %c0_12] : memref<32x128xf32, #tpu.memory_space<vmem>>, vector<32x128xf32>
      tpu.vector_store %arg7[%c0_11, %c0_12], %12 {strides = array<i32>} : memref<32x128xf32, #tpu.memory_space<vmem>>, vector<32x128xf32>,
    } else {
    }
    %c0 = arith.constant 0 : index
    %c0_1 = arith.constant 0 : index
    %3 = vector.load %arg7[%c0, %c0_1] : memref<32x128xf32, #tpu.memory_space<vmem>>, vector<32x128xf32>
    %c0_2 = arith.constant 0 : index
    %c0_3 = arith.constant 0 : index
    %4 = vector.load %arg3[%c0_2, %c0_3] : memref<32x128xbf16, #tpu.memory_space<vmem>>, vector<32x128xbf16>
    %c0_4 = arith.constant 0 : index
    %c0_5 = arith.constant 0 : index
    %5 = vector.load %arg4[%c0_4, %c0_5] : memref<128x128xbf16, #tpu.memory_space<vmem>>, vector<128x128xbf16>
    %cst = arith.constant dense<0.000000e+00> : vector<32x128xf32>
    %6 = tpu.matmul %4, %5, %cst {dimension_numbers = #tpu.dot_dimension_numbers<[1], [0], [0], [1], [0, 0, 1, 1], [], []>} : vector<32x128xbf16>, vector<128x128xbf16>, vector<32x128xf32> -> vector<32x128xf32>
    %7 = arith.addf %3, %6 : vector<32x128xf32>
    %c0_6 = arith.constant 0 : index
    %c0_7 = arith.constant 0 : index
    %8 = vector.load %arg7[%c0_6, %c0_7] : memref<32x128xf32, #tpu.memory_space<vmem>>, vector<32x128xf32>
    tpu.vector_store %arg7[%c0_6, %c0_7], %7 {strides = array<i32>} : memref<32x128xf32, #tpu.memory_space<vmem>>, vector<32x128xf32>,
    %c0_i32_8 = arith.constant 0 : i32
    %9 = arith.cmpi eq, %arg2, %c0_i32_8 : i32
    %10 = arith.extui %9 : i1 to i32
    %c0_i32_9 = arith.constant 0 : i32
    %11 = arith.cmpi ne, %10, %c0_i32_9 : i32
    scf.if %11 {
      %c0_10 = arith.constant 0 : index
      %c0_11 = arith.constant 0 : index
      %12 = vector.load %arg7[%c0_10, %c0_11] : memref<32x128xf32, #tpu.memory_space<vmem>>, vector<32x128xf32>
      %c0_12 = arith.constant 0 : index
      %c0_13 = arith.constant 0 : index
      %13 = vector.load %arg5[%c0_12, %c0_13] : memref<1x128xf32, #tpu.memory_space<vmem>>, vector<1x128xf32>
      %14 = vector.broadcast %13 : vector<1x128xf32> to vector<32x128xf32>
      %15 = arith.addf %12, %14 : vector<32x128xf32>
      %16 = arith.truncf %15 : vector<32x128xf32> to vector<32x128xbf16>
      %c0_14 = arith.constant 0 : index
      %c0_15 = arith.constant 0 : index
      %17 = vector.load %arg6[%c0_14, %c0_15] : memref<32x128xbf16, #tpu.memory_space<vmem>>, vector<32x128xbf16>
      tpu.vector_store %arg6[%c0_14, %c0_15], %16 {strides = array<i32>} : memref<32x128xbf16, #tpu.memory_space<vmem>>, vector<32x128xbf16>,
    } else {
    }
    return
  }
  func.func @transform_0(%arg0: i32, %arg1: i32, %arg2: i32) -> (i32, i32) {
    %c0_i32 = arith.constant 0 : i32
    return %arg0, %arg2 : i32, i32
  }
  func.func @transform_1(%arg0: i32, %arg1: i32, %arg2: i32) -> (i32, i32) {
    %c0_i32 = arith.constant 0 : i32
    return %arg2, %arg1 : i32, i32
  }
  func.func @transform_2(%arg0: i32, %arg1: i32, %arg2: i32) -> (i32, i32) {
    %c0_i32 = arith.constant 0 : i32
    %c0_i32_0 = arith.constant 0 : i32
    return %c0_i32, %arg1 : i32, i32
  }
  func.func @transform_3(%arg0: i32, %arg1: i32, %arg2: i32) -> (i32, i32) {
    %c0_i32 = arith.constant 0 : i32
    return %arg0, %arg1 : i32, i32
  }
}

module attributes {stable_mosaic.version = 11 : i64} {
  func.func @_mha_kernel(%arg0: i32, %arg1: i32, %arg2: memref<1x4x16x32xbf16, #tpu.memory_space<vmem>>, %arg3: memref<1x4x16x32xbf16, #tpu.memory_space<vmem>>, %arg4: memref<1x4x16x32xbf16, #tpu.memory_space<vmem>>, %arg5: memref<128x128xbf16, #tpu.memory_space<vmem>>, %arg6: memref<1x128xf32, #tpu.memory_space<vmem>>, %arg7: memref<1x16x128xbf16, #tpu.memory_space<vmem>>, %arg8: memref<1x128xf32, #tpu.memory_space<vmem>>, %arg9: memref<1x128xf32, #tpu.memory_space<vmem>>, %arg10: memref<1x16x128xbf16, #tpu.memory_space<vmem>>, %arg11: memref<16x128xf32, #tpu.memory_space<vmem>>) attributes {dimension_semantics = [#tpu.dimension_semantics<parallel>, #tpu.dimension_semantics<parallel>], iteration_bounds = array<i64: 2, 1>, scalar_prefetch = 0 : i64, scratch_operands = 1 : i64, tpu.core_type = #tpu.core_type<tc>, window_params = [{transform_indices = @transform_0, window_bounds = array<i64: 1, 4, 16, 32>}, {transform_indices = @transform_1, window_bounds = array<i64: 1, 4, 16, 32>}, {transform_indices = @transform_2, window_bounds = array<i64: 1, 4, 16, 32>}, {pipeline_mode = #tpu.pipeline_mode<synchronous>, transform_indices = @transform_3, window_bounds = array<i64: 128, 128>}, {pipeline_mode = #tpu.pipeline_mode<synchronous>, transform_indices = @transform_4, window_bounds = array<i64: 1, 128>}, {transform_indices = @transform_5, window_bounds = array<i64: 1, 16, 128>}, {pipeline_mode = #tpu.pipeline_mode<synchronous>, transform_indices = @transform_6, window_bounds = array<i64: 1, 128>}, {pipeline_mode = #tpu.pipeline_mode<synchronous>, transform_indices = @transform_7, window_bounds = array<i64: 1, 128>}, {transform_indices = @transform_8, window_bounds = array<i64: 1, 16, 128>}]} {
    %c16_i32 = arith.constant 16 : i32
    %0 = arith.muli %arg1, %c16_i32 : i32
    %1 = tpu.iota {dimensions = array<i32: 0>} : vector<16x16xi32>
    %2 = vector.broadcast %0 : i32 to vector<16x16xi32>
    %3 = arith.addi %1, %2 : vector<16x16xi32>
    %4 = tpu.iota {dimensions = array<i32: 1>} : vector<16x16xi32>
    %5 = arith.cmpi sgt, %4, %3 : vector<16x16xi32>
    %cst = arith.constant -1.000000e+30 : f32
    %cst_0 = arith.constant 0.000000e+00 : f32
    %6 = vector.broadcast %cst : f32 to vector<16x16xf32>
    %7 = vector.broadcast %cst_0 : f32 to vector<16x16xf32>
    %8 = arith.select %5, %6, %7 : vector<16x16xi1>, vector<16x16xf32>
    %c0 = arith.constant 0 : index
    %c0_1 = arith.constant 0 : index
    %c0_2 = arith.constant 0 : index
    %c0_3 = arith.constant 0 : index
    %9 = vector.load %arg2[%c0, %c0_1, %c0_2, %c0_3] : memref<1x4x16x32xbf16, #tpu.memory_space<vmem>>, vector<1x1x16x32xbf16>
    %10 = vector.shape_cast %9 : vector<1x1x16x32xbf16> to vector<16x32xbf16>
    %c0_4 = arith.constant 0 : index
    %c0_5 = arith.constant 0 : index
    %c0_6 = arith.constant 0 : index
    %c0_7 = arith.constant 0 : index
    %11 = vector.load %arg3[%c0_4, %c0_5, %c0_6, %c0_7] : memref<1x4x16x32xbf16, #tpu.memory_space<vmem>>, vector<1x1x16x32xbf16>
    %12 = vector.shape_cast %11 : vector<1x1x16x32xbf16> to vector<16x32xbf16>
    %c0_8 = arith.constant 0 : index
    %c0_9 = arith.constant 0 : index
    %c0_10 = arith.constant 0 : index
    %c0_11 = arith.constant 0 : index
    %13 = vector.load %arg4[%c0_8, %c0_9, %c0_10, %c0_11] : memref<1x4x16x32xbf16, #tpu.memory_space<vmem>>, vector<1x1x16x32xbf16>
    %14 = vector.shape_cast %13 : vector<1x1x16x32xbf16> to vector<16x32xbf16>
    %cst_12 = arith.constant dense<0.000000e+00> : vector<16x16xf32>
    %15 = tpu.matmul %10, %12, %cst_12 {dimension_numbers = #tpu.dot_dimension_numbers<[1], [1], [0], [0], [0, 0, 1, 0], [], []>} : vector<16x32xbf16>, vector<16x32xbf16>, vector<16x16xf32> -> vector<16x16xf32>
    %cst_13 = arith.constant 0.176776692 : f32
    %16 = vector.broadcast %cst_13 : f32 to vector<16x16xf32>
    %17 = arith.mulf %15, %16 : vector<16x16xf32>
    %18 = arith.addf %17, %8 : vector<16x16xf32>
    %cst_14 = arith.constant dense<0xFF800000> : vector<16xf32>
    %19 = vector.multi_reduction <maximumf>, %18, %cst_14 [1] : vector<16x16xf32> to vector<16xf32>
    %20 = vector.shape_cast %19 : vector<16xf32> to vector<16x1xf32>
    %21 = vector.broadcast %20 : vector<16x1xf32> to vector<16x16xf32>
    %22 = arith.subf %18, %21 : vector<16x16xf32>
    %23 = math.exp %22 : vector<16x16xf32>
    %cst_15 = arith.constant dense<0.000000e+00> : vector<16xf32>
    %24 = vector.multi_reduction <add>, %23, %cst_15 [1] : vector<16x16xf32> to vector<16xf32>
    %25 = vector.shape_cast %24 : vector<16xf32> to vector<16x1xf32>
    %26 = tpu.reciprocal %25 {approx = true} : vector<16x1xf32> -> vector<16x1xf32>
    %27 = vector.broadcast %26 : vector<16x1xf32> to vector<16x16xf32>
    %28 = arith.mulf %23, %27 : vector<16x16xf32>
    %29 = arith.truncf %28 : vector<16x16xf32> to vector<16x16xbf16>
    %cst_16 = arith.constant dense<0.000000e+00> : vector<16x32xf32>
    %30 = tpu.matmul %29, %14, %cst_16 {dimension_numbers = #tpu.dot_dimension_numbers<[1], [0], [0], [1], [0, 0, 1, 1], [], []>} : vector<16x16xbf16>, vector<16x32xbf16>, vector<16x32xf32> -> vector<16x32xf32>
    %c0_17 = arith.constant 0 : index
    %c0_18 = arith.constant 0 : index
    %31 = vector.load %arg11[%c0_17, %c0_18] : memref<16x128xf32, #tpu.memory_space<vmem>>, vector<16x32xf32>
    tpu.vector_store %arg11[%c0_17, %c0_18], %30 {strides = array<i32>} : memref<16x128xf32, #tpu.memory_space<vmem>>, vector<16x32xf32>,
    %c0_19 = arith.constant 0 : index
    %c1 = arith.constant 1 : index
    %c0_20 = arith.constant 0 : index
    %c0_21 = arith.constant 0 : index
    %32 = vector.load %arg2[%c0_19, %c1, %c0_20, %c0_21] : memref<1x4x16x32xbf16, #tpu.memory_space<vmem>>, vector<1x1x16x32xbf16>
    %33 = vector.shape_cast %32 : vector<1x1x16x32xbf16> to vector<16x32xbf16>
    %c0_22 = arith.constant 0 : index
    %c1_23 = arith.constant 1 : index
    %c0_24 = arith.constant 0 : index
    %c0_25 = arith.constant 0 : index
    %34 = vector.load %arg3[%c0_22, %c1_23, %c0_24, %c0_25] : memref<1x4x16x32xbf16, #tpu.memory_space<vmem>>, vector<1x1x16x32xbf16>
    %35 = vector.shape_cast %34 : vector<1x1x16x32xbf16> to vector<16x32xbf16>
    %c0_26 = arith.constant 0 : index
    %c1_27 = arith.constant 1 : index
    %c0_28 = arith.constant 0 : index
    %c0_29 = arith.constant 0 : index
    %36 = vector.load %arg4[%c0_26, %c1_27, %c0_28, %c0_29] : memref<1x4x16x32xbf16, #tpu.memory_space<vmem>>, vector<1x1x16x32xbf16>
    %37 = vector.shape_cast %36 : vector<1x1x16x32xbf16> to vector<16x32xbf16>
    %cst_30 = arith.constant dense<0.000000e+00> : vector<16x16xf32>
    %38 = tpu.matmul %33, %35, %cst_30 {dimension_numbers = #tpu.dot_dimension_numbers<[1], [1], [0], [0], [0, 0, 1, 0], [], []>} : vector<16x32xbf16>, vector<16x32xbf16>, vector<16x16xf32> -> vector<16x16xf32>
    %cst_31 = arith.constant 0.176776692 : f32
    %39 = vector.broadcast %cst_31 : f32 to vector<16x16xf32>
    %40 = arith.mulf %38, %39 : vector<16x16xf32>
    %41 = arith.addf %40, %8 : vector<16x16xf32>
    %cst_32 = arith.constant dense<0xFF800000> : vector<16xf32>
    %42 = vector.multi_reduction <maximumf>, %41, %cst_32 [1] : vector<16x16xf32> to vector<16xf32>
    %43 = vector.shape_cast %42 : vector<16xf32> to vector<16x1xf32>
    %44 = vector.broadcast %43 : vector<16x1xf32> to vector<16x16xf32>
    %45 = arith.subf %41, %44 : vector<16x16xf32>
    %46 = math.exp %45 : vector<16x16xf32>
    %cst_33 = arith.constant dense<0.000000e+00> : vector<16xf32>
    %47 = vector.multi_reduction <add>, %46, %cst_33 [1] : vector<16x16xf32> to vector<16xf32>
    %48 = vector.shape_cast %47 : vector<16xf32> to vector<16x1xf32>
    %49 = tpu.reciprocal %48 {approx = true} : vector<16x1xf32> -> vector<16x1xf32>
    %50 = vector.broadcast %49 : vector<16x1xf32> to vector<16x16xf32>
    %51 = arith.mulf %46, %50 : vector<16x16xf32>
    %52 = arith.truncf %51 : vector<16x16xf32> to vector<16x16xbf16>
    %cst_34 = arith.constant dense<0.000000e+00> : vector<16x32xf32>
    %53 = tpu.matmul %52, %37, %cst_34 {dimension_numbers = #tpu.dot_dimension_numbers<[1], [0], [0], [1], [0, 0, 1, 1], [], []>} : vector<16x16xbf16>, vector<16x32xbf16>, vector<16x32xf32> -> vector<16x32xf32>
    %c0_35 = arith.constant 0 : index
    %c32 = arith.constant 32 : index
    %54 = vector.load %arg11[%c0_35, %c32] : memref<16x128xf32, #tpu.memory_space<vmem>>, vector<16x32xf32>
    tpu.vector_store %arg11[%c0_35, %c32], %53 {strides = array<i32>} : memref<16x128xf32, #tpu.memory_space<vmem>>, vector<16x32xf32>,
    %c0_36 = arith.constant 0 : index
    %c2 = arith.constant 2 : index
    %c0_37 = arith.constant 0 : index
    %c0_38 = arith.constant 0 : index
    %55 = vector.load %arg2[%c0_36, %c2, %c0_37, %c0_38] : memref<1x4x16x32xbf16, #tpu.memory_space<vmem>>, vector<1x1x16x32xbf16>
    %56 = vector.shape_cast %55 : vector<1x1x16x32xbf16> to vector<16x32xbf16>
    %c0_39 = arith.constant 0 : index
    %c2_40 = arith.constant 2 : index
    %c0_41 = arith.constant 0 : index
    %c0_42 = arith.constant 0 : index
    %57 = vector.load %arg3[%c0_39, %c2_40, %c0_41, %c0_42] : memref<1x4x16x32xbf16, #tpu.memory_space<vmem>>, vector<1x1x16x32xbf16>
    %58 = vector.shape_cast %57 : vector<1x1x16x32xbf16> to vector<16x32xbf16>
    %c0_43 = arith.constant 0 : index
    %c2_44 = arith.constant 2 : index
    %c0_45 = arith.constant 0 : index
    %c0_46 = arith.constant 0 : index
    %59 = vector.load %arg4[%c0_43, %c2_44, %c0_45, %c0_46] : memref<1x4x16x32xbf16, #tpu.memory_space<vmem>>, vector<1x1x16x32xbf16>
    %60 = vector.shape_cast %59 : vector<1x1x16x32xbf16> to vector<16x32xbf16>
    %cst_47 = arith.constant dense<0.000000e+00> : vector<16x16xf32>
    %61 = tpu.matmul %56, %58, %cst_47 {dimension_numbers = #tpu.dot_dimension_numbers<[1], [1], [0], [0], [0, 0, 1, 0], [], []>} : vector<16x32xbf16>, vector<16x32xbf16>, vector<16x16xf32> -> vector<16x16xf32>
    %cst_48 = arith.constant 0.176776692 : f32
    %62 = vector.broadcast %cst_48 : f32 to vector<16x16xf32>
    %63 = arith.mulf %61, %62 : vector<16x16xf32>
    %64 = arith.addf %63, %8 : vector<16x16xf32>
    %cst_49 = arith.constant dense<0xFF800000> : vector<16xf32>
    %65 = vector.multi_reduction <maximumf>, %64, %cst_49 [1] : vector<16x16xf32> to vector<16xf32>
    %66 = vector.shape_cast %65 : vector<16xf32> to vector<16x1xf32>
    %67 = vector.broadcast %66 : vector<16x1xf32> to vector<16x16xf32>
    %68 = arith.subf %64, %67 : vector<16x16xf32>
    %69 = math.exp %68 : vector<16x16xf32>
    %cst_50 = arith.constant dense<0.000000e+00> : vector<16xf32>
    %70 = vector.multi_reduction <add>, %69, %cst_50 [1] : vector<16x16xf32> to vector<16xf32>
    %71 = vector.shape_cast %70 : vector<16xf32> to vector<16x1xf32>
    %72 = tpu.reciprocal %71 {approx = true} : vector<16x1xf32> -> vector<16x1xf32>
    %73 = vector.broadcast %72 : vector<16x1xf32> to vector<16x16xf32>
    %74 = arith.mulf %69, %73 : vector<16x16xf32>
    %75 = arith.truncf %74 : vector<16x16xf32> to vector<16x16xbf16>
    %cst_51 = arith.constant dense<0.000000e+00> : vector<16x32xf32>
    %76 = tpu.matmul %75, %60, %cst_51 {dimension_numbers = #tpu.dot_dimension_numbers<[1], [0], [0], [1], [0, 0, 1, 1], [], []>} : vector<16x16xbf16>, vector<16x32xbf16>, vector<16x32xf32> -> vector<16x32xf32>
    %c0_52 = arith.constant 0 : index
    %c64 = arith.constant 64 : index
    %77 = vector.load %arg11[%c0_52, %c64] : memref<16x128xf32, #tpu.memory_space<vmem>>, vector<16x32xf32>
    tpu.vector_store %arg11[%c0_52, %c64], %76 {strides = array<i32>} : memref<16x128xf32, #tpu.memory_space<vmem>>, vector<16x32xf32>,
    %c0_53 = arith.constant 0 : index
    %c3 = arith.constant 3 : index
    %c0_54 = arith.constant 0 : index
    %c0_55 = arith.constant 0 : index
    %78 = vector.load %arg2[%c0_53, %c3, %c0_54, %c0_55] : memref<1x4x16x32xbf16, #tpu.memory_space<vmem>>, vector<1x1x16x32xbf16>
    %79 = vector.shape_cast %78 : vector<1x1x16x32xbf16> to vector<16x32xbf16>
    %c0_56 = arith.constant 0 : index
    %c3_57 = arith.constant 3 : index
    %c0_58 = arith.constant 0 : index
    %c0_59 = arith.constant 0 : index
    %80 = vector.load %arg3[%c0_56, %c3_57, %c0_58, %c0_59] : memref<1x4x16x32xbf16, #tpu.memory_space<vmem>>, vector<1x1x16x32xbf16>
    %81 = vector.shape_cast %80 : vector<1x1x16x32xbf16> to vector<16x32xbf16>
    %c0_60 = arith.constant 0 : index
    %c3_61 = arith.constant 3 : index
    %c0_62 = arith.constant 0 : index
    %c0_63 = arith.constant 0 : index
    %82 = vector.load %arg4[%c0_60, %c3_61, %c0_62, %c0_63] : memref<1x4x16x32xbf16, #tpu.memory_space<vmem>>, vector<1x1x16x32xbf16>
    %83 = vector.shape_cast %82 : vector<1x1x16x32xbf16> to vector<16x32xbf16>
    %cst_64 = arith.constant dense<0.000000e+00> : vector<16x16xf32>
    %84 = tpu.matmul %79, %81, %cst_64 {dimension_numbers = #tpu.dot_dimension_numbers<[1], [1], [0], [0], [0, 0, 1, 0], [], []>} : vector<16x32xbf16>, vector<16x32xbf16>, vector<16x16xf32> -> vector<16x16xf32>
    %cst_65 = arith.constant 0.176776692 : f32
    %85 = vector.broadcast %cst_65 : f32 to vector<16x16xf32>
    %86 = arith.mulf %84, %85 : vector<16x16xf32>
    %87 = arith.addf %86, %8 : vector<16x16xf32>
    %cst_66 = arith.constant dense<0xFF800000> : vector<16xf32>
    %88 = vector.multi_reduction <maximumf>, %87, %cst_66 [1] : vector<16x16xf32> to vector<16xf32>
    %89 = vector.shape_cast %88 : vector<16xf32> to vector<16x1xf32>
    %90 = vector.broadcast %89 : vector<16x1xf32> to vector<16x16xf32>
    %91 = arith.subf %87, %90 : vector<16x16xf32>
    %92 = math.exp %91 : vector<16x16xf32>
    %cst_67 = arith.constant dense<0.000000e+00> : vector<16xf32>
    %93 = vector.multi_reduction <add>, %92, %cst_67 [1] : vector<16x16xf32> to vector<16xf32>
    %94 = vector.shape_cast %93 : vector<16xf32> to vector<16x1xf32>
    %95 = tpu.reciprocal %94 {approx = true} : vector<16x1xf32> -> vector<16x1xf32>
    %96 = vector.broadcast %95 : vector<16x1xf32> to vector<16x16xf32>
    %97 = arith.mulf %92, %96 : vector<16x16xf32>
    %98 = arith.truncf %97 : vector<16x16xf32> to vector<16x16xbf16>
    %cst_68 = arith.constant dense<0.000000e+00> : vector<16x32xf32>
    %99 = tpu.matmul %98, %83, %cst_68 {dimension_numbers = #tpu.dot_dimension_numbers<[1], [0], [0], [1], [0, 0, 1, 1], [], []>} : vector<16x16xbf16>, vector<16x32xbf16>, vector<16x32xf32> -> vector<16x32xf32>
    %c0_69 = arith.constant 0 : index
    %c96 = arith.constant 96 : index
    %100 = vector.load %arg11[%c0_69, %c96] : memref<16x128xf32, #tpu.memory_space<vmem>>, vector<16x32xf32>
    tpu.vector_store %arg11[%c0_69, %c96], %99 {strides = array<i32>} : memref<16x128xf32, #tpu.memory_space<vmem>>, vector<16x32xf32>,
    %c0_70 = arith.constant 0 : index
    %c0_71 = arith.constant 0 : index
    %101 = vector.load %arg11[%c0_70, %c0_71] : memref<16x128xf32, #tpu.memory_space<vmem>>, vector<16x128xf32>
    %102 = arith.truncf %101 : vector<16x128xf32> to vector<16x128xbf16>
    %c0_72 = arith.constant 0 : index
    %c0_73 = arith.constant 0 : index
    %103 = vector.load %arg5[%c0_72, %c0_73] : memref<128x128xbf16, #tpu.memory_space<vmem>>, vector<128x128xbf16>
    %cst_74 = arith.constant dense<0.000000e+00> : vector<16x128xf32>
    %104 = tpu.matmul %102, %103, %cst_74 {dimension_numbers = #tpu.dot_dimension_numbers<[1], [0], [0], [1], [0, 0, 1, 1], [], []>} : vector<16x128xbf16>, vector<128x128xbf16>, vector<16x128xf32> -> vector<16x128xf32>
    %c0_75 = arith.constant 0 : index
    %c0_76 = arith.constant 0 : index
    %105 = vector.load %arg6[%c0_75, %c0_76] : memref<1x128xf32, #tpu.memory_space<vmem>>, vector<1x128xf32>
    %106 = vector.broadcast %105 : vector<1x128xf32> to vector<16x128xf32>
    %107 = arith.addf %104, %106 : vector<16x128xf32>
    %c0_77 = arith.constant 0 : index
    %c0_78 = arith.constant 0 : index
    %c0_79 = arith.constant 0 : index
    %108 = vector.load %arg7[%c0_77, %c0_78, %c0_79] : memref<1x16x128xbf16, #tpu.memory_space<vmem>>, vector<1x16x128xbf16>
    %109 = vector.shape_cast %108 : vector<1x16x128xbf16> to vector<16x128xbf16>
    %110 = arith.extf %109 : vector<16x128xbf16> to vector<16x128xf32>
    %111 = arith.addf %107, %110 : vector<16x128xf32>
    %cst_80 = arith.constant dense<0.000000e+00> : vector<16xf32>
    %112 = vector.multi_reduction <add>, %111, %cst_80 [1] : vector<16x128xf32> to vector<16xf32>
    %113 = vector.shape_cast %112 : vector<16xf32> to vector<16x1xf32>
    %cst_81 = arith.constant 1.280000e+02 : f32
    %114 = vector.broadcast %cst_81 : f32 to vector<16x1xf32>
    %115 = arith.divf %113, %114 : vector<16x1xf32>
    %116 = vector.broadcast %115 : vector<16x1xf32> to vector<16x128xf32>
    %117 = arith.subf %111, %116 : vector<16x128xf32>
    %118 = arith.mulf %117, %117 : vector<16x128xf32>
    %cst_82 = arith.constant dense<0.000000e+00> : vector<16xf32>
    %119 = vector.multi_reduction <add>, %118, %cst_82 [1] : vector<16x128xf32> to vector<16xf32>
    %120 = vector.shape_cast %119 : vector<16xf32> to vector<16x1xf32>
    %cst_83 = arith.constant 1.280000e+02 : f32
    %121 = vector.broadcast %cst_83 : f32 to vector<16x1xf32>
    %122 = arith.divf %120, %121 : vector<16x1xf32>
    %123 = vector.broadcast %115 : vector<16x1xf32> to vector<16x128xf32>
    %124 = arith.subf %111, %123 : vector<16x128xf32>
    %cst_84 = arith.constant 9.99999974E-6 : f32
    %125 = vector.broadcast %cst_84 : f32 to vector<16x1xf32>
    %126 = arith.addf %122, %125 : vector<16x1xf32>
    %127 = math.rsqrt %126 : vector<16x1xf32>
    %128 = vector.broadcast %127 : vector<16x1xf32> to vector<16x128xf32>
    %129 = arith.mulf %124, %128 : vector<16x128xf32>
    %c0_85 = arith.constant 0 : index
    %c0_86 = arith.constant 0 : index
    %130 = vector.load %arg8[%c0_85, %c0_86] : memref<1x128xf32, #tpu.memory_space<vmem>>, vector<1x128xf32>
    %131 = vector.broadcast %130 : vector<1x128xf32> to vector<16x128xf32>
    %132 = arith.mulf %129, %131 : vector<16x128xf32>
    %c0_87 = arith.constant 0 : index
    %c0_88 = arith.constant 0 : index
    %133 = vector.load %arg9[%c0_87, %c0_88] : memref<1x128xf32, #tpu.memory_space<vmem>>, vector<1x128xf32>
    %134 = vector.broadcast %133 : vector<1x128xf32> to vector<16x128xf32>
    %135 = arith.addf %132, %134 : vector<16x128xf32>
    %136 = arith.truncf %135 : vector<16x128xf32> to vector<16x128xbf16>
    %c0_89 = arith.constant 0 : index
    %c0_90 = arith.constant 0 : index
    %c0_91 = arith.constant 0 : index
    %137 = vector.load %arg10[%c0_89, %c0_90, %c0_91] : memref<1x16x128xbf16, #tpu.memory_space<vmem>>, vector<1x16x128xbf16>
    %138 = vector.shape_cast %137 : vector<1x16x128xbf16> to vector<16x128xbf16>
    %139 = vector.shape_cast %136 : vector<16x128xbf16> to vector<1x16x128xbf16>
    tpu.vector_store %arg10[%c0_89, %c0_90, %c0_91], %139 {strides = array<i32>} : memref<1x16x128xbf16, #tpu.memory_space<vmem>>, vector<1x16x128xbf16>,
    return
  }
  func.func @transform_0(%arg0: i32, %arg1: i32) -> (i32, i32, i32, i32) {
    %c0_i32 = arith.constant 0 : i32
    %c0_i32_0 = arith.constant 0 : i32
    %c0_i32_1 = arith.constant 0 : i32
    return %arg0, %c0_i32, %arg1, %c0_i32_0 : i32, i32, i32, i32
  }
  func.func @transform_1(%arg0: i32, %arg1: i32) -> (i32, i32, i32, i32) {
    %c0_i32 = arith.constant 0 : i32
    %c0_i32_0 = arith.constant 0 : i32
    %c0_i32_1 = arith.constant 0 : i32
    %c0_i32_2 = arith.constant 0 : i32
    return %arg0, %c0_i32, %c0_i32_0, %c0_i32_1 : i32, i32, i32, i32
  }
  func.func @transform_2(%arg0: i32, %arg1: i32) -> (i32, i32, i32, i32) {
    %c0_i32 = arith.constant 0 : i32
    %c0_i32_0 = arith.constant 0 : i32
    %c0_i32_1 = arith.constant 0 : i32
    %c0_i32_2 = arith.constant 0 : i32
    return %arg0, %c0_i32, %c0_i32_0, %c0_i32_1 : i32, i32, i32, i32
  }
  func.func @transform_3(%arg0: i32, %arg1: i32) -> (i32, i32) {
    %c0_i32 = arith.constant 0 : i32
    %c0_i32_0 = arith.constant 0 : i32
    %c0_i32_1 = arith.constant 0 : i32
    return %c0_i32, %c0_i32_0 : i32, i32
  }
  func.func @transform_4(%arg0: i32, %arg1: i32) -> (i32, i32) {
    %c0_i32 = arith.constant 0 : i32
    %c0_i32_0 = arith.constant 0 : i32
    %c0_i32_1 = arith.constant 0 : i32
    return %c0_i32, %c0_i32_0 : i32, i32
  }
  func.func @transform_5(%arg0: i32, %arg1: i32) -> (i32, i32, i32) {
    %c0_i32 = arith.constant 0 : i32
    %c0_i32_0 = arith.constant 0 : i32
    return %arg0, %arg1, %c0_i32 : i32, i32, i32
  }
  func.func @transform_6(%arg0: i32, %arg1: i32) -> (i32, i32) {
    %c0_i32 = arith.constant 0 : i32
    %c0_i32_0 = arith.constant 0 : i32
    %c0_i32_1 = arith.constant 0 : i32
    return %c0_i32, %c0_i32_0 : i32, i32
  }
  func.func @transform_7(%arg0: i32, %arg1: i32) -> (i32, i32) {
    %c0_i32 = arith.constant 0 : i32
    %c0_i32_0 = arith.constant 0 : i32
    %c0_i32_1 = arith.constant 0 : i32
    return %c0_i32, %c0_i32_0 : i32, i32
  }
  func.func @transform_8(%arg0: i32, %arg1: i32) -> (i32, i32, i32) {
    %c0_i32 = arith.constant 0 : i32
    %c0_i32_0 = arith.constant 0 : i32
    return %arg0, %arg1, %c0_i32 : i32, i32, i32
  }
}

module attributes {stable_mosaic.version = 11 : i64} {
  func.func @_mha_kernel(%arg0: i32, %arg1: i32, %arg2: memref<1x4x16x32xbf16, #tpu.memory_space<vmem>>, %arg3: memref<1x4x16x32xbf16, #tpu.memory_space<vmem>>, %arg4: memref<1x4x16x32xbf16, #tpu.memory_space<vmem>>, %arg5: memref<128x128xbf16, #tpu.memory_space<vmem>>, %arg6: memref<1x128xf32, #tpu.memory_space<vmem>>, %arg7: memref<1x16x128xbf16, #tpu.memory_space<vmem>>, %arg8: memref<1x128xf32, #tpu.memory_space<vmem>>, %arg9: memref<1x128xf32, #tpu.memory_space<vmem>>, %arg10: memref<1x16x128xbf16, #tpu.memory_space<vmem>>, %arg11: memref<16x128xf32, #tpu.memory_space<vmem>>) attributes {dimension_semantics = [#tpu.dimension_semantics<parallel>, #tpu.dimension_semantics<parallel>], iteration_bounds = array<i64: 2, 1>, scalar_prefetch = 0 : i64, scratch_operands = 1 : i64, tpu.core_type = #tpu.core_type<tc>, window_params = [{transform_indices = @transform_0, window_bounds = array<i64: 1, 4, 16, 32>}, {transform_indices = @transform_1, window_bounds = array<i64: 1, 4, 16, 32>}, {transform_indices = @transform_2, window_bounds = array<i64: 1, 4, 16, 32>}, {pipeline_mode = #tpu.pipeline_mode<synchronous>, transform_indices = @transform_3, window_bounds = array<i64: 128, 128>}, {pipeline_mode = #tpu.pipeline_mode<synchronous>, transform_indices = @transform_4, window_bounds = array<i64: 1, 128>}, {transform_indices = @transform_5, window_bounds = array<i64: 1, 16, 128>}, {pipeline_mode = #tpu.pipeline_mode<synchronous>, transform_indices = @transform_6, window_bounds = array<i64: 1, 128>}, {pipeline_mode = #tpu.pipeline_mode<synchronous>, transform_indices = @transform_7, window_bounds = array<i64: 1, 128>}, {transform_indices = @transform_8, window_bounds = array<i64: 1, 16, 128>}]} {
    %c0 = arith.constant 0 : index
    %c0_0 = arith.constant 0 : index
    %c0_1 = arith.constant 0 : index
    %c0_2 = arith.constant 0 : index
    %0 = vector.load %arg2[%c0, %c0_0, %c0_1, %c0_2] : memref<1x4x16x32xbf16, #tpu.memory_space<vmem>>, vector<1x1x16x32xbf16>
    %1 = vector.shape_cast %0 : vector<1x1x16x32xbf16> to vector<16x32xbf16>
    %c0_3 = arith.constant 0 : index
    %c0_4 = arith.constant 0 : index
    %c0_5 = arith.constant 0 : index
    %c0_6 = arith.constant 0 : index
    %2 = vector.load %arg3[%c0_3, %c0_4, %c0_5, %c0_6] : memref<1x4x16x32xbf16, #tpu.memory_space<vmem>>, vector<1x1x16x32xbf16>
    %3 = vector.shape_cast %2 : vector<1x1x16x32xbf16> to vector<16x32xbf16>
    %c0_7 = arith.constant 0 : index
    %c0_8 = arith.constant 0 : index
    %c0_9 = arith.constant 0 : index
    %c0_10 = arith.constant 0 : index
    %4 = vector.load %arg4[%c0_7, %c0_8, %c0_9, %c0_10] : memref<1x4x16x32xbf16, #tpu.memory_space<vmem>>, vector<1x1x16x32xbf16>
    %5 = vector.shape_cast %4 : vector<1x1x16x32xbf16> to vector<16x32xbf16>
    %cst = arith.constant dense<0.000000e+00> : vector<16x16xf32>
    %6 = tpu.matmul %1, %3, %cst {dimension_numbers = #tpu.dot_dimension_numbers<[1], [1], [0], [0], [0, 0, 1, 0], [], []>} : vector<16x32xbf16>, vector<16x32xbf16>, vector<16x16xf32> -> vector<16x16xf32>
    %cst_11 = arith.constant 0.176776692 : f32
    %7 = vector.broadcast %cst_11 : f32 to vector<16x16xf32>
    %8 = arith.mulf %6, %7 : vector<16x16xf32>
    %cst_12 = arith.constant dense<0xFF800000> : vector<16xf32>
    %9 = vector.multi_reduction <maximumf>, %8, %cst_12 [1] : vector<16x16xf32> to vector<16xf32>
    %10 = vector.shape_cast %9 : vector<16xf32> to vector<16x1xf32>
    %11 = vector.broadcast %10 : vector<16x1xf32> to vector<16x16xf32>
    %12 = arith.subf %8, %11 : vector<16x16xf32>
    %13 = math.exp %12 : vector<16x16xf32>
    %cst_13 = arith.constant dense<0.000000e+00> : vector<16xf32>
    %14 = vector.multi_reduction <add>, %13, %cst_13 [1] : vector<16x16xf32> to vector<16xf32>
    %15 = vector.shape_cast %14 : vector<16xf32> to vector<16x1xf32>
    %16 = tpu.reciprocal %15 {approx = true} : vector<16x1xf32> -> vector<16x1xf32>
    %17 = vector.broadcast %16 : vector<16x1xf32> to vector<16x16xf32>
    %18 = arith.mulf %13, %17 : vector<16x16xf32>
    %19 = arith.truncf %18 : vector<16x16xf32> to vector<16x16xbf16>
    %cst_14 = arith.constant dense<0.000000e+00> : vector<16x32xf32>
    %20 = tpu.matmul %19, %5, %cst_14 {dimension_numbers = #tpu.dot_dimension_numbers<[1], [0], [0], [1], [0, 0, 1, 1], [], []>} : vector<16x16xbf16>, vector<16x32xbf16>, vector<16x32xf32> -> vector<16x32xf32>
    %c0_15 = arith.constant 0 : index
    %c0_16 = arith.constant 0 : index
    %21 = vector.load %arg11[%c0_15, %c0_16] : memref<16x128xf32, #tpu.memory_space<vmem>>, vector<16x32xf32>
    tpu.vector_store %arg11[%c0_15, %c0_16], %20 {strides = array<i32>} : memref<16x128xf32, #tpu.memory_space<vmem>>, vector<16x32xf32>,
    %c0_17 = arith.constant 0 : index
    %c1 = arith.constant 1 : index
    %c0_18 = arith.constant 0 : index
    %c0_19 = arith.constant 0 : index
    %22 = vector.load %arg2[%c0_17, %c1, %c0_18, %c0_19] : memref<1x4x16x32xbf16, #tpu.memory_space<vmem>>, vector<1x1x16x32xbf16>
    %23 = vector.shape_cast %22 : vector<1x1x16x32xbf16> to vector<16x32xbf16>
    %c0_20 = arith.constant 0 : index
    %c1_21 = arith.constant 1 : index
    %c0_22 = arith.constant 0 : index
    %c0_23 = arith.constant 0 : index
    %24 = vector.load %arg3[%c0_20, %c1_21, %c0_22, %c0_23] : memref<1x4x16x32xbf16, #tpu.memory_space<vmem>>, vector<1x1x16x32xbf16>
    %25 = vector.shape_cast %24 : vector<1x1x16x32xbf16> to vector<16x32xbf16>
    %c0_24 = arith.constant 0 : index
    %c1_25 = arith.constant 1 : index
    %c0_26 = arith.constant 0 : index
    %c0_27 = arith.constant 0 : index
    %26 = vector.load %arg4[%c0_24, %c1_25, %c0_26, %c0_27] : memref<1x4x16x32xbf16, #tpu.memory_space<vmem>>, vector<1x1x16x32xbf16>
    %27 = vector.shape_cast %26 : vector<1x1x16x32xbf16> to vector<16x32xbf16>
    %cst_28 = arith.constant dense<0.000000e+00> : vector<16x16xf32>
    %28 = tpu.matmul %23, %25, %cst_28 {dimension_numbers = #tpu.dot_dimension_numbers<[1], [1], [0], [0], [0, 0, 1, 0], [], []>} : vector<16x32xbf16>, vector<16x32xbf16>, vector<16x16xf32> -> vector<16x16xf32>
    %cst_29 = arith.constant 0.176776692 : f32
    %29 = vector.broadcast %cst_29 : f32 to vector<16x16xf32>
    %30 = arith.mulf %28, %29 : vector<16x16xf32>
    %cst_30 = arith.constant dense<0xFF800000> : vector<16xf32>
    %31 = vector.multi_reduction <maximumf>, %30, %cst_30 [1] : vector<16x16xf32> to vector<16xf32>
    %32 = vector.shape_cast %31 : vector<16xf32> to vector<16x1xf32>
    %33 = vector.broadcast %32 : vector<16x1xf32> to vector<16x16xf32>
    %34 = arith.subf %30, %33 : vector<16x16xf32>
    %35 = math.exp %34 : vector<16x16xf32>
    %cst_31 = arith.constant dense<0.000000e+00> : vector<16xf32>
    %36 = vector.multi_reduction <add>, %35, %cst_31 [1] : vector<16x16xf32> to vector<16xf32>
    %37 = vector.shape_cast %36 : vector<16xf32> to vector<16x1xf32>
    %38 = tpu.reciprocal %37 {approx = true} : vector<16x1xf32> -> vector<16x1xf32>
    %39 = vector.broadcast %38 : vector<16x1xf32> to vector<16x16xf32>
    %40 = arith.mulf %35, %39 : vector<16x16xf32>
    %41 = arith.truncf %40 : vector<16x16xf32> to vector<16x16xbf16>
    %cst_32 = arith.constant dense<0.000000e+00> : vector<16x32xf32>
    %42 = tpu.matmul %41, %27, %cst_32 {dimension_numbers = #tpu.dot_dimension_numbers<[1], [0], [0], [1], [0, 0, 1, 1], [], []>} : vector<16x16xbf16>, vector<16x32xbf16>, vector<16x32xf32> -> vector<16x32xf32>
    %c0_33 = arith.constant 0 : index
    %c32 = arith.constant 32 : index
    %43 = vector.load %arg11[%c0_33, %c32] : memref<16x128xf32, #tpu.memory_space<vmem>>, vector<16x32xf32>
    tpu.vector_store %arg11[%c0_33, %c32], %42 {strides = array<i32>} : memref<16x128xf32, #tpu.memory_space<vmem>>, vector<16x32xf32>,
    %c0_34 = arith.constant 0 : index
    %c2 = arith.constant 2 : index
    %c0_35 = arith.constant 0 : index
    %c0_36 = arith.constant 0 : index
    %44 = vector.load %arg2[%c0_34, %c2, %c0_35, %c0_36] : memref<1x4x16x32xbf16, #tpu.memory_space<vmem>>, vector<1x1x16x32xbf16>
    %45 = vector.shape_cast %44 : vector<1x1x16x32xbf16> to vector<16x32xbf16>
    %c0_37 = arith.constant 0 : index
    %c2_38 = arith.constant 2 : index
    %c0_39 = arith.constant 0 : index
    %c0_40 = arith.constant 0 : index
    %46 = vector.load %arg3[%c0_37, %c2_38, %c0_39, %c0_40] : memref<1x4x16x32xbf16, #tpu.memory_space<vmem>>, vector<1x1x16x32xbf16>
    %47 = vector.shape_cast %46 : vector<1x1x16x32xbf16> to vector<16x32xbf16>
    %c0_41 = arith.constant 0 : index
    %c2_42 = arith.constant 2 : index
    %c0_43 = arith.constant 0 : index
    %c0_44 = arith.constant 0 : index
    %48 = vector.load %arg4[%c0_41, %c2_42, %c0_43, %c0_44] : memref<1x4x16x32xbf16, #tpu.memory_space<vmem>>, vector<1x1x16x32xbf16>
    %49 = vector.shape_cast %48 : vector<1x1x16x32xbf16> to vector<16x32xbf16>
    %cst_45 = arith.constant dense<0.000000e+00> : vector<16x16xf32>
    %50 = tpu.matmul %45, %47, %cst_45 {dimension_numbers = #tpu.dot_dimension_numbers<[1], [1], [0], [0], [0, 0, 1, 0], [], []>} : vector<16x32xbf16>, vector<16x32xbf16>, vector<16x16xf32> -> vector<16x16xf32>
    %cst_46 = arith.constant 0.176776692 : f32
    %51 = vector.broadcast %cst_46 : f32 to vector<16x16xf32>
    %52 = arith.mulf %50, %51 : vector<16x16xf32>
    %cst_47 = arith.constant dense<0xFF800000> : vector<16xf32>
    %53 = vector.multi_reduction <maximumf>, %52, %cst_47 [1] : vector<16x16xf32> to vector<16xf32>
    %54 = vector.shape_cast %53 : vector<16xf32> to vector<16x1xf32>
    %55 = vector.broadcast %54 : vector<16x1xf32> to vector<16x16xf32>
    %56 = arith.subf %52, %55 : vector<16x16xf32>
    %57 = math.exp %56 : vector<16x16xf32>
    %cst_48 = arith.constant dense<0.000000e+00> : vector<16xf32>
    %58 = vector.multi_reduction <add>, %57, %cst_48 [1] : vector<16x16xf32> to vector<16xf32>
    %59 = vector.shape_cast %58 : vector<16xf32> to vector<16x1xf32>
    %60 = tpu.reciprocal %59 {approx = true} : vector<16x1xf32> -> vector<16x1xf32>
    %61 = vector.broadcast %60 : vector<16x1xf32> to vector<16x16xf32>
    %62 = arith.mulf %57, %61 : vector<16x16xf32>
    %63 = arith.truncf %62 : vector<16x16xf32> to vector<16x16xbf16>
    %cst_49 = arith.constant dense<0.000000e+00> : vector<16x32xf32>
    %64 = tpu.matmul %63, %49, %cst_49 {dimension_numbers = #tpu.dot_dimension_numbers<[1], [0], [0], [1], [0, 0, 1, 1], [], []>} : vector<16x16xbf16>, vector<16x32xbf16>, vector<16x32xf32> -> vector<16x32xf32>
    %c0_50 = arith.constant 0 : index
    %c64 = arith.constant 64 : index
    %65 = vector.load %arg11[%c0_50, %c64] : memref<16x128xf32, #tpu.memory_space<vmem>>, vector<16x32xf32>
    tpu.vector_store %arg11[%c0_50, %c64], %64 {strides = array<i32>} : memref<16x128xf32, #tpu.memory_space<vmem>>, vector<16x32xf32>,
    %c0_51 = arith.constant 0 : index
    %c3 = arith.constant 3 : index
    %c0_52 = arith.constant 0 : index
    %c0_53 = arith.constant 0 : index
    %66 = vector.load %arg2[%c0_51, %c3, %c0_52, %c0_53] : memref<1x4x16x32xbf16, #tpu.memory_space<vmem>>, vector<1x1x16x32xbf16>
    %67 = vector.shape_cast %66 : vector<1x1x16x32xbf16> to vector<16x32xbf16>
    %c0_54 = arith.constant 0 : index
    %c3_55 = arith.constant 3 : index
    %c0_56 = arith.constant 0 : index
    %c0_57 = arith.constant 0 : index
    %68 = vector.load %arg3[%c0_54, %c3_55, %c0_56, %c0_57] : memref<1x4x16x32xbf16, #tpu.memory_space<vmem>>, vector<1x1x16x32xbf16>
    %69 = vector.shape_cast %68 : vector<1x1x16x32xbf16> to vector<16x32xbf16>
    %c0_58 = arith.constant 0 : index
    %c3_59 = arith.constant 3 : index
    %c0_60 = arith.constant 0 : index
    %c0_61 = arith.constant 0 : index
    %70 = vector.load %arg4[%c0_58, %c3_59, %c0_60, %c0_61] : memref<1x4x16x32xbf16, #tpu.memory_space<vmem>>, vector<1x1x16x32xbf16>
    %71 = vector.shape_cast %70 : vector<1x1x16x32xbf16> to vector<16x32xbf16>
    %cst_62 = arith.constant dense<0.000000e+00> : vector<16x16xf32>
    %72 = tpu.matmul %67, %69, %cst_62 {dimension_numbers = #tpu.dot_dimension_numbers<[1], [1], [0], [0], [0, 0, 1, 0], [], []>} : vector<16x32xbf16>, vector<16x32xbf16>, vector<16x16xf32> -> vector<16x16xf32>
    %cst_63 = arith.constant 0.176776692 : f32
    %73 = vector.broadcast %cst_63 : f32 to vector<16x16xf32>
    %74 = arith.mulf %72, %73 : vector<16x16xf32>
    %cst_64 = arith.constant dense<0xFF800000> : vector<16xf32>
    %75 = vector.multi_reduction <maximumf>, %74, %cst_64 [1] : vector<16x16xf32> to vector<16xf32>
    %76 = vector.shape_cast %75 : vector<16xf32> to vector<16x1xf32>
    %77 = vector.broadcast %76 : vector<16x1xf32> to vector<16x16xf32>
    %78 = arith.subf %74, %77 : vector<16x16xf32>
    %79 = math.exp %78 : vector<16x16xf32>
    %cst_65 = arith.constant dense<0.000000e+00> : vector<16xf32>
    %80 = vector.multi_reduction <add>, %79, %cst_65 [1] : vector<16x16xf32> to vector<16xf32>
    %81 = vector.shape_cast %80 : vector<16xf32> to vector<16x1xf32>
    %82 = tpu.reciprocal %81 {approx = true} : vector<16x1xf32> -> vector<16x1xf32>
    %83 = vector.broadcast %82 : vector<16x1xf32> to vector<16x16xf32>
    %84 = arith.mulf %79, %83 : vector<16x16xf32>
    %85 = arith.truncf %84 : vector<16x16xf32> to vector<16x16xbf16>
    %cst_66 = arith.constant dense<0.000000e+00> : vector<16x32xf32>
    %86 = tpu.matmul %85, %71, %cst_66 {dimension_numbers = #tpu.dot_dimension_numbers<[1], [0], [0], [1], [0, 0, 1, 1], [], []>} : vector<16x16xbf16>, vector<16x32xbf16>, vector<16x32xf32> -> vector<16x32xf32>
    %c0_67 = arith.constant 0 : index
    %c96 = arith.constant 96 : index
    %87 = vector.load %arg11[%c0_67, %c96] : memref<16x128xf32, #tpu.memory_space<vmem>>, vector<16x32xf32>
    tpu.vector_store %arg11[%c0_67, %c96], %86 {strides = array<i32>} : memref<16x128xf32, #tpu.memory_space<vmem>>, vector<16x32xf32>,
    %c0_68 = arith.constant 0 : index
    %c0_69 = arith.constant 0 : index
    %88 = vector.load %arg11[%c0_68, %c0_69] : memref<16x128xf32, #tpu.memory_space<vmem>>, vector<16x128xf32>
    %89 = arith.truncf %88 : vector<16x128xf32> to vector<16x128xbf16>
    %c0_70 = arith.constant 0 : index
    %c0_71 = arith.constant 0 : index
    %90 = vector.load %arg5[%c0_70, %c0_71] : memref<128x128xbf16, #tpu.memory_space<vmem>>, vector<128x128xbf16>
    %cst_72 = arith.constant dense<0.000000e+00> : vector<16x128xf32>
    %91 = tpu.matmul %89, %90, %cst_72 {dimension_numbers = #tpu.dot_dimension_numbers<[1], [0], [0], [1], [0, 0, 1, 1], [], []>} : vector<16x128xbf16>, vector<128x128xbf16>, vector<16x128xf32> -> vector<16x128xf32>
    %c0_73 = arith.constant 0 : index
    %c0_74 = arith.constant 0 : index
    %92 = vector.load %arg6[%c0_73, %c0_74] : memref<1x128xf32, #tpu.memory_space<vmem>>, vector<1x128xf32>
    %93 = vector.broadcast %92 : vector<1x128xf32> to vector<16x128xf32>
    %94 = arith.addf %91, %93 : vector<16x128xf32>
    %c0_75 = arith.constant 0 : index
    %c0_76 = arith.constant 0 : index
    %c0_77 = arith.constant 0 : index
    %95 = vector.load %arg7[%c0_75, %c0_76, %c0_77] : memref<1x16x128xbf16, #tpu.memory_space<vmem>>, vector<1x16x128xbf16>
    %96 = vector.shape_cast %95 : vector<1x16x128xbf16> to vector<16x128xbf16>
    %97 = arith.extf %96 : vector<16x128xbf16> to vector<16x128xf32>
    %98 = arith.addf %94, %97 : vector<16x128xf32>
    %cst_78 = arith.constant dense<0.000000e+00> : vector<16xf32>
    %99 = vector.multi_reduction <add>, %98, %cst_78 [1] : vector<16x128xf32> to vector<16xf32>
    %100 = vector.shape_cast %99 : vector<16xf32> to vector<16x1xf32>
    %cst_79 = arith.constant 1.280000e+02 : f32
    %101 = vector.broadcast %cst_79 : f32 to vector<16x1xf32>
    %102 = arith.divf %100, %101 : vector<16x1xf32>
    %103 = vector.broadcast %102 : vector<16x1xf32> to vector<16x128xf32>
    %104 = arith.subf %98, %103 : vector<16x128xf32>
    %105 = arith.mulf %104, %104 : vector<16x128xf32>
    %cst_80 = arith.constant dense<0.000000e+00> : vector<16xf32>
    %106 = vector.multi_reduction <add>, %105, %cst_80 [1] : vector<16x128xf32> to vector<16xf32>
    %107 = vector.shape_cast %106 : vector<16xf32> to vector<16x1xf32>
    %cst_81 = arith.constant 1.280000e+02 : f32
    %108 = vector.broadcast %cst_81 : f32 to vector<16x1xf32>
    %109 = arith.divf %107, %108 : vector<16x1xf32>
    %110 = vector.broadcast %102 : vector<16x1xf32> to vector<16x128xf32>
    %111 = arith.subf %98, %110 : vector<16x128xf32>
    %cst_82 = arith.constant 9.99999974E-6 : f32
    %112 = vector.broadcast %cst_82 : f32 to vector<16x1xf32>
    %113 = arith.addf %109, %112 : vector<16x1xf32>
    %114 = math.rsqrt %113 : vector<16x1xf32>
    %115 = vector.broadcast %114 : vector<16x1xf32> to vector<16x128xf32>
    %116 = arith.mulf %111, %115 : vector<16x128xf32>
    %c0_83 = arith.constant 0 : index
    %c0_84 = arith.constant 0 : index
    %117 = vector.load %arg8[%c0_83, %c0_84] : memref<1x128xf32, #tpu.memory_space<vmem>>, vector<1x128xf32>
    %118 = vector.broadcast %117 : vector<1x128xf32> to vector<16x128xf32>
    %119 = arith.mulf %116, %118 : vector<16x128xf32>
    %c0_85 = arith.constant 0 : index
    %c0_86 = arith.constant 0 : index
    %120 = vector.load %arg9[%c0_85, %c0_86] : memref<1x128xf32, #tpu.memory_space<vmem>>, vector<1x128xf32>
    %121 = vector.broadcast %120 : vector<1x128xf32> to vector<16x128xf32>
    %122 = arith.addf %119, %121 : vector<16x128xf32>
    %123 = arith.truncf %122 : vector<16x128xf32> to vector<16x128xbf16>
    %c0_87 = arith.constant 0 : index
    %c0_88 = arith.constant 0 : index
    %c0_89 = arith.constant 0 : index
    %124 = vector.load %arg10[%c0_87, %c0_88, %c0_89] : memref<1x16x128xbf16, #tpu.memory_space<vmem>>, vector<1x16x128xbf16>
    %125 = vector.shape_cast %124 : vector<1x16x128xbf16> to vector<16x128xbf16>
    %126 = vector.shape_cast %123 : vector<16x128xbf16> to vector<1x16x128xbf16>
    tpu.vector_store %arg10[%c0_87, %c0_88, %c0_89], %126 {strides = array<i32>} : memref<1x16x128xbf16, #tpu.memory_space<vmem>>, vector<1x16x128xbf16>,
    return
  }
  func.func @transform_0(%arg0: i32, %arg1: i32) -> (i32, i32, i32, i32) {
    %c0_i32 = arith.constant 0 : i32
    %c0_i32_0 = arith.constant 0 : i32
    %c0_i32_1 = arith.constant 0 : i32
    return %arg0, %c0_i32, %arg1, %c0_i32_0 : i32, i32, i32, i32
  }
  func.func @transform_1(%arg0: i32, %arg1: i32) -> (i32, i32, i32, i32) {
    %c0_i32 = arith.constant 0 : i32
    %c0_i32_0 = arith.constant 0 : i32
    %c0_i32_1 = arith.constant 0 : i32
    %c0_i32_2 = arith.constant 0 : i32
    return %arg0, %c0_i32, %c0_i32_0, %c0_i32_1 : i32, i32, i32, i32
  }
  func.func @transform_2(%arg0: i32, %arg1: i32) -> (i32, i32, i32, i32) {
    %c0_i32 = arith.constant 0 : i32
    %c0_i32_0 = arith.constant 0 : i32
    %c0_i32_1 = arith.constant 0 : i32
    %c0_i32_2 = arith.constant 0 : i32
    return %arg0, %c0_i32, %c0_i32_0, %c0_i32_1 : i32, i32, i32, i32
  }
  func.func @transform_3(%arg0: i32, %arg1: i32) -> (i32, i32) {
    %c0_i32 = arith.constant 0 : i32
    %c0_i32_0 = arith.constant 0 : i32
    %c0_i32_1 = arith.constant 0 : i32
    return %c0_i32, %c0_i32_0 : i32, i32
  }
  func.func @transform_4(%arg0: i32, %arg1: i32) -> (i32, i32) {
    %c0_i32 = arith.constant 0 : i32
    %c0_i32_0 = arith.constant 0 : i32
    %c0_i32_1 = arith.constant 0 : i32
    return %c0_i32, %c0_i32_0 : i32, i32
  }
  func.func @transform_5(%arg0: i32, %arg1: i32) -> (i32, i32, i32) {
    %c0_i32 = arith.constant 0 : i32
    %c0_i32_0 = arith.constant 0 : i32
    return %arg0, %arg1, %c0_i32 : i32, i32, i32
  }
  func.func @transform_6(%arg0: i32, %arg1: i32) -> (i32, i32) {
    %c0_i32 = arith.constant 0 : i32
    %c0_i32_0 = arith.constant 0 : i32
    %c0_i32_1 = arith.constant 0 : i32
    return %c0_i32, %c0_i32_0 : i32, i32
  }
  func.func @transform_7(%arg0: i32, %arg1: i32) -> (i32, i32) {
    %c0_i32 = arith.constant 0 : i32
    %c0_i32_0 = arith.constant 0 : i32
    %c0_i32_1 = arith.constant 0 : i32
    return %c0_i32, %c0_i32_0 : i32, i32
  }
  func.func @transform_8(%arg0: i32, %arg1: i32) -> (i32, i32, i32) {
    %c0_i32 = arith.constant 0 : i32
    %c0_i32_0 = arith.constant 0 : i32
    return %arg0, %arg1, %c0_i32 : i32, i32, i32
  }
}

module attributes {stable_mosaic.version = 11 : i64} {
  func.func @_linear_kernel(%arg0: i32, %arg1: i32, %arg2: i32, %arg3: memref<32x128xbf16, #tpu.memory_space<vmem>>, %arg4: memref<128x256xbf16, #tpu.memory_space<vmem>>, %arg5: memref<1x256xf32, #tpu.memory_space<vmem>>, %arg6: memref<32x256xbf16, #tpu.memory_space<vmem>>, %arg7: memref<32x256xf32, #tpu.memory_space<vmem>>) attributes {dimension_semantics = [#tpu.dimension_semantics<parallel>, #tpu.dimension_semantics<parallel>, #tpu.dimension_semantics<arbitrary>], iteration_bounds = array<i64: 1, 1, 1>, scalar_prefetch = 0 : i64, scratch_operands = 1 : i64, tpu.core_type = #tpu.core_type<tc>, window_params = [{transform_indices = @transform_0, window_bounds = array<i64: 32, 128>}, {transform_indices = @transform_1, window_bounds = array<i64: 128, 256>}, {transform_indices = @transform_2, window_bounds = array<i64: 1, 256>}, {transform_indices = @transform_3, window_bounds = array<i64: 32, 256>}]} {
    %c0_i32 = arith.constant 0 : i32
    %0 = arith.cmpi eq, %arg2, %c0_i32 : i32
    %1 = arith.extui %0 : i1 to i32
    %c0_i32_0 = arith.constant 0 : i32
    %2 = arith.cmpi ne, %1, %c0_i32_0 : i32
    scf.if %2 {
      %cst_10 = arith.constant 0.000000e+00 : f32
      %12 = vector.broadcast %cst_10 : f32 to vector<32x256xf32>
      %c0_11 = arith.constant 0 : index
      %c0_12 = arith.constant 0 : index
      %13 = vector.load %arg7[%c0_11, %c0_12] : memref<32x256xf32, #tpu.memory_space<vmem>>, vector<32x256xf32>
      tpu.vector_store %arg7[%c0_11, %c0_12], %12 {strides = array<i32>} : memref<32x256xf32, #tpu.memory_space<vmem>>, vector<32x256xf32>,
    } else {
    }
    %c0 = arith.constant 0 : index
    %c0_1 = arith.constant 0 : index
    %3 = vector.load %arg7[%c0, %c0_1] : memref<32x256xf32, #tpu.memory_space<vmem>>, vector<32x256xf32>
    %c0_2 = arith.constant 0 : index
    %c0_3 = arith.constant 0 : index
    %4 = vector.load %arg3[%c0_2, %c0_3] : memref<32x128xbf16, #tpu.memory_space<vmem>>, vector<32x128xbf16>
    %c0_4 = arith.constant 0 : index
    %c0_5 = arith.constant 0 : index
    %5 = vector.load %arg4[%c0_4, %c0_5] : memref<128x256xbf16, #tpu.memory_space<vmem>>, vector<128x256xbf16>
    %cst = arith.constant dense<0.000000e+00> : vector<32x256xf32>
    %6 = tpu.matmul %4, %5, %cst {dimension_numbers = #tpu.dot_dimension_numbers<[1], [0], [0], [1], [0, 0, 1, 1], [], []>} : vector<32x128xbf16>, vector<128x256xbf16>, vector<32x256xf32> -> vector<32x256xf32>
    %7 = arith.addf %3, %6 : vector<32x256xf32>
    %c0_6 = arith.constant 0 : index
    %c0_7 = arith.constant 0 : index
    %8 = vector.load %arg7[%c0_6, %c0_7] : memref<32x256xf32, #tpu.memory_space<vmem>>, vector<32x256xf32>
    tpu.vector_store %arg7[%c0_6, %c0_7], %7 {strides = array<i32>} : memref<32x256xf32, #tpu.memory_space<vmem>>, vector<32x256xf32>,
    %c0_i32_8 = arith.constant 0 : i32
    %9 = arith.cmpi eq, %arg2, %c0_i32_8 : i32
    %10 = arith.extui %9 : i1 to i32
    %c0_i32_9 = arith.constant 0 : i32
    %11 = arith.cmpi ne, %10, %c0_i32_9 : i32
    scf.if %11 {
      %c0_10 = arith.constant 0 : index
      %c0_11 = arith.constant 0 : index
      %12 = vector.load %arg7[%c0_10, %c0_11] : memref<32x256xf32, #tpu.memory_space<vmem>>, vector<32x256xf32>
      %c0_12 = arith.constant 0 : index
      %c0_13 = arith.constant 0 : index
      %13 = vector.load %arg5[%c0_12, %c0_13] : memref<1x256xf32, #tpu.memory_space<vmem>>, vector<1x256xf32>
      %14 = vector.broadcast %13 : vector<1x256xf32> to vector<32x256xf32>
      %15 = arith.addf %12, %14 : vector<32x256xf32>
      %cst_14 = arith.constant 0.000000e+00 : f32
      %16 = vector.broadcast %cst_14 : f32 to vector<32x256xf32>
      %17 = arith.maximumf %15, %16 : vector<32x256xf32>
      %18 = arith.truncf %17 : vector<32x256xf32> to vector<32x256xbf16>
      %c0_15 = arith.constant 0 : index
      %c0_16 = arith.constant 0 : index
      %19 = vector.load %arg6[%c0_15, %c0_16] : memref<32x256xbf16, #tpu.memory_space<vmem>>, vector<32x256xbf16>
      tpu.vector_store %arg6[%c0_15, %c0_16], %18 {strides = array<i32>} : memref<32x256xbf16, #tpu.memory_space<vmem>>, vector<32x256xbf16>,
    } else {
    }
    return
  }
  func.func @transform_0(%arg0: i32, %arg1: i32, %arg2: i32) -> (i32, i32) {
    %c0_i32 = arith.constant 0 : i32
    return %arg0, %arg2 : i32, i32
  }
  func.func @transform_1(%arg0: i32, %arg1: i32, %arg2: i32) -> (i32, i32) {
    %c0_i32 = arith.constant 0 : i32
    return %arg2, %arg1 : i32, i32
  }
  func.func @transform_2(%arg0: i32, %arg1: i32, %arg2: i32) -> (i32, i32) {
    %c0_i32 = arith.constant 0 : i32
    %c0_i32_0 = arith.constant 0 : i32
    return %c0_i32, %arg1 : i32, i32
  }
  func.func @transform_3(%arg0: i32, %arg1: i32, %arg2: i32) -> (i32, i32) {
    %c0_i32 = arith.constant 0 : i32
    return %arg0, %arg1 : i32, i32
  }
}

module attributes {stable_mosaic.version = 11 : i64} {
  func.func @_linear_add_ln_kernel(%arg0: i32, %arg1: i32, %arg2: memref<32x256xbf16, #tpu.memory_space<vmem>>, %arg3: memref<256x128xbf16, #tpu.memory_space<vmem>>, %arg4: memref<1x128xf32, #tpu.memory_space<vmem>>, %arg5: memref<32x128xbf16, #tpu.memory_space<vmem>>, %arg6: memref<1x128xf32, #tpu.memory_space<vmem>>, %arg7: memref<1x128xf32, #tpu.memory_space<vmem>>, %arg8: memref<32x128xbf16, #tpu.memory_space<vmem>>, %arg9: memref<32x128xf32, #tpu.memory_space<vmem>>) attributes {dimension_semantics = [#tpu.dimension_semantics<parallel>, #tpu.dimension_semantics<arbitrary>], iteration_bounds = array<i64: 1, 1>, scalar_prefetch = 0 : i64, scratch_operands = 1 : i64, tpu.core_type = #tpu.core_type<tc>, window_params = [{transform_indices = @transform_0, window_bounds = array<i64: 32, 256>}, {transform_indices = @transform_1, window_bounds = array<i64: 256, 128>}, {pipeline_mode = #tpu.pipeline_mode<synchronous>, transform_indices = @transform_2, window_bounds = array<i64: 1, 128>}, {transform_indices = @transform_3, window_bounds = array<i64: 32, 128>}, {pipeline_mode = #tpu.pipeline_mode<synchronous>, transform_indices = @transform_4, window_bounds = array<i64: 1, 128>}, {pipeline_mode = #tpu.pipeline_mode<synchronous>, transform_indices = @transform_5, window_bounds = array<i64: 1, 128>}, {transform_indices = @transform_6, window_bounds = array<i64: 32, 128>}]} {
    %c0_i32 = arith.constant 0 : i32
    %0 = arith.cmpi eq, %arg1, %c0_i32 : i32
    %1 = arith.extui %0 : i1 to i32
    %c0_i32_0 = arith.constant 0 : i32
    %2 = arith.cmpi ne, %1, %c0_i32_0 : i32
    scf.if %2 {
      %cst_10 = arith.constant 0.000000e+00 : f32
      %12 = vector.broadcast %cst_10 : f32 to vector<32x128xf32>
      %c0_11 = arith.constant 0 : index
      %c0_12 = arith.constant 0 : index
      %13 = vector.load %arg9[%c0_11, %c0_12] : memref<32x128xf32, #tpu.memory_space<vmem>>, vector<32x128xf32>
      tpu.vector_store %arg9[%c0_11, %c0_12], %12 {strides = array<i32>} : memref<32x128xf32, #tpu.memory_space<vmem>>, vector<32x128xf32>,
    } else {
    }
    %c0 = arith.constant 0 : index
    %c0_1 = arith.constant 0 : index
    %3 = vector.load %arg9[%c0, %c0_1] : memref<32x128xf32, #tpu.memory_space<vmem>>, vector<32x128xf32>
    %c0_2 = arith.constant 0 : index
    %c0_3 = arith.constant 0 : index
    %4 = vector.load %arg2[%c0_2, %c0_3] : memref<32x256xbf16, #tpu.memory_space<vmem>>, vector<32x256xbf16>
    %c0_4 = arith.constant 0 : index
    %c0_5 = arith.constant 0 : index
    %5 = vector.load %arg3[%c0_4, %c0_5] : memref<256x128xbf16, #tpu.memory_space<vmem>>, vector<256x128xbf16>
    %cst = arith.constant dense<0.000000e+00> : vector<32x128xf32>
    %6 = tpu.matmul %4, %5, %cst {dimension_numbers = #tpu.dot_dimension_numbers<[1], [0], [0], [1], [0, 0, 1, 1], [], []>} : vector<32x256xbf16>, vector<256x128xbf16>, vector<32x128xf32> -> vector<32x128xf32>
    %7 = arith.addf %3, %6 : vector<32x128xf32>
    %c0_6 = arith.constant 0 : index
    %c0_7 = arith.constant 0 : index
    %8 = vector.load %arg9[%c0_6, %c0_7] : memref<32x128xf32, #tpu.memory_space<vmem>>, vector<32x128xf32>
    tpu.vector_store %arg9[%c0_6, %c0_7], %7 {strides = array<i32>} : memref<32x128xf32, #tpu.memory_space<vmem>>, vector<32x128xf32>,
    %c0_i32_8 = arith.constant 0 : i32
    %9 = arith.cmpi eq, %arg1, %c0_i32_8 : i32
    %10 = arith.extui %9 : i1 to i32
    %c0_i32_9 = arith.constant 0 : i32
    %11 = arith.cmpi ne, %10, %c0_i32_9 : i32
    scf.if %11 {
      %c0_10 = arith.constant 0 : index
      %c0_11 = arith.constant 0 : index
      %12 = vector.load %arg9[%c0_10, %c0_11] : memref<32x128xf32, #tpu.memory_space<vmem>>, vector<32x128xf32>
      %c0_12 = arith.constant 0 : index
      %c0_13 = arith.constant 0 : index
      %13 = vector.load %arg4[%c0_12, %c0_13] : memref<1x128xf32, #tpu.memory_space<vmem>>, vector<1x128xf32>
      %14 = vector.broadcast %13 : vector<1x128xf32> to vector<32x128xf32>
      %15 = arith.addf %12, %14 : vector<32x128xf32>
      %c0_14 = arith.constant 0 : index
      %c0_15 = arith.constant 0 : index
      %16 = vector.load %arg5[%c0_14, %c0_15] : memref<32x128xbf16, #tpu.memory_space<vmem>>, vector<32x128xbf16>
      %17 = arith.extf %16 : vector<32x128xbf16> to vector<32x128xf32>
      %18 = arith.addf %15, %17 : vector<32x128xf32>
      %c0_16 = arith.constant 0 : index
      %c0_17 = arith.constant 0 : index
      %19 = vector.load %arg6[%c0_16, %c0_17] : memref<1x128xf32, #tpu.memory_space<vmem>>, vector<1x128xf32>
      %c0_18 = arith.constant 0 : index
      %c0_19 = arith.constant 0 : index
      %20 = vector.load %arg7[%c0_18, %c0_19] : memref<1x128xf32, #tpu.memory_space<vmem>>, vector<1x128xf32>
      %cst_20 = arith.constant dense<0.000000e+00> : vector<32xf32>
      %21 = vector.multi_reduction <add>, %18, %cst_20 [1] : vector<32x128xf32> to vector<32xf32>
      %22 = vector.shape_cast %21 : vector<32xf32> to vector<32x1xf32>
      %cst_21 = arith.constant 1.280000e+02 : f32
      %23 = vector.broadcast %cst_21 : f32 to vector<32x1xf32>
      %24 = arith.divf %22, %23 : vector<32x1xf32>
      %25 = vector.broadcast %24 : vector<32x1xf32> to vector<32x128xf32>
      %26 = arith.subf %18, %25 : vector<32x128xf32>
      %27 = arith.mulf %26, %26 : vector<32x128xf32>
      %cst_22 = arith.constant dense<0.000000e+00> : vector<32xf32>
      %28 = vector.multi_reduction <add>, %27, %cst_22 [1] : vector<32x128xf32> to vector<32xf32>
      %29 = vector.shape_cast %28 : vector<32xf32> to vector<32x1xf32>
      %cst_23 = arith.constant 1.280000e+02 : f32
      %30 = vector.broadcast %cst_23 : f32 to vector<32x1xf32>
      %31 = arith.divf %29, %30 : vector<32x1xf32>
      %32 = vector.broadcast %24 : vector<32x1xf32> to vector<32x128xf32>
      %33 = arith.subf %18, %32 : vector<32x128xf32>
      %cst_24 = arith.constant 9.99999974E-6 : f32
      %34 = vector.broadcast %cst_24 : f32 to vector<32x1xf32>
      %35 = arith.addf %31, %34 : vector<32x1xf32>
      %36 = math.rsqrt %35 : vector<32x1xf32>
      %37 = vector.broadcast %36 : vector<32x1xf32> to vector<32x128xf32>
      %38 = arith.mulf %33, %37 : vector<32x128xf32>
      %39 = vector.broadcast %19 : vector<1x128xf32> to vector<32x128xf32>
      %40 = arith.mulf %38, %39 : vector<32x128xf32>
      %41 = vector.broadcast %20 : vector<1x128xf32> to vector<32x128xf32>
      %42 = arith.addf %40, %41 : vector<32x128xf32>
      %43 = arith.truncf %42 : vector<32x128xf32> to vector<32x128xbf16>
      %c0_25 = arith.constant 0 : index
      %c0_26 = arith.constant 0 : index
      %44 = vector.load %arg8[%c0_25, %c0_26] : memref<32x128xbf16, #tpu.memory_space<vmem>>, vector<32x128xbf16>
      tpu.vector_store %arg8[%c0_25, %c0_26], %43 {strides = array<i32>} : memref<32x128xbf16, #tpu.memory_space<vmem>>, vector<32x128xbf16>,
    } else {
    }
    return
  }
  func.func @transform_0(%arg0: i32, %arg1: i32) -> (i32, i32) {
    %c0_i32 = arith.constant 0 : i32
    return %arg0, %arg1 : i32, i32
  }
  func.func @transform_1(%arg0: i32, %arg1: i32) -> (i32, i32) {
    %c0_i32 = arith.constant 0 : i32
    %c0_i32_0 = arith.constant 0 : i32
    return %arg1, %c0_i32 : i32, i32
  }
  func.func @transform_2(%arg0: i32, %arg1: i32) -> (i32, i32) {
    %c0_i32 = arith.constant 0 : i32
    %c0_i32_0 = arith.constant 0 : i32
    %c0_i32_1 = arith.constant 0 : i32
    return %c0_i32, %c0_i32_0 : i32, i32
  }
  func.func @transform_3(%arg0: i32, %arg1: i32) -> (i32, i32) {
    %c0_i32 = arith.constant 0 : i32
    %c0_i32_0 = arith.constant 0 : i32
    return %arg0, %c0_i32 : i32, i32
  }
  func.func @transform_4(%arg0: i32, %arg1: i32) -> (i32, i32) {
    %c0_i32 = arith.constant 0 : i32
    %c0_i32_0 = arith.constant 0 : i32
    %c0_i32_1 = arith.constant 0 : i32
    return %c0_i32, %c0_i32_0 : i32, i32
  }
  func.func @transform_5(%arg0: i32, %arg1: i32) -> (i32, i32) {
    %c0_i32 = arith.constant 0 : i32
    %c0_i32_0 = arith.constant 0 : i32
    %c0_i32_1 = arith.constant 0 : i32
    return %c0_i32, %c0_i32_0 : i32, i32
  }
  func.func @transform_6(%arg0: i32, %arg1: i32) -> (i32, i32) {
    %c0_i32 = arith.constant 0 : i32
    %c0_i32_0 = arith.constant 0 : i32
    return %arg0, %c0_i32 : i32, i32
  }
}

module attributes {stable_mosaic.version = 11 : i64} {
  func.func @_linear_add_ln_kernel(%arg0: i32, %arg1: i32, %arg2: memref<32x256xbf16, #tpu.memory_space<vmem>>, %arg3: memref<256x128xbf16, #tpu.memory_space<vmem>>, %arg4: memref<1x128xf32, #tpu.memory_space<vmem>>, %arg5: memref<32x128xbf16, #tpu.memory_space<vmem>>, %arg6: memref<1x128xf32, #tpu.memory_space<vmem>>, %arg7: memref<1x128xf32, #tpu.memory_space<vmem>>, %arg8: memref<1x128xf32, #tpu.memory_space<vmem>>, %arg9: memref<1x128xf32, #tpu.memory_space<vmem>>, %arg10: memref<32x128xbf16, #tpu.memory_space<vmem>>, %arg11: memref<32x128xf32, #tpu.memory_space<vmem>>) attributes {dimension_semantics = [#tpu.dimension_semantics<parallel>, #tpu.dimension_semantics<arbitrary>], iteration_bounds = array<i64: 1, 1>, scalar_prefetch = 0 : i64, scratch_operands = 1 : i64, tpu.core_type = #tpu.core_type<tc>, window_params = [{transform_indices = @transform_0, window_bounds = array<i64: 32, 256>}, {transform_indices = @transform_1, window_bounds = array<i64: 256, 128>}, {pipeline_mode = #tpu.pipeline_mode<synchronous>, transform_indices = @transform_2, window_bounds = array<i64: 1, 128>}, {transform_indices = @transform_3, window_bounds = array<i64: 32, 128>}, {pipeline_mode = #tpu.pipeline_mode<synchronous>, transform_indices = @transform_4, window_bounds = array<i64: 1, 128>}, {pipeline_mode = #tpu.pipeline_mode<synchronous>, transform_indices = @transform_5, window_bounds = array<i64: 1, 128>}, {pipeline_mode = #tpu.pipeline_mode<synchronous>, transform_indices = @transform_6, window_bounds = array<i64: 1, 128>}, {pipeline_mode = #tpu.pipeline_mode<synchronous>, transform_indices = @transform_7, window_bounds = array<i64: 1, 128>}, {transform_indices = @transform_8, window_bounds = array<i64: 32, 128>}]} {
    %c0_i32 = arith.constant 0 : i32
    %0 = arith.cmpi eq, %arg1, %c0_i32 : i32
    %1 = arith.extui %0 : i1 to i32
    %c0_i32_0 = arith.constant 0 : i32
    %2 = arith.cmpi ne, %1, %c0_i32_0 : i32
    scf.if %2 {
      %cst_10 = arith.constant 0.000000e+00 : f32
      %12 = vector.broadcast %cst_10 : f32 to vector<32x128xf32>
      %c0_11 = arith.constant 0 : index
      %c0_12 = arith.constant 0 : index
      %13 = vector.load %arg11[%c0_11, %c0_12] : memref<32x128xf32, #tpu.memory_space<vmem>>, vector<32x128xf32>
      tpu.vector_store %arg11[%c0_11, %c0_12], %12 {strides = array<i32>} : memref<32x128xf32, #tpu.memory_space<vmem>>, vector<32x128xf32>,
    } else {
    }
    %c0 = arith.constant 0 : index
    %c0_1 = arith.constant 0 : index
    %3 = vector.load %arg11[%c0, %c0_1] : memref<32x128xf32, #tpu.memory_space<vmem>>, vector<32x128xf32>
    %c0_2 = arith.constant 0 : index
    %c0_3 = arith.constant 0 : index
    %4 = vector.load %arg2[%c0_2, %c0_3] : memref<32x256xbf16, #tpu.memory_space<vmem>>, vector<32x256xbf16>
    %c0_4 = arith.constant 0 : index
    %c0_5 = arith.constant 0 : index
    %5 = vector.load %arg3[%c0_4, %c0_5] : memref<256x128xbf16, #tpu.memory_space<vmem>>, vector<256x128xbf16>
    %cst = arith.constant dense<0.000000e+00> : vector<32x128xf32>
    %6 = tpu.matmul %4, %5, %cst {dimension_numbers = #tpu.dot_dimension_numbers<[1], [0], [0], [1], [0, 0, 1, 1], [], []>} : vector<32x256xbf16>, vector<256x128xbf16>, vector<32x128xf32> -> vector<32x128xf32>
    %7 = arith.addf %3, %6 : vector<32x128xf32>
    %c0_6 = arith.constant 0 : index
    %c0_7 = arith.constant 0 : index
    %8 = vector.load %arg11[%c0_6, %c0_7] : memref<32x128xf32, #tpu.memory_space<vmem>>, vector<32x128xf32>
    tpu.vector_store %arg11[%c0_6, %c0_7], %7 {strides = array<i32>} : memref<32x128xf32, #tpu.memory_space<vmem>>, vector<32x128xf32>,
    %c0_i32_8 = arith.constant 0 : i32
    %9 = arith.cmpi eq, %arg1, %c0_i32_8 : i32
    %10 = arith.extui %9 : i1 to i32
    %c0_i32_9 = arith.constant 0 : i32
    %11 = arith.cmpi ne, %10, %c0_i32_9 : i32
    scf.if %11 {
      %c0_10 = arith.constant 0 : index
      %c0_11 = arith.constant 0 : index
      %12 = vector.load %arg11[%c0_10, %c0_11] : memref<32x128xf32, #tpu.memory_space<vmem>>, vector<32x128xf32>
      %c0_12 = arith.constant 0 : index
      %c0_13 = arith.constant 0 : index
      %13 = vector.load %arg4[%c0_12, %c0_13] : memref<1x128xf32, #tpu.memory_space<vmem>>, vector<1x128xf32>
      %14 = vector.broadcast %13 : vector<1x128xf32> to vector<32x128xf32>
      %15 = arith.addf %12, %14 : vector<32x128xf32>
      %c0_14 = arith.constant 0 : index
      %c0_15 = arith.constant 0 : index
      %16 = vector.load %arg5[%c0_14, %c0_15] : memref<32x128xbf16, #tpu.memory_space<vmem>>, vector<32x128xbf16>
      %17 = arith.extf %16 : vector<32x128xbf16> to vector<32x128xf32>
      %18 = arith.addf %15, %17 : vector<32x128xf32>
      %c0_16 = arith.constant 0 : index
      %c0_17 = arith.constant 0 : index
      %19 = vector.load %arg6[%c0_16, %c0_17] : memref<1x128xf32, #tpu.memory_space<vmem>>, vector<1x128xf32>
      %c0_18 = arith.constant 0 : index
      %c0_19 = arith.constant 0 : index
      %20 = vector.load %arg7[%c0_18, %c0_19] : memref<1x128xf32, #tpu.memory_space<vmem>>, vector<1x128xf32>
      %cst_20 = arith.constant dense<0.000000e+00> : vector<32xf32>
      %21 = vector.multi_reduction <add>, %18, %cst_20 [1] : vector<32x128xf32> to vector<32xf32>
      %22 = vector.shape_cast %21 : vector<32xf32> to vector<32x1xf32>
      %cst_21 = arith.constant 1.280000e+02 : f32
      %23 = vector.broadcast %cst_21 : f32 to vector<32x1xf32>
      %24 = arith.divf %22, %23 : vector<32x1xf32>
      %25 = vector.broadcast %24 : vector<32x1xf32> to vector<32x128xf32>
      %26 = arith.subf %18, %25 : vector<32x128xf32>
      %27 = arith.mulf %26, %26 : vector<32x128xf32>
      %cst_22 = arith.constant dense<0.000000e+00> : vector<32xf32>
      %28 = vector.multi_reduction <add>, %27, %cst_22 [1] : vector<32x128xf32> to vector<32xf32>
      %29 = vector.shape_cast %28 : vector<32xf32> to vector<32x1xf32>
      %cst_23 = arith.constant 1.280000e+02 : f32
      %30 = vector.broadcast %cst_23 : f32 to vector<32x1xf32>
      %31 = arith.divf %29, %30 : vector<32x1xf32>
      %32 = vector.broadcast %24 : vector<32x1xf32> to vector<32x128xf32>
      %33 = arith.subf %18, %32 : vector<32x128xf32>
      %cst_24 = arith.constant 9.99999974E-6 : f32
      %34 = vector.broadcast %cst_24 : f32 to vector<32x1xf32>
      %35 = arith.addf %31, %34 : vector<32x1xf32>
      %36 = math.rsqrt %35 : vector<32x1xf32>
      %37 = vector.broadcast %36 : vector<32x1xf32> to vector<32x128xf32>
      %38 = arith.mulf %33, %37 : vector<32x128xf32>
      %39 = vector.broadcast %19 : vector<1x128xf32> to vector<32x128xf32>
      %40 = arith.mulf %38, %39 : vector<32x128xf32>
      %41 = vector.broadcast %20 : vector<1x128xf32> to vector<32x128xf32>
      %42 = arith.addf %40, %41 : vector<32x128xf32>
      %c0_25 = arith.constant 0 : index
      %c0_26 = arith.constant 0 : index
      %43 = vector.load %arg8[%c0_25, %c0_26] : memref<1x128xf32, #tpu.memory_space<vmem>>, vector<1x128xf32>
      %c0_27 = arith.constant 0 : index
      %c0_28 = arith.constant 0 : index
      %44 = vector.load %arg9[%c0_27, %c0_28] : memref<1x128xf32, #tpu.memory_space<vmem>>, vector<1x128xf32>
      %cst_29 = arith.constant dense<0.000000e+00> : vector<32xf32>
      %45 = vector.multi_reduction <add>, %42, %cst_29 [1] : vector<32x128xf32> to vector<32xf32>
      %46 = vector.shape_cast %45 : vector<32xf32> to vector<32x1xf32>
      %cst_30 = arith.constant 1.280000e+02 : f32
      %47 = vector.broadcast %cst_30 : f32 to vector<32x1xf32>
      %48 = arith.divf %46, %47 : vector<32x1xf32>
      %49 = vector.broadcast %48 : vector<32x1xf32> to vector<32x128xf32>
      %50 = arith.subf %42, %49 : vector<32x128xf32>
      %51 = arith.mulf %50, %50 : vector<32x128xf32>
      %cst_31 = arith.constant dense<0.000000e+00> : vector<32xf32>
      %52 = vector.multi_reduction <add>, %51, %cst_31 [1] : vector<32x128xf32> to vector<32xf32>
      %53 = vector.shape_cast %52 : vector<32xf32> to vector<32x1xf32>
      %cst_32 = arith.constant 1.280000e+02 : f32
      %54 = vector.broadcast %cst_32 : f32 to vector<32x1xf32>
      %55 = arith.divf %53, %54 : vector<32x1xf32>
      %56 = vector.broadcast %48 : vector<32x1xf32> to vector<32x128xf32>
      %57 = arith.subf %42, %56 : vector<32x128xf32>
      %cst_33 = arith.constant 9.99999974E-6 : f32
      %58 = vector.broadcast %cst_33 : f32 to vector<32x1xf32>
      %59 = arith.addf %55, %58 : vector<32x1xf32>
      %60 = math.rsqrt %59 : vector<32x1xf32>
      %61 = vector.broadcast %60 : vector<32x1xf32> to vector<32x128xf32>
      %62 = arith.mulf %57, %61 : vector<32x128xf32>
      %63 = vector.broadcast %43 : vector<1x128xf32> to vector<32x128xf32>
      %64 = arith.mulf %62, %63 : vector<32x128xf32>
      %65 = vector.broadcast %44 : vector<1x128xf32> to vector<32x128xf32>
      %66 = arith.addf %64, %65 : vector<32x128xf32>
      %67 = arith.truncf %66 : vector<32x128xf32> to vector<32x128xbf16>
      %c0_34 = arith.constant 0 : index
      %c0_35 = arith.constant 0 : index
      %68 = vector.load %arg10[%c0_34, %c0_35] : memref<32x128xbf16, #tpu.memory_space<vmem>>, vector<32x128xbf16>
      tpu.vector_store %arg10[%c0_34, %c0_35], %67 {strides = array<i32>} : memref<32x128xbf16, #tpu.memory_space<vmem>>, vector<32x128xbf16>,
    } else {
    }
    return
  }
  func.func @transform_0(%arg0: i32, %arg1: i32) -> (i32, i32) {
    %c0_i32 = arith.constant 0 : i32
    return %arg0, %arg1 : i32, i32
  }
  func.func @transform_1(%arg0: i32, %arg1: i32) -> (i32, i32) {
    %c0_i32 = arith.constant 0 : i32
    %c0_i32_0 = arith.constant 0 : i32
    return %arg1, %c0_i32 : i32, i32
  }
  func.func @transform_2(%arg0: i32, %arg1: i32) -> (i32, i32) {
    %c0_i32 = arith.constant 0 : i32
    %c0_i32_0 = arith.constant 0 : i32
    %c0_i32_1 = arith.constant 0 : i32
    return %c0_i32, %c0_i32_0 : i32, i32
  }
  func.func @transform_3(%arg0: i32, %arg1: i32) -> (i32, i32) {
    %c0_i32 = arith.constant 0 : i32
    %c0_i32_0 = arith.constant 0 : i32
    return %arg0, %c0_i32 : i32, i32
  }
  func.func @transform_4(%arg0: i32, %arg1: i32) -> (i32, i32) {
    %c0_i32 = arith.constant 0 : i32
    %c0_i32_0 = arith.constant 0 : i32
    %c0_i32_1 = arith.constant 0 : i32
    return %c0_i32, %c0_i32_0 : i32, i32
  }
  func.func @transform_5(%arg0: i32, %arg1: i32) -> (i32, i32) {
    %c0_i32 = arith.constant 0 : i32
    %c0_i32_0 = arith.constant 0 : i32
    %c0_i32_1 = arith.constant 0 : i32
    return %c0_i32, %c0_i32_0 : i32, i32
  }
  func.func @transform_6(%arg0: i32, %arg1: i32) -> (i32, i32) {
    %c0_i32 = arith.constant 0 : i32
    %c0_i32_0 = arith.constant 0 : i32
    %c0_i32_1 = arith.constant 0 : i32
    return %c0_i32, %c0_i32_0 : i32, i32
  }
  func.func @transform_7(%arg0: i32, %arg1: i32) -> (i32, i32) {
    %c0_i32 = arith.constant 0 : i32
    %c0_i32_0 = arith.constant 0 : i32
    %c0_i32_1 = arith.constant 0 : i32
    return %c0_i32, %c0_i32_0 : i32, i32
  }
  func.func @transform_8(%arg0: i32, %arg1: i32) -> (i32, i32) {
    %c0_i32 = arith.constant 0 : i32
    %c0_i32_0 = arith.constant 0 : i32
    return %arg0, %c0_i32 : i32, i32
  }
}

module attributes {stable_mosaic.version = 11 : i64} {
  func.func @_linear_kernel(%arg0: i32, %arg1: i32, %arg2: i32, %arg3: memref<32x128xbf16, #tpu.memory_space<vmem>>, %arg4: memref<128x256xbf16, #tpu.memory_space<vmem>>, %arg5: memref<1x256xf32, #tpu.memory_space<vmem>>, %arg6: memref<32x256xbf16, #tpu.memory_space<vmem>>, %arg7: memref<32x256xf32, #tpu.memory_space<vmem>>) attributes {dimension_semantics = [#tpu.dimension_semantics<parallel>, #tpu.dimension_semantics<parallel>, #tpu.dimension_semantics<arbitrary>], iteration_bounds = array<i64: 1, 1, 1>, scalar_prefetch = 0 : i64, scratch_operands = 1 : i64, tpu.core_type = #tpu.core_type<tc>, window_params = [{transform_indices = @transform_0, window_bounds = array<i64: 32, 128>}, {transform_indices = @transform_1, window_bounds = array<i64: 128, 256>}, {transform_indices = @transform_2, window_bounds = array<i64: 1, 256>}, {transform_indices = @transform_3, window_bounds = array<i64: 32, 256>}]} {
    %c0_i32 = arith.constant 0 : i32
    %0 = arith.cmpi eq, %arg2, %c0_i32 : i32
    %1 = arith.extui %0 : i1 to i32
    %c0_i32_0 = arith.constant 0 : i32
    %2 = arith.cmpi ne, %1, %c0_i32_0 : i32
    scf.if %2 {
      %cst_10 = arith.constant 0.000000e+00 : f32
      %12 = vector.broadcast %cst_10 : f32 to vector<32x256xf32>
      %c0_11 = arith.constant 0 : index
      %c0_12 = arith.constant 0 : index
      %13 = vector.load %arg7[%c0_11, %c0_12] : memref<32x256xf32, #tpu.memory_space<vmem>>, vector<32x256xf32>
      tpu.vector_store %arg7[%c0_11, %c0_12], %12 {strides = array<i32>} : memref<32x256xf32, #tpu.memory_space<vmem>>, vector<32x256xf32>,
    } else {
    }
    %c0 = arith.constant 0 : index
    %c0_1 = arith.constant 0 : index
    %3 = vector.load %arg7[%c0, %c0_1] : memref<32x256xf32, #tpu.memory_space<vmem>>, vector<32x256xf32>
    %c0_2 = arith.constant 0 : index
    %c0_3 = arith.constant 0 : index
    %4 = vector.load %arg3[%c0_2, %c0_3] : memref<32x128xbf16, #tpu.memory_space<vmem>>, vector<32x128xbf16>
    %c0_4 = arith.constant 0 : index
    %c0_5 = arith.constant 0 : index
    %5 = vector.load %arg4[%c0_4, %c0_5] : memref<128x256xbf16, #tpu.memory_space<vmem>>, vector<128x256xbf16>
    %cst = arith.constant dense<0.000000e+00> : vector<32x256xf32>
    %6 = tpu.matmul %4, %5, %cst {dimension_numbers = #tpu.dot_dimension_numbers<[1], [0], [0], [1], [0, 0, 1, 1], [], []>} : vector<32x128xbf16>, vector<128x256xbf16>, vector<32x256xf32> -> vector<32x256xf32>
    %7 = arith.addf %3, %6 : vector<32x256xf32>
    %c0_6 = arith.constant 0 : index
    %c0_7 = arith.constant 0 : index
    %8 = vector.load %arg7[%c0_6, %c0_7] : memref<32x256xf32, #tpu.memory_space<vmem>>, vector<32x256xf32>
    tpu.vector_store %arg7[%c0_6, %c0_7], %7 {strides = array<i32>} : memref<32x256xf32, #tpu.memory_space<vmem>>, vector<32x256xf32>,
    %c0_i32_8 = arith.constant 0 : i32
    %9 = arith.cmpi eq, %arg2, %c0_i32_8 : i32
    %10 = arith.extui %9 : i1 to i32
    %c0_i32_9 = arith.constant 0 : i32
    %11 = arith.cmpi ne, %10, %c0_i32_9 : i32
    scf.if %11 {
      %c0_10 = arith.constant 0 : index
      %c0_11 = arith.constant 0 : index
      %12 = vector.load %arg7[%c0_10, %c0_11] : memref<32x256xf32, #tpu.memory_space<vmem>>, vector<32x256xf32>
      %c0_12 = arith.constant 0 : index
      %c0_13 = arith.constant 0 : index
      %13 = vector.load %arg5[%c0_12, %c0_13] : memref<1x256xf32, #tpu.memory_space<vmem>>, vector<1x256xf32>
      %14 = vector.broadcast %13 : vector<1x256xf32> to vector<32x256xf32>
      %15 = arith.addf %12, %14 : vector<32x256xf32>
      %16 = arith.truncf %15 : vector<32x256xf32> to vector<32x256xbf16>
      %c0_14 = arith.constant 0 : index
      %c0_15 = arith.constant 0 : index
      %17 = vector.load %arg6[%c0_14, %c0_15] : memref<32x256xbf16, #tpu.memory_space<vmem>>, vector<32x256xbf16>
      tpu.vector_store %arg6[%c0_14, %c0_15], %16 {strides = array<i32>} : memref<32x256xbf16, #tpu.memory_space<vmem>>, vector<32x256xbf16>,
    } else {
    }
    return
  }
  func.func @transform_0(%arg0: i32, %arg1: i32, %arg2: i32) -> (i32, i32) {
    %c0_i32 = arith.constant 0 : i32
    return %arg0, %arg2 : i32, i32
  }
  func.func @transform_1(%arg0: i32, %arg1: i32, %arg2: i32) -> (i32, i32) {
    %c0_i32 = arith.constant 0 : i32
    return %arg2, %arg1 : i32, i32
  }
  func.func @transform_2(%arg0: i32, %arg1: i32, %arg2: i32) -> (i32, i32) {
    %c0_i32 = arith.constant 0 : i32
    %c0_i32_0 = arith.constant 0 : i32
    return %c0_i32, %arg1 : i32, i32
  }
  func.func @transform_3(%arg0: i32, %arg1: i32, %arg2: i32) -> (i32, i32) {
    %c0_i32 = arith.constant 0 : i32
    return %arg0, %arg1 : i32, i32
  }
}

module attributes {stable_mosaic.version = 11 : i64} {
  func.func @_linear_kernel(%arg0: i32, %arg1: i32, %arg2: i32, %arg3: memref<32x128xbf16, #tpu.memory_space<vmem>>, %arg4: memref<128x128xbf16, #tpu.memory_space<vmem>>, %arg5: memref<1x128xf32, #tpu.memory_space<vmem>>, %arg6: memref<32x128xf32, #tpu.memory_space<vmem>>, %arg7: memref<32x128xf32, #tpu.memory_space<vmem>>) attributes {dimension_semantics = [#tpu.dimension_semantics<parallel>, #tpu.dimension_semantics<parallel>, #tpu.dimension_semantics<arbitrary>], iteration_bounds = array<i64: 1, 1, 1>, scalar_prefetch = 0 : i64, scratch_operands = 1 : i64, tpu.core_type = #tpu.core_type<tc>, window_params = [{transform_indices = @transform_0, window_bounds = array<i64: 32, 128>}, {transform_indices = @transform_1, window_bounds = array<i64: 128, 128>}, {transform_indices = @transform_2, window_bounds = array<i64: 1, 128>}, {transform_indices = @transform_3, window_bounds = array<i64: 32, 128>}]} {
    %c0_i32 = arith.constant 0 : i32
    %0 = arith.cmpi eq, %arg2, %c0_i32 : i32
    %1 = arith.extui %0 : i1 to i32
    %c0_i32_0 = arith.constant 0 : i32
    %2 = arith.cmpi ne, %1, %c0_i32_0 : i32
    scf.if %2 {
      %cst_10 = arith.constant 0.000000e+00 : f32
      %12 = vector.broadcast %cst_10 : f32 to vector<32x128xf32>
      %c0_11 = arith.constant 0 : index
      %c0_12 = arith.constant 0 : index
      %13 = vector.load %arg7[%c0_11, %c0_12] : memref<32x128xf32, #tpu.memory_space<vmem>>, vector<32x128xf32>
      tpu.vector_store %arg7[%c0_11, %c0_12], %12 {strides = array<i32>} : memref<32x128xf32, #tpu.memory_space<vmem>>, vector<32x128xf32>,
    } else {
    }
    %c0 = arith.constant 0 : index
    %c0_1 = arith.constant 0 : index
    %3 = vector.load %arg7[%c0, %c0_1] : memref<32x128xf32, #tpu.memory_space<vmem>>, vector<32x128xf32>
    %c0_2 = arith.constant 0 : index
    %c0_3 = arith.constant 0 : index
    %4 = vector.load %arg3[%c0_2, %c0_3] : memref<32x128xbf16, #tpu.memory_space<vmem>>, vector<32x128xbf16>
    %c0_4 = arith.constant 0 : index
    %c0_5 = arith.constant 0 : index
    %5 = vector.load %arg4[%c0_4, %c0_5] : memref<128x128xbf16, #tpu.memory_space<vmem>>, vector<128x128xbf16>
    %cst = arith.constant dense<0.000000e+00> : vector<32x128xf32>
    %6 = tpu.matmul %4, %5, %cst {dimension_numbers = #tpu.dot_dimension_numbers<[1], [0], [0], [1], [0, 0, 1, 1], [], []>} : vector<32x128xbf16>, vector<128x128xbf16>, vector<32x128xf32> -> vector<32x128xf32>
    %7 = arith.addf %3, %6 : vector<32x128xf32>
    %c0_6 = arith.constant 0 : index
    %c0_7 = arith.constant 0 : index
    %8 = vector.load %arg7[%c0_6, %c0_7] : memref<32x128xf32, #tpu.memory_space<vmem>>, vector<32x128xf32>
    tpu.vector_store %arg7[%c0_6, %c0_7], %7 {strides = array<i32>} : memref<32x128xf32, #tpu.memory_space<vmem>>, vector<32x128xf32>,
    %c0_i32_8 = arith.constant 0 : i32
    %9 = arith.cmpi eq, %arg2, %c0_i32_8 : i32
    %10 = arith.extui %9 : i1 to i32
    %c0_i32_9 = arith.constant 0 : i32
    %11 = arith.cmpi ne, %10, %c0_i32_9 : i32
    scf.if %11 {
      %c0_10 = arith.constant 0 : index
      %c0_11 = arith.constant 0 : index
      %12 = vector.load %arg7[%c0_10, %c0_11] : memref<32x128xf32, #tpu.memory_space<vmem>>, vector<32x128xf32>
      %c0_12 = arith.constant 0 : index
      %c0_13 = arith.constant 0 : index
      %13 = vector.load %arg5[%c0_12, %c0_13] : memref<1x128xf32, #tpu.memory_space<vmem>>, vector<1x128xf32>
      %14 = vector.broadcast %13 : vector<1x128xf32> to vector<32x128xf32>
      %15 = arith.addf %12, %14 : vector<32x128xf32>
      %c0_14 = arith.constant 0 : index
      %c0_15 = arith.constant 0 : index
      %16 = vector.load %arg6[%c0_14, %c0_15] : memref<32x128xf32, #tpu.memory_space<vmem>>, vector<32x128xf32>
      tpu.vector_store %arg6[%c0_14, %c0_15], %15 {strides = array<i32>} : memref<32x128xf32, #tpu.memory_space<vmem>>, vector<32x128xf32>,
    } else {
    }
    return
  }
  func.func @transform_0(%arg0: i32, %arg1: i32, %arg2: i32) -> (i32, i32) {
    %c0_i32 = arith.constant 0 : i32
    return %arg0, %arg2 : i32, i32
  }
  func.func @transform_1(%arg0: i32, %arg1: i32, %arg2: i32) -> (i32, i32) {
    %c0_i32 = arith.constant 0 : i32
    return %arg2, %arg1 : i32, i32
  }
  func.func @transform_2(%arg0: i32, %arg1: i32, %arg2: i32) -> (i32, i32) {
    %c0_i32 = arith.constant 0 : i32
    %c0_i32_0 = arith.constant 0 : i32
    return %c0_i32, %arg1 : i32, i32
  }
  func.func @transform_3(%arg0: i32, %arg1: i32, %arg2: i32) -> (i32, i32) {
    %c0_i32 = arith.constant 0 : i32
    return %arg0, %arg1 : i32, i32
  }
}

</mosaic_0001>

<llo_original>
// kernel: transformer_chatbot_forward.26
$region0: #{transformer_chatbot_forward.26}
  #allocation0 [shape = 'u32[]', space=smem, size = 0x4, offset = 0x4, fixed_abs, tag = 'smem constant byte address 0x4 - core index']
  #allocation1 [shape = 'u32[144,128]{1,0:T(1,128)}', space=vmem, size = 0x12000, scoped, tag = 'internal scratch']
  %s0 = inlined_call_operand.vmem [shape: bf16[2,16,128], index: 0, kind: input, shape index: {}]
  %s1 = inlined_call_operand.vmem [shape: f32[1,16,128], index: 1, kind: input, shape index: {}]
  %s2 = inlined_call_operand.vmem [shape: bf16[2,16,128], index: 2, kind: output, shape index: {}]
  %s3 = sld [smem:[#allocation0]]
  $region41: #{transformer_chatbot_forward.26} parent=0
    _
  %s5 = ssub.s32 1, %s3
  %s6 = scalar_select 0, %s5, %s3
  loop: start=0, step=1, limit=4
  $region2: #{transformer_chatbot_forward.26} parent=0 // loop_pre_header
    _
  $region3: #{transformer_chatbot_forward.26} parent=0 // loop_header
    %s8 = sphi 0, %s12
    %p9 = scmp.ge.s32.totalorder %s8, 4
    %s18 = sphi 0, %s20
    %s21 = sphi 0, %s18
    %s22 = sphi 0, %s21
    %s38 = sphi 0, %s22
    %s42 = sphi 0, %s42
    %s44 = sphi 0, %s42
    %s45 = sphi 0, %s44
    %s59 = sphi 0, %s45
    %s65 = sphi 0, %s67
    %s68 = sphi 0, %s65
    %s69 = sphi 0, %s68
    %s85 = sphi 0, %s69
  $region4: #{transformer_chatbot_forward.26} parent=0 // loop_header_branch
    %11 = sbr.rel (%p9) target = $region8
  $region5: #{transformer_chatbot_forward.26} parent=0 // loop_body
    %s13 = ssub.s32 %s8, 1
    %s14 = ssub.s32 %s8, 2
    %s15 = sadd.s32 %s8, 1
    %s16 = ssub.s32 %s8, %s15
    %p17 = scmp.eq.s32.totalorder %s16, 0
    %s19 = sadd.s32 %s18, 1
    %s20 = scalar_select %p17, %s18, %s19
    %p23 = pneg %p17
    %p24 = scmp.eq.s32.totalorder %s8, 1
    %p25 = por %p23, %p24
    %p26 = scmp.ne.s32.totalorder %s18, %s21
    %p27 = scmp.eq.s32.totalorder %s8, 0
    %p28 = por %p26, %p27
    %p29 = scmp.ne.s32.totalorder %s18, %s21
    %p30 = scmp.eq.s32.totalorder %s13, 1
    %p31 = por %p29, %p30
    %p32 = scmp.ne.s32.totalorder %s21, %s22
    %p33 = scmp.eq.s32.totalorder %s13, 0
    %p34 = por %p32, %p33
    %p35 = scmp.ne.s32.totalorder %s21, %s22
    %p36 = scmp.eq.s32.totalorder %s14, 1
    %p37 = por %p35, %p36
    %p39 = scmp.ne.s32.totalorder %s22, %s38
    %p40 = scmp.eq.s32.totalorder %s14, 0
    %p41 = por %p39, %p40
    %s43 = sadd.s32 %s42, 1
    %p46 = scmp.eq.s32.totalorder %s8, 1
    %p47 = scmp.ne.s32.totalorder %s42, %s44
    %p48 = scmp.eq.s32.totalorder %s8, 0
    %p49 = por %p47, %p48
    %p50 = scmp.ne.s32.totalorder %s42, %s44
    %p51 = scmp.eq.s32.totalorder %s13, 1
    %p52 = por %p50, %p51
    %p53 = scmp.ne.s32.totalorder %s44, %s45
    %p54 = scmp.eq.s32.totalorder %s13, 0
    %p55 = por %p53, %p54
    %p56 = scmp.ne.s32.totalorder %s44, %s45
    %p57 = scmp.eq.s32.totalorder %s14, 1
    %p58 = por %p56, %p57
    %p60 = scmp.ne.s32.totalorder %s45, %s59
    %p61 = scmp.eq.s32.totalorder %s14, 0
    %p62 = por %p60, %p61
    %s63 = ssub.s32 %s8, %s15
    %p64 = scmp.eq.s32.totalorder %s63, 0
    %s66 = sadd.s32 %s65, 1
    %s67 = scalar_select %p64, %s65, %s66
    %p70 = pneg %p64
    %p71 = scmp.eq.s32.totalorder %s8, 1
    %p72 = por %p70, %p71
    %p73 = scmp.ne.s32.totalorder %s65, %s68
    %p74 = scmp.eq.s32.totalorder %s8, 0
    %p75 = por %p73, %p74
    %p76 = scmp.ne.s32.totalorder %s65, %s68
    %p77 = scmp.eq.s32.totalorder %s13, 1
    %p78 = por %p76, %p77
    %p79 = scmp.ne.s32.totalorder %s68, %s69
    %p80 = scmp.eq.s32.totalorder %s13, 0
    %p81 = por %p79, %p80
    %p82 = scmp.ne.s32.totalorder %s68, %s69
    %p83 = scmp.eq.s32.totalorder %s14, 1
    %p84 = por %p82, %p83
    %p86 = scmp.ne.s32.totalorder %s69, %s85
    %p87 = scmp.eq.s32.totalorder %s14, 0
    %p88 = por %p86, %p87
    %p89 = scmp.le.s32.totalorder 1, %s8
    %p90 = scmp.lt.s32.totalorder %s8, 3
    %p91 = pnand %p89, %p90
    %p92 = pneg %p91
    // Predicated region
    $region9: #{transformer_chatbot_forward.26} parent=5 // pred_check
      _
    $region10: #{transformer_chatbot_forward.26} parent=5 // pred_check_branch
      %94 = sbr.rel (%p91) target = $region12
    $region11: #{transformer_chatbot_forward.26} parent=5 // pred_region
      %s95 = ssub.s32 %s8, 1
      // Predicated region
      $region13: #{transformer_chatbot_forward.26} parent=11 // pred_check
        %p96 = pneg %p55
      $region14: #{transformer_chatbot_forward.26} parent=11 // pred_check_branch
        %98 = sbr.rel (%p96) target = $region16
      $region15: #{transformer_chatbot_forward.26} parent=11 // pred_region
        _
      $region16: #{transformer_chatbot_forward.26} parent=11 // pred_fallthru
        _
    $region12: #{transformer_chatbot_forward.26} parent=5 // pred_fallthru
      _
    %p99 = scmp.lt.s32.totalorder %s8, 2
    // Predicated region
    $region17: #{transformer_chatbot_forward.26} parent=5 // pred_check
      %p100 = pneg %p99
    $region18: #{transformer_chatbot_forward.26} parent=5 // pred_check_branch
      %102 = sbr.rel (%p100) target = $region20
    $region19: #{transformer_chatbot_forward.26} parent=5 // pred_region
      // Predicated region
      $region21: #{transformer_chatbot_forward.26} parent=19 // pred_check
        %p103 = pneg %p28
      $region22: #{transformer_chatbot_forward.26} parent=19 // pred_check_branch
        %105 = sbr.rel (%p103) target = $region24
      $region23: #{transformer_chatbot_forward.26} parent=19 // pred_region
        %p106 = scmp.lt.s32.totalorder %s8, 1
        %s107 = scalar_select %p106, %s8, 1
        %s108 = smul.addr %s107, 2
        %s109 = smul.addr %s108, 4
        %s110 = scalar_lea.vmem %s0, %s109
      $region24: #{transformer_chatbot_forward.26} parent=19 // pred_fallthru
        _
    $region20: #{transformer_chatbot_forward.26} parent=5 // pred_fallthru
      _
    %p111 = scmp.le.s32.totalorder 1, %s8
    %p112 = scmp.lt.s32.totalorder %s8, 3
    %p113 = pnand %p111, %p112
    %p114 = pneg %p113
    // Predicated region
    $region25: #{transformer_chatbot_forward.26} parent=5 // pred_check
      _
    $region26: #{transformer_chatbot_forward.26} parent=5 // pred_check_branch
      %116 = sbr.rel (%p113) target = $region28
    $region27: #{transformer_chatbot_forward.26} parent=5 // pred_region
      %s117 = ssub.s32 %s8, 1
      %p118 = scmp.lt.s32.totalorder %s13, 1
      %s119 = scalar_select %p118, %s13, 1
      %s120 = smul.addr %s119, 2
      %s121 = smul.addr %s120, 4
      %s122 = scalar_lea.vmem %s0, %s121
      %p123 = pneg %p34
      %p124 = pneg %p31
      %p125 = pneg %p55
      %p126 = pneg %p52
      %p127 = pneg %p81
      %p128 = pneg %p78
      %p129 = scmp.lt.s32.totalorder %s13, 1
      %s130 = scalar_select %p129, %s13, 1
      %s131 = smul.addr %s130, 2
      %s132 = smul.addr %s131, 4
      %s133 = scalar_lea.vmem %s2, %s132
      %p134 = scmp.lt.s32.totalorder %s13, 1
      %s135 = scalar_select %p134, %s13, 1
      %s136 = smul.addr %s135, 2
      %s137 = smul.addr %s136, 4
      %s138 = scalar_lea.vmem %s0, %s137
      %p139 = scmp.lt.s32.totalorder %s13, 1
      %s140 = scalar_select %p139, %s13, 1
      %s141 = smul.addr %s140, 2
      %s142 = smul.addr %s141, 4
      %s143 = scalar_lea.vmem %s2, %s142
      %v144 = vld [vmem:[%s138] sm:$0xf]
      %v145 = vld [vmem:[%s138 + $0x4] sm:$0xf]
      %v146 = vunpack.c.l.bf16 %v144
      %v147 = vunpack.c.l.bf16 %v145
      %v148 = vmul.f32 %v146, 11.313708
      %v149 = vmul.f32 %v147, 11.313708
      %v150 = vld [vmem:[%s1] sm:$0xff]
      %v151 = vld [vmem:[%s1 + $0x8] sm:$0xff]
      %v152 = vadd.f32 %v148, %v150
      %v153 = vadd.f32 %v149, %v151
      %v154 = vpack.c.bf16 %v153, %v152
      %v156 = vunpack.c.l.b16 %v154
      %v157 = vunpack.c.h.b16 %v154
      %v158 = vpack.c.b16 %v156, %v156
      %v159 = vpack.c.b16 %v157, %v157
      %162 = vst [vmem:[%s143] sm:$0xf] %v158
      %163 = vst [vmem:[%s143 + $0x4] sm:$0xf] %v159
      %p164 = scmp.lt.s32.totalorder %s13, 1
      %s165 = scalar_select %p164, %s13, 1
      %s166 = smul.addr %s165, 2
      %s167 = smul.addr %s166, 4
      %s168 = scalar_lea.vmem %s2, %s167
      // Predicated region
      $region29: #{transformer_chatbot_forward.26} parent=27 // pred_check
        %p169 = pneg %p78
      $region30: #{transformer_chatbot_forward.26} parent=27 // pred_check_branch
        %171 = sbr.rel (%p169) target = $region32
      $region31: #{transformer_chatbot_forward.26} parent=27 // pred_region
        _
      $region32: #{transformer_chatbot_forward.26} parent=27 // pred_fallthru
        _
    $region28: #{transformer_chatbot_forward.26} parent=5 // pred_fallthru
      _
    %p172 = scmp.le.s32.totalorder 2, %s8
    // Predicated region
    $region33: #{transformer_chatbot_forward.26} parent=5 // pred_check
      %p173 = pneg %p172
    $region34: #{transformer_chatbot_forward.26} parent=5 // pred_check_branch
      %175 = sbr.rel (%p173) target = $region36
    $region35: #{transformer_chatbot_forward.26} parent=5 // pred_region
      %s176 = ssub.s32 %s8, 2
      // Predicated region
      $region37: #{transformer_chatbot_forward.26} parent=35 // pred_check
        %p177 = pneg %p84
      $region38: #{transformer_chatbot_forward.26} parent=35 // pred_check_branch
        %179 = sbr.rel (%p177) target = $region40
      $region39: #{transformer_chatbot_forward.26} parent=35 // pred_region
        %p180 = scmp.lt.s32.totalorder %s14, 1
        %s181 = scalar_select %p180, %s14, 1
        %s182 = smul.addr %s181, 2
        %s183 = smul.addr %s182, 4
        %s184 = scalar_lea.vmem %s2, %s183
      $region40: #{transformer_chatbot_forward.26} parent=35 // pred_fallthru
        _
    $region36: #{transformer_chatbot_forward.26} parent=5 // pred_fallthru
      _
  $region6: #{transformer_chatbot_forward.26} parent=0 // loop_footer
    %s12 = sadd.s32 1, %s8
  $region7: #{transformer_chatbot_forward.26} parent=0 // loop_footer_branch
    %7 = sbr.rel target = $region3
  $region8: #{transformer_chatbot_forward.26} parent=0 // loop_exit
    _

// kernel: transformer_chatbot_forward.35
$region0: #{transformer_chatbot_forward.35}
  #allocation0 [shape = 'u32[]', space=smem, size = 0x4, offset = 0x4, fixed_abs, tag = 'smem constant byte address 0x4 - core index']
  #allocation1 [shape = 'u32[144,128]{1,0:T(1,128)}', space=vmem, size = 0x12000, scoped, tag = 'internal scratch']
  #allocation2 [shape = 'f32[32,384]{1,0:T(8,128)}', space=vmem, size = 0xc000, scoped, tag = 'scratch operand']
  %s0 = inlined_call_operand.vmem [shape: bf16[32,128], index: 0, kind: input, shape index: {}]
  %s1 = inlined_call_operand.vmem [shape: bf16[128,384], index: 1, kind: input, shape index: {}]
  %s2 = inlined_call_operand.vmem [shape: f32[1,384], index: 2, kind: input, shape index: {}]
  %s3 = inlined_call_operand.vmem [shape: bf16[32,384], index: 3, kind: output, shape index: {}]
  %s4 = sld [smem:[#allocation0]]
  $region30: #{transformer_chatbot_forward.35} parent=0
    _
  %s6 = ssub.s32 1, %s4
  %s7 = scalar_select 0, %s6, %s4
  // Predicated region
  $region2: #{transformer_chatbot_forward.35} parent=0 // pred_check
    _
  $region3: #{transformer_chatbot_forward.35} parent=0 // pred_check_branch
    %9 = sbr.rel (0) target = $region5
  $region4: #{transformer_chatbot_forward.35} parent=0 // pred_region
    _
  $region5: #{transformer_chatbot_forward.35} parent=0 // pred_fallthru
    _
  // Predicated region
  $region6: #{transformer_chatbot_forward.35} parent=0 // pred_check
    _
  $region7: #{transformer_chatbot_forward.35} parent=0 // pred_check_branch
    %11 = sbr.rel (0) target = $region9
  $region8: #{transformer_chatbot_forward.35} parent=0 // pred_region
    _
  $region9: #{transformer_chatbot_forward.35} parent=0 // pred_fallthru
    _
  // Predicated region
  $region10: #{transformer_chatbot_forward.35} parent=0 // pred_check
    _
  $region11: #{transformer_chatbot_forward.35} parent=0 // pred_check_branch
    %13 = sbr.rel (0) target = $region13
  $region12: #{transformer_chatbot_forward.35} parent=0 // pred_region
    _
  $region13: #{transformer_chatbot_forward.35} parent=0 // pred_fallthru
    _
  %p15 = scmp.eq.s32.totalorder 0, 0
  // Predicated region
  $region14: #{transformer_chatbot_forward.35} parent=0 // pred_check
    %p16 = pneg %p15
  $region15: #{transformer_chatbot_forward.35} parent=0 // pred_check_branch
    %18 = sbr.rel (%p16) target = $region17
  $region16: #{transformer_chatbot_forward.35} parent=0 // pred_region
    %19 = vst [vmem:[#allocation2] sm:$0xff] 0.0
    %20 = vst [vmem:[#allocation2 + $0x8] sm:$0xff] 0.0
    %21 = vst [vmem:[#allocation2 + $0x10] sm:$0xff] 0.0
    %22 = vst [vmem:[#allocation2 + $0x18] sm:$0xff] 0.0
    %23 = vst [vmem:[#allocation2 + $0x20] sm:$0xff] 0.0
    %24 = vst [vmem:[#allocation2 + $0x28] sm:$0xff] 0.0
    %25 = vst [vmem:[#allocation2 + $0x30] sm:$0xff] 0.0
    %26 = vst [vmem:[#allocation2 + $0x38] sm:$0xff] 0.0
    %27 = vst [vmem:[#allocation2 + $0x40] sm:$0xff] 0.0
    %28 = vst [vmem:[#allocation2 + $0x48] sm:$0xff] 0.0
    %29 = vst [vmem:[#allocation2 + $0x50] sm:$0xff] 0.0
    %30 = vst [vmem:[#allocation2 + $0x58] sm:$0xff] 0.0
  $region17: #{transformer_chatbot_forward.35} parent=0 // pred_fallthru
    _
  %v31 = vld [vmem:[#allocation2] sm:$0xff]
  %v32 = vld [vmem:[#allocation2 + $0x8] sm:$0xff]
  %v33 = vld [vmem:[#allocation2 + $0x10] sm:$0xff]
  %v34 = vld [vmem:[#allocation2 + $0x18] sm:$0xff]
  %v35 = vld [vmem:[#allocation2 + $0x20] sm:$0xff]
  %v36 = vld [vmem:[#allocation2 + $0x28] sm:$0xff]
  %v37 = vld [vmem:[#allocation2 + $0x30] sm:$0xff]
  %v38 = vld [vmem:[#allocation2 + $0x38] sm:$0xff]
  %v39 = vld [vmem:[#allocation2 + $0x40] sm:$0xff]
  %v40 = vld [vmem:[#allocation2 + $0x48] sm:$0xff]
  %v41 = vld [vmem:[#allocation2 + $0x50] sm:$0xff]
  %v42 = vld [vmem:[#allocation2 + $0x58] sm:$0xff]
  %v43 = vld [vmem:[%s0] sm:$0xf]
  %v44 = vld [vmem:[%s0 + $0x4] sm:$0xf]
  %v45 = vld [vmem:[%s0 + $0x8] sm:$0xf]
  %v46 = vld [vmem:[%s0 + $0xc] sm:$0xf]
  %v47 = vld [vmem:[%s1] sm:$0xff]
  %v48 = vld [vmem:[%s1 + $0x8] sm:$0xf]
  %v49 = vld [vmem:[%s1 + $0xc] sm:$0xff]
  %v50 = vld [vmem:[%s1 + $0x14] sm:$0xf]
  %v51 = vld [vmem:[%s1 + $0x18] sm:$0xff]
  %v52 = vld [vmem:[%s1 + $0x20] sm:$0xf]
  %v53 = vld [vmem:[%s1 + $0x24] sm:$0xff]
  %v54 = vld [vmem:[%s1 + $0x2c] sm:$0xf]
  %v55 = vld [vmem:[%s1 + $0x30] sm:$0xff]
  %v56 = vld [vmem:[%s1 + $0x38] sm:$0xf]
  %v57 = vld [vmem:[%s1 + $0x3c] sm:$0xff]
  %v58 = vld [vmem:[%s1 + $0x44] sm:$0xf]
  %v59 = vld [vmem:[%s1 + $0x48] sm:$0xff]
  %v60 = vld [vmem:[%s1 + $0x50] sm:$0xf]
  %v61 = vld [vmem:[%s1 + $0x54] sm:$0xff]
  %v62 = vld [vmem:[%s1 + $0x5c] sm:$0xf]
  %v63 = vld [vmem:[%s1 + $0x60] sm:$0xff]
  %v64 = vld [vmem:[%s1 + $0x68] sm:$0xf]
  %v65 = vld [vmem:[%s1 + $0x6c] sm:$0xff]
  %v66 = vld [vmem:[%s1 + $0x74] sm:$0xf]
  %v67 = vld [vmem:[%s1 + $0x78] sm:$0xff]
  %v68 = vld [vmem:[%s1 + $0x80] sm:$0xf]
  %v69 = vld [vmem:[%s1 + $0x84] sm:$0xff]
  %v70 = vld [vmem:[%s1 + $0x8c] sm:$0xf]
  %v71 = vld [vmem:[%s1 + $0x90] sm:$0xff]
  %v72 = vld [vmem:[%s1 + $0x98] sm:$0xf]
  %v73 = vld [vmem:[%s1 + $0x9c] sm:$0xff]
  %v74 = vld [vmem:[%s1 + $0xa4] sm:$0xf]
  %v75 = vld [vmem:[%s1 + $0xa8] sm:$0xff]
  %v76 = vld [vmem:[%s1 + $0xb0] sm:$0xf]
  %v77 = vld [vmem:[%s1 + $0xb4] sm:$0xff]
  %v78 = vld [vmem:[%s1 + $0xbc] sm:$0xf]
  %v83 = vunpack.c.l.b16 %v43
  %v84 = vunpack.c.l.b16 %v44
  %v85 = vunpack.c.l.b16 %v45
  %v86 = vunpack.c.l.b16 %v46
  %v87 = vpack.c.b16 %v84, %v83
  %v88 = vpack.c.b16 %v86, %v85
  %v123 = vunpack.c.l.b16 %v47
  %v124 = vunpack.c.h.b16 %v47
  %v125 = vunpack.c.l.b16 %v48
  %v126 = vunpack.c.l.b16 %v49
  %v127 = vunpack.c.h.b16 %v49
  %v128 = vunpack.c.l.b16 %v50
  %v129 = vunpack.c.l.b16 %v51
  %v130 = vunpack.c.h.b16 %v51
  %v131 = vunpack.c.l.b16 %v52
  %v132 = vunpack.c.l.b16 %v53
  %v133 = vunpack.c.h.b16 %v53
  %v134 = vunpack.c.l.b16 %v54
  %v135 = vunpack.c.l.b16 %v55
  %v136 = vunpack.c.h.b16 %v55
  %v137 = vunpack.c.l.b16 %v56
  %v138 = vunpack.c.l.b16 %v57
  %v139 = vunpack.c.h.b16 %v57
  %v140 = vunpack.c.l.b16 %v58
  %v141 = vunpack.c.l.b16 %v59
  %v142 = vunpack.c.h.b16 %v59
  %v143 = vunpack.c.l.b16 %v60
  %v144 = vunpack.c.l.b16 %v61
  %v145 = vunpack.c.h.b16 %v61
  %v146 = vunpack.c.l.b16 %v62
  %v147 = vunpack.c.l.b16 %v63
  %v148 = vunpack.c.h.b16 %v63
  %v149 = vunpack.c.l.b16 %v64
  %v150 = vunpack.c.l.b16 %v65
  %v151 = vunpack.c.h.b16 %v65
  %v152 = vunpack.c.l.b16 %v66
  %v153 = vunpack.c.l.b16 %v67
  %v154 = vunpack.c.h.b16 %v67
  %v155 = vunpack.c.l.b16 %v68
  %v156 = vunpack.c.l.b16 %v69
  %v157 = vunpack.c.h.b16 %v69
  %v158 = vunpack.c.l.b16 %v70
  %v159 = vunpack.c.l.b16 %v71
  %v160 = vunpack.c.h.b16 %v71
  %v161 = vunpack.c.l.b16 %v72
  %v162 = vunpack.c.l.b16 %v73
  %v163 = vunpack.c.h.b16 %v73
  %v164 = vunpack.c.l.b16 %v74
  %v165 = vunpack.c.l.b16 %v75
  %v166 = vunpack.c.h.b16 %v75
  %v167 = vunpack.c.l.b16 %v76
  %v168 = vunpack.c.l.b16 %v77
  %v169 = vunpack.c.h.b16 %v77
  %v170 = vunpack.c.l.b16 %v78
  %v171 = vpack.c.b16 %v126, %v123
  %v172 = vpack.c.b16 %v127, %v124
  %v173 = vpack.c.b16 %v128, %v125
  %v174 = vpack.c.b16 %v132, %v129
  %v175 = vpack.c.b16 %v133, %v130
  %v176 = vpack.c.b16 %v134, %v131
  %v177 = vpack.c.b16 %v138, %v135
  %v178 = vpack.c.b16 %v139, %v136
  %v179 = vpack.c.b16 %v140, %v137
  %v180 = vpack.c.b16 %v144, %v141
  %v181 = vpack.c.b16 %v145, %v142
  %v182 = vpack.c.b16 %v146, %v143
  %v183 = vpack.c.b16 %v150, %v147
  %v184 = vpack.c.b16 %v151, %v148
  %v185 = vpack.c.b16 %v152, %v149
  %v186 = vpack.c.b16 %v156, %v153
  %v187 = vpack.c.b16 %v157, %v154
  %v188 = vpack.c.b16 %v158, %v155
  %v189 = vpack.c.b16 %v162, %v159
  %v190 = vpack.c.b16 %v163, %v160
  %v191 = vpack.c.b16 %v164, %v161
  %v192 = vpack.c.b16 %v168, %v165
  %v193 = vpack.c.b16 %v169, %v166
  %v194 = vpack.c.b16 %v170, %v167
  %219 = vmatprep.subr.bf16.mxu0 %v172
  %220 = vmatpush1.bf16.msra.mxu0 %v171
  %221 = vmatprep.subr.bf16.mxu0 %v175
  %222 = vmatpush1.bf16.msra.mxu0 %v174
  %223 = vmatprep.subr.bf16.mxu0 %v178
  %224 = vmatpush1.bf16.msra.mxu0 %v177
  %225 = vmatprep.subr.bf16.mxu0 %v181
  %226 = vmatpush1.bf16.msra.mxu0 %v180
  %227 = vmatprep.subr.bf16.mxu0 %v184
  %228 = vmatpush1.bf16.msra.mxu0 %v183
  %229 = vmatprep.subr.bf16.mxu0 %v187
  %230 = vmatpush1.bf16.msra.mxu0 %v186
  %231 = vmatprep.subr.bf16.mxu0 %v190
  %232 = vmatpush1.bf16.msra.mxu0 %v189
  %233 = vmatprep.subr.bf16.mxu0 %v193
  %234 = vmatpush1.bf16.msra.mxu0 %v192
  %235 = vmatprep.subr.bf16.mxu0 0
  %236 = vmatpush1.bf16.msra.mxu0 0
  %237 = vmatprep.subr.bf16.mxu0 0
  %238 = vmatpush1.bf16.msra.mxu0 0
  %239 = vmatprep.subr.bf16.mxu0 0
  %240 = vmatpush1.bf16.msra.mxu0 0
  %241 = vmatprep.subr.bf16.mxu0 0
  %242 = vmatpush1.bf16.msra.mxu0 0
  %243 = vmatprep.subr.bf16.mxu0 0
  %244 = vmatpush1.bf16.msra.mxu0 0
  %245 = vmatprep.subr.bf16.mxu0 0
  %246 = vmatpush1.bf16.msra.mxu0 0
  %247 = vmatprep.subr.bf16.mxu0 0
  %248 = vmatpush1.bf16.msra.mxu0 0
  %249 = vmatprep.subr.bf16.mxu0 0
  %250 = vmatpush1.bf16.msra.mxu0 0
  %251 = vmatprep.mubr.bf16.mxu0 0
  %252 = vmatmul.mubr.bf16.gmra.mrb[0].mxu0 %v87
  %v253 = vpop.f32.mrb[0].mxu0
  %v254 = vadd.f32 0.0, %v253
  %v255 = vpop.f32.mrb[0].mxu0
  %v256 = vadd.f32 0.0, %v255
  %v257 = vpop.f32.mrb[0].mxu0
  %v258 = vadd.f32 0.0, %v257
  %v259 = vpop.f32.mrb[0].mxu0
  %v260 = vadd.f32 0.0, %v259
  %261 = vmatprep.mubr.bf16.mxu0 0
  %262 = vmatmul.mubr.bf16.gmra.mrb[0].mxu0 %v88
  %v263 = vpop.f32.mrb[0].mxu0
  %v264 = vadd.f32 0.0, %v263
  %v265 = vpop.f32.mrb[0].mxu0
  %v266 = vadd.f32 0.0, %v265
  %v267 = vpop.f32.mrb[0].mxu0
  %v268 = vadd.f32 0.0, %v267
  %v269 = vpop.f32.mrb[0].mxu0
  %v270 = vadd.f32 0.0, %v269
  %271 = vdwg.mxu0
  %272 = vmatprep.subr.bf16.mxu0 0
  %273 = vmatpush1.bf16.msra.mxu0 %v173
  %274 = vmatprep.subr.bf16.mxu0 0
  %275 = vmatpush1.bf16.msra.mxu0 %v176
  %276 = vmatprep.subr.bf16.mxu0 0
  %277 = vmatpush1.bf16.msra.mxu0 %v179
  %278 = vmatprep.subr.bf16.mxu0 0
  %279 = vmatpush1.bf16.msra.mxu0 %v182
  %280 = vmatprep.subr.bf16.mxu0 0
  %281 = vmatpush1.bf16.msra.mxu0 %v185
  %282 = vmatprep.subr.bf16.mxu0 0
  %283 = vmatpush1.bf16.msra.mxu0 %v188
  %284 = vmatprep.subr.bf16.mxu0 0
  %285 = vmatpush1.bf16.msra.mxu0 %v191
  %286 = vmatprep.subr.bf16.mxu0 0
  %287 = vmatpush1.bf16.msra.mxu0 %v194
  %288 = vmatprep.subr.bf16.mxu0 0
  %289 = vmatpush1.bf16.msra.mxu0 0
  %290 = vmatprep.subr.bf16.mxu0 0
  %291 = vmatpush1.bf16.msra.mxu0 0
  %292 = vmatprep.subr.bf16.mxu0 0
  %293 = vmatpush1.bf16.msra.mxu0 0
  %294 = vmatprep.subr.bf16.mxu0 0
  %295 = vmatpush1.bf16.msra.mxu0 0
  %296 = vmatprep.subr.bf16.mxu0 0
  %297 = vmatpush1.bf16.msra.mxu0 0
  %298 = vmatprep.subr.bf16.mxu0 0
  %299 = vmatpush1.bf16.msra.mxu0 0
  %300 = vmatprep.subr.bf16.mxu0 0
  %301 = vmatpush1.bf16.msra.mxu0 0
  %302 = vmatprep.subr.bf16.mxu0 0
  %303 = vmatpush1.bf16.msra.mxu0 0
  %304 = vmatprep.mubr.bf16.mxu0 0
  %305 = vmatmul.mubr.bf16.gmra.mrb[0].mxu0 %v87
  %v306 = vpop.f32.mrb[0].mxu0
  %v307 = vadd.f32 0.0, %v306
  %v308 = vpop.f32.mrb[0].mxu0
  %v309 = vpop.f32.mrb[0].mxu0
  %v310 = vadd.f32 0.0, %v309
  %v311 = vpop.f32.mrb[0].mxu0
  %312 = vmatprep.mubr.bf16.mxu0 0
  %313 = vmatmul.mubr.bf16.gmra.mrb[0].mxu0 %v88
  %v314 = vpop.f32.mrb[0].mxu0
  %v315 = vadd.f32 0.0, %v314
  %v316 = vpop.f32.mrb[0].mxu0
  %v317 = vpop.f32.mrb[0].mxu0
  %v318 = vadd.f32 0.0, %v317
  %v319 = vpop.f32.mrb[0].mxu0
  %320 = vdwg.mxu0
  %v321 = vadd.f32 %v31, %v254
  %v322 = vadd.f32 %v32, %v256
  %v323 = vadd.f32 %v33, %v307
  %v324 = vadd.f32 %v34, %v258
  %v325 = vadd.f32 %v35, %v260
  %v326 = vadd.f32 %v36, %v310
  %v327 = vadd.f32 %v37, %v264
  %v328 = vadd.f32 %v38, %v266
  %v329 = vadd.f32 %v39, %v315
  %v330 = vadd.f32 %v40, %v268
  %v331 = vadd.f32 %v41, %v270
  %v332 = vadd.f32 %v42, %v318
  %333 = vst [vmem:[#allocation2] sm:$0xff] %v321
  %334 = vst [vmem:[#allocation2 + $0x8] sm:$0xff] %v322
  %335 = vst [vmem:[#allocation2 + $0x10] sm:$0xff] %v323
  %336 = vst [vmem:[#allocation2 + $0x18] sm:$0xff] %v324
  %337 = vst [vmem:[#allocation2 + $0x20] sm:$0xff] %v325
  %338 = vst [vmem:[#allocation2 + $0x28] sm:$0xff] %v326
  %339 = vst [vmem:[#allocation2 + $0x30] sm:$0xff] %v327
  %340 = vst [vmem:[#allocation2 + $0x38] sm:$0xff] %v328
  %341 = vst [vmem:[#allocation2 + $0x40] sm:$0xff] %v329
  %342 = vst [vmem:[#allocation2 + $0x48] sm:$0xff] %v330
  %343 = vst [vmem:[#allocation2 + $0x50] sm:$0xff] %v331
  %344 = vst [vmem:[#allocation2 + $0x58] sm:$0xff] %v332
  // Predicated region
  $region18: #{transformer_chatbot_forward.35} parent=0 // pred_check
    %p345 = pneg %p15
  $region19: #{transformer_chatbot_forward.35} parent=0 // pred_check_branch
    %347 = sbr.rel (%p345) target = $region21
  $region20: #{transformer_chatbot_forward.35} parent=0 // pred_region
    %v348 = vld [vmem:[#allocation2] sm:$0xff]
    %v349 = vld [vmem:[#allocation2 + $0x8] sm:$0xff]
    %v350 = vld [vmem:[#allocation2 + $0x10] sm:$0xff]
    %v351 = vld [vmem:[#allocation2 + $0x18] sm:$0xff]
    %v352 = vld [vmem:[#allocation2 + $0x20] sm:$0xff]
    %v353 = vld [vmem:[#allocation2 + $0x28] sm:$0xff]
    %v354 = vld [vmem:[#allocation2 + $0x30] sm:$0xff]
    %v355 = vld [vmem:[#allocation2 + $0x38] sm:$0xff]
    %v356 = vld [vmem:[#allocation2 + $0x40] sm:$0xff]
    %v357 = vld [vmem:[#allocation2 + $0x48] sm:$0xff]
    %v358 = vld [vmem:[#allocation2 + $0x50] sm:$0xff]
    %v359 = vld [vmem:[#allocation2 + $0x58] sm:$0xff]
    %v360 = vld [vmem:[%s2] sm:$0x7]
    %v362 = vlaneseq
    %v363 = vshrl.u32 %v362, 7
    %v364 = vsub.s32 0, %v363
    %v365 = vrot.slane %v360, %v364
    %v366 = vlaneseq
    %v367 = vshrl.u32 %v366, 7
    %v368 = vsub.s32 1, %v367
    %v369 = vrot.slane %v360, %v368
    %v370 = vlaneseq
    %v371 = vshrl.u32 %v370, 7
    %v372 = vsub.s32 2, %v371
    %v373 = vrot.slane %v360, %v372
    %v377 = vadd.f32 %v348, %v365
    %v378 = vadd.f32 %v349, %v369
    %v379 = vadd.f32 %v350, %v373
    %v380 = vadd.f32 %v351, %v365
    %v381 = vadd.f32 %v352, %v369
    %v382 = vadd.f32 %v353, %v373
    %v383 = vadd.f32 %v354, %v365
    %v384 = vadd.f32 %v355, %v369
    %v385 = vadd.f32 %v356, %v373
    %v386 = vadd.f32 %v357, %v365
    %v387 = vadd.f32 %v358, %v369
    %v388 = vadd.f32 %v359, %v373
    %v389 = vpack.c.bf16 %v380, %v377
    %v390 = vpack.c.bf16 %v381, %v378
    %v391 = vpack.c.bf16 %v382, %v379
    %v392 = vpack.c.bf16 %v386, %v383
    %v393 = vpack.c.bf16 %v387, %v384
    %v394 = vpack.c.bf16 %v388, %v385
    %v401 = vunpack.c.l.b16 %v389
    %v402 = vunpack.c.l.b16 %v390
    %v403 = vunpack.c.l.b16 %v391
    %v404 = vunpack.c.h.b16 %v389
    %v405 = vunpack.c.h.b16 %v390
    %v406 = vunpack.c.h.b16 %v391
    %v407 = vunpack.c.l.b16 %v392
    %v408 = vunpack.c.l.b16 %v393
    %v409 = vunpack.c.l.b16 %v394
    %v410 = vunpack.c.h.b16 %v392
    %v411 = vunpack.c.h.b16 %v393
    %v412 = vunpack.c.h.b16 %v394
    %v413 = vpack.c.b16 %v402, %v401
    %v414 = vpack.c.b16 %v403, %v403
    %v415 = vpack.c.b16 %v405, %v404
    %v416 = vpack.c.b16 %v406, %v406
    %v417 = vpack.c.b16 %v408, %v407
    %v418 = vpack.c.b16 %v409, %v409
    %v419 = vpack.c.b16 %v411, %v410
    %v420 = vpack.c.b16 %v412, %v412
    %429 = vst [vmem:[%s3] sm:$0xff] %v413
    %430 = vst [vmem:[%s3 + $0x8] sm:$0xf] %v414
    %431 = vst [vmem:[%s3 + $0xc] sm:$0xff] %v415
    %432 = vst [vmem:[%s3 + $0x14] sm:$0xf] %v416
    %433 = vst [vmem:[%s3 + $0x18] sm:$0xff] %v417
    %434 = vst [vmem:[%s3 + $0x20] sm:$0xf] %v418
    %435 = vst [vmem:[%s3 + $0x24] sm:$0xff] %v419
    %436 = vst [vmem:[%s3 + $0x2c] sm:$0xf] %v420
  $region21: #{transformer_chatbot_forward.35} parent=0 // pred_fallthru
    _
  // Predicated region
  $region22: #{transformer_chatbot_forward.35} parent=0 // pred_check
    _
  $region23: #{transformer_chatbot_forward.35} parent=0 // pred_check_branch
    %438 = sbr.rel (0) target = $region25
  $region24: #{transformer_chatbot_forward.35} parent=0 // pred_region
    _
  $region25: #{transformer_chatbot_forward.35} parent=0 // pred_fallthru
    _
  // Predicated region
  $region26: #{transformer_chatbot_forward.35} parent=0 // pred_check
    _
  $region27: #{transformer_chatbot_forward.35} parent=0 // pred_check_branch
    %440 = sbr.rel (0) target = $region29
  $region28: #{transformer_chatbot_forward.35} parent=0 // pred_region
    _
  $region29: #{transformer_chatbot_forward.35} parent=0 // pred_fallthru
    _

// kernel: transformer_chatbot_forward.37
$region0: #{transformer_chatbot_forward.37}
  #allocation0 [shape = 'u32[]', space=smem, size = 0x4, offset = 0x4, fixed_abs, tag = 'smem constant byte address 0x4 - core index']
  #allocation1 [shape = 'u32[144,128]{1,0:T(1,128)}', space=vmem, size = 0x12000, scoped, tag = 'internal scratch']
  #allocation2 [shape = 'f32[32,128]{1,0:T(8,128)}', space=vmem, size = 0x4000, scoped, tag = 'scratch operand']
  %s0 = inlined_call_operand.vmem [shape: bf16[32,128], index: 0, kind: input, shape index: {}]
  %s1 = inlined_call_operand.vmem [shape: bf16[128,128], index: 1, kind: input, shape index: {}]
  %s2 = inlined_call_operand.vmem [shape: f32[1,128], index: 2, kind: input, shape index: {}]
  %s3 = inlined_call_operand.vmem [shape: bf16[32,128], index: 3, kind: output, shape index: {}]
  %s4 = sld [smem:[#allocation0]]
  $region30: #{transformer_chatbot_forward.37} parent=0
    _
  %s6 = ssub.s32 1, %s4
  %s7 = scalar_select 0, %s6, %s4
  // Predicated region
  $region2: #{transformer_chatbot_forward.37} parent=0 // pred_check
    _
  $region3: #{transformer_chatbot_forward.37} parent=0 // pred_check_branch
    %9 = sbr.rel (0) target = $region5
  $region4: #{transformer_chatbot_forward.37} parent=0 // pred_region
    _
  $region5: #{transformer_chatbot_forward.37} parent=0 // pred_fallthru
    _
  // Predicated region
  $region6: #{transformer_chatbot_forward.37} parent=0 // pred_check
    _
  $region7: #{transformer_chatbot_forward.37} parent=0 // pred_check_branch
    %11 = sbr.rel (0) target = $region9
  $region8: #{transformer_chatbot_forward.37} parent=0 // pred_region
    _
  $region9: #{transformer_chatbot_forward.37} parent=0 // pred_fallthru
    _
  // Predicated region
  $region10: #{transformer_chatbot_forward.37} parent=0 // pred_check
    _
  $region11: #{transformer_chatbot_forward.37} parent=0 // pred_check_branch
    %13 = sbr.rel (0) target = $region13
  $region12: #{transformer_chatbot_forward.37} parent=0 // pred_region
    _
  $region13: #{transformer_chatbot_forward.37} parent=0 // pred_fallthru
    _
  %p15 = scmp.eq.s32.totalorder 0, 0
  // Predicated region
  $region14: #{transformer_chatbot_forward.37} parent=0 // pred_check
    %p16 = pneg %p15
  $region15: #{transformer_chatbot_forward.37} parent=0 // pred_check_branch
    %18 = sbr.rel (%p16) target = $region17
  $region16: #{transformer_chatbot_forward.37} parent=0 // pred_region
    %19 = vst [vmem:[#allocation2] sm:$0xff] 0.0
    %20 = vst [vmem:[#allocation2 + $0x8] sm:$0xff] 0.0
    %21 = vst [vmem:[#allocation2 + $0x10] sm:$0xff] 0.0
    %22 = vst [vmem:[#allocation2 + $0x18] sm:$0xff] 0.0
  $region17: #{transformer_chatbot_forward.37} parent=0 // pred_fallthru
    _
  %v23 = vld [vmem:[#allocation2] sm:$0xff]
  %v24 = vld [vmem:[#allocation2 + $0x8] sm:$0xff]
  %v25 = vld [vmem:[#allocation2 + $0x10] sm:$0xff]
  %v26 = vld [vmem:[#allocation2 + $0x18] sm:$0xff]
  %v27 = vld [vmem:[%s0] sm:$0xf]
  %v28 = vld [vmem:[%s0 + $0x4] sm:$0xf]
  %v29 = vld [vmem:[%s0 + $0x8] sm:$0xf]
  %v30 = vld [vmem:[%s0 + $0xc] sm:$0xf]
  %v31 = vld [vmem:[%s1] sm:$0xf]
  %v32 = vld [vmem:[%s1 + $0x4] sm:$0xf]
  %v33 = vld [vmem:[%s1 + $0x8] sm:$0xf]
  %v34 = vld [vmem:[%s1 + $0xc] sm:$0xf]
  %v35 = vld [vmem:[%s1 + $0x10] sm:$0xf]
  %v36 = vld [vmem:[%s1 + $0x14] sm:$0xf]
  %v37 = vld [vmem:[%s1 + $0x18] sm:$0xf]
  %v38 = vld [vmem:[%s1 + $0x1c] sm:$0xf]
  %v39 = vld [vmem:[%s1 + $0x20] sm:$0xf]
  %v40 = vld [vmem:[%s1 + $0x24] sm:$0xf]
  %v41 = vld [vmem:[%s1 + $0x28] sm:$0xf]
  %v42 = vld [vmem:[%s1 + $0x2c] sm:$0xf]
  %v43 = vld [vmem:[%s1 + $0x30] sm:$0xf]
  %v44 = vld [vmem:[%s1 + $0x34] sm:$0xf]
  %v45 = vld [vmem:[%s1 + $0x38] sm:$0xf]
  %v46 = vld [vmem:[%s1 + $0x3c] sm:$0xf]
  %v51 = vunpack.c.l.b16 %v27
  %v52 = vunpack.c.l.b16 %v28
  %v53 = vunpack.c.l.b16 %v29
  %v54 = vunpack.c.l.b16 %v30
  %v55 = vpack.c.b16 %v52, %v51
  %v56 = vpack.c.b16 %v54, %v53
  %v75 = vunpack.c.l.b16 %v31
  %v76 = vunpack.c.l.b16 %v32
  %v77 = vunpack.c.l.b16 %v33
  %v78 = vunpack.c.l.b16 %v34
  %v79 = vunpack.c.l.b16 %v35
  %v80 = vunpack.c.l.b16 %v36
  %v81 = vunpack.c.l.b16 %v37
  %v82 = vunpack.c.l.b16 %v38
  %v83 = vunpack.c.l.b16 %v39
  %v84 = vunpack.c.l.b16 %v40
  %v85 = vunpack.c.l.b16 %v41
  %v86 = vunpack.c.l.b16 %v42
  %v87 = vunpack.c.l.b16 %v43
  %v88 = vunpack.c.l.b16 %v44
  %v89 = vunpack.c.l.b16 %v45
  %v90 = vunpack.c.l.b16 %v46
  %v91 = vpack.c.b16 %v76, %v75
  %v92 = vpack.c.b16 %v78, %v77
  %v93 = vpack.c.b16 %v80, %v79
  %v94 = vpack.c.b16 %v82, %v81
  %v95 = vpack.c.b16 %v84, %v83
  %v96 = vpack.c.b16 %v86, %v85
  %v97 = vpack.c.b16 %v88, %v87
  %v98 = vpack.c.b16 %v90, %v89
  %107 = vmatprep.subr.bf16.mxu0 0
  %108 = vmatpush1.bf16.msra.mxu0 %v91
  %109 = vmatprep.subr.bf16.mxu0 0
  %110 = vmatpush1.bf16.msra.mxu0 %v92
  %111 = vmatprep.subr.bf16.mxu0 0
  %112 = vmatpush1.bf16.msra.mxu0 %v93
  %113 = vmatprep.subr.bf16.mxu0 0
  %114 = vmatpush1.bf16.msra.mxu0 %v94
  %115 = vmatprep.subr.bf16.mxu0 0
  %116 = vmatpush1.bf16.msra.mxu0 %v95
  %117 = vmatprep.subr.bf16.mxu0 0
  %118 = vmatpush1.bf16.msra.mxu0 %v96
  %119 = vmatprep.subr.bf16.mxu0 0
  %120 = vmatpush1.bf16.msra.mxu0 %v97
  %121 = vmatprep.subr.bf16.mxu0 0
  %122 = vmatpush1.bf16.msra.mxu0 %v98
  %123 = vmatprep.subr.bf16.mxu0 0
  %124 = vmatpush1.bf16.msra.mxu0 0
  %125 = vmatprep.subr.bf16.mxu0 0
  %126 = vmatpush1.bf16.msra.mxu0 0
  %127 = vmatprep.subr.bf16.mxu0 0
  %128 = vmatpush1.bf16.msra.mxu0 0
  %129 = vmatprep.subr.bf16.mxu0 0
  %130 = vmatpush1.bf16.msra.mxu0 0
  %131 = vmatprep.subr.bf16.mxu0 0
  %132 = vmatpush1.bf16.msra.mxu0 0
  %133 = vmatprep.subr.bf16.mxu0 0
  %134 = vmatpush1.bf16.msra.mxu0 0
  %135 = vmatprep.subr.bf16.mxu0 0
  %136 = vmatpush1.bf16.msra.mxu0 0
  %137 = vmatprep.subr.bf16.mxu0 0
  %138 = vmatpush1.bf16.msra.mxu0 0
  %139 = vmatprep.mubr.bf16.mxu0 0
  %140 = vmatmul.mubr.bf16.gmra.mrb[0].mxu0 %v55
  %v141 = vpop.f32.mrb[0].mxu0
  %v142 = vadd.f32 0.0, %v141
  %v143 = vpop.f32.mrb[0].mxu0
  %v144 = vpop.f32.mrb[0].mxu0
  %v145 = vadd.f32 0.0, %v144
  %v146 = vpop.f32.mrb[0].mxu0
  %147 = vmatprep.mubr.bf16.mxu0 0
  %148 = vmatmul.mubr.bf16.gmra.mrb[0].mxu0 %v56
  %v149 = vpop.f32.mrb[0].mxu0
  %v150 = vadd.f32 0.0, %v149
  %v151 = vpop.f32.mrb[0].mxu0
  %v152 = vpop.f32.mrb[0].mxu0
  %v153 = vadd.f32 0.0, %v152
  %v154 = vpop.f32.mrb[0].mxu0
  %155 = vdwg.mxu0
  %v156 = vadd.f32 %v23, %v142
  %v157 = vadd.f32 %v24, %v145
  %v158 = vadd.f32 %v25, %v150
  %v159 = vadd.f32 %v26, %v153
  %160 = vst [vmem:[#allocation2] sm:$0xff] %v156
  %161 = vst [vmem:[#allocation2 + $0x8] sm:$0xff] %v157
  %162 = vst [vmem:[#allocation2 + $0x10] sm:$0xff] %v158
  %163 = vst [vmem:[#allocation2 + $0x18] sm:$0xff] %v159
  // Predicated region
  $region18: #{transformer_chatbot_forward.37} parent=0 // pred_check
    %p164 = pneg %p15
  $region19: #{transformer_chatbot_forward.37} parent=0 // pred_check_branch
    %166 = sbr.rel (%p164) target = $region21
  $region20: #{transformer_chatbot_forward.37} parent=0 // pred_region
    %v167 = vld [vmem:[#allocation2] sm:$0xff]
    %v168 = vld [vmem:[#allocation2 + $0x8] sm:$0xff]
    %v169 = vld [vmem:[#allocation2 + $0x10] sm:$0xff]
    %v170 = vld [vmem:[#allocation2 + $0x18] sm:$0xff]
    %v171 = vld [vmem:[%s2] sm:$0x1]
    %v173 = vlaneseq
    %v174 = vshrl.u32 %v173, 7
    %v175 = vsub.s32 0, %v174
    %v176 = vrot.slane %v171, %v175
    %v178 = vadd.f32 %v167, %v176
    %v179 = vadd.f32 %v168, %v176
    %v180 = vadd.f32 %v169, %v176
    %v181 = vadd.f32 %v170, %v176
    %v182 = vpack.c.bf16 %v179, %v178
    %v183 = vpack.c.bf16 %v181, %v180
    %v186 = vunpack.c.l.b16 %v182
    %v187 = vunpack.c.h.b16 %v182
    %v188 = vunpack.c.l.b16 %v183
    %v189 = vunpack.c.h.b16 %v183
    %v190 = vpack.c.b16 %v186, %v186
    %v191 = vpack.c.b16 %v187, %v187
    %v192 = vpack.c.b16 %v188, %v188
    %v193 = vpack.c.b16 %v189, %v189
    %198 = vst [vmem:[%s3] sm:$0xf] %v190
    %199 = vst [vmem:[%s3 + $0x4] sm:$0xf] %v191
    %200 = vst [vmem:[%s3 + $0x8] sm:$0xf] %v192
    %201 = vst [vmem:[%s3 + $0xc] sm:$0xf] %v193
  $region21: #{transformer_chatbot_forward.37} parent=0 // pred_fallthru
    _
  // Predicated region
  $region22: #{transformer_chatbot_forward.37} parent=0 // pred_check
    _
  $region23: #{transformer_chatbot_forward.37} parent=0 // pred_check_branch
    %203 = sbr.rel (0) target = $region25
  $region24: #{transformer_chatbot_forward.37} parent=0 // pred_region
    _
  $region25: #{transformer_chatbot_forward.37} parent=0 // pred_fallthru
    _
  // Predicated region
  $region26: #{transformer_chatbot_forward.37} parent=0 // pred_check
    _
  $region27: #{transformer_chatbot_forward.37} parent=0 // pred_check_branch
    %205 = sbr.rel (0) target = $region29
  $region28: #{transformer_chatbot_forward.37} parent=0 // pred_region
    _
  $region29: #{transformer_chatbot_forward.37} parent=0 // pred_fallthru
    _

// kernel: transformer_chatbot_forward.29
$region0: #{transformer_chatbot_forward.29}
  #allocation0 [shape = 'u32[]', space=smem, size = 0x4, offset = 0x4, fixed_abs, tag = 'smem constant byte address 0x4 - core index']
  #allocation1 [shape = 'u32[144,128]{1,0:T(1,128)}', space=vmem, size = 0x12000, scoped, tag = 'internal scratch']
  #allocation2 [shape = 'f32[32,256]{1,0:T(8,128)}', space=vmem, size = 0x8000, scoped, tag = 'scratch operand']
  %s0 = inlined_call_operand.vmem [shape: bf16[32,128], index: 0, kind: input, shape index: {}]
  %s1 = inlined_call_operand.vmem [shape: bf16[128,256], index: 1, kind: input, shape index: {}]
  %s2 = inlined_call_operand.vmem [shape: f32[1,256], index: 2, kind: input, shape index: {}]
  %s3 = inlined_call_operand.vmem [shape: bf16[32,256], index: 3, kind: output, shape index: {}]
  %s4 = sld [smem:[#allocation0]]
  $region30: #{transformer_chatbot_forward.29} parent=0
    _
  %s6 = ssub.s32 1, %s4
  %s7 = scalar_select 0, %s6, %s4
  // Predicated region
  $region2: #{transformer_chatbot_forward.29} parent=0 // pred_check
    _
  $region3: #{transformer_chatbot_forward.29} parent=0 // pred_check_branch
    %9 = sbr.rel (0) target = $region5
  $region4: #{transformer_chatbot_forward.29} parent=0 // pred_region
    _
  $region5: #{transformer_chatbot_forward.29} parent=0 // pred_fallthru
    _
  // Predicated region
  $region6: #{transformer_chatbot_forward.29} parent=0 // pred_check
    _
  $region7: #{transformer_chatbot_forward.29} parent=0 // pred_check_branch
    %11 = sbr.rel (0) target = $region9
  $region8: #{transformer_chatbot_forward.29} parent=0 // pred_region
    _
  $region9: #{transformer_chatbot_forward.29} parent=0 // pred_fallthru
    _
  // Predicated region
  $region10: #{transformer_chatbot_forward.29} parent=0 // pred_check
    _
  $region11: #{transformer_chatbot_forward.29} parent=0 // pred_check_branch
    %13 = sbr.rel (0) target = $region13
  $region12: #{transformer_chatbot_forward.29} parent=0 // pred_region
    _
  $region13: #{transformer_chatbot_forward.29} parent=0 // pred_fallthru
    _
  %p15 = scmp.eq.s32.totalorder 0, 0
  // Predicated region
  $region14: #{transformer_chatbot_forward.29} parent=0 // pred_check
    %p16 = pneg %p15
  $region15: #{transformer_chatbot_forward.29} parent=0 // pred_check_branch
    %18 = sbr.rel (%p16) target = $region17
  $region16: #{transformer_chatbot_forward.29} parent=0 // pred_region
    %19 = vst [vmem:[#allocation2] sm:$0xff] 0.0
    %20 = vst [vmem:[#allocation2 + $0x8] sm:$0xff] 0.0
    %21 = vst [vmem:[#allocation2 + $0x10] sm:$0xff] 0.0
    %22 = vst [vmem:[#allocation2 + $0x18] sm:$0xff] 0.0
    %23 = vst [vmem:[#allocation2 + $0x20] sm:$0xff] 0.0
    %24 = vst [vmem:[#allocation2 + $0x28] sm:$0xff] 0.0
    %25 = vst [vmem:[#allocation2 + $0x30] sm:$0xff] 0.0
    %26 = vst [vmem:[#allocation2 + $0x38] sm:$0xff] 0.0
  $region17: #{transformer_chatbot_forward.29} parent=0 // pred_fallthru
    _
  %v27 = vld [vmem:[#allocation2] sm:$0xff]
  %v28 = vld [vmem:[#allocation2 + $0x8] sm:$0xff]
  %v29 = vld [vmem:[#allocation2 + $0x10] sm:$0xff]
  %v30 = vld [vmem:[#allocation2 + $0x18] sm:$0xff]
  %v31 = vld [vmem:[#allocation2 + $0x20] sm:$0xff]
  %v32 = vld [vmem:[#allocation2 + $0x28] sm:$0xff]
  %v33 = vld [vmem:[#allocation2 + $0x30] sm:$0xff]
  %v34 = vld [vmem:[#allocation2 + $0x38] sm:$0xff]
  %v35 = vld [vmem:[%s0] sm:$0xf]
  %v36 = vld [vmem:[%s0 + $0x4] sm:$0xf]
  %v37 = vld [vmem:[%s0 + $0x8] sm:$0xf]
  %v38 = vld [vmem:[%s0 + $0xc] sm:$0xf]
  %v39 = vld [vmem:[%s1] sm:$0xff]
  %v40 = vld [vmem:[%s1 + $0x8] sm:$0xff]
  %v41 = vld [vmem:[%s1 + $0x10] sm:$0xff]
  %v42 = vld [vmem:[%s1 + $0x18] sm:$0xff]
  %v43 = vld [vmem:[%s1 + $0x20] sm:$0xff]
  %v44 = vld [vmem:[%s1 + $0x28] sm:$0xff]
  %v45 = vld [vmem:[%s1 + $0x30] sm:$0xff]
  %v46 = vld [vmem:[%s1 + $0x38] sm:$0xff]
  %v47 = vld [vmem:[%s1 + $0x40] sm:$0xff]
  %v48 = vld [vmem:[%s1 + $0x48] sm:$0xff]
  %v49 = vld [vmem:[%s1 + $0x50] sm:$0xff]
  %v50 = vld [vmem:[%s1 + $0x58] sm:$0xff]
  %v51 = vld [vmem:[%s1 + $0x60] sm:$0xff]
  %v52 = vld [vmem:[%s1 + $0x68] sm:$0xff]
  %v53 = vld [vmem:[%s1 + $0x70] sm:$0xff]
  %v54 = vld [vmem:[%s1 + $0x78] sm:$0xff]
  %v59 = vunpack.c.l.b16 %v35
  %v60 = vunpack.c.l.b16 %v36
  %v61 = vunpack.c.l.b16 %v37
  %v62 = vunpack.c.l.b16 %v38
  %v63 = vpack.c.b16 %v60, %v59
  %v64 = vpack.c.b16 %v62, %v61
  %v83 = vunpack.c.l.b16 %v39
  %v84 = vunpack.c.h.b16 %v39
  %v85 = vunpack.c.l.b16 %v40
  %v86 = vunpack.c.h.b16 %v40
  %v87 = vunpack.c.l.b16 %v41
  %v88 = vunpack.c.h.b16 %v41
  %v89 = vunpack.c.l.b16 %v42
  %v90 = vunpack.c.h.b16 %v42
  %v91 = vunpack.c.l.b16 %v43
  %v92 = vunpack.c.h.b16 %v43
  %v93 = vunpack.c.l.b16 %v44
  %v94 = vunpack.c.h.b16 %v44
  %v95 = vunpack.c.l.b16 %v45
  %v96 = vunpack.c.h.b16 %v45
  %v97 = vunpack.c.l.b16 %v46
  %v98 = vunpack.c.h.b16 %v46
  %v99 = vunpack.c.l.b16 %v47
  %v100 = vunpack.c.h.b16 %v47
  %v101 = vunpack.c.l.b16 %v48
  %v102 = vunpack.c.h.b16 %v48
  %v103 = vunpack.c.l.b16 %v49
  %v104 = vunpack.c.h.b16 %v49
  %v105 = vunpack.c.l.b16 %v50
  %v106 = vunpack.c.h.b16 %v50
  %v107 = vunpack.c.l.b16 %v51
  %v108 = vunpack.c.h.b16 %v51
  %v109 = vunpack.c.l.b16 %v52
  %v110 = vunpack.c.h.b16 %v52
  %v111 = vunpack.c.l.b16 %v53
  %v112 = vunpack.c.h.b16 %v53
  %v113 = vunpack.c.l.b16 %v54
  %v114 = vunpack.c.h.b16 %v54
  %v115 = vpack.c.b16 %v85, %v83
  %v116 = vpack.c.b16 %v86, %v84
  %v117 = vpack.c.b16 %v89, %v87
  %v118 = vpack.c.b16 %v90, %v88
  %v119 = vpack.c.b16 %v93, %v91
  %v120 = vpack.c.b16 %v94, %v92
  %v121 = vpack.c.b16 %v97, %v95
  %v122 = vpack.c.b16 %v98, %v96
  %v123 = vpack.c.b16 %v101, %v99
  %v124 = vpack.c.b16 %v102, %v100
  %v125 = vpack.c.b16 %v105, %v103
  %v126 = vpack.c.b16 %v106, %v104
  %v127 = vpack.c.b16 %v109, %v107
  %v128 = vpack.c.b16 %v110, %v108
  %v129 = vpack.c.b16 %v113, %v111
  %v130 = vpack.c.b16 %v114, %v112
  %147 = vmatprep.subr.bf16.mxu0 %v116
  %148 = vmatpush1.bf16.msra.mxu0 %v115
  %149 = vmatprep.subr.bf16.mxu0 %v118
  %150 = vmatpush1.bf16.msra.mxu0 %v117
  %151 = vmatprep.subr.bf16.mxu0 %v120
  %152 = vmatpush1.bf16.msra.mxu0 %v119
  %153 = vmatprep.subr.bf16.mxu0 %v122
  %154 = vmatpush1.bf16.msra.mxu0 %v121
  %155 = vmatprep.subr.bf16.mxu0 %v124
  %156 = vmatpush1.bf16.msra.mxu0 %v123
  %157 = vmatprep.subr.bf16.mxu0 %v126
  %158 = vmatpush1.bf16.msra.mxu0 %v125
  %159 = vmatprep.subr.bf16.mxu0 %v128
  %160 = vmatpush1.bf16.msra.mxu0 %v127
  %161 = vmatprep.subr.bf16.mxu0 %v130
  %162 = vmatpush1.bf16.msra.mxu0 %v129
  %163 = vmatprep.subr.bf16.mxu0 0
  %164 = vmatpush1.bf16.msra.mxu0 0
  %165 = vmatprep.subr.bf16.mxu0 0
  %166 = vmatpush1.bf16.msra.mxu0 0
  %167 = vmatprep.subr.bf16.mxu0 0
  %168 = vmatpush1.bf16.msra.mxu0 0
  %169 = vmatprep.subr.bf16.mxu0 0
  %170 = vmatpush1.bf16.msra.mxu0 0
  %171 = vmatprep.subr.bf16.mxu0 0
  %172 = vmatpush1.bf16.msra.mxu0 0
  %173 = vmatprep.subr.bf16.mxu0 0
  %174 = vmatpush1.bf16.msra.mxu0 0
  %175 = vmatprep.subr.bf16.mxu0 0
  %176 = vmatpush1.bf16.msra.mxu0 0
  %177 = vmatprep.subr.bf16.mxu0 0
  %178 = vmatpush1.bf16.msra.mxu0 0
  %179 = vmatprep.mubr.bf16.mxu0 0
  %180 = vmatmul.mubr.bf16.gmra.mrb[0].mxu0 %v63
  %v181 = vpop.f32.mrb[0].mxu0
  %v182 = vadd.f32 0.0, %v181
  %v183 = vpop.f32.mrb[0].mxu0
  %v184 = vadd.f32 0.0, %v183
  %v185 = vpop.f32.mrb[0].mxu0
  %v186 = vadd.f32 0.0, %v185
  %v187 = vpop.f32.mrb[0].mxu0
  %v188 = vadd.f32 0.0, %v187
  %189 = vmatprep.mubr.bf16.mxu0 0
  %190 = vmatmul.mubr.bf16.gmra.mrb[0].mxu0 %v64
  %v191 = vpop.f32.mrb[0].mxu0
  %v192 = vadd.f32 0.0, %v191
  %v193 = vpop.f32.mrb[0].mxu0
  %v194 = vadd.f32 0.0, %v193
  %v195 = vpop.f32.mrb[0].mxu0
  %v196 = vadd.f32 0.0, %v195
  %v197 = vpop.f32.mrb[0].mxu0
  %v198 = vadd.f32 0.0, %v197
  %199 = vdwg.mxu0
  %v200 = vadd.f32 %v27, %v182
  %v201 = vadd.f32 %v28, %v184
  %v202 = vadd.f32 %v29, %v186
  %v203 = vadd.f32 %v30, %v188
  %v204 = vadd.f32 %v31, %v192
  %v205 = vadd.f32 %v32, %v194
  %v206 = vadd.f32 %v33, %v196
  %v207 = vadd.f32 %v34, %v198
  %208 = vst [vmem:[#allocation2] sm:$0xff] %v200
  %209 = vst [vmem:[#allocation2 + $0x8] sm:$0xff] %v201
  %210 = vst [vmem:[#allocation2 + $0x10] sm:$0xff] %v202
  %211 = vst [vmem:[#allocation2 + $0x18] sm:$0xff] %v203
  %212 = vst [vmem:[#allocation2 + $0x20] sm:$0xff] %v204
  %213 = vst [vmem:[#allocation2 + $0x28] sm:$0xff] %v205
  %214 = vst [vmem:[#allocation2 + $0x30] sm:$0xff] %v206
  %215 = vst [vmem:[#allocation2 + $0x38] sm:$0xff] %v207
  // Predicated region
  $region18: #{transformer_chatbot_forward.29} parent=0 // pred_check
    %p216 = pneg %p15
  $region19: #{transformer_chatbot_forward.29} parent=0 // pred_check_branch
    %218 = sbr.rel (%p216) target = $region21
  $region20: #{transformer_chatbot_forward.29} parent=0 // pred_region
    %v219 = vld [vmem:[#allocation2] sm:$0xff]
    %v220 = vld [vmem:[#allocation2 + $0x8] sm:$0xff]
    %v221 = vld [vmem:[#allocation2 + $0x10] sm:$0xff]
    %v222 = vld [vmem:[#allocation2 + $0x18] sm:$0xff]
    %v223 = vld [vmem:[#allocation2 + $0x20] sm:$0xff]
    %v224 = vld [vmem:[#allocation2 + $0x28] sm:$0xff]
    %v225 = vld [vmem:[#allocation2 + $0x30] sm:$0xff]
    %v226 = vld [vmem:[#allocation2 + $0x38] sm:$0xff]
    %v227 = vld [vmem:[%s2] sm:$0x3]
    %v229 = vlaneseq
    %v230 = vshrl.u32 %v229, 7
    %v231 = vsub.s32 0, %v230
    %v232 = vrot.slane %v227, %v231
    %v233 = vlaneseq
    %v234 = vshrl.u32 %v233, 7
    %v235 = vsub.s32 1, %v234
    %v236 = vrot.slane %v227, %v235
    %v239 = vadd.f32 %v219, %v232
    %v240 = vadd.f32 %v220, %v236
    %v241 = vadd.f32 %v221, %v232
    %v242 = vadd.f32 %v222, %v236
    %v243 = vadd.f32 %v223, %v232
    %v244 = vadd.f32 %v224, %v236
    %v245 = vadd.f32 %v225, %v232
    %v246 = vadd.f32 %v226, %v236
    %v247 = vmax.f32 %v239, 0.0
    %v248 = vmax.f32 %v240, 0.0
    %v249 = vmax.f32 %v241, 0.0
    %v250 = vmax.f32 %v242, 0.0
    %v251 = vmax.f32 %v243, 0.0
    %v252 = vmax.f32 %v244, 0.0
    %v253 = vmax.f32 %v245, 0.0
    %v254 = vmax.f32 %v246, 0.0
    %v255 = vpack.c.bf16 %v249, %v247
    %v256 = vpack.c.bf16 %v250, %v248
    %v257 = vpack.c.bf16 %v253, %v251
    %v258 = vpack.c.bf16 %v254, %v252
    %v263 = vunpack.c.l.b16 %v255
    %v264 = vunpack.c.l.b16 %v256
    %v265 = vunpack.c.h.b16 %v255
    %v266 = vunpack.c.h.b16 %v256
    %v267 = vunpack.c.l.b16 %v257
    %v268 = vunpack.c.l.b16 %v258
    %v269 = vunpack.c.h.b16 %v257
    %v270 = vunpack.c.h.b16 %v258
    %v271 = vpack.c.b16 %v264, %v263
    %v272 = vpack.c.b16 %v266, %v265
    %v273 = vpack.c.b16 %v268, %v267
    %v274 = vpack.c.b16 %v270, %v269
    %279 = vst [vmem:[%s3] sm:$0xff] %v271
    %280 = vst [vmem:[%s3 + $0x8] sm:$0xff] %v272
    %281 = vst [vmem:[%s3 + $0x10] sm:$0xff] %v273
    %282 = vst [vmem:[%s3 + $0x18] sm:$0xff] %v274
  $region21: #{transformer_chatbot_forward.29} parent=0 // pred_fallthru
    _
  // Predicated region
  $region22: #{transformer_chatbot_forward.29} parent=0 // pred_check
    _
  $region23: #{transformer_chatbot_forward.29} parent=0 // pred_check_branch
    %284 = sbr.rel (0) target = $region25
  $region24: #{transformer_chatbot_forward.29} parent=0 // pred_region
    _
  $region25: #{transformer_chatbot_forward.29} parent=0 // pred_fallthru
    _
  // Predicated region
  $region26: #{transformer_chatbot_forward.29} parent=0 // pred_check
    _
  $region27: #{transformer_chatbot_forward.29} parent=0 // pred_check_branch
    %286 = sbr.rel (0) target = $region29
  $region28: #{transformer_chatbot_forward.29} parent=0 // pred_region
    _
  $region29: #{transformer_chatbot_forward.29} parent=0 // pred_fallthru
    _

// kernel: transformer_chatbot_forward.36
$region0: #{transformer_chatbot_forward.36}
  #allocation0 [shape = 'u32[]', space=smem, size = 0x4, offset = 0x4, fixed_abs, tag = 'smem constant byte address 0x4 - core index']
  #allocation1 [shape = 'u32[144,128]{1,0:T(1,128)}', space=vmem, size = 0x12000, scoped, tag = 'internal scratch']
  #allocation2 [shape = 'f32[16,128]{1,0:T(8,128)}', space=vmem, size = 0x2000, scoped, tag = 'scratch operand']
  %s0 = inlined_call_operand.vmem [shape: bf16[2,4,16,32], index: 0, kind: input, shape index: {}]
  %s1 = inlined_call_operand.vmem [shape: bf16[2,4,16,32], index: 1, kind: input, shape index: {}]
  %s2 = inlined_call_operand.vmem [shape: bf16[2,4,16,32], index: 2, kind: input, shape index: {}]
  %s3 = inlined_call_operand.vmem [shape: bf16[128,128], index: 3, kind: input, shape index: {}]
  %s4 = inlined_call_operand.vmem [shape: f32[1,128], index: 4, kind: input, shape index: {}]
  %s5 = inlined_call_operand.vmem [shape: bf16[2,16,128], index: 5, kind: input, shape index: {}]
  %s6 = inlined_call_operand.vmem [shape: f32[1,128], index: 6, kind: input, shape index: {}]
  %s7 = inlined_call_operand.vmem [shape: f32[1,128], index: 7, kind: input, shape index: {}]
  %s8 = inlined_call_operand.vmem [shape: bf16[2,16,128], index: 8, kind: output, shape index: {}]
  %s9 = sld [smem:[#allocation0]]
  $region65: #{transformer_chatbot_forward.36} parent=0
    _
  %s11 = ssub.s32 1, %s9
  %s12 = scalar_select 0, %s11, %s9
  loop: start=0, step=1, limit=4
  $region2: #{transformer_chatbot_forward.36} parent=0 // loop_pre_header
    _
  $region3: #{transformer_chatbot_forward.36} parent=0 // loop_header
    %s14 = sphi 0, %s18
    %p15 = scmp.ge.s32.totalorder %s14, 4
    %s21 = sphi 0, %s33
    %s22 = sphi 0, %s29
    %s23 = sphi 0, %s21
    %s24 = sphi 0, %s22
    %s25 = sphi 0, %s23
    %s26 = sphi 0, %s24
    %s38 = sphi 0, %s40
    %s41 = sphi 0, %s38
    %s42 = sphi 0, %s41
    %s58 = sphi 0, %s42
    %s64 = sphi 0, %s66
    %s67 = sphi 0, %s64
    %s68 = sphi 0, %s67
    %s84 = sphi 0, %s68
    %s90 = sphi 0, %s92
    %s93 = sphi 0, %s90
    %s94 = sphi 0, %s93
    %s110 = sphi 0, %s94
    %s114 = sphi 0, %s114
    %s116 = sphi 0, %s114
    %s117 = sphi 0, %s116
    %s131 = sphi 0, %s117
    %s135 = sphi 0, %s135
    %s137 = sphi 0, %s135
    %s138 = sphi 0, %s137
    %s152 = sphi 0, %s138
    %s160 = sphi 0, %s162
    %s163 = sphi 0, %s160
    %s164 = sphi 0, %s163
    %s180 = sphi 0, %s164
    %s184 = sphi 0, %s184
    %s186 = sphi 0, %s184
    %s187 = sphi 0, %s186
    %s201 = sphi 0, %s187
    %s205 = sphi 0, %s205
    %s207 = sphi 0, %s205
    %s208 = sphi 0, %s207
    %s222 = sphi 0, %s208
    %s230 = sphi 0, %s232
    %s233 = sphi 0, %s230
    %s234 = sphi 0, %s233
    %s250 = sphi 0, %s234
  $region4: #{transformer_chatbot_forward.36} parent=0 // loop_header_branch
    %17 = sbr.rel (%p15) target = $region8
  $region5: #{transformer_chatbot_forward.36} parent=0 // loop_body
    %s19 = ssub.s32 %s14, 1
    %s20 = ssub.s32 %s14, 2
    %s27 = sadd.s32 1, %s22
    %p28 = scmp.ge.s32.totalorder %s27, 1
    %s29 = scalar_select %p28, 0, %s27
    %s30 = sadd.s32 1, %s21
    %s31 = scalar_select %p28, %s30, %s21
    %p32 = scmp.ge.s32.totalorder %s31, 2
    %s33 = scalar_select %p32, 0, %s31
    %s34 = ssub.s32 %s21, %s33
    %s35 = ssub.s32 %s22, %s29
    %s36 = sor.u32 %s34, %s35
    %p37 = scmp.eq.s32.totalorder %s36, 0
    %s39 = sadd.s32 %s38, 1
    %s40 = scalar_select %p37, %s38, %s39
    %p43 = pneg %p37
    %p44 = scmp.eq.s32.totalorder %s14, 1
    %p45 = por %p43, %p44
    %p46 = scmp.ne.s32.totalorder %s38, %s41
    %p47 = scmp.eq.s32.totalorder %s14, 0
    %p48 = por %p46, %p47
    %p49 = scmp.ne.s32.totalorder %s38, %s41
    %p50 = scmp.eq.s32.totalorder %s19, 1
    %p51 = por %p49, %p50
    %p52 = scmp.ne.s32.totalorder %s41, %s42
    %p53 = scmp.eq.s32.totalorder %s19, 0
    %p54 = por %p52, %p53
    %p55 = scmp.ne.s32.totalorder %s41, %s42
    %p56 = scmp.eq.s32.totalorder %s20, 1
    %p57 = por %p55, %p56
    %p59 = scmp.ne.s32.totalorder %s42, %s58
    %p60 = scmp.eq.s32.totalorder %s20, 0
    %p61 = por %p59, %p60
    %s62 = ssub.s32 %s21, %s33
    %p63 = scmp.eq.s32.totalorder %s62, 0
    %s65 = sadd.s32 %s64, 1
    %s66 = scalar_select %p63, %s64, %s65
    %p69 = pneg %p63
    %p70 = scmp.eq.s32.totalorder %s14, 1
    %p71 = por %p69, %p70
    %p72 = scmp.ne.s32.totalorder %s64, %s67
    %p73 = scmp.eq.s32.totalorder %s14, 0
    %p74 = por %p72, %p73
    %p75 = scmp.ne.s32.totalorder %s64, %s67
    %p76 = scmp.eq.s32.totalorder %s19, 1
    %p77 = por %p75, %p76
    %p78 = scmp.ne.s32.totalorder %s67, %s68
    %p79 = scmp.eq.s32.totalorder %s19, 0
    %p80 = por %p78, %p79
    %p81 = scmp.ne.s32.totalorder %s67, %s68
    %p82 = scmp.eq.s32.totalorder %s20, 1
    %p83 = por %p81, %p82
    %p85 = scmp.ne.s32.totalorder %s68, %s84
    %p86 = scmp.eq.s32.totalorder %s20, 0
    %p87 = por %p85, %p86
    %s88 = ssub.s32 %s21, %s33
    %p89 = scmp.eq.s32.totalorder %s88, 0
    %s91 = sadd.s32 %s90, 1
    %s92 = scalar_select %p89, %s90, %s91
    %p95 = pneg %p89
    %p96 = scmp.eq.s32.totalorder %s14, 1
    %p97 = por %p95, %p96
    %p98 = scmp.ne.s32.totalorder %s90, %s93
    %p99 = scmp.eq.s32.totalorder %s14, 0
    %p100 = por %p98, %p99
    %p101 = scmp.ne.s32.totalorder %s90, %s93
    %p102 = scmp.eq.s32.totalorder %s19, 1
    %p103 = por %p101, %p102
    %p104 = scmp.ne.s32.totalorder %s93, %s94
    %p105 = scmp.eq.s32.totalorder %s19, 0
    %p106 = por %p104, %p105
    %p107 = scmp.ne.s32.totalorder %s93, %s94
    %p108 = scmp.eq.s32.totalorder %s20, 1
    %p109 = por %p107, %p108
    %p111 = scmp.ne.s32.totalorder %s94, %s110
    %p112 = scmp.eq.s32.totalorder %s20, 0
    %p113 = por %p111, %p112
    %s115 = sadd.s32 %s114, 1
    %p118 = scmp.eq.s32.totalorder %s14, 1
    %p119 = scmp.ne.s32.totalorder %s114, %s116
    %p120 = scmp.eq.s32.totalorder %s14, 0
    %p121 = por %p119, %p120
    %p122 = scmp.ne.s32.totalorder %s114, %s116
    %p123 = scmp.eq.s32.totalorder %s19, 1
    %p124 = por %p122, %p123
    %p125 = scmp.ne.s32.totalorder %s116, %s117
    %p126 = scmp.eq.s32.totalorder %s19, 0
    %p127 = por %p125, %p126
    %p128 = scmp.ne.s32.totalorder %s116, %s117
    %p129 = scmp.eq.s32.totalorder %s20, 1
    %p130 = por %p128, %p129
    %p132 = scmp.ne.s32.totalorder %s117, %s131
    %p133 = scmp.eq.s32.totalorder %s20, 0
    %p134 = por %p132, %p133
    %s136 = sadd.s32 %s135, 1
    %p139 = scmp.eq.s32.totalorder %s14, 1
    %p140 = scmp.ne.s32.totalorder %s135, %s137
    %p141 = scmp.eq.s32.totalorder %s14, 0
    %p142 = por %p140, %p141
    %p143 = scmp.ne.s32.totalorder %s135, %s137
    %p144 = scmp.eq.s32.totalorder %s19, 1
    %p145 = por %p143, %p144
    %p146 = scmp.ne.s32.totalorder %s137, %s138
    %p147 = scmp.eq.s32.totalorder %s19, 0
    %p148 = por %p146, %p147
    %p149 = scmp.ne.s32.totalorder %s137, %s138
    %p150 = scmp.eq.s32.totalorder %s20, 1
    %p151 = por %p149, %p150
    %p153 = scmp.ne.s32.totalorder %s138, %s152
    %p154 = scmp.eq.s32.totalorder %s20, 0
    %p155 = por %p153, %p154
    %s156 = ssub.s32 %s21, %s33
    %s157 = ssub.s32 %s22, %s29
    %s158 = sor.u32 %s156, %s157
    %p159 = scmp.eq.s32.totalorder %s158, 0
    %s161 = sadd.s32 %s160, 1
    %s162 = scalar_select %p159, %s160, %s161
    %p165 = pneg %p159
    %p166 = scmp.eq.s32.totalorder %s14, 1
    %p167 = por %p165, %p166
    %p168 = scmp.ne.s32.totalorder %s160, %s163
    %p169 = scmp.eq.s32.totalorder %s14, 0
    %p170 = por %p168, %p169
    %p171 = scmp.ne.s32.totalorder %s160, %s163
    %p172 = scmp.eq.s32.totalorder %s19, 1
    %p173 = por %p171, %p172
    %p174 = scmp.ne.s32.totalorder %s163, %s164
    %p175 = scmp.eq.s32.totalorder %s19, 0
    %p176 = por %p174, %p175
    %p177 = scmp.ne.s32.totalorder %s163, %s164
    %p178 = scmp.eq.s32.totalorder %s20, 1
    %p179 = por %p177, %p178
    %p181 = scmp.ne.s32.totalorder %s164, %s180
    %p182 = scmp.eq.s32.totalorder %s20, 0
    %p183 = por %p181, %p182
    %s185 = sadd.s32 %s184, 1
    %p188 = scmp.eq.s32.totalorder %s14, 1
    %p189 = scmp.ne.s32.totalorder %s184, %s186
    %p190 = scmp.eq.s32.totalorder %s14, 0
    %p191 = por %p189, %p190
    %p192 = scmp.ne.s32.totalorder %s184, %s186
    %p193 = scmp.eq.s32.totalorder %s19, 1
    %p194 = por %p192, %p193
    %p195 = scmp.ne.s32.totalorder %s186, %s187
    %p196 = scmp.eq.s32.totalorder %s19, 0
    %p197 = por %p195, %p196
    %p198 = scmp.ne.s32.totalorder %s186, %s187
    %p199 = scmp.eq.s32.totalorder %s20, 1
    %p200 = por %p198, %p199
    %p202 = scmp.ne.s32.totalorder %s187, %s201
    %p203 = scmp.eq.s32.totalorder %s20, 0
    %p204 = por %p202, %p203
    %s206 = sadd.s32 %s205, 1
    %p209 = scmp.eq.s32.totalorder %s14, 1
    %p210 = scmp.ne.s32.totalorder %s205, %s207
    %p211 = scmp.eq.s32.totalorder %s14, 0
    %p212 = por %p210, %p211
    %p213 = scmp.ne.s32.totalorder %s205, %s207
    %p214 = scmp.eq.s32.totalorder %s19, 1
    %p215 = por %p213, %p214
    %p216 = scmp.ne.s32.totalorder %s207, %s208
    %p217 = scmp.eq.s32.totalorder %s19, 0
    %p218 = por %p216, %p217
    %p219 = scmp.ne.s32.totalorder %s207, %s208
    %p220 = scmp.eq.s32.totalorder %s20, 1
    %p221 = por %p219, %p220
    %p223 = scmp.ne.s32.totalorder %s208, %s222
    %p224 = scmp.eq.s32.totalorder %s20, 0
    %p225 = por %p223, %p224
    %s226 = ssub.s32 %s21, %s33
    %s227 = ssub.s32 %s22, %s29
    %s228 = sor.u32 %s226, %s227
    %p229 = scmp.eq.s32.totalorder %s228, 0
    %s231 = sadd.s32 %s230, 1
    %s232 = scalar_select %p229, %s230, %s231
    %p235 = pneg %p229
    %p236 = scmp.eq.s32.totalorder %s14, 1
    %p237 = por %p235, %p236
    %p238 = scmp.ne.s32.totalorder %s230, %s233
    %p239 = scmp.eq.s32.totalorder %s14, 0
    %p240 = por %p238, %p239
    %p241 = scmp.ne.s32.totalorder %s230, %s233
    %p242 = scmp.eq.s32.totalorder %s19, 1
    %p243 = por %p241, %p242
    %p244 = scmp.ne.s32.totalorder %s233, %s234
    %p245 = scmp.eq.s32.totalorder %s19, 0
    %p246 = por %p244, %p245
    %p247 = scmp.ne.s32.totalorder %s233, %s234
    %p248 = scmp.eq.s32.totalorder %s20, 1
    %p249 = por %p247, %p248
    %p251 = scmp.ne.s32.totalorder %s234, %s250
    %p252 = scmp.eq.s32.totalorder %s20, 0
    %p253 = por %p251, %p252
    %p254 = scmp.le.s32.totalorder 1, %s14
    %p255 = scmp.lt.s32.totalorder %s14, 3
    %p256 = pnand %p254, %p255
    %p257 = pneg %p256
    // Predicated region
    $region9: #{transformer_chatbot_forward.36} parent=5 // pred_check
      _
    $region10: #{transformer_chatbot_forward.36} parent=5 // pred_check_branch
      %259 = sbr.rel (%p256) target = $region12
    $region11: #{transformer_chatbot_forward.36} parent=5 // pred_region
      %s260 = ssub.s32 %s14, 1
      // Predicated region
      $region13: #{transformer_chatbot_forward.36} parent=11 // pred_check
        %p261 = pneg %p127
      $region14: #{transformer_chatbot_forward.36} parent=11 // pred_check_branch
        %263 = sbr.rel (%p261) target = $region16
      $region15: #{transformer_chatbot_forward.36} parent=11 // pred_region
        _
      $region16: #{transformer_chatbot_forward.36} parent=11 // pred_fallthru
        _
      // Predicated region
      $region17: #{transformer_chatbot_forward.36} parent=11 // pred_check
        %p264 = pneg %p148
      $region18: #{transformer_chatbot_forward.36} parent=11 // pred_check_branch
        %266 = sbr.rel (%p264) target = $region20
      $region19: #{transformer_chatbot_forward.36} parent=11 // pred_region
        _
      $region20: #{transformer_chatbot_forward.36} parent=11 // pred_fallthru
        _
      // Predicated region
      $region21: #{transformer_chatbot_forward.36} parent=11 // pred_check
        %p267 = pneg %p197
      $region22: #{transformer_chatbot_forward.36} parent=11 // pred_check_branch
        %269 = sbr.rel (%p267) target = $region24
      $region23: #{transformer_chatbot_forward.36} parent=11 // pred_region
        _
      $region24: #{transformer_chatbot_forward.36} parent=11 // pred_fallthru
        _
      // Predicated region
      $region25: #{transformer_chatbot_forward.36} parent=11 // pred_check
        %p270 = pneg %p218
      $region26: #{transformer_chatbot_forward.36} parent=11 // pred_check_branch
        %272 = sbr.rel (%p270) target = $region28
      $region27: #{transformer_chatbot_forward.36} parent=11 // pred_region
        _
      $region28: #{transformer_chatbot_forward.36} parent=11 // pred_fallthru
        _
    $region12: #{transformer_chatbot_forward.36} parent=5 // pred_fallthru
      _
    %p273 = scmp.lt.s32.totalorder %s14, 2
    // Predicated region
    $region29: #{transformer_chatbot_forward.36} parent=5 // pred_check
      %p274 = pneg %p273
    $region30: #{transformer_chatbot_forward.36} parent=5 // pred_check_branch
      %276 = sbr.rel (%p274) target = $region32
    $region31: #{transformer_chatbot_forward.36} parent=5 // pred_region
      // Predicated region
      $region33: #{transformer_chatbot_forward.36} parent=31 // pred_check
        %p277 = pneg %p48
      $region34: #{transformer_chatbot_forward.36} parent=31 // pred_check_branch
        %279 = sbr.rel (%p277) target = $region36
      $region35: #{transformer_chatbot_forward.36} parent=31 // pred_region
        %s280 = smul.u32 2, %s22
        %p281 = scmp.lt.s32.totalorder %s21, 1
        %s282 = scalar_select %p281, %s21, 1
        %p283 = scmp.lt.s32.totalorder %s280, 1
        %s284 = scalar_select %p283, %s280, 1
        %s285 = smul.addr %s282, 8
        %s286 = sadd.s32 %s284, %s285
        %s287 = smul.addr %s286, 4
        %s288 = scalar_lea.vmem %s0, %s287
        %s289 = smul.u32 2, %s22
      $region36: #{transformer_chatbot_forward.36} parent=31 // pred_fallthru
        _
      // Predicated region
      $region37: #{transformer_chatbot_forward.36} parent=31 // pred_check
        %p290 = pneg %p74
      $region38: #{transformer_chatbot_forward.36} parent=31 // pred_check_branch
        %292 = sbr.rel (%p290) target = $region40
      $region39: #{transformer_chatbot_forward.36} parent=31 // pred_region
        %p293 = scmp.lt.s32.totalorder %s21, 1
        %s294 = scalar_select %p293, %s21, 1
        %s295 = smul.addr %s294, 8
        %s296 = smul.addr %s295, 4
        %s297 = scalar_lea.vmem %s1, %s296
      $region40: #{transformer_chatbot_forward.36} parent=31 // pred_fallthru
        _
      // Predicated region
      $region41: #{transformer_chatbot_forward.36} parent=31 // pred_check
        %p298 = pneg %p100
      $region42: #{transformer_chatbot_forward.36} parent=31 // pred_check_branch
        %300 = sbr.rel (%p298) target = $region44
      $region43: #{transformer_chatbot_forward.36} parent=31 // pred_region
        %p301 = scmp.lt.s32.totalorder %s21, 1
        %s302 = scalar_select %p301, %s21, 1
        %s303 = smul.addr %s302, 8
        %s304 = smul.addr %s303, 4
        %s305 = scalar_lea.vmem %s2, %s304
      $region44: #{transformer_chatbot_forward.36} parent=31 // pred_fallthru
        _
      // Predicated region
      $region45: #{transformer_chatbot_forward.36} parent=31 // pred_check
        %p306 = pneg %p170
      $region46: #{transformer_chatbot_forward.36} parent=31 // pred_check_branch
        %308 = sbr.rel (%p306) target = $region48
      $region47: #{transformer_chatbot_forward.36} parent=31 // pred_region
        %s309 = smul.u32 2, %s22
        %p310 = scmp.lt.s32.totalorder %s21, 1
        %s311 = scalar_select %p310, %s21, 1
        %p312 = scmp.lt.s32.totalorder %s309, 1
        %s313 = scalar_select %p312, %s309, 1
        %s314 = smul.addr %s311, 2
        %s315 = sadd.s32 %s313, %s314
        %s316 = smul.addr %s315, 4
        %s317 = scalar_lea.vmem %s5, %s316
        %s318 = smul.u32 2, %s22
      $region48: #{transformer_chatbot_forward.36} parent=31 // pred_fallthru
        _
    $region32: #{transformer_chatbot_forward.36} parent=5 // pred_fallthru
      _
    %p319 = scmp.le.s32.totalorder 1, %s14
    %p320 = scmp.lt.s32.totalorder %s14, 3
    %p321 = pnand %p319, %p320
    %p322 = pneg %p321
    // Predicated region
    $region49: #{transformer_chatbot_forward.36} parent=5 // pred_check
      _
    $region50: #{transformer_chatbot_forward.36} parent=5 // pred_check_branch
      %324 = sbr.rel (%p321) target = $region52
    $region51: #{transformer_chatbot_forward.36} parent=5 // pred_region
      %s325 = ssub.s32 %s14, 1
      %s326 = smul.u32 2, %s24
      %p327 = scmp.lt.s32.totalorder %s23, 1
      %s328 = scalar_select %p327, %s23, 1
      %p329 = scmp.lt.s32.totalorder %s326, 1
      %s330 = scalar_select %p329, %s326, 1
      %s331 = smul.addr %s328, 8
      %s332 = sadd.s32 %s330, %s331
      %s333 = smul.addr %s332, 4
      %s334 = scalar_lea.vmem %s0, %s333
      %p335 = pneg %p54
      %p336 = pneg %p51
      %p337 = scmp.lt.s32.totalorder %s23, 1
      %s338 = scalar_select %p337, %s23, 1
      %s339 = smul.addr %s338, 8
      %s340 = smul.addr %s339, 4
      %s341 = scalar_lea.vmem %s1, %s340
      %p342 = pneg %p80
      %p343 = pneg %p77
      %p344 = scmp.lt.s32.totalorder %s23, 1
      %s345 = scalar_select %p344, %s23, 1
      %s346 = smul.addr %s345, 8
      %s347 = smul.addr %s346, 4
      %s348 = scalar_lea.vmem %s2, %s347
      %p349 = pneg %p106
      %p350 = pneg %p103
      %p351 = pneg %p127
      %p352 = pneg %p124
      %p353 = pneg %p148
      %p354 = pneg %p145
      %s355 = smul.u32 2, %s24
      %p356 = scmp.lt.s32.totalorder %s23, 1
      %s357 = scalar_select %p356, %s23, 1
      %p358 = scmp.lt.s32.totalorder %s355, 1
      %s359 = scalar_select %p358, %s355, 1
      %s360 = smul.addr %s357, 2
      %s361 = sadd.s32 %s359, %s360
      %s362 = smul.addr %s361, 4
      %s363 = scalar_lea.vmem %s5, %s362
      %p364 = pneg %p176
      %p365 = pneg %p173
      %p366 = pneg %p197
      %p367 = pneg %p194
      %p368 = pneg %p218
      %p369 = pneg %p215
      %p370 = pneg %p246
      %p371 = pneg %p243
      %s372 = smul.u32 2, %s24
      %p373 = scmp.lt.s32.totalorder %s23, 1
      %s374 = scalar_select %p373, %s23, 1
      %p375 = scmp.lt.s32.totalorder %s372, 1
      %s376 = scalar_select %p375, %s372, 1
      %s377 = smul.addr %s374, 2
      %s378 = sadd.s32 %s376, %s377
      %s379 = smul.addr %s378, 4
      %s380 = scalar_lea.vmem %s8, %s379
      %s381 = smul.u32 2, %s24
      %p382 = scmp.lt.s32.totalorder %s23, 1
      %s383 = scalar_select %p382, %s23, 1
      %p384 = scmp.lt.s32.totalorder %s381, 1
      %s385 = scalar_select %p384, %s381, 1
      %s386 = smul.addr %s383, 8
      %s387 = sadd.s32 %s385, %s386
      %s388 = smul.addr %s387, 4
      %s389 = scalar_lea.vmem %s0, %s388
      %s390 = smul.u32 2, %s24
      %p391 = scmp.lt.s32.totalorder %s23, 1
      %s392 = scalar_select %p391, %s23, 1
      %s393 = smul.addr %s392, 8
      %s394 = smul.addr %s393, 4
      %s395 = scalar_lea.vmem %s1, %s394
      %p396 = scmp.lt.s32.totalorder %s23, 1
      %s397 = scalar_select %p396, %s23, 1
      %s398 = smul.addr %s397, 8
      %s399 = smul.addr %s398, 4
      %s400 = scalar_lea.vmem %s2, %s399
      %s401 = smul.u32 2, %s24
      %p402 = scmp.lt.s32.totalorder %s23, 1
      %s403 = scalar_select %p402, %s23, 1
      %p404 = scmp.lt.s32.totalorder %s401, 1
      %s405 = scalar_select %p404, %s401, 1
      %s406 = smul.addr %s403, 2
      %s407 = sadd.s32 %s405, %s406
      %s408 = smul.addr %s407, 4
      %s409 = scalar_lea.vmem %s5, %s408
      %s410 = smul.u32 2, %s24
      %s411 = smul.u32 2, %s24
      %p412 = scmp.lt.s32.totalorder %s23, 1
      %s413 = scalar_select %p412, %s23, 1
      %p414 = scmp.lt.s32.totalorder %s411, 1
      %s415 = scalar_select %p414, %s411, 1
      %s416 = smul.addr %s413, 2
      %s417 = sadd.s32 %s415, %s416
      %s418 = smul.addr %s417, 4
      %s419 = scalar_lea.vmem %s8, %s418
      %s420 = smul.u32 2, %s24
      %s422 = smul.u32 %s24, 16
      %v423 = vlaneseq
      %v424 = vshrl.u32 %v423, 7
      %v425 = vadd.s32 %v424, 8
      %v426 = vstv %s422
      %v427 = vadd.s32 %v424, %v426
      %v428 = vadd.s32 %v425, %v426
      %v429 = vlaneseq
      %v430 = vand.u32 %v429, 127
      %vm431 = vcmp.gt.s32.totalorder %v430, %v427
      %vm432 = vcmp.gt.s32.totalorder %v430, %v428
      %v433 = vsel %vm431, -1e+30, 0.0
      %v434 = vsel %vm432, -1e+30, 0.0
      %v435 = vld [vmem:[%s389] sm:$0xf]
      %v436 = vld [vmem:[%s389 + $0x4] sm:$0xf]
      %v437 = vld [vmem:[%s395] sm:$0xf]
      %v438 = vld [vmem:[%s395 + $0x4] sm:$0xf]
      %v439 = vld [vmem:[%s400] sm:$0xf]
      %v440 = vld [vmem:[%s400 + $0x4] sm:$0xf]
      %v443 = vunpack.c.l.b16 %v435
      %v444 = vunpack.c.l.b16 %v436
      %v445 = vpack.c.b16 %v444, %v443
      %v448 = vunpack.c.l.b16 %v437
      %v449 = vunpack.c.l.b16 %v438
      %v450 = vpack.c.b16 %v449, %v448
      %vm451 = vcmask 261120
      %v453 = vsel %vm451, %v445, 0
      %v456 = vsel %vm451, %v450, 0
      %458 = vmatprep.subr.bf16.mxu0 0
      %459 = vmatpush1.bf16.xpose.msra.mxu0 %v456
      %460 = vmatprep.subr.bf16.mxu0 0
      %461 = vmatpush1.bf16.xpose.msra.mxu0 0
      %462 = vmatprep.subr.bf16.mxu0 0
      %463 = vmatpush1.bf16.xpose.msra.mxu0 0
      %464 = vmatprep.subr.bf16.mxu0 0
      %465 = vmatpush1.bf16.xpose.msra.mxu0 0
      %466 = vmatprep.subr.bf16.mxu0 0
      %467 = vmatpush1.bf16.xpose.msra.mxu0 0
      %468 = vmatprep.subr.bf16.mxu0 0
      %469 = vmatpush1.bf16.xpose.msra.mxu0 0
      %470 = vmatprep.subr.bf16.mxu0 0
      %471 = vmatpush1.bf16.xpose.msra.mxu0 0
      %472 = vmatprep.subr.bf16.mxu0 0
      %473 = vmatpush1.bf16.xpose.msra.mxu0 0
      %474 = vmatprep.subr.bf16.mxu0 0
      %475 = vmatpush1.bf16.xpose.msra.mxu0 0
      %476 = vmatprep.subr.bf16.mxu0 0
      %477 = vmatpush1.bf16.xpose.msra.mxu0 0
      %478 = vmatprep.subr.bf16.mxu0 0
      %479 = vmatpush1.bf16.xpose.msra.mxu0 0
      %480 = vmatprep.subr.bf16.mxu0 0
      %481 = vmatpush1.bf16.xpose.msra.mxu0 0
      %482 = vmatprep.subr.bf16.mxu0 0
      %483 = vmatpush1.bf16.xpose.msra.mxu0 0
      %484 = vmatprep.subr.bf16.mxu0 0
      %485 = vmatpush1.bf16.xpose.msra.mxu0 0
      %486 = vmatprep.subr.bf16.mxu0 0
      %487 = vmatpush1.bf16.xpose.msra.mxu0 0
      %488 = vmatprep.subr.bf16.mxu0 0
      %489 = vmatpush1.bf16.xpose.msra.mxu0 0
      %490 = vmatprep.mubr.bf16.mxu0 0
      %491 = vmatmul.mubr.bf16.gmra.mrb[0].mxu0 %v453
      %v492 = vpop.f32.mrb[0].mxu0
      %v493 = vadd.f32 0.0, %v492
      %v494 = vpop.f32.mrb[0].mxu0
      %v495 = vpop.f32.mrb[0].mxu0
      %v496 = vadd.f32 0.0, %v495
      %v497 = vpop.f32.mrb[0].mxu0
      %498 = vdwg.mxu0
      %v499 = vmul.f32 %v493, 0.17677669
      %v500 = vmul.f32 %v496, 0.17677669
      %v501 = vadd.f32 %v499, %v433
      %v502 = vadd.f32 %v500, %v434
      %vm503 = vcmask 130048
      %v504 = vsel %vm503, %v501, -inf
      %505 = vmax.xlane.f32.xlu0 %v504
      %v506 = vpop.xlane.xlu0 %505
      %v507 = vsel %vm503, %v502, -inf
      %508 = vmax.xlane.f32.xlu0 %v507
      %v509 = vpop.xlane.xlu0 %508
      %v510 = vsub.f32 %v501, %v506
      %v511 = vsub.f32 %v502, %v509
      %v512 = vmul.f32 %v510, 1.442695
      %v513 = vpow.pop %v512
      %v514 = vmul.f32 %v511, 1.442695
      %v515 = vpow.pop %v514
      %v516 = vsel %vm503, %v513, 0.0
      %517 = vadd.xlane.f32.xlu0 %v516
      %v518 = vpop.xlane.xlu0 %517
      %v519 = vsel %vm503, %v515, 0.0
      %520 = vadd.xlane.f32.xlu0 %v519
      %v521 = vpop.xlane.xlu0 %520
      %v522 = vrcp.pop %v518
      %v523 = vrcp.pop %v521
      %v524 = vmul.f32 %v513, %v522
      %v525 = vmul.f32 %v515, %v523
      %v526 = vpack.c.bf16 %v525, %v524
      %v529 = vunpack.c.l.b16 %v439
      %v530 = vunpack.c.l.b16 %v440
      %v531 = vpack.c.b16 %v530, %v529
      %v534 = vsel %vm503, %v526, 0
      %536 = vmatprep.subr.bf16.mxu0 0
      %537 = vmatpush1.bf16.msra.mxu0 %v531
      %538 = vmatprep.subr.bf16.mxu0 0
      %539 = vmatpush1.bf16.msra.mxu0 0
      %540 = vmatprep.subr.bf16.mxu0 0
      %541 = vmatpush1.bf16.msra.mxu0 0
      %542 = vmatprep.subr.bf16.mxu0 0
      %543 = vmatpush1.bf16.msra.mxu0 0
      %544 = vmatprep.subr.bf16.mxu0 0
      %545 = vmatpush1.bf16.msra.mxu0 0
      %546 = vmatprep.subr.bf16.mxu0 0
      %547 = vmatpush1.bf16.msra.mxu0 0
      %548 = vmatprep.subr.bf16.mxu0 0
      %549 = vmatpush1.bf16.msra.mxu0 0
      %550 = vmatprep.subr.bf16.mxu0 0
      %551 = vmatpush1.bf16.msra.mxu0 0
      %552 = vmatprep.subr.bf16.mxu0 0
      %553 = vmatpush1.bf16.msra.mxu0 0
      %554 = vmatprep.subr.bf16.mxu0 0
      %555 = vmatpush1.bf16.msra.mxu0 0
      %556 = vmatprep.subr.bf16.mxu0 0
      %557 = vmatpush1.bf16.msra.mxu0 0
      %558 = vmatprep.subr.bf16.mxu0 0
      %559 = vmatpush1.bf16.msra.mxu0 0
      %560 = vmatprep.subr.bf16.mxu0 0
      %561 = vmatpush1.bf16.msra.mxu0 0
      %562 = vmatprep.subr.bf16.mxu0 0
      %563 = vmatpush1.bf16.msra.mxu0 0
      %564 = vmatprep.subr.bf16.mxu0 0
      %565 = vmatpush1.bf16.msra.mxu0 0
      %566 = vmatprep.subr.bf16.mxu0 0
      %567 = vmatpush1.bf16.msra.mxu0 0
      %568 = vmatprep.mubr.bf16.mxu0 0
      %569 = vmatmul.mubr.bf16.gmra.mrb[0].mxu0 %v534
      %v570 = vpop.f32.mrb[0].mxu0
      %v571 = vadd.f32 0.0, %v570
      %v572 = vpop.f32.mrb[0].mxu0
      %v573 = vpop.f32.mrb[0].mxu0
      %v574 = vadd.f32 0.0, %v573
      %v575 = vpop.f32.mrb[0].mxu0
      %576 = vdwg.mxu0
      %577 = vst.msk [vmem:[#allocation2] sm:$0xff] %vm451, %v571
      %578 = vst.msk [vmem:[#allocation2 + $0x8] sm:$0xff] %vm451, %v574
      %s579 = scalar_lea.vmem %s389, 8
      %v580 = vld [vmem:[%s579] sm:$0xf]
      %v581 = vld [vmem:[%s579 + $0x4] sm:$0xf]
      %s582 = scalar_lea.vmem %s395, 8
      %v583 = vld [vmem:[%s582] sm:$0xf]
      %v584 = vld [vmem:[%s582 + $0x4] sm:$0xf]
      %s585 = scalar_lea.vmem %s400, 8
      %v586 = vld [vmem:[%s585] sm:$0xf]
      %v587 = vld [vmem:[%s585 + $0x4] sm:$0xf]
      %v590 = vunpack.c.l.b16 %v580
      %v591 = vunpack.c.l.b16 %v581
      %v592 = vpack.c.b16 %v591, %v590
      %v595 = vunpack.c.l.b16 %v583
      %v596 = vunpack.c.l.b16 %v584
      %v597 = vpack.c.b16 %v596, %v595
      %v599 = vsel %vm451, %v592, 0
      %v602 = vsel %vm451, %v597, 0
      %604 = vmatprep.subr.bf16.mxu0 0
      %605 = vmatpush1.bf16.xpose.msra.mxu0 %v602
      %606 = vmatprep.subr.bf16.mxu0 0
      %607 = vmatpush1.bf16.xpose.msra.mxu0 0
      %608 = vmatprep.subr.bf16.mxu0 0
      %609 = vmatpush1.bf16.xpose.msra.mxu0 0
      %610 = vmatprep.subr.bf16.mxu0 0
      %611 = vmatpush1.bf16.xpose.msra.mxu0 0
      %612 = vmatprep.subr.bf16.mxu0 0
      %613 = vmatpush1.bf16.xpose.msra.mxu0 0
      %614 = vmatprep.subr.bf16.mxu0 0
      %615 = vmatpush1.bf16.xpose.msra.mxu0 0
      %616 = vmatprep.subr.bf16.mxu0 0
      %617 = vmatpush1.bf16.xpose.msra.mxu0 0
      %618 = vmatprep.subr.bf16.mxu0 0
      %619 = vmatpush1.bf16.xpose.msra.mxu0 0
      %620 = vmatprep.subr.bf16.mxu0 0
      %621 = vmatpush1.bf16.xpose.msra.mxu0 0
      %622 = vmatprep.subr.bf16.mxu0 0
      %623 = vmatpush1.bf16.xpose.msra.mxu0 0
      %624 = vmatprep.subr.bf16.mxu0 0
      %625 = vmatpush1.bf16.xpose.msra.mxu0 0
      %626 = vmatprep.subr.bf16.mxu0 0
      %627 = vmatpush1.bf16.xpose.msra.mxu0 0
      %628 = vmatprep.subr.bf16.mxu0 0
      %629 = vmatpush1.bf16.xpose.msra.mxu0 0
      %630 = vmatprep.subr.bf16.mxu0 0
      %631 = vmatpush1.bf16.xpose.msra.mxu0 0
      %632 = vmatprep.subr.bf16.mxu0 0
      %633 = vmatpush1.bf16.xpose.msra.mxu0 0
      %634 = vmatprep.subr.bf16.mxu0 0
      %635 = vmatpush1.bf16.xpose.msra.mxu0 0
      %636 = vmatprep.mubr.bf16.mxu0 0
      %637 = vmatmul.mubr.bf16.gmra.mrb[0].mxu0 %v599
      %v638 = vpop.f32.mrb[0].mxu0
      %v639 = vadd.f32 0.0, %v638
      %v640 = vpop.f32.mrb[0].mxu0
      %v641 = vpop.f32.mrb[0].mxu0
      %v642 = vadd.f32 0.0, %v641
      %v643 = vpop.f32.mrb[0].mxu0
      %644 = vdwg.mxu0
      %v645 = vmul.f32 %v639, 0.17677669
      %v646 = vmul.f32 %v642, 0.17677669
      %v647 = vadd.f32 %v645, %v433
      %v648 = vadd.f32 %v646, %v434
      %v649 = vsel %vm503, %v647, -inf
      %650 = vmax.xlane.f32.xlu0 %v649
      %v651 = vpop.xlane.xlu0 %650
      %v652 = vsel %vm503, %v648, -inf
      %653 = vmax.xlane.f32.xlu0 %v652
      %v654 = vpop.xlane.xlu0 %653
      %v655 = vsub.f32 %v647, %v651
      %v656 = vsub.f32 %v648, %v654
      %v657 = vmul.f32 %v655, 1.442695
      %v658 = vpow.pop %v657
      %v659 = vmul.f32 %v656, 1.442695
      %v660 = vpow.pop %v659
      %v661 = vsel %vm503, %v658, 0.0
      %662 = vadd.xlane.f32.xlu0 %v661
      %v663 = vpop.xlane.xlu0 %662
      %v664 = vsel %vm503, %v660, 0.0
      %665 = vadd.xlane.f32.xlu0 %v664
      %v666 = vpop.xlane.xlu0 %665
      %v667 = vrcp.pop %v663
      %v668 = vrcp.pop %v666
      %v669 = vmul.f32 %v658, %v667
      %v670 = vmul.f32 %v660, %v668
      %v671 = vpack.c.bf16 %v670, %v669
      %v674 = vunpack.c.l.b16 %v586
      %v675 = vunpack.c.l.b16 %v587
      %v676 = vpack.c.b16 %v675, %v674
      %v679 = vsel %vm503, %v671, 0
      %681 = vmatprep.subr.bf16.mxu0 0
      %682 = vmatpush1.bf16.msra.mxu0 %v676
      %683 = vmatprep.subr.bf16.mxu0 0
      %684 = vmatpush1.bf16.msra.mxu0 0
      %685 = vmatprep.subr.bf16.mxu0 0
      %686 = vmatpush1.bf16.msra.mxu0 0
      %687 = vmatprep.subr.bf16.mxu0 0
      %688 = vmatpush1.bf16.msra.mxu0 0
      %689 = vmatprep.subr.bf16.mxu0 0
      %690 = vmatpush1.bf16.msra.mxu0 0
      %691 = vmatprep.subr.bf16.mxu0 0
      %692 = vmatpush1.bf16.msra.mxu0 0
      %693 = vmatprep.subr.bf16.mxu0 0
      %694 = vmatpush1.bf16.msra.mxu0 0
      %695 = vmatprep.subr.bf16.mxu0 0
      %696 = vmatpush1.bf16.msra.mxu0 0
      %697 = vmatprep.subr.bf16.mxu0 0
      %698 = vmatpush1.bf16.msra.mxu0 0
      %699 = vmatprep.subr.bf16.mxu0 0
      %700 = vmatpush1.bf16.msra.mxu0 0
      %701 = vmatprep.subr.bf16.mxu0 0
      %702 = vmatpush1.bf16.msra.mxu0 0
      %703 = vmatprep.subr.bf16.mxu0 0
      %704 = vmatpush1.bf16.msra.mxu0 0
      %705 = vmatprep.subr.bf16.mxu0 0
      %706 = vmatpush1.bf16.msra.mxu0 0
      %707 = vmatprep.subr.bf16.mxu0 0
      %708 = vmatpush1.bf16.msra.mxu0 0
      %709 = vmatprep.subr.bf16.mxu0 0
      %710 = vmatpush1.bf16.msra.mxu0 0
      %711 = vmatprep.subr.bf16.mxu0 0
      %712 = vmatpush1.bf16.msra.mxu0 0
      %713 = vmatprep.mubr.bf16.mxu0 0
      %714 = vmatmul.mubr.bf16.gmra.mrb[0].mxu0 %v679
      %v715 = vpop.f32.mrb[0].mxu0
      %v716 = vadd.f32 0.0, %v715
      %v717 = vpop.f32.mrb[0].mxu0
      %v718 = vpop.f32.mrb[0].mxu0
      %v719 = vadd.f32 0.0, %v718
      %v720 = vpop.f32.mrb[0].mxu0
      %721 = vdwg.mxu0
      %724 = vrot.lane.b32.xlu0 %v716, 32
      %v725 = vpop.permute.xlu0 %724
      %726 = vrot.lane.b32.xlu0 %v719, 32
      %v727 = vpop.permute.xlu0 %726
      %vm730 = vcmask 523520
      %731 = vst.msk [vmem:[#allocation2] sm:$0xff] %vm730, %v725
      %732 = vst.msk [vmem:[#allocation2 + $0x8] sm:$0xff] %vm730, %v727
      %s733 = scalar_lea.vmem %s389, 16
      %v734 = vld [vmem:[%s733] sm:$0xf]
      %v735 = vld [vmem:[%s733 + $0x4] sm:$0xf]
      %s736 = scalar_lea.vmem %s395, 16
      %v737 = vld [vmem:[%s736] sm:$0xf]
      %v738 = vld [vmem:[%s736 + $0x4] sm:$0xf]
      %s739 = scalar_lea.vmem %s400, 16
      %v740 = vld [vmem:[%s739] sm:$0xf]
      %v741 = vld [vmem:[%s739 + $0x4] sm:$0xf]
      %v744 = vunpack.c.l.b16 %v734
      %v745 = vunpack.c.l.b16 %v735
      %v746 = vpack.c.b16 %v745, %v744
      %v749 = vunpack.c.l.b16 %v737
      %v750 = vunpack.c.l.b16 %v738
      %v751 = vpack.c.b16 %v750, %v749
      %v753 = vsel %vm451, %v746, 0
      %v756 = vsel %vm451, %v751, 0
      %758 = vmatprep.subr.bf16.mxu0 0
      %759 = vmatpush1.bf16.xpose.msra.mxu0 %v756
      %760 = vmatprep.subr.bf16.mxu0 0
      %761 = vmatpush1.bf16.xpose.msra.mxu0 0
      %762 = vmatprep.subr.bf16.mxu0 0
      %763 = vmatpush1.bf16.xpose.msra.mxu0 0
      %764 = vmatprep.subr.bf16.mxu0 0
      %765 = vmatpush1.bf16.xpose.msra.mxu0 0
      %766 = vmatprep.subr.bf16.mxu0 0
      %767 = vmatpush1.bf16.xpose.msra.mxu0 0
      %768 = vmatprep.subr.bf16.mxu0 0
      %769 = vmatpush1.bf16.xpose.msra.mxu0 0
      %770 = vmatprep.subr.bf16.mxu0 0
      %771 = vmatpush1.bf16.xpose.msra.mxu0 0
      %772 = vmatprep.subr.bf16.mxu0 0
      %773 = vmatpush1.bf16.xpose.msra.mxu0 0
      %774 = vmatprep.subr.bf16.mxu0 0
      %775 = vmatpush1.bf16.xpose.msra.mxu0 0
      %776 = vmatprep.subr.bf16.mxu0 0
      %777 = vmatpush1.bf16.xpose.msra.mxu0 0
      %778 = vmatprep.subr.bf16.mxu0 0
      %779 = vmatpush1.bf16.xpose.msra.mxu0 0
      %780 = vmatprep.subr.bf16.mxu0 0
      %781 = vmatpush1.bf16.xpose.msra.mxu0 0
      %782 = vmatprep.subr.bf16.mxu0 0
      %783 = vmatpush1.bf16.xpose.msra.mxu0 0
      %784 = vmatprep.subr.bf16.mxu0 0
      %785 = vmatpush1.bf16.xpose.msra.mxu0 0
      %786 = vmatprep.subr.bf16.mxu0 0
      %787 = vmatpush1.bf16.xpose.msra.mxu0 0
      %788 = vmatprep.subr.bf16.mxu0 0
      %789 = vmatpush1.bf16.xpose.msra.mxu0 0
      %790 = vmatprep.mubr.bf16.mxu0 0
      %791 = vmatmul.mubr.bf16.gmra.mrb[0].mxu0 %v753
      %v792 = vpop.f32.mrb[0].mxu0
      %v793 = vadd.f32 0.0, %v792
      %v794 = vpop.f32.mrb[0].mxu0
      %v795 = vpop.f32.mrb[0].mxu0
      %v796 = vadd.f32 0.0, %v795
      %v797 = vpop.f32.mrb[0].mxu0
      %798 = vdwg.mxu0
      %v799 = vmul.f32 %v793, 0.17677669
      %v800 = vmul.f32 %v796, 0.17677669
      %v801 = vadd.f32 %v799, %v433
      %v802 = vadd.f32 %v800, %v434
      %v803 = vsel %vm503, %v801, -inf
      %804 = vmax.xlane.f32.xlu0 %v803
      %v805 = vpop.xlane.xlu0 %804
      %v806 = vsel %vm503, %v802, -inf
      %807 = vmax.xlane.f32.xlu0 %v806
      %v808 = vpop.xlane.xlu0 %807
      %v809 = vsub.f32 %v801, %v805
      %v810 = vsub.f32 %v802, %v808
      %v811 = vmul.f32 %v809, 1.442695
      %v812 = vpow.pop %v811
      %v813 = vmul.f32 %v810, 1.442695
      %v814 = vpow.pop %v813
      %v815 = vsel %vm503, %v812, 0.0
      %816 = vadd.xlane.f32.xlu0 %v815
      %v817 = vpop.xlane.xlu0 %816
      %v818 = vsel %vm503, %v814, 0.0
      %819 = vadd.xlane.f32.xlu0 %v818
      %v820 = vpop.xlane.xlu0 %819
      %v821 = vrcp.pop %v817
      %v822 = vrcp.pop %v820
      %v823 = vmul.f32 %v812, %v821
      %v824 = vmul.f32 %v814, %v822
      %v825 = vpack.c.bf16 %v824, %v823
      %v828 = vunpack.c.l.b16 %v740
      %v829 = vunpack.c.l.b16 %v741
      %v830 = vpack.c.b16 %v829, %v828
      %v833 = vsel %vm503, %v825, 0
      %835 = vmatprep.subr.bf16.mxu0 0
      %836 = vmatpush1.bf16.msra.mxu0 %v830
      %837 = vmatprep.subr.bf16.mxu0 0
      %838 = vmatpush1.bf16.msra.mxu0 0
      %839 = vmatprep.subr.bf16.mxu0 0
      %840 = vmatpush1.bf16.msra.mxu0 0
      %841 = vmatprep.subr.bf16.mxu0 0
      %842 = vmatpush1.bf16.msra.mxu0 0
      %843 = vmatprep.subr.bf16.mxu0 0
      %844 = vmatpush1.bf16.msra.mxu0 0
      %845 = vmatprep.subr.bf16.mxu0 0
      %846 = vmatpush1.bf16.msra.mxu0 0
      %847 = vmatprep.subr.bf16.mxu0 0
      %848 = vmatpush1.bf16.msra.mxu0 0
      %849 = vmatprep.subr.bf16.mxu0 0
      %850 = vmatpush1.bf16.msra.mxu0 0
      %851 = vmatprep.subr.bf16.mxu0 0
      %852 = vmatpush1.bf16.msra.mxu0 0
      %853 = vmatprep.subr.bf16.mxu0 0
      %854 = vmatpush1.bf16.msra.mxu0 0
      %855 = vmatprep.subr.bf16.mxu0 0
      %856 = vmatpush1.bf16.msra.mxu0 0
      %857 = vmatprep.subr.bf16.mxu0 0
      %858 = vmatpush1.bf16.msra.mxu0 0
      %859 = vmatprep.subr.bf16.mxu0 0
      %860 = vmatpush1.bf16.msra.mxu0 0
      %861 = vmatprep.subr.bf16.mxu0 0
      %862 = vmatpush1.bf16.msra.mxu0 0
      %863 = vmatprep.subr.bf16.mxu0 0
      %864 = vmatpush1.bf16.msra.mxu0 0
      %865 = vmatprep.subr.bf16.mxu0 0
      %866 = vmatpush1.bf16.msra.mxu0 0
      %867 = vmatprep.mubr.bf16.mxu0 0
      %868 = vmatmul.mubr.bf16.gmra.mrb[0].mxu0 %v833
      %v869 = vpop.f32.mrb[0].mxu0
      %v870 = vadd.f32 0.0, %v869
      %v871 = vpop.f32.mrb[0].mxu0
      %v872 = vpop.f32.mrb[0].mxu0
      %v873 = vadd.f32 0.0, %v872
      %v874 = vpop.f32.mrb[0].mxu0
      %875 = vdwg.mxu0
      %878 = vrot.lane.b32.xlu0 %v870, 64
      %v879 = vpop.permute.xlu0 %878
      %880 = vrot.lane.b32.xlu0 %v873, 64
      %v881 = vpop.permute.xlu0 %880
      %vm884 = vcmask 785920
      %885 = vst.msk [vmem:[#allocation2] sm:$0xff] %vm884, %v879
      %886 = vst.msk [vmem:[#allocation2 + $0x8] sm:$0xff] %vm884, %v881
      %s887 = scalar_lea.vmem %s389, 24
      %v888 = vld [vmem:[%s887] sm:$0xf]
      %v889 = vld [vmem:[%s887 + $0x4] sm:$0xf]
      %s890 = scalar_lea.vmem %s395, 24
      %v891 = vld [vmem:[%s890] sm:$0xf]
      %v892 = vld [vmem:[%s890 + $0x4] sm:$0xf]
      %s893 = scalar_lea.vmem %s400, 24
      %v894 = vld [vmem:[%s893] sm:$0xf]
      %v895 = vld [vmem:[%s893 + $0x4] sm:$0xf]
      %v898 = vunpack.c.l.b16 %v888
      %v899 = vunpack.c.l.b16 %v889
      %v900 = vpack.c.b16 %v899, %v898
      %v903 = vunpack.c.l.b16 %v891
      %v904 = vunpack.c.l.b16 %v892
      %v905 = vpack.c.b16 %v904, %v903
      %v907 = vsel %vm451, %v900, 0
      %v910 = vsel %vm451, %v905, 0
      %912 = vmatprep.subr.bf16.mxu0 0
      %913 = vmatpush1.bf16.xpose.msra.mxu0 %v910
      %914 = vmatprep.subr.bf16.mxu0 0
      %915 = vmatpush1.bf16.xpose.msra.mxu0 0
      %916 = vmatprep.subr.bf16.mxu0 0
      %917 = vmatpush1.bf16.xpose.msra.mxu0 0
      %918 = vmatprep.subr.bf16.mxu0 0
      %919 = vmatpush1.bf16.xpose.msra.mxu0 0
      %920 = vmatprep.subr.bf16.mxu0 0
      %921 = vmatpush1.bf16.xpose.msra.mxu0 0
      %922 = vmatprep.subr.bf16.mxu0 0
      %923 = vmatpush1.bf16.xpose.msra.mxu0 0
      %924 = vmatprep.subr.bf16.mxu0 0
      %925 = vmatpush1.bf16.xpose.msra.mxu0 0
      %926 = vmatprep.subr.bf16.mxu0 0
      %927 = vmatpush1.bf16.xpose.msra.mxu0 0
      %928 = vmatprep.subr.bf16.mxu0 0
      %929 = vmatpush1.bf16.xpose.msra.mxu0 0
      %930 = vmatprep.subr.bf16.mxu0 0
      %931 = vmatpush1.bf16.xpose.msra.mxu0 0
      %932 = vmatprep.subr.bf16.mxu0 0
      %933 = vmatpush1.bf16.xpose.msra.mxu0 0
      %934 = vmatprep.subr.bf16.mxu0 0
      %935 = vmatpush1.bf16.xpose.msra.mxu0 0
      %936 = vmatprep.subr.bf16.mxu0 0
      %937 = vmatpush1.bf16.xpose.msra.mxu0 0
      %938 = vmatprep.subr.bf16.mxu0 0
      %939 = vmatpush1.bf16.xpose.msra.mxu0 0
      %940 = vmatprep.subr.bf16.mxu0 0
      %941 = vmatpush1.bf16.xpose.msra.mxu0 0
      %942 = vmatprep.subr.bf16.mxu0 0
      %943 = vmatpush1.bf16.xpose.msra.mxu0 0
      %944 = vmatprep.mubr.bf16.mxu0 0
      %945 = vmatmul.mubr.bf16.gmra.mrb[0].mxu0 %v907
      %v946 = vpop.f32.mrb[0].mxu0
      %v947 = vadd.f32 0.0, %v946
      %v948 = vpop.f32.mrb[0].mxu0
      %v949 = vpop.f32.mrb[0].mxu0
      %v950 = vadd.f32 0.0, %v949
      %v951 = vpop.f32.mrb[0].mxu0
      %952 = vdwg.mxu0
      %v953 = vmul.f32 %v947, 0.17677669
      %v954 = vmul.f32 %v950, 0.17677669
      %v955 = vadd.f32 %v953, %v433
      %v956 = vadd.f32 %v954, %v434
      %v957 = vsel %vm503, %v955, -inf
      %958 = vmax.xlane.f32.xlu0 %v957
      %v959 = vpop.xlane.xlu0 %958
      %v960 = vsel %vm503, %v956, -inf
      %961 = vmax.xlane.f32.xlu0 %v960
      %v962 = vpop.xlane.xlu0 %961
      %v963 = vsub.f32 %v955, %v959
      %v964 = vsub.f32 %v956, %v962
      %v965 = vmul.f32 %v963, 1.442695
      %v966 = vpow.pop %v965
      %v967 = vmul.f32 %v964, 1.442695
      %v968 = vpow.pop %v967
      %v969 = vsel %vm503, %v966, 0.0
      %970 = vadd.xlane.f32.xlu0 %v969
      %v971 = vpop.xlane.xlu0 %970
      %v972 = vsel %vm503, %v968, 0.0
      %973 = vadd.xlane.f32.xlu0 %v972
      %v974 = vpop.xlane.xlu0 %973
      %v975 = vrcp.pop %v971
      %v976 = vrcp.pop %v974
      %v977 = vmul.f32 %v966, %v975
      %v978 = vmul.f32 %v968, %v976
      %v979 = vpack.c.bf16 %v978, %v977
      %v982 = vunpack.c.l.b16 %v894
      %v983 = vunpack.c.l.b16 %v895
      %v984 = vpack.c.b16 %v983, %v982
      %v987 = vsel %vm503, %v979, 0
      %989 = vmatprep.subr.bf16.mxu0 0
      %990 = vmatpush1.bf16.msra.mxu0 %v984
      %991 = vmatprep.subr.bf16.mxu0 0
      %992 = vmatpush1.bf16.msra.mxu0 0
      %993 = vmatprep.subr.bf16.mxu0 0
      %994 = vmatpush1.bf16.msra.mxu0 0
      %995 = vmatprep.subr.bf16.mxu0 0
      %996 = vmatpush1.bf16.msra.mxu0 0
      %997 = vmatprep.subr.bf16.mxu0 0
      %998 = vmatpush1.bf16.msra.mxu0 0
      %999 = vmatprep.subr.bf16.mxu0 0
      %1000 = vmatpush1.bf16.msra.mxu0 0
      %1001 = vmatprep.subr.bf16.mxu0 0
      %1002 = vmatpush1.bf16.msra.mxu0 0
      %1003 = vmatprep.subr.bf16.mxu0 0
      %1004 = vmatpush1.bf16.msra.mxu0 0
      %1005 = vmatprep.subr.bf16.mxu0 0
      %1006 = vmatpush1.bf16.msra.mxu0 0
      %1007 = vmatprep.subr.bf16.mxu0 0
      %1008 = vmatpush1.bf16.msra.mxu0 0
      %1009 = vmatprep.subr.bf16.mxu0 0
      %1010 = vmatpush1.bf16.msra.mxu0 0
      %1011 = vmatprep.subr.bf16.mxu0 0
      %1012 = vmatpush1.bf16.msra.mxu0 0
      %1013 = vmatprep.subr.bf16.mxu0 0
      %1014 = vmatpush1.bf16.msra.mxu0 0
      %1015 = vmatprep.subr.bf16.mxu0 0
      %1016 = vmatpush1.bf16.msra.mxu0 0
      %1017 = vmatprep.subr.bf16.mxu0 0
      %1018 = vmatpush1.bf16.msra.mxu0 0
      %1019 = vmatprep.subr.bf16.mxu0 0
      %1020 = vmatpush1.bf16.msra.mxu0 0
      %1021 = vmatprep.mubr.bf16.mxu0 0
      %1022 = vmatmul.mubr.bf16.gmra.mrb[0].mxu0 %v987
      %v1023 = vpop.f32.mrb[0].mxu0
      %v1024 = vadd.f32 0.0, %v1023
      %v1025 = vpop.f32.mrb[0].mxu0
      %v1026 = vpop.f32.mrb[0].mxu0
      %v1027 = vadd.f32 0.0, %v1026
      %v1028 = vpop.f32.mrb[0].mxu0
      %1029 = vdwg.mxu0
      %1032 = vrot.lane.b32.xlu0 %v1024, 96
      %v1033 = vpop.permute.xlu0 %1032
      %1034 = vrot.lane.b32.xlu0 %v1027, 96
      %v1035 = vpop.permute.xlu0 %1034
      %vm1038 = vcmask 1048320
      %1039 = vst.msk [vmem:[#allocation2] sm:$0xff] %vm1038, %v1033
      %1040 = vst.msk [vmem:[#allocation2 + $0x8] sm:$0xff] %vm1038, %v1035
      %v1041 = vld [vmem:[#allocation2] sm:$0xff]
      %v1042 = vld [vmem:[#allocation2 + $0x8] sm:$0xff]
      %v1043 = vpack.c.bf16 %v1042, %v1041
      %v1044 = vld [vmem:[%s3] sm:$0xf]
      %v1045 = vld [vmem:[%s3 + $0x4] sm:$0xf]
      %v1046 = vld [vmem:[%s3 + $0x8] sm:$0xf]
      %v1047 = vld [vmem:[%s3 + $0xc] sm:$0xf]
      %v1048 = vld [vmem:[%s3 + $0x10] sm:$0xf]
      %v1049 = vld [vmem:[%s3 + $0x14] sm:$0xf]
      %v1050 = vld [vmem:[%s3 + $0x18] sm:$0xf]
      %v1051 = vld [vmem:[%s3 + $0x1c] sm:$0xf]
      %v1052 = vld [vmem:[%s3 + $0x20] sm:$0xf]
      %v1053 = vld [vmem:[%s3 + $0x24] sm:$0xf]
      %v1054 = vld [vmem:[%s3 + $0x28] sm:$0xf]
      %v1055 = vld [vmem:[%s3 + $0x2c] sm:$0xf]
      %v1056 = vld [vmem:[%s3 + $0x30] sm:$0xf]
      %v1057 = vld [vmem:[%s3 + $0x34] sm:$0xf]
      %v1058 = vld [vmem:[%s3 + $0x38] sm:$0xf]
      %v1059 = vld [vmem:[%s3 + $0x3c] sm:$0xf]
      %v1060 = vld [vmem:[%s4] sm:$0x1]
      %v1062 = vlaneseq
      %v1063 = vshrl.u32 %v1062, 7
      %v1064 = vsub.s32 0, %v1063
      %v1065 = vrot.slane %v1060, %v1064
      %v1083 = vunpack.c.l.b16 %v1044
      %v1084 = vunpack.c.l.b16 %v1045
      %v1085 = vunpack.c.l.b16 %v1046
      %v1086 = vunpack.c.l.b16 %v1047
      %v1087 = vunpack.c.l.b16 %v1048
      %v1088 = vunpack.c.l.b16 %v1049
      %v1089 = vunpack.c.l.b16 %v1050
      %v1090 = vunpack.c.l.b16 %v1051
      %v1091 = vunpack.c.l.b16 %v1052
      %v1092 = vunpack.c.l.b16 %v1053
      %v1093 = vunpack.c.l.b16 %v1054
      %v1094 = vunpack.c.l.b16 %v1055
      %v1095 = vunpack.c.l.b16 %v1056
      %v1096 = vunpack.c.l.b16 %v1057
      %v1097 = vunpack.c.l.b16 %v1058
      %v1098 = vunpack.c.l.b16 %v1059
      %v1099 = vpack.c.b16 %v1084, %v1083
      %v1100 = vpack.c.b16 %v1086, %v1085
      %v1101 = vpack.c.b16 %v1088, %v1087
      %v1102 = vpack.c.b16 %v1090, %v1089
      %v1103 = vpack.c.b16 %v1092, %v1091
      %v1104 = vpack.c.b16 %v1094, %v1093
      %v1105 = vpack.c.b16 %v1096, %v1095
      %v1106 = vpack.c.b16 %v1098, %v1097
      %1115 = vmatprep.subr.bf16.mxu0 0
      %1116 = vmatpush1.bf16.msra.mxu0 %v1099
      %1117 = vmatprep.subr.bf16.mxu0 0
      %1118 = vmatpush1.bf16.msra.mxu0 %v1100
      %1119 = vmatprep.subr.bf16.mxu0 0
      %1120 = vmatpush1.bf16.msra.mxu0 %v1101
      %1121 = vmatprep.subr.bf16.mxu0 0
      %1122 = vmatpush1.bf16.msra.mxu0 %v1102
      %1123 = vmatprep.subr.bf16.mxu0 0
      %1124 = vmatpush1.bf16.msra.mxu0 %v1103
      %1125 = vmatprep.subr.bf16.mxu0 0
      %1126 = vmatpush1.bf16.msra.mxu0 %v1104
      %1127 = vmatprep.subr.bf16.mxu0 0
      %1128 = vmatpush1.bf16.msra.mxu0 %v1105
      %1129 = vmatprep.subr.bf16.mxu0 0
      %1130 = vmatpush1.bf16.msra.mxu0 %v1106
      %1131 = vmatprep.subr.bf16.mxu0 0
      %1132 = vmatpush1.bf16.msra.mxu0 0
      %1133 = vmatprep.subr.bf16.mxu0 0
      %1134 = vmatpush1.bf16.msra.mxu0 0
      %1135 = vmatprep.subr.bf16.mxu0 0
      %1136 = vmatpush1.bf16.msra.mxu0 0
      %1137 = vmatprep.subr.bf16.mxu0 0
      %1138 = vmatpush1.bf16.msra.mxu0 0
      %1139 = vmatprep.subr.bf16.mxu0 0
      %1140 = vmatpush1.bf16.msra.mxu0 0
      %1141 = vmatprep.subr.bf16.mxu0 0
      %1142 = vmatpush1.bf16.msra.mxu0 0
      %1143 = vmatprep.subr.bf16.mxu0 0
      %1144 = vmatpush1.bf16.msra.mxu0 0
      %1145 = vmatprep.subr.bf16.mxu0 0
      %1146 = vmatpush1.bf16.msra.mxu0 0
      %1147 = vmatprep.mubr.bf16.mxu0 0
      %1148 = vmatmul.mubr.bf16.gmra.mrb[0].mxu0 %v1043
      %v1149 = vpop.f32.mrb[0].mxu0
      %v1150 = vadd.f32 %v1065, %v1149
      %v1151 = vpop.f32.mrb[0].mxu0
      %v1152 = vpop.f32.mrb[0].mxu0
      %v1153 = vadd.f32 %v1065, %v1152
      %v1154 = vpop.f32.mrb[0].mxu0
      %1155 = vdwg.mxu0
      %v1156 = vld [vmem:[%s409] sm:$0xf]
      %v1157 = vld [vmem:[%s409 + $0x4] sm:$0xf]
      %v1158 = vunpack.c.l.bf16 %v1156
      %v1159 = vunpack.c.l.bf16 %v1157
      %v1160 = vadd.f32 %v1150, %v1158
      %v1161 = vadd.f32 %v1153, %v1159
      %1162 = vadd.xlane.f32.xlu0 %v1160
      %v1163 = vpop.xlane.xlu0 %1162
      %1164 = vadd.xlane.f32.xlu0 %v1161
      %v1165 = vpop.xlane.xlu0 %1164
      %v1166 = vrcp.pop 128.0
      %v1167 = vmul.f32 %v1163, %v1166
      %v1168 = vmul.f32 %v1165, %v1166
      %v1169 = vsub.f32 %v1160, %v1167
      %v1170 = vsub.f32 %v1161, %v1168
      %v1171 = vmul.f32 %v1169, %v1169
      %v1172 = vmul.f32 %v1170, %v1170
      %1173 = vadd.xlane.f32.xlu0 %v1171
      %v1174 = vpop.xlane.xlu0 %1173
      %1175 = vadd.xlane.f32.xlu0 %v1172
      %v1176 = vpop.xlane.xlu0 %1175
      %v1177 = vmul.f32 %v1174, %v1166
      %v1178 = vmul.f32 %v1176, %v1166
      %v1179 = vadd.f32 %v1177, 1e-05
      %v1180 = vadd.f32 %v1178, 1e-05
      %v1181 = vrsqrt.pop %v1179
      %v1182 = vrsqrt.pop %v1180
      %v1183 = vmul.f32 %v1169, %v1181
      %v1184 = vmul.f32 %v1170, %v1182
      %v1185 = vld [vmem:[%s6] sm:$0x1]
      %v1187 = vlaneseq
      %v1188 = vshrl.u32 %v1187, 7
      %v1189 = vsub.s32 0, %v1188
      %v1190 = vrot.slane %v1185, %v1189
      %v1192 = vmul.f32 %v1183, %v1190
      %v1193 = vmul.f32 %v1184, %v1190
      %v1194 = vld [vmem:[%s7] sm:$0x1]
      %v1196 = vlaneseq
      %v1197 = vshrl.u32 %v1196, 7
      %v1198 = vsub.s32 0, %v1197
      %v1199 = vrot.slane %v1194, %v1198
      %v1201 = vadd.f32 %v1192, %v1199
      %v1202 = vadd.f32 %v1193, %v1199
      %v1203 = vpack.c.bf16 %v1202, %v1201
      %v1205 = vunpack.c.l.b16 %v1203
      %v1206 = vunpack.c.h.b16 %v1203
      %v1207 = vpack.c.b16 %v1205, %v1205
      %v1208 = vpack.c.b16 %v1206, %v1206
      %1211 = vst [vmem:[%s419] sm:$0xf] %v1207
      %1212 = vst [vmem:[%s419 + $0x4] sm:$0xf] %v1208
      %s1213 = smul.u32 2, %s24
      %p1214 = scmp.lt.s32.totalorder %s23, 1
      %s1215 = scalar_select %p1214, %s23, 1
      %p1216 = scmp.lt.s32.totalorder %s1213, 1
      %s1217 = scalar_select %p1216, %s1213, 1
      %s1218 = smul.addr %s1215, 2
      %s1219 = sadd.s32 %s1217, %s1218
      %s1220 = smul.addr %s1219, 4
      %s1221 = scalar_lea.vmem %s8, %s1220
      // Predicated region
      $region53: #{transformer_chatbot_forward.36} parent=51 // pred_check
        %p1222 = pneg %p243
      $region54: #{transformer_chatbot_forward.36} parent=51 // pred_check_branch
        %1224 = sbr.rel (%p1222) target = $region56
      $region55: #{transformer_chatbot_forward.36} parent=51 // pred_region
        %s1225 = smul.u32 2, %s24
      $region56: #{transformer_chatbot_forward.36} parent=51 // pred_fallthru
        _
    $region52: #{transformer_chatbot_forward.36} parent=5 // pred_fallthru
      _
    %p1226 = scmp.le.s32.totalorder 2, %s14
    // Predicated region
    $region57: #{transformer_chatbot_forward.36} parent=5 // pred_check
      %p1227 = pneg %p1226
    $region58: #{transformer_chatbot_forward.36} parent=5 // pred_check_branch
      %1229 = sbr.rel (%p1227) target = $region60
    $region59: #{transformer_chatbot_forward.36} parent=5 // pred_region
      %s1230 = ssub.s32 %s14, 2
      // Predicated region
      $region61: #{transformer_chatbot_forward.36} parent=59 // pred_check
        %p1231 = pneg %p249
      $region62: #{transformer_chatbot_forward.36} parent=59 // pred_check_branch
        %1233 = sbr.rel (%p1231) target = $region64
      $region63: #{transformer_chatbot_forward.36} parent=59 // pred_region
        %s1234 = smul.u32 2, %s26
        %p1235 = scmp.lt.s32.totalorder %s25, 1
        %s1236 = scalar_select %p1235, %s25, 1
        %p1237 = scmp.lt.s32.totalorder %s1234, 1
        %s1238 = scalar_select %p1237, %s1234, 1
        %s1239 = smul.addr %s1236, 2
        %s1240 = sadd.s32 %s1238, %s1239
        %s1241 = smul.addr %s1240, 4
        %s1242 = scalar_lea.vmem %s8, %s1241
      $region64: #{transformer_chatbot_forward.36} parent=59 // pred_fallthru
        _
    $region60: #{transformer_chatbot_forward.36} parent=5 // pred_fallthru
      _
  $region6: #{transformer_chatbot_forward.36} parent=0 // loop_footer
    %s18 = sadd.s32 1, %s14
  $region7: #{transformer_chatbot_forward.36} parent=0 // loop_footer_branch
    %13 = sbr.rel target = $region3
  $region8: #{transformer_chatbot_forward.36} parent=0 // loop_exit
    _

// kernel: transformer_chatbot_forward.28
$region0: #{transformer_chatbot_forward.28}
  #allocation0 [shape = 'u32[]', space=smem, size = 0x4, offset = 0x4, fixed_abs, tag = 'smem constant byte address 0x4 - core index']
  #allocation1 [shape = 'u32[144,128]{1,0:T(1,128)}', space=vmem, size = 0x12000, scoped, tag = 'internal scratch']
  #allocation2 [shape = 'f32[16,128]{1,0:T(8,128)}', space=vmem, size = 0x2000, scoped, tag = 'scratch operand']
  %s0 = inlined_call_operand.vmem [shape: bf16[2,4,16,32], index: 0, kind: input, shape index: {}]
  %s1 = inlined_call_operand.vmem [shape: bf16[2,4,16,32], index: 1, kind: input, shape index: {}]
  %s2 = inlined_call_operand.vmem [shape: bf16[2,4,16,32], index: 2, kind: input, shape index: {}]
  %s3 = inlined_call_operand.vmem [shape: bf16[128,128], index: 3, kind: input, shape index: {}]
  %s4 = inlined_call_operand.vmem [shape: f32[1,128], index: 4, kind: input, shape index: {}]
  %s5 = inlined_call_operand.vmem [shape: bf16[2,16,128], index: 5, kind: input, shape index: {}]
  %s6 = inlined_call_operand.vmem [shape: f32[1,128], index: 6, kind: input, shape index: {}]
  %s7 = inlined_call_operand.vmem [shape: f32[1,128], index: 7, kind: input, shape index: {}]
  %s8 = inlined_call_operand.vmem [shape: bf16[2,16,128], index: 8, kind: output, shape index: {}]
  %s9 = sld [smem:[#allocation0]]
  $region65: #{transformer_chatbot_forward.28} parent=0
    _
  %s11 = ssub.s32 1, %s9
  %s12 = scalar_select 0, %s11, %s9
  loop: start=0, step=1, limit=4
  $region2: #{transformer_chatbot_forward.28} parent=0 // loop_pre_header
    _
  $region3: #{transformer_chatbot_forward.28} parent=0 // loop_header
    %s14 = sphi 0, %s18
    %p15 = scmp.ge.s32.totalorder %s14, 4
    %s21 = sphi 0, %s33
    %s22 = sphi 0, %s29
    %s23 = sphi 0, %s21
    %s24 = sphi 0, %s22
    %s25 = sphi 0, %s23
    %s26 = sphi 0, %s24
    %s38 = sphi 0, %s40
    %s41 = sphi 0, %s38
    %s42 = sphi 0, %s41
    %s58 = sphi 0, %s42
    %s64 = sphi 0, %s66
    %s67 = sphi 0, %s64
    %s68 = sphi 0, %s67
    %s84 = sphi 0, %s68
    %s90 = sphi 0, %s92
    %s93 = sphi 0, %s90
    %s94 = sphi 0, %s93
    %s110 = sphi 0, %s94
    %s114 = sphi 0, %s114
    %s116 = sphi 0, %s114
    %s117 = sphi 0, %s116
    %s131 = sphi 0, %s117
    %s135 = sphi 0, %s135
    %s137 = sphi 0, %s135
    %s138 = sphi 0, %s137
    %s152 = sphi 0, %s138
    %s160 = sphi 0, %s162
    %s163 = sphi 0, %s160
    %s164 = sphi 0, %s163
    %s180 = sphi 0, %s164
    %s184 = sphi 0, %s184
    %s186 = sphi 0, %s184
    %s187 = sphi 0, %s186
    %s201 = sphi 0, %s187
    %s205 = sphi 0, %s205
    %s207 = sphi 0, %s205
    %s208 = sphi 0, %s207
    %s222 = sphi 0, %s208
    %s230 = sphi 0, %s232
    %s233 = sphi 0, %s230
    %s234 = sphi 0, %s233
    %s250 = sphi 0, %s234
  $region4: #{transformer_chatbot_forward.28} parent=0 // loop_header_branch
    %17 = sbr.rel (%p15) target = $region8
  $region5: #{transformer_chatbot_forward.28} parent=0 // loop_body
    %s19 = ssub.s32 %s14, 1
    %s20 = ssub.s32 %s14, 2
    %s27 = sadd.s32 1, %s22
    %p28 = scmp.ge.s32.totalorder %s27, 1
    %s29 = scalar_select %p28, 0, %s27
    %s30 = sadd.s32 1, %s21
    %s31 = scalar_select %p28, %s30, %s21
    %p32 = scmp.ge.s32.totalorder %s31, 2
    %s33 = scalar_select %p32, 0, %s31
    %s34 = ssub.s32 %s21, %s33
    %s35 = ssub.s32 %s22, %s29
    %s36 = sor.u32 %s34, %s35
    %p37 = scmp.eq.s32.totalorder %s36, 0
    %s39 = sadd.s32 %s38, 1
    %s40 = scalar_select %p37, %s38, %s39
    %p43 = pneg %p37
    %p44 = scmp.eq.s32.totalorder %s14, 1
    %p45 = por %p43, %p44
    %p46 = scmp.ne.s32.totalorder %s38, %s41
    %p47 = scmp.eq.s32.totalorder %s14, 0
    %p48 = por %p46, %p47
    %p49 = scmp.ne.s32.totalorder %s38, %s41
    %p50 = scmp.eq.s32.totalorder %s19, 1
    %p51 = por %p49, %p50
    %p52 = scmp.ne.s32.totalorder %s41, %s42
    %p53 = scmp.eq.s32.totalorder %s19, 0
    %p54 = por %p52, %p53
    %p55 = scmp.ne.s32.totalorder %s41, %s42
    %p56 = scmp.eq.s32.totalorder %s20, 1
    %p57 = por %p55, %p56
    %p59 = scmp.ne.s32.totalorder %s42, %s58
    %p60 = scmp.eq.s32.totalorder %s20, 0
    %p61 = por %p59, %p60
    %s62 = ssub.s32 %s21, %s33
    %p63 = scmp.eq.s32.totalorder %s62, 0
    %s65 = sadd.s32 %s64, 1
    %s66 = scalar_select %p63, %s64, %s65
    %p69 = pneg %p63
    %p70 = scmp.eq.s32.totalorder %s14, 1
    %p71 = por %p69, %p70
    %p72 = scmp.ne.s32.totalorder %s64, %s67
    %p73 = scmp.eq.s32.totalorder %s14, 0
    %p74 = por %p72, %p73
    %p75 = scmp.ne.s32.totalorder %s64, %s67
    %p76 = scmp.eq.s32.totalorder %s19, 1
    %p77 = por %p75, %p76
    %p78 = scmp.ne.s32.totalorder %s67, %s68
    %p79 = scmp.eq.s32.totalorder %s19, 0
    %p80 = por %p78, %p79
    %p81 = scmp.ne.s32.totalorder %s67, %s68
    %p82 = scmp.eq.s32.totalorder %s20, 1
    %p83 = por %p81, %p82
    %p85 = scmp.ne.s32.totalorder %s68, %s84
    %p86 = scmp.eq.s32.totalorder %s20, 0
    %p87 = por %p85, %p86
    %s88 = ssub.s32 %s21, %s33
    %p89 = scmp.eq.s32.totalorder %s88, 0
    %s91 = sadd.s32 %s90, 1
    %s92 = scalar_select %p89, %s90, %s91
    %p95 = pneg %p89
    %p96 = scmp.eq.s32.totalorder %s14, 1
    %p97 = por %p95, %p96
    %p98 = scmp.ne.s32.totalorder %s90, %s93
    %p99 = scmp.eq.s32.totalorder %s14, 0
    %p100 = por %p98, %p99
    %p101 = scmp.ne.s32.totalorder %s90, %s93
    %p102 = scmp.eq.s32.totalorder %s19, 1
    %p103 = por %p101, %p102
    %p104 = scmp.ne.s32.totalorder %s93, %s94
    %p105 = scmp.eq.s32.totalorder %s19, 0
    %p106 = por %p104, %p105
    %p107 = scmp.ne.s32.totalorder %s93, %s94
    %p108 = scmp.eq.s32.totalorder %s20, 1
    %p109 = por %p107, %p108
    %p111 = scmp.ne.s32.totalorder %s94, %s110
    %p112 = scmp.eq.s32.totalorder %s20, 0
    %p113 = por %p111, %p112
    %s115 = sadd.s32 %s114, 1
    %p118 = scmp.eq.s32.totalorder %s14, 1
    %p119 = scmp.ne.s32.totalorder %s114, %s116
    %p120 = scmp.eq.s32.totalorder %s14, 0
    %p121 = por %p119, %p120
    %p122 = scmp.ne.s32.totalorder %s114, %s116
    %p123 = scmp.eq.s32.totalorder %s19, 1
    %p124 = por %p122, %p123
    %p125 = scmp.ne.s32.totalorder %s116, %s117
    %p126 = scmp.eq.s32.totalorder %s19, 0
    %p127 = por %p125, %p126
    %p128 = scmp.ne.s32.totalorder %s116, %s117
    %p129 = scmp.eq.s32.totalorder %s20, 1
    %p130 = por %p128, %p129
    %p132 = scmp.ne.s32.totalorder %s117, %s131
    %p133 = scmp.eq.s32.totalorder %s20, 0
    %p134 = por %p132, %p133
    %s136 = sadd.s32 %s135, 1
    %p139 = scmp.eq.s32.totalorder %s14, 1
    %p140 = scmp.ne.s32.totalorder %s135, %s137
    %p141 = scmp.eq.s32.totalorder %s14, 0
    %p142 = por %p140, %p141
    %p143 = scmp.ne.s32.totalorder %s135, %s137
    %p144 = scmp.eq.s32.totalorder %s19, 1
    %p145 = por %p143, %p144
    %p146 = scmp.ne.s32.totalorder %s137, %s138
    %p147 = scmp.eq.s32.totalorder %s19, 0
    %p148 = por %p146, %p147
    %p149 = scmp.ne.s32.totalorder %s137, %s138
    %p150 = scmp.eq.s32.totalorder %s20, 1
    %p151 = por %p149, %p150
    %p153 = scmp.ne.s32.totalorder %s138, %s152
    %p154 = scmp.eq.s32.totalorder %s20, 0
    %p155 = por %p153, %p154
    %s156 = ssub.s32 %s21, %s33
    %s157 = ssub.s32 %s22, %s29
    %s158 = sor.u32 %s156, %s157
    %p159 = scmp.eq.s32.totalorder %s158, 0
    %s161 = sadd.s32 %s160, 1
    %s162 = scalar_select %p159, %s160, %s161
    %p165 = pneg %p159
    %p166 = scmp.eq.s32.totalorder %s14, 1
    %p167 = por %p165, %p166
    %p168 = scmp.ne.s32.totalorder %s160, %s163
    %p169 = scmp.eq.s32.totalorder %s14, 0
    %p170 = por %p168, %p169
    %p171 = scmp.ne.s32.totalorder %s160, %s163
    %p172 = scmp.eq.s32.totalorder %s19, 1
    %p173 = por %p171, %p172
    %p174 = scmp.ne.s32.totalorder %s163, %s164
    %p175 = scmp.eq.s32.totalorder %s19, 0
    %p176 = por %p174, %p175
    %p177 = scmp.ne.s32.totalorder %s163, %s164
    %p178 = scmp.eq.s32.totalorder %s20, 1
    %p179 = por %p177, %p178
    %p181 = scmp.ne.s32.totalorder %s164, %s180
    %p182 = scmp.eq.s32.totalorder %s20, 0
    %p183 = por %p181, %p182
    %s185 = sadd.s32 %s184, 1
    %p188 = scmp.eq.s32.totalorder %s14, 1
    %p189 = scmp.ne.s32.totalorder %s184, %s186
    %p190 = scmp.eq.s32.totalorder %s14, 0
    %p191 = por %p189, %p190
    %p192 = scmp.ne.s32.totalorder %s184, %s186
    %p193 = scmp.eq.s32.totalorder %s19, 1
    %p194 = por %p192, %p193
    %p195 = scmp.ne.s32.totalorder %s186, %s187
    %p196 = scmp.eq.s32.totalorder %s19, 0
    %p197 = por %p195, %p196
    %p198 = scmp.ne.s32.totalorder %s186, %s187
    %p199 = scmp.eq.s32.totalorder %s20, 1
    %p200 = por %p198, %p199
    %p202 = scmp.ne.s32.totalorder %s187, %s201
    %p203 = scmp.eq.s32.totalorder %s20, 0
    %p204 = por %p202, %p203
    %s206 = sadd.s32 %s205, 1
    %p209 = scmp.eq.s32.totalorder %s14, 1
    %p210 = scmp.ne.s32.totalorder %s205, %s207
    %p211 = scmp.eq.s32.totalorder %s14, 0
    %p212 = por %p210, %p211
    %p213 = scmp.ne.s32.totalorder %s205, %s207
    %p214 = scmp.eq.s32.totalorder %s19, 1
    %p215 = por %p213, %p214
    %p216 = scmp.ne.s32.totalorder %s207, %s208
    %p217 = scmp.eq.s32.totalorder %s19, 0
    %p218 = por %p216, %p217
    %p219 = scmp.ne.s32.totalorder %s207, %s208
    %p220 = scmp.eq.s32.totalorder %s20, 1
    %p221 = por %p219, %p220
    %p223 = scmp.ne.s32.totalorder %s208, %s222
    %p224 = scmp.eq.s32.totalorder %s20, 0
    %p225 = por %p223, %p224
    %s226 = ssub.s32 %s21, %s33
    %s227 = ssub.s32 %s22, %s29
    %s228 = sor.u32 %s226, %s227
    %p229 = scmp.eq.s32.totalorder %s228, 0
    %s231 = sadd.s32 %s230, 1
    %s232 = scalar_select %p229, %s230, %s231
    %p235 = pneg %p229
    %p236 = scmp.eq.s32.totalorder %s14, 1
    %p237 = por %p235, %p236
    %p238 = scmp.ne.s32.totalorder %s230, %s233
    %p239 = scmp.eq.s32.totalorder %s14, 0
    %p240 = por %p238, %p239
    %p241 = scmp.ne.s32.totalorder %s230, %s233
    %p242 = scmp.eq.s32.totalorder %s19, 1
    %p243 = por %p241, %p242
    %p244 = scmp.ne.s32.totalorder %s233, %s234
    %p245 = scmp.eq.s32.totalorder %s19, 0
    %p246 = por %p244, %p245
    %p247 = scmp.ne.s32.totalorder %s233, %s234
    %p248 = scmp.eq.s32.totalorder %s20, 1
    %p249 = por %p247, %p248
    %p251 = scmp.ne.s32.totalorder %s234, %s250
    %p252 = scmp.eq.s32.totalorder %s20, 0
    %p253 = por %p251, %p252
    %p254 = scmp.le.s32.totalorder 1, %s14
    %p255 = scmp.lt.s32.totalorder %s14, 3
    %p256 = pnand %p254, %p255
    %p257 = pneg %p256
    // Predicated region
    $region9: #{transformer_chatbot_forward.28} parent=5 // pred_check
      _
    $region10: #{transformer_chatbot_forward.28} parent=5 // pred_check_branch
      %259 = sbr.rel (%p256) target = $region12
    $region11: #{transformer_chatbot_forward.28} parent=5 // pred_region
      %s260 = ssub.s32 %s14, 1
      // Predicated region
      $region13: #{transformer_chatbot_forward.28} parent=11 // pred_check
        %p261 = pneg %p127
      $region14: #{transformer_chatbot_forward.28} parent=11 // pred_check_branch
        %263 = sbr.rel (%p261) target = $region16
      $region15: #{transformer_chatbot_forward.28} parent=11 // pred_region
        _
      $region16: #{transformer_chatbot_forward.28} parent=11 // pred_fallthru
        _
      // Predicated region
      $region17: #{transformer_chatbot_forward.28} parent=11 // pred_check
        %p264 = pneg %p148
      $region18: #{transformer_chatbot_forward.28} parent=11 // pred_check_branch
        %266 = sbr.rel (%p264) target = $region20
      $region19: #{transformer_chatbot_forward.28} parent=11 // pred_region
        _
      $region20: #{transformer_chatbot_forward.28} parent=11 // pred_fallthru
        _
      // Predicated region
      $region21: #{transformer_chatbot_forward.28} parent=11 // pred_check
        %p267 = pneg %p197
      $region22: #{transformer_chatbot_forward.28} parent=11 // pred_check_branch
        %269 = sbr.rel (%p267) target = $region24
      $region23: #{transformer_chatbot_forward.28} parent=11 // pred_region
        _
      $region24: #{transformer_chatbot_forward.28} parent=11 // pred_fallthru
        _
      // Predicated region
      $region25: #{transformer_chatbot_forward.28} parent=11 // pred_check
        %p270 = pneg %p218
      $region26: #{transformer_chatbot_forward.28} parent=11 // pred_check_branch
        %272 = sbr.rel (%p270) target = $region28
      $region27: #{transformer_chatbot_forward.28} parent=11 // pred_region
        _
      $region28: #{transformer_chatbot_forward.28} parent=11 // pred_fallthru
        _
    $region12: #{transformer_chatbot_forward.28} parent=5 // pred_fallthru
      _
    %p273 = scmp.lt.s32.totalorder %s14, 2
    // Predicated region
    $region29: #{transformer_chatbot_forward.28} parent=5 // pred_check
      %p274 = pneg %p273
    $region30: #{transformer_chatbot_forward.28} parent=5 // pred_check_branch
      %276 = sbr.rel (%p274) target = $region32
    $region31: #{transformer_chatbot_forward.28} parent=5 // pred_region
      // Predicated region
      $region33: #{transformer_chatbot_forward.28} parent=31 // pred_check
        %p277 = pneg %p48
      $region34: #{transformer_chatbot_forward.28} parent=31 // pred_check_branch
        %279 = sbr.rel (%p277) target = $region36
      $region35: #{transformer_chatbot_forward.28} parent=31 // pred_region
        %s280 = smul.u32 2, %s22
        %p281 = scmp.lt.s32.totalorder %s21, 1
        %s282 = scalar_select %p281, %s21, 1
        %p283 = scmp.lt.s32.totalorder %s280, 1
        %s284 = scalar_select %p283, %s280, 1
        %s285 = smul.addr %s282, 8
        %s286 = sadd.s32 %s284, %s285
        %s287 = smul.addr %s286, 4
        %s288 = scalar_lea.vmem %s0, %s287
        %s289 = smul.u32 2, %s22
      $region36: #{transformer_chatbot_forward.28} parent=31 // pred_fallthru
        _
      // Predicated region
      $region37: #{transformer_chatbot_forward.28} parent=31 // pred_check
        %p290 = pneg %p74
      $region38: #{transformer_chatbot_forward.28} parent=31 // pred_check_branch
        %292 = sbr.rel (%p290) target = $region40
      $region39: #{transformer_chatbot_forward.28} parent=31 // pred_region
        %p293 = scmp.lt.s32.totalorder %s21, 1
        %s294 = scalar_select %p293, %s21, 1
        %s295 = smul.addr %s294, 8
        %s296 = smul.addr %s295, 4
        %s297 = scalar_lea.vmem %s1, %s296
      $region40: #{transformer_chatbot_forward.28} parent=31 // pred_fallthru
        _
      // Predicated region
      $region41: #{transformer_chatbot_forward.28} parent=31 // pred_check
        %p298 = pneg %p100
      $region42: #{transformer_chatbot_forward.28} parent=31 // pred_check_branch
        %300 = sbr.rel (%p298) target = $region44
      $region43: #{transformer_chatbot_forward.28} parent=31 // pred_region
        %p301 = scmp.lt.s32.totalorder %s21, 1
        %s302 = scalar_select %p301, %s21, 1
        %s303 = smul.addr %s302, 8
        %s304 = smul.addr %s303, 4
        %s305 = scalar_lea.vmem %s2, %s304
      $region44: #{transformer_chatbot_forward.28} parent=31 // pred_fallthru
        _
      // Predicated region
      $region45: #{transformer_chatbot_forward.28} parent=31 // pred_check
        %p306 = pneg %p170
      $region46: #{transformer_chatbot_forward.28} parent=31 // pred_check_branch
        %308 = sbr.rel (%p306) target = $region48
      $region47: #{transformer_chatbot_forward.28} parent=31 // pred_region
        %s309 = smul.u32 2, %s22
        %p310 = scmp.lt.s32.totalorder %s21, 1
        %s311 = scalar_select %p310, %s21, 1
        %p312 = scmp.lt.s32.totalorder %s309, 1
        %s313 = scalar_select %p312, %s309, 1
        %s314 = smul.addr %s311, 2
        %s315 = sadd.s32 %s313, %s314
        %s316 = smul.addr %s315, 4
        %s317 = scalar_lea.vmem %s5, %s316
        %s318 = smul.u32 2, %s22
      $region48: #{transformer_chatbot_forward.28} parent=31 // pred_fallthru
        _
    $region32: #{transformer_chatbot_forward.28} parent=5 // pred_fallthru
      _
    %p319 = scmp.le.s32.totalorder 1, %s14
    %p320 = scmp.lt.s32.totalorder %s14, 3
    %p321 = pnand %p319, %p320
    %p322 = pneg %p321
    // Predicated region
    $region49: #{transformer_chatbot_forward.28} parent=5 // pred_check
      _
    $region50: #{transformer_chatbot_forward.28} parent=5 // pred_check_branch
      %324 = sbr.rel (%p321) target = $region52
    $region51: #{transformer_chatbot_forward.28} parent=5 // pred_region
      %s325 = ssub.s32 %s14, 1
      %s326 = smul.u32 2, %s24
      %p327 = scmp.lt.s32.totalorder %s23, 1
      %s328 = scalar_select %p327, %s23, 1
      %p329 = scmp.lt.s32.totalorder %s326, 1
      %s330 = scalar_select %p329, %s326, 1
      %s331 = smul.addr %s328, 8
      %s332 = sadd.s32 %s330, %s331
      %s333 = smul.addr %s332, 4
      %s334 = scalar_lea.vmem %s0, %s333
      %p335 = pneg %p54
      %p336 = pneg %p51
      %p337 = scmp.lt.s32.totalorder %s23, 1
      %s338 = scalar_select %p337, %s23, 1
      %s339 = smul.addr %s338, 8
      %s340 = smul.addr %s339, 4
      %s341 = scalar_lea.vmem %s1, %s340
      %p342 = pneg %p80
      %p343 = pneg %p77
      %p344 = scmp.lt.s32.totalorder %s23, 1
      %s345 = scalar_select %p344, %s23, 1
      %s346 = smul.addr %s345, 8
      %s347 = smul.addr %s346, 4
      %s348 = scalar_lea.vmem %s2, %s347
      %p349 = pneg %p106
      %p350 = pneg %p103
      %p351 = pneg %p127
      %p352 = pneg %p124
      %p353 = pneg %p148
      %p354 = pneg %p145
      %s355 = smul.u32 2, %s24
      %p356 = scmp.lt.s32.totalorder %s23, 1
      %s357 = scalar_select %p356, %s23, 1
      %p358 = scmp.lt.s32.totalorder %s355, 1
      %s359 = scalar_select %p358, %s355, 1
      %s360 = smul.addr %s357, 2
      %s361 = sadd.s32 %s359, %s360
      %s362 = smul.addr %s361, 4
      %s363 = scalar_lea.vmem %s5, %s362
      %p364 = pneg %p176
      %p365 = pneg %p173
      %p366 = pneg %p197
      %p367 = pneg %p194
      %p368 = pneg %p218
      %p369 = pneg %p215
      %p370 = pneg %p246
      %p371 = pneg %p243
      %s372 = smul.u32 2, %s24
      %p373 = scmp.lt.s32.totalorder %s23, 1
      %s374 = scalar_select %p373, %s23, 1
      %p375 = scmp.lt.s32.totalorder %s372, 1
      %s376 = scalar_select %p375, %s372, 1
      %s377 = smul.addr %s374, 2
      %s378 = sadd.s32 %s376, %s377
      %s379 = smul.addr %s378, 4
      %s380 = scalar_lea.vmem %s8, %s379
      %s381 = smul.u32 2, %s24
      %p382 = scmp.lt.s32.totalorder %s23, 1
      %s383 = scalar_select %p382, %s23, 1
      %p384 = scmp.lt.s32.totalorder %s381, 1
      %s385 = scalar_select %p384, %s381, 1
      %s386 = smul.addr %s383, 8
      %s387 = sadd.s32 %s385, %s386
      %s388 = smul.addr %s387, 4
      %s389 = scalar_lea.vmem %s0, %s388
      %s390 = smul.u32 2, %s24
      %p391 = scmp.lt.s32.totalorder %s23, 1
      %s392 = scalar_select %p391, %s23, 1
      %s393 = smul.addr %s392, 8
      %s394 = smul.addr %s393, 4
      %s395 = scalar_lea.vmem %s1, %s394
      %p396 = scmp.lt.s32.totalorder %s23, 1
      %s397 = scalar_select %p396, %s23, 1
      %s398 = smul.addr %s397, 8
      %s399 = smul.addr %s398, 4
      %s400 = scalar_lea.vmem %s2, %s399
      %s401 = smul.u32 2, %s24
      %p402 = scmp.lt.s32.totalorder %s23, 1
      %s403 = scalar_select %p402, %s23, 1
      %p404 = scmp.lt.s32.totalorder %s401, 1
      %s405 = scalar_select %p404, %s401, 1
      %s406 = smul.addr %s403, 2
      %s407 = sadd.s32 %s405, %s406
      %s408 = smul.addr %s407, 4
      %s409 = scalar_lea.vmem %s5, %s408
      %s410 = smul.u32 2, %s24
      %s411 = smul.u32 2, %s24
      %p412 = scmp.lt.s32.totalorder %s23, 1
      %s413 = scalar_select %p412, %s23, 1
      %p414 = scmp.lt.s32.totalorder %s411, 1
      %s415 = scalar_select %p414, %s411, 1
      %s416 = smul.addr %s413, 2
      %s417 = sadd.s32 %s415, %s416
      %s418 = smul.addr %s417, 4
      %s419 = scalar_lea.vmem %s8, %s418
      %s420 = smul.u32 2, %s24
      %v422 = vld [vmem:[%s389] sm:$0xf]
      %v423 = vld [vmem:[%s389 + $0x4] sm:$0xf]
      %v424 = vld [vmem:[%s395] sm:$0xf]
      %v425 = vld [vmem:[%s395 + $0x4] sm:$0xf]
      %v426 = vld [vmem:[%s400] sm:$0xf]
      %v427 = vld [vmem:[%s400 + $0x4] sm:$0xf]
      %v430 = vunpack.c.l.b16 %v422
      %v431 = vunpack.c.l.b16 %v423
      %v432 = vpack.c.b16 %v431, %v430
      %v435 = vunpack.c.l.b16 %v424
      %v436 = vunpack.c.l.b16 %v425
      %v437 = vpack.c.b16 %v436, %v435
      %vm438 = vcmask 261120
      %v440 = vsel %vm438, %v432, 0
      %v443 = vsel %vm438, %v437, 0
      %445 = vmatprep.subr.bf16.mxu0 0
      %446 = vmatpush1.bf16.xpose.msra.mxu0 %v443
      %447 = vmatprep.subr.bf16.mxu0 0
      %448 = vmatpush1.bf16.xpose.msra.mxu0 0
      %449 = vmatprep.subr.bf16.mxu0 0
      %450 = vmatpush1.bf16.xpose.msra.mxu0 0
      %451 = vmatprep.subr.bf16.mxu0 0
      %452 = vmatpush1.bf16.xpose.msra.mxu0 0
      %453 = vmatprep.subr.bf16.mxu0 0
      %454 = vmatpush1.bf16.xpose.msra.mxu0 0
      %455 = vmatprep.subr.bf16.mxu0 0
      %456 = vmatpush1.bf16.xpose.msra.mxu0 0
      %457 = vmatprep.subr.bf16.mxu0 0
      %458 = vmatpush1.bf16.xpose.msra.mxu0 0
      %459 = vmatprep.subr.bf16.mxu0 0
      %460 = vmatpush1.bf16.xpose.msra.mxu0 0
      %461 = vmatprep.subr.bf16.mxu0 0
      %462 = vmatpush1.bf16.xpose.msra.mxu0 0
      %463 = vmatprep.subr.bf16.mxu0 0
      %464 = vmatpush1.bf16.xpose.msra.mxu0 0
      %465 = vmatprep.subr.bf16.mxu0 0
      %466 = vmatpush1.bf16.xpose.msra.mxu0 0
      %467 = vmatprep.subr.bf16.mxu0 0
      %468 = vmatpush1.bf16.xpose.msra.mxu0 0
      %469 = vmatprep.subr.bf16.mxu0 0
      %470 = vmatpush1.bf16.xpose.msra.mxu0 0
      %471 = vmatprep.subr.bf16.mxu0 0
      %472 = vmatpush1.bf16.xpose.msra.mxu0 0
      %473 = vmatprep.subr.bf16.mxu0 0
      %474 = vmatpush1.bf16.xpose.msra.mxu0 0
      %475 = vmatprep.subr.bf16.mxu0 0
      %476 = vmatpush1.bf16.xpose.msra.mxu0 0
      %477 = vmatprep.mubr.bf16.mxu0 0
      %478 = vmatmul.mubr.bf16.gmra.mrb[0].mxu0 %v440
      %v479 = vpop.f32.mrb[0].mxu0
      %v480 = vadd.f32 0.0, %v479
      %v481 = vpop.f32.mrb[0].mxu0
      %v482 = vpop.f32.mrb[0].mxu0
      %v483 = vadd.f32 0.0, %v482
      %v484 = vpop.f32.mrb[0].mxu0
      %485 = vdwg.mxu0
      %v486 = vmul.f32 %v480, 0.17677669
      %v487 = vmul.f32 %v483, 0.17677669
      %vm488 = vcmask 130048
      %v489 = vsel %vm488, %v486, -inf
      %490 = vmax.xlane.f32.xlu0 %v489
      %v491 = vpop.xlane.xlu0 %490
      %v492 = vsel %vm488, %v487, -inf
      %493 = vmax.xlane.f32.xlu0 %v492
      %v494 = vpop.xlane.xlu0 %493
      %v495 = vsub.f32 %v486, %v491
      %v496 = vsub.f32 %v487, %v494
      %v497 = vmul.f32 %v495, 1.442695
      %v498 = vpow.pop %v497
      %v499 = vmul.f32 %v496, 1.442695
      %v500 = vpow.pop %v499
      %v501 = vsel %vm488, %v498, 0.0
      %502 = vadd.xlane.f32.xlu0 %v501
      %v503 = vpop.xlane.xlu0 %502
      %v504 = vsel %vm488, %v500, 0.0
      %505 = vadd.xlane.f32.xlu0 %v504
      %v506 = vpop.xlane.xlu0 %505
      %v507 = vrcp.pop %v503
      %v508 = vrcp.pop %v506
      %v509 = vmul.f32 %v498, %v507
      %v510 = vmul.f32 %v500, %v508
      %v511 = vpack.c.bf16 %v510, %v509
      %v514 = vunpack.c.l.b16 %v426
      %v515 = vunpack.c.l.b16 %v427
      %v516 = vpack.c.b16 %v515, %v514
      %v519 = vsel %vm488, %v511, 0
      %521 = vmatprep.subr.bf16.mxu0 0
      %522 = vmatpush1.bf16.msra.mxu0 %v516
      %523 = vmatprep.subr.bf16.mxu0 0
      %524 = vmatpush1.bf16.msra.mxu0 0
      %525 = vmatprep.subr.bf16.mxu0 0
      %526 = vmatpush1.bf16.msra.mxu0 0
      %527 = vmatprep.subr.bf16.mxu0 0
      %528 = vmatpush1.bf16.msra.mxu0 0
      %529 = vmatprep.subr.bf16.mxu0 0
      %530 = vmatpush1.bf16.msra.mxu0 0
      %531 = vmatprep.subr.bf16.mxu0 0
      %532 = vmatpush1.bf16.msra.mxu0 0
      %533 = vmatprep.subr.bf16.mxu0 0
      %534 = vmatpush1.bf16.msra.mxu0 0
      %535 = vmatprep.subr.bf16.mxu0 0
      %536 = vmatpush1.bf16.msra.mxu0 0
      %537 = vmatprep.subr.bf16.mxu0 0
      %538 = vmatpush1.bf16.msra.mxu0 0
      %539 = vmatprep.subr.bf16.mxu0 0
      %540 = vmatpush1.bf16.msra.mxu0 0
      %541 = vmatprep.subr.bf16.mxu0 0
      %542 = vmatpush1.bf16.msra.mxu0 0
      %543 = vmatprep.subr.bf16.mxu0 0
      %544 = vmatpush1.bf16.msra.mxu0 0
      %545 = vmatprep.subr.bf16.mxu0 0
      %546 = vmatpush1.bf16.msra.mxu0 0
      %547 = vmatprep.subr.bf16.mxu0 0
      %548 = vmatpush1.bf16.msra.mxu0 0
      %549 = vmatprep.subr.bf16.mxu0 0
      %550 = vmatpush1.bf16.msra.mxu0 0
      %551 = vmatprep.subr.bf16.mxu0 0
      %552 = vmatpush1.bf16.msra.mxu0 0
      %553 = vmatprep.mubr.bf16.mxu0 0
      %554 = vmatmul.mubr.bf16.gmra.mrb[0].mxu0 %v519
      %v555 = vpop.f32.mrb[0].mxu0
      %v556 = vadd.f32 0.0, %v555
      %v557 = vpop.f32.mrb[0].mxu0
      %v558 = vpop.f32.mrb[0].mxu0
      %v559 = vadd.f32 0.0, %v558
      %v560 = vpop.f32.mrb[0].mxu0
      %561 = vdwg.mxu0
      %562 = vst.msk [vmem:[#allocation2] sm:$0xff] %vm438, %v556
      %563 = vst.msk [vmem:[#allocation2 + $0x8] sm:$0xff] %vm438, %v559
      %s564 = scalar_lea.vmem %s389, 8
      %v565 = vld [vmem:[%s564] sm:$0xf]
      %v566 = vld [vmem:[%s564 + $0x4] sm:$0xf]
      %s567 = scalar_lea.vmem %s395, 8
      %v568 = vld [vmem:[%s567] sm:$0xf]
      %v569 = vld [vmem:[%s567 + $0x4] sm:$0xf]
      %s570 = scalar_lea.vmem %s400, 8
      %v571 = vld [vmem:[%s570] sm:$0xf]
      %v572 = vld [vmem:[%s570 + $0x4] sm:$0xf]
      %v575 = vunpack.c.l.b16 %v565
      %v576 = vunpack.c.l.b16 %v566
      %v577 = vpack.c.b16 %v576, %v575
      %v580 = vunpack.c.l.b16 %v568
      %v581 = vunpack.c.l.b16 %v569
      %v582 = vpack.c.b16 %v581, %v580
      %v584 = vsel %vm438, %v577, 0
      %v587 = vsel %vm438, %v582, 0
      %589 = vmatprep.subr.bf16.mxu0 0
      %590 = vmatpush1.bf16.xpose.msra.mxu0 %v587
      %591 = vmatprep.subr.bf16.mxu0 0
      %592 = vmatpush1.bf16.xpose.msra.mxu0 0
      %593 = vmatprep.subr.bf16.mxu0 0
      %594 = vmatpush1.bf16.xpose.msra.mxu0 0
      %595 = vmatprep.subr.bf16.mxu0 0
      %596 = vmatpush1.bf16.xpose.msra.mxu0 0
      %597 = vmatprep.subr.bf16.mxu0 0
      %598 = vmatpush1.bf16.xpose.msra.mxu0 0
      %599 = vmatprep.subr.bf16.mxu0 0
      %600 = vmatpush1.bf16.xpose.msra.mxu0 0
      %601 = vmatprep.subr.bf16.mxu0 0
      %602 = vmatpush1.bf16.xpose.msra.mxu0 0
      %603 = vmatprep.subr.bf16.mxu0 0
      %604 = vmatpush1.bf16.xpose.msra.mxu0 0
      %605 = vmatprep.subr.bf16.mxu0 0
      %606 = vmatpush1.bf16.xpose.msra.mxu0 0
      %607 = vmatprep.subr.bf16.mxu0 0
      %608 = vmatpush1.bf16.xpose.msra.mxu0 0
      %609 = vmatprep.subr.bf16.mxu0 0
      %610 = vmatpush1.bf16.xpose.msra.mxu0 0
      %611 = vmatprep.subr.bf16.mxu0 0
      %612 = vmatpush1.bf16.xpose.msra.mxu0 0
      %613 = vmatprep.subr.bf16.mxu0 0
      %614 = vmatpush1.bf16.xpose.msra.mxu0 0
      %615 = vmatprep.subr.bf16.mxu0 0
      %616 = vmatpush1.bf16.xpose.msra.mxu0 0
      %617 = vmatprep.subr.bf16.mxu0 0
      %618 = vmatpush1.bf16.xpose.msra.mxu0 0
      %619 = vmatprep.subr.bf16.mxu0 0
      %620 = vmatpush1.bf16.xpose.msra.mxu0 0
      %621 = vmatprep.mubr.bf16.mxu0 0
      %622 = vmatmul.mubr.bf16.gmra.mrb[0].mxu0 %v584
      %v623 = vpop.f32.mrb[0].mxu0
      %v624 = vadd.f32 0.0, %v623
      %v625 = vpop.f32.mrb[0].mxu0
      %v626 = vpop.f32.mrb[0].mxu0
      %v627 = vadd.f32 0.0, %v626
      %v628 = vpop.f32.mrb[0].mxu0
      %629 = vdwg.mxu0
      %v630 = vmul.f32 %v624, 0.17677669
      %v631 = vmul.f32 %v627, 0.17677669
      %v632 = vsel %vm488, %v630, -inf
      %633 = vmax.xlane.f32.xlu0 %v632
      %v634 = vpop.xlane.xlu0 %633
      %v635 = vsel %vm488, %v631, -inf
      %636 = vmax.xlane.f32.xlu0 %v635
      %v637 = vpop.xlane.xlu0 %636
      %v638 = vsub.f32 %v630, %v634
      %v639 = vsub.f32 %v631, %v637
      %v640 = vmul.f32 %v638, 1.442695
      %v641 = vpow.pop %v640
      %v642 = vmul.f32 %v639, 1.442695
      %v643 = vpow.pop %v642
      %v644 = vsel %vm488, %v641, 0.0
      %645 = vadd.xlane.f32.xlu0 %v644
      %v646 = vpop.xlane.xlu0 %645
      %v647 = vsel %vm488, %v643, 0.0
      %648 = vadd.xlane.f32.xlu0 %v647
      %v649 = vpop.xlane.xlu0 %648
      %v650 = vrcp.pop %v646
      %v651 = vrcp.pop %v649
      %v652 = vmul.f32 %v641, %v650
      %v653 = vmul.f32 %v643, %v651
      %v654 = vpack.c.bf16 %v653, %v652
      %v657 = vunpack.c.l.b16 %v571
      %v658 = vunpack.c.l.b16 %v572
      %v659 = vpack.c.b16 %v658, %v657
      %v662 = vsel %vm488, %v654, 0
      %664 = vmatprep.subr.bf16.mxu0 0
      %665 = vmatpush1.bf16.msra.mxu0 %v659
      %666 = vmatprep.subr.bf16.mxu0 0
      %667 = vmatpush1.bf16.msra.mxu0 0
      %668 = vmatprep.subr.bf16.mxu0 0
      %669 = vmatpush1.bf16.msra.mxu0 0
      %670 = vmatprep.subr.bf16.mxu0 0
      %671 = vmatpush1.bf16.msra.mxu0 0
      %672 = vmatprep.subr.bf16.mxu0 0
      %673 = vmatpush1.bf16.msra.mxu0 0
      %674 = vmatprep.subr.bf16.mxu0 0
      %675 = vmatpush1.bf16.msra.mxu0 0
      %676 = vmatprep.subr.bf16.mxu0 0
      %677 = vmatpush1.bf16.msra.mxu0 0
      %678 = vmatprep.subr.bf16.mxu0 0
      %679 = vmatpush1.bf16.msra.mxu0 0
      %680 = vmatprep.subr.bf16.mxu0 0
      %681 = vmatpush1.bf16.msra.mxu0 0
      %682 = vmatprep.subr.bf16.mxu0 0
      %683 = vmatpush1.bf16.msra.mxu0 0
      %684 = vmatprep.subr.bf16.mxu0 0
      %685 = vmatpush1.bf16.msra.mxu0 0
      %686 = vmatprep.subr.bf16.mxu0 0
      %687 = vmatpush1.bf16.msra.mxu0 0
      %688 = vmatprep.subr.bf16.mxu0 0
      %689 = vmatpush1.bf16.msra.mxu0 0
      %690 = vmatprep.subr.bf16.mxu0 0
      %691 = vmatpush1.bf16.msra.mxu0 0
      %692 = vmatprep.subr.bf16.mxu0 0
      %693 = vmatpush1.bf16.msra.mxu0 0
      %694 = vmatprep.subr.bf16.mxu0 0
      %695 = vmatpush1.bf16.msra.mxu0 0
      %696 = vmatprep.mubr.bf16.mxu0 0
      %697 = vmatmul.mubr.bf16.gmra.mrb[0].mxu0 %v662
      %v698 = vpop.f32.mrb[0].mxu0
      %v699 = vadd.f32 0.0, %v698
      %v700 = vpop.f32.mrb[0].mxu0
      %v701 = vpop.f32.mrb[0].mxu0
      %v702 = vadd.f32 0.0, %v701
      %v703 = vpop.f32.mrb[0].mxu0
      %704 = vdwg.mxu0
      %707 = vrot.lane.b32.xlu0 %v699, 32
      %v708 = vpop.permute.xlu0 %707
      %709 = vrot.lane.b32.xlu0 %v702, 32
      %v710 = vpop.permute.xlu0 %709
      %vm713 = vcmask 523520
      %714 = vst.msk [vmem:[#allocation2] sm:$0xff] %vm713, %v708
      %715 = vst.msk [vmem:[#allocation2 + $0x8] sm:$0xff] %vm713, %v710
      %s716 = scalar_lea.vmem %s389, 16
      %v717 = vld [vmem:[%s716] sm:$0xf]
      %v718 = vld [vmem:[%s716 + $0x4] sm:$0xf]
      %s719 = scalar_lea.vmem %s395, 16
      %v720 = vld [vmem:[%s719] sm:$0xf]
      %v721 = vld [vmem:[%s719 + $0x4] sm:$0xf]
      %s722 = scalar_lea.vmem %s400, 16
      %v723 = vld [vmem:[%s722] sm:$0xf]
      %v724 = vld [vmem:[%s722 + $0x4] sm:$0xf]
      %v727 = vunpack.c.l.b16 %v717
      %v728 = vunpack.c.l.b16 %v718
      %v729 = vpack.c.b16 %v728, %v727
      %v732 = vunpack.c.l.b16 %v720
      %v733 = vunpack.c.l.b16 %v721
      %v734 = vpack.c.b16 %v733, %v732
      %v736 = vsel %vm438, %v729, 0
      %v739 = vsel %vm438, %v734, 0
      %741 = vmatprep.subr.bf16.mxu0 0
      %742 = vmatpush1.bf16.xpose.msra.mxu0 %v739
      %743 = vmatprep.subr.bf16.mxu0 0
      %744 = vmatpush1.bf16.xpose.msra.mxu0 0
      %745 = vmatprep.subr.bf16.mxu0 0
      %746 = vmatpush1.bf16.xpose.msra.mxu0 0
      %747 = vmatprep.subr.bf16.mxu0 0
      %748 = vmatpush1.bf16.xpose.msra.mxu0 0
      %749 = vmatprep.subr.bf16.mxu0 0
      %750 = vmatpush1.bf16.xpose.msra.mxu0 0
      %751 = vmatprep.subr.bf16.mxu0 0
      %752 = vmatpush1.bf16.xpose.msra.mxu0 0
      %753 = vmatprep.subr.bf16.mxu0 0
      %754 = vmatpush1.bf16.xpose.msra.mxu0 0
      %755 = vmatprep.subr.bf16.mxu0 0
      %756 = vmatpush1.bf16.xpose.msra.mxu0 0
      %757 = vmatprep.subr.bf16.mxu0 0
      %758 = vmatpush1.bf16.xpose.msra.mxu0 0
      %759 = vmatprep.subr.bf16.mxu0 0
      %760 = vmatpush1.bf16.xpose.msra.mxu0 0
      %761 = vmatprep.subr.bf16.mxu0 0
      %762 = vmatpush1.bf16.xpose.msra.mxu0 0
      %763 = vmatprep.subr.bf16.mxu0 0
      %764 = vmatpush1.bf16.xpose.msra.mxu0 0
      %765 = vmatprep.subr.bf16.mxu0 0
      %766 = vmatpush1.bf16.xpose.msra.mxu0 0
      %767 = vmatprep.subr.bf16.mxu0 0
      %768 = vmatpush1.bf16.xpose.msra.mxu0 0
      %769 = vmatprep.subr.bf16.mxu0 0
      %770 = vmatpush1.bf16.xpose.msra.mxu0 0
      %771 = vmatprep.subr.bf16.mxu0 0
      %772 = vmatpush1.bf16.xpose.msra.mxu0 0
      %773 = vmatprep.mubr.bf16.mxu0 0
      %774 = vmatmul.mubr.bf16.gmra.mrb[0].mxu0 %v736
      %v775 = vpop.f32.mrb[0].mxu0
      %v776 = vadd.f32 0.0, %v775
      %v777 = vpop.f32.mrb[0].mxu0
      %v778 = vpop.f32.mrb[0].mxu0
      %v779 = vadd.f32 0.0, %v778
      %v780 = vpop.f32.mrb[0].mxu0
      %781 = vdwg.mxu0
      %v782 = vmul.f32 %v776, 0.17677669
      %v783 = vmul.f32 %v779, 0.17677669
      %v784 = vsel %vm488, %v782, -inf
      %785 = vmax.xlane.f32.xlu0 %v784
      %v786 = vpop.xlane.xlu0 %785
      %v787 = vsel %vm488, %v783, -inf
      %788 = vmax.xlane.f32.xlu0 %v787
      %v789 = vpop.xlane.xlu0 %788
      %v790 = vsub.f32 %v782, %v786
      %v791 = vsub.f32 %v783, %v789
      %v792 = vmul.f32 %v790, 1.442695
      %v793 = vpow.pop %v792
      %v794 = vmul.f32 %v791, 1.442695
      %v795 = vpow.pop %v794
      %v796 = vsel %vm488, %v793, 0.0
      %797 = vadd.xlane.f32.xlu0 %v796
      %v798 = vpop.xlane.xlu0 %797
      %v799 = vsel %vm488, %v795, 0.0
      %800 = vadd.xlane.f32.xlu0 %v799
      %v801 = vpop.xlane.xlu0 %800
      %v802 = vrcp.pop %v798
      %v803 = vrcp.pop %v801
      %v804 = vmul.f32 %v793, %v802
      %v805 = vmul.f32 %v795, %v803
      %v806 = vpack.c.bf16 %v805, %v804
      %v809 = vunpack.c.l.b16 %v723
      %v810 = vunpack.c.l.b16 %v724
      %v811 = vpack.c.b16 %v810, %v809
      %v814 = vsel %vm488, %v806, 0
      %816 = vmatprep.subr.bf16.mxu0 0
      %817 = vmatpush1.bf16.msra.mxu0 %v811
      %818 = vmatprep.subr.bf16.mxu0 0
      %819 = vmatpush1.bf16.msra.mxu0 0
      %820 = vmatprep.subr.bf16.mxu0 0
      %821 = vmatpush1.bf16.msra.mxu0 0
      %822 = vmatprep.subr.bf16.mxu0 0
      %823 = vmatpush1.bf16.msra.mxu0 0
      %824 = vmatprep.subr.bf16.mxu0 0
      %825 = vmatpush1.bf16.msra.mxu0 0
      %826 = vmatprep.subr.bf16.mxu0 0
      %827 = vmatpush1.bf16.msra.mxu0 0
      %828 = vmatprep.subr.bf16.mxu0 0
      %829 = vmatpush1.bf16.msra.mxu0 0
      %830 = vmatprep.subr.bf16.mxu0 0
      %831 = vmatpush1.bf16.msra.mxu0 0
      %832 = vmatprep.subr.bf16.mxu0 0
      %833 = vmatpush1.bf16.msra.mxu0 0
      %834 = vmatprep.subr.bf16.mxu0 0
      %835 = vmatpush1.bf16.msra.mxu0 0
      %836 = vmatprep.subr.bf16.mxu0 0
      %837 = vmatpush1.bf16.msra.mxu0 0
      %838 = vmatprep.subr.bf16.mxu0 0
      %839 = vmatpush1.bf16.msra.mxu0 0
      %840 = vmatprep.subr.bf16.mxu0 0
      %841 = vmatpush1.bf16.msra.mxu0 0
      %842 = vmatprep.subr.bf16.mxu0 0
      %843 = vmatpush1.bf16.msra.mxu0 0
      %844 = vmatprep.subr.bf16.mxu0 0
      %845 = vmatpush1.bf16.msra.mxu0 0
      %846 = vmatprep.subr.bf16.mxu0 0
      %847 = vmatpush1.bf16.msra.mxu0 0
      %848 = vmatprep.mubr.bf16.mxu0 0
      %849 = vmatmul.mubr.bf16.gmra.mrb[0].mxu0 %v814
      %v850 = vpop.f32.mrb[0].mxu0
      %v851 = vadd.f32 0.0, %v850
      %v852 = vpop.f32.mrb[0].mxu0
      %v853 = vpop.f32.mrb[0].mxu0
      %v854 = vadd.f32 0.0, %v853
      %v855 = vpop.f32.mrb[0].mxu0
      %856 = vdwg.mxu0
      %859 = vrot.lane.b32.xlu0 %v851, 64
      %v860 = vpop.permute.xlu0 %859
      %861 = vrot.lane.b32.xlu0 %v854, 64
      %v862 = vpop.permute.xlu0 %861
      %vm865 = vcmask 785920
      %866 = vst.msk [vmem:[#allocation2] sm:$0xff] %vm865, %v860
      %867 = vst.msk [vmem:[#allocation2 + $0x8] sm:$0xff] %vm865, %v862
      %s868 = scalar_lea.vmem %s389, 24
      %v869 = vld [vmem:[%s868] sm:$0xf]
      %v870 = vld [vmem:[%s868 + $0x4] sm:$0xf]
      %s871 = scalar_lea.vmem %s395, 24
      %v872 = vld [vmem:[%s871] sm:$0xf]
      %v873 = vld [vmem:[%s871 + $0x4] sm:$0xf]
      %s874 = scalar_lea.vmem %s400, 24
      %v875 = vld [vmem:[%s874] sm:$0xf]
      %v876 = vld [vmem:[%s874 + $0x4] sm:$0xf]
      %v879 = vunpack.c.l.b16 %v869
      %v880 = vunpack.c.l.b16 %v870
      %v881 = vpack.c.b16 %v880, %v879
      %v884 = vunpack.c.l.b16 %v872
      %v885 = vunpack.c.l.b16 %v873
      %v886 = vpack.c.b16 %v885, %v884
      %v888 = vsel %vm438, %v881, 0
      %v891 = vsel %vm438, %v886, 0
      %893 = vmatprep.subr.bf16.mxu0 0
      %894 = vmatpush1.bf16.xpose.msra.mxu0 %v891
      %895 = vmatprep.subr.bf16.mxu0 0
      %896 = vmatpush1.bf16.xpose.msra.mxu0 0
      %897 = vmatprep.subr.bf16.mxu0 0
      %898 = vmatpush1.bf16.xpose.msra.mxu0 0
      %899 = vmatprep.subr.bf16.mxu0 0
      %900 = vmatpush1.bf16.xpose.msra.mxu0 0
      %901 = vmatprep.subr.bf16.mxu0 0
      %902 = vmatpush1.bf16.xpose.msra.mxu0 0
      %903 = vmatprep.subr.bf16.mxu0 0
      %904 = vmatpush1.bf16.xpose.msra.mxu0 0
      %905 = vmatprep.subr.bf16.mxu0 0
      %906 = vmatpush1.bf16.xpose.msra.mxu0 0
      %907 = vmatprep.subr.bf16.mxu0 0
      %908 = vmatpush1.bf16.xpose.msra.mxu0 0
      %909 = vmatprep.subr.bf16.mxu0 0
      %910 = vmatpush1.bf16.xpose.msra.mxu0 0
      %911 = vmatprep.subr.bf16.mxu0 0
      %912 = vmatpush1.bf16.xpose.msra.mxu0 0
      %913 = vmatprep.subr.bf16.mxu0 0
      %914 = vmatpush1.bf16.xpose.msra.mxu0 0
      %915 = vmatprep.subr.bf16.mxu0 0
      %916 = vmatpush1.bf16.xpose.msra.mxu0 0
      %917 = vmatprep.subr.bf16.mxu0 0
      %918 = vmatpush1.bf16.xpose.msra.mxu0 0
      %919 = vmatprep.subr.bf16.mxu0 0
      %920 = vmatpush1.bf16.xpose.msra.mxu0 0
      %921 = vmatprep.subr.bf16.mxu0 0
      %922 = vmatpush1.bf16.xpose.msra.mxu0 0
      %923 = vmatprep.subr.bf16.mxu0 0
      %924 = vmatpush1.bf16.xpose.msra.mxu0 0
      %925 = vmatprep.mubr.bf16.mxu0 0
      %926 = vmatmul.mubr.bf16.gmra.mrb[0].mxu0 %v888
      %v927 = vpop.f32.mrb[0].mxu0
      %v928 = vadd.f32 0.0, %v927
      %v929 = vpop.f32.mrb[0].mxu0
      %v930 = vpop.f32.mrb[0].mxu0
      %v931 = vadd.f32 0.0, %v930
      %v932 = vpop.f32.mrb[0].mxu0
      %933 = vdwg.mxu0
      %v934 = vmul.f32 %v928, 0.17677669
      %v935 = vmul.f32 %v931, 0.17677669
      %v936 = vsel %vm488, %v934, -inf
      %937 = vmax.xlane.f32.xlu0 %v936
      %v938 = vpop.xlane.xlu0 %937
      %v939 = vsel %vm488, %v935, -inf
      %940 = vmax.xlane.f32.xlu0 %v939
      %v941 = vpop.xlane.xlu0 %940
      %v942 = vsub.f32 %v934, %v938
      %v943 = vsub.f32 %v935, %v941
      %v944 = vmul.f32 %v942, 1.442695
      %v945 = vpow.pop %v944
      %v946 = vmul.f32 %v943, 1.442695
      %v947 = vpow.pop %v946
      %v948 = vsel %vm488, %v945, 0.0
      %949 = vadd.xlane.f32.xlu0 %v948
      %v950 = vpop.xlane.xlu0 %949
      %v951 = vsel %vm488, %v947, 0.0
      %952 = vadd.xlane.f32.xlu0 %v951
      %v953 = vpop.xlane.xlu0 %952
      %v954 = vrcp.pop %v950
      %v955 = vrcp.pop %v953
      %v956 = vmul.f32 %v945, %v954
      %v957 = vmul.f32 %v947, %v955
      %v958 = vpack.c.bf16 %v957, %v956
      %v961 = vunpack.c.l.b16 %v875
      %v962 = vunpack.c.l.b16 %v876
      %v963 = vpack.c.b16 %v962, %v961
      %v966 = vsel %vm488, %v958, 0
      %968 = vmatprep.subr.bf16.mxu0 0
      %969 = vmatpush1.bf16.msra.mxu0 %v963
      %970 = vmatprep.subr.bf16.mxu0 0
      %971 = vmatpush1.bf16.msra.mxu0 0
      %972 = vmatprep.subr.bf16.mxu0 0
      %973 = vmatpush1.bf16.msra.mxu0 0
      %974 = vmatprep.subr.bf16.mxu0 0
      %975 = vmatpush1.bf16.msra.mxu0 0
      %976 = vmatprep.subr.bf16.mxu0 0
      %977 = vmatpush1.bf16.msra.mxu0 0
      %978 = vmatprep.subr.bf16.mxu0 0
      %979 = vmatpush1.bf16.msra.mxu0 0
      %980 = vmatprep.subr.bf16.mxu0 0
      %981 = vmatpush1.bf16.msra.mxu0 0
      %982 = vmatprep.subr.bf16.mxu0 0
      %983 = vmatpush1.bf16.msra.mxu0 0
      %984 = vmatprep.subr.bf16.mxu0 0
      %985 = vmatpush1.bf16.msra.mxu0 0
      %986 = vmatprep.subr.bf16.mxu0 0
      %987 = vmatpush1.bf16.msra.mxu0 0
      %988 = vmatprep.subr.bf16.mxu0 0
      %989 = vmatpush1.bf16.msra.mxu0 0
      %990 = vmatprep.subr.bf16.mxu0 0
      %991 = vmatpush1.bf16.msra.mxu0 0
      %992 = vmatprep.subr.bf16.mxu0 0
      %993 = vmatpush1.bf16.msra.mxu0 0
      %994 = vmatprep.subr.bf16.mxu0 0
      %995 = vmatpush1.bf16.msra.mxu0 0
      %996 = vmatprep.subr.bf16.mxu0 0
      %997 = vmatpush1.bf16.msra.mxu0 0
      %998 = vmatprep.subr.bf16.mxu0 0
      %999 = vmatpush1.bf16.msra.mxu0 0
      %1000 = vmatprep.mubr.bf16.mxu0 0
      %1001 = vmatmul.mubr.bf16.gmra.mrb[0].mxu0 %v966
      %v1002 = vpop.f32.mrb[0].mxu0
      %v1003 = vadd.f32 0.0, %v1002
      %v1004 = vpop.f32.mrb[0].mxu0
      %v1005 = vpop.f32.mrb[0].mxu0
      %v1006 = vadd.f32 0.0, %v1005
      %v1007 = vpop.f32.mrb[0].mxu0
      %1008 = vdwg.mxu0
      %1011 = vrot.lane.b32.xlu0 %v1003, 96
      %v1012 = vpop.permute.xlu0 %1011
      %1013 = vrot.lane.b32.xlu0 %v1006, 96
      %v1014 = vpop.permute.xlu0 %1013
      %vm1017 = vcmask 1048320
      %1018 = vst.msk [vmem:[#allocation2] sm:$0xff] %vm1017, %v1012
      %1019 = vst.msk [vmem:[#allocation2 + $0x8] sm:$0xff] %vm1017, %v1014
      %v1020 = vld [vmem:[#allocation2] sm:$0xff]
      %v1021 = vld [vmem:[#allocation2 + $0x8] sm:$0xff]
      %v1022 = vpack.c.bf16 %v1021, %v1020
      %v1023 = vld [vmem:[%s3] sm:$0xf]
      %v1024 = vld [vmem:[%s3 + $0x4] sm:$0xf]
      %v1025 = vld [vmem:[%s3 + $0x8] sm:$0xf]
      %v1026 = vld [vmem:[%s3 + $0xc] sm:$0xf]
      %v1027 = vld [vmem:[%s3 + $0x10] sm:$0xf]
      %v1028 = vld [vmem:[%s3 + $0x14] sm:$0xf]
      %v1029 = vld [vmem:[%s3 + $0x18] sm:$0xf]
      %v1030 = vld [vmem:[%s3 + $0x1c] sm:$0xf]
      %v1031 = vld [vmem:[%s3 + $0x20] sm:$0xf]
      %v1032 = vld [vmem:[%s3 + $0x24] sm:$0xf]
      %v1033 = vld [vmem:[%s3 + $0x28] sm:$0xf]
      %v1034 = vld [vmem:[%s3 + $0x2c] sm:$0xf]
      %v1035 = vld [vmem:[%s3 + $0x30] sm:$0xf]
      %v1036 = vld [vmem:[%s3 + $0x34] sm:$0xf]
      %v1037 = vld [vmem:[%s3 + $0x38] sm:$0xf]
      %v1038 = vld [vmem:[%s3 + $0x3c] sm:$0xf]
      %v1039 = vld [vmem:[%s4] sm:$0x1]
      %v1041 = vlaneseq
      %v1042 = vshrl.u32 %v1041, 7
      %v1043 = vsub.s32 0, %v1042
      %v1044 = vrot.slane %v1039, %v1043
      %v1062 = vunpack.c.l.b16 %v1023
      %v1063 = vunpack.c.l.b16 %v1024
      %v1064 = vunpack.c.l.b16 %v1025
      %v1065 = vunpack.c.l.b16 %v1026
      %v1066 = vunpack.c.l.b16 %v1027
      %v1067 = vunpack.c.l.b16 %v1028
      %v1068 = vunpack.c.l.b16 %v1029
      %v1069 = vunpack.c.l.b16 %v1030
      %v1070 = vunpack.c.l.b16 %v1031
      %v1071 = vunpack.c.l.b16 %v1032
      %v1072 = vunpack.c.l.b16 %v1033
      %v1073 = vunpack.c.l.b16 %v1034
      %v1074 = vunpack.c.l.b16 %v1035
      %v1075 = vunpack.c.l.b16 %v1036
      %v1076 = vunpack.c.l.b16 %v1037
      %v1077 = vunpack.c.l.b16 %v1038
      %v1078 = vpack.c.b16 %v1063, %v1062
      %v1079 = vpack.c.b16 %v1065, %v1064
      %v1080 = vpack.c.b16 %v1067, %v1066
      %v1081 = vpack.c.b16 %v1069, %v1068
      %v1082 = vpack.c.b16 %v1071, %v1070
      %v1083 = vpack.c.b16 %v1073, %v1072
      %v1084 = vpack.c.b16 %v1075, %v1074
      %v1085 = vpack.c.b16 %v1077, %v1076
      %1094 = vmatprep.subr.bf16.mxu0 0
      %1095 = vmatpush1.bf16.msra.mxu0 %v1078
      %1096 = vmatprep.subr.bf16.mxu0 0
      %1097 = vmatpush1.bf16.msra.mxu0 %v1079
      %1098 = vmatprep.subr.bf16.mxu0 0
      %1099 = vmatpush1.bf16.msra.mxu0 %v1080
      %1100 = vmatprep.subr.bf16.mxu0 0
      %1101 = vmatpush1.bf16.msra.mxu0 %v1081
      %1102 = vmatprep.subr.bf16.mxu0 0
      %1103 = vmatpush1.bf16.msra.mxu0 %v1082
      %1104 = vmatprep.subr.bf16.mxu0 0
      %1105 = vmatpush1.bf16.msra.mxu0 %v1083
      %1106 = vmatprep.subr.bf16.mxu0 0
      %1107 = vmatpush1.bf16.msra.mxu0 %v1084
      %1108 = vmatprep.subr.bf16.mxu0 0
      %1109 = vmatpush1.bf16.msra.mxu0 %v1085
      %1110 = vmatprep.subr.bf16.mxu0 0
      %1111 = vmatpush1.bf16.msra.mxu0 0
      %1112 = vmatprep.subr.bf16.mxu0 0
      %1113 = vmatpush1.bf16.msra.mxu0 0
      %1114 = vmatprep.subr.bf16.mxu0 0
      %1115 = vmatpush1.bf16.msra.mxu0 0
      %1116 = vmatprep.subr.bf16.mxu0 0
      %1117 = vmatpush1.bf16.msra.mxu0 0
      %1118 = vmatprep.subr.bf16.mxu0 0
      %1119 = vmatpush1.bf16.msra.mxu0 0
      %1120 = vmatprep.subr.bf16.mxu0 0
      %1121 = vmatpush1.bf16.msra.mxu0 0
      %1122 = vmatprep.subr.bf16.mxu0 0
      %1123 = vmatpush1.bf16.msra.mxu0 0
      %1124 = vmatprep.subr.bf16.mxu0 0
      %1125 = vmatpush1.bf16.msra.mxu0 0
      %1126 = vmatprep.mubr.bf16.mxu0 0
      %1127 = vmatmul.mubr.bf16.gmra.mrb[0].mxu0 %v1022
      %v1128 = vpop.f32.mrb[0].mxu0
      %v1129 = vadd.f32 %v1044, %v1128
      %v1130 = vpop.f32.mrb[0].mxu0
      %v1131 = vpop.f32.mrb[0].mxu0
      %v1132 = vadd.f32 %v1044, %v1131
      %v1133 = vpop.f32.mrb[0].mxu0
      %1134 = vdwg.mxu0
      %v1135 = vld [vmem:[%s409] sm:$0xf]
      %v1136 = vld [vmem:[%s409 + $0x4] sm:$0xf]
      %v1137 = vunpack.c.l.bf16 %v1135
      %v1138 = vunpack.c.l.bf16 %v1136
      %v1139 = vadd.f32 %v1129, %v1137
      %v1140 = vadd.f32 %v1132, %v1138
      %1141 = vadd.xlane.f32.xlu0 %v1139
      %v1142 = vpop.xlane.xlu0 %1141
      %1143 = vadd.xlane.f32.xlu0 %v1140
      %v1144 = vpop.xlane.xlu0 %1143
      %v1145 = vrcp.pop 128.0
      %v1146 = vmul.f32 %v1142, %v1145
      %v1147 = vmul.f32 %v1144, %v1145
      %v1148 = vsub.f32 %v1139, %v1146
      %v1149 = vsub.f32 %v1140, %v1147
      %v1150 = vmul.f32 %v1148, %v1148
      %v1151 = vmul.f32 %v1149, %v1149
      %1152 = vadd.xlane.f32.xlu0 %v1150
      %v1153 = vpop.xlane.xlu0 %1152
      %1154 = vadd.xlane.f32.xlu0 %v1151
      %v1155 = vpop.xlane.xlu0 %1154
      %v1156 = vmul.f32 %v1153, %v1145
      %v1157 = vmul.f32 %v1155, %v1145
      %v1158 = vadd.f32 %v1156, 1e-05
      %v1159 = vadd.f32 %v1157, 1e-05
      %v1160 = vrsqrt.pop %v1158
      %v1161 = vrsqrt.pop %v1159
      %v1162 = vmul.f32 %v1148, %v1160
      %v1163 = vmul.f32 %v1149, %v1161
      %v1164 = vld [vmem:[%s6] sm:$0x1]
      %v1166 = vlaneseq
      %v1167 = vshrl.u32 %v1166, 7
      %v1168 = vsub.s32 0, %v1167
      %v1169 = vrot.slane %v1164, %v1168
      %v1171 = vmul.f32 %v1162, %v1169
      %v1172 = vmul.f32 %v1163, %v1169
      %v1173 = vld [vmem:[%s7] sm:$0x1]
      %v1175 = vlaneseq
      %v1176 = vshrl.u32 %v1175, 7
      %v1177 = vsub.s32 0, %v1176
      %v1178 = vrot.slane %v1173, %v1177
      %v1180 = vadd.f32 %v1171, %v1178
      %v1181 = vadd.f32 %v1172, %v1178
      %v1182 = vpack.c.bf16 %v1181, %v1180
      %v1184 = vunpack.c.l.b16 %v1182
      %v1185 = vunpack.c.h.b16 %v1182
      %v1186 = vpack.c.b16 %v1184, %v1184
      %v1187 = vpack.c.b16 %v1185, %v1185
      %1190 = vst [vmem:[%s419] sm:$0xf] %v1186
      %1191 = vst [vmem:[%s419 + $0x4] sm:$0xf] %v1187
      %s1192 = smul.u32 2, %s24
      %p1193 = scmp.lt.s32.totalorder %s23, 1
      %s1194 = scalar_select %p1193, %s23, 1
      %p1195 = scmp.lt.s32.totalorder %s1192, 1
      %s1196 = scalar_select %p1195, %s1192, 1
      %s1197 = smul.addr %s1194, 2
      %s1198 = sadd.s32 %s1196, %s1197
      %s1199 = smul.addr %s1198, 4
      %s1200 = scalar_lea.vmem %s8, %s1199
      // Predicated region
      $region53: #{transformer_chatbot_forward.28} parent=51 // pred_check
        %p1201 = pneg %p243
      $region54: #{transformer_chatbot_forward.28} parent=51 // pred_check_branch
        %1203 = sbr.rel (%p1201) target = $region56
      $region55: #{transformer_chatbot_forward.28} parent=51 // pred_region
        %s1204 = smul.u32 2, %s24
      $region56: #{transformer_chatbot_forward.28} parent=51 // pred_fallthru
        _
    $region52: #{transformer_chatbot_forward.28} parent=5 // pred_fallthru
      _
    %p1205 = scmp.le.s32.totalorder 2, %s14
    // Predicated region
    $region57: #{transformer_chatbot_forward.28} parent=5 // pred_check
      %p1206 = pneg %p1205
    $region58: #{transformer_chatbot_forward.28} parent=5 // pred_check_branch
      %1208 = sbr.rel (%p1206) target = $region60
    $region59: #{transformer_chatbot_forward.28} parent=5 // pred_region
      %s1209 = ssub.s32 %s14, 2
      // Predicated region
      $region61: #{transformer_chatbot_forward.28} parent=59 // pred_check
        %p1210 = pneg %p249
      $region62: #{transformer_chatbot_forward.28} parent=59 // pred_check_branch
        %1212 = sbr.rel (%p1210) target = $region64
      $region63: #{transformer_chatbot_forward.28} parent=59 // pred_region
        %s1213 = smul.u32 2, %s26
        %p1214 = scmp.lt.s32.totalorder %s25, 1
        %s1215 = scalar_select %p1214, %s25, 1
        %p1216 = scmp.lt.s32.totalorder %s1213, 1
        %s1217 = scalar_select %p1216, %s1213, 1
        %s1218 = smul.addr %s1215, 2
        %s1219 = sadd.s32 %s1217, %s1218
        %s1220 = smul.addr %s1219, 4
        %s1221 = scalar_lea.vmem %s8, %s1220
      $region64: #{transformer_chatbot_forward.28} parent=59 // pred_fallthru
        _
    $region60: #{transformer_chatbot_forward.28} parent=5 // pred_fallthru
      _
  $region6: #{transformer_chatbot_forward.28} parent=0 // loop_footer
    %s18 = sadd.s32 1, %s14
  $region7: #{transformer_chatbot_forward.28} parent=0 // loop_footer_branch
    %13 = sbr.rel target = $region3
  $region8: #{transformer_chatbot_forward.28} parent=0 // loop_exit
    _

// kernel: transformer_chatbot_forward.30
$region0: #{transformer_chatbot_forward.30}
  #allocation0 [shape = 'u32[]', space=smem, size = 0x4, offset = 0x4, fixed_abs, tag = 'smem constant byte address 0x4 - core index']
  #allocation1 [shape = 'u32[144,128]{1,0:T(1,128)}', space=vmem, size = 0x12000, scoped, tag = 'internal scratch']
  #allocation2 [shape = 'f32[32,128]{1,0:T(8,128)}', space=vmem, size = 0x4000, scoped, tag = 'scratch operand']
  %s0 = inlined_call_operand.vmem [shape: bf16[32,256], index: 0, kind: input, shape index: {}]
  %s1 = inlined_call_operand.vmem [shape: bf16[256,128], index: 1, kind: input, shape index: {}]
  %s2 = inlined_call_operand.vmem [shape: f32[1,128], index: 2, kind: input, shape index: {}]
  %s3 = inlined_call_operand.vmem [shape: bf16[32,128], index: 3, kind: input, shape index: {}]
  %s4 = inlined_call_operand.vmem [shape: f32[1,128], index: 4, kind: input, shape index: {}]
  %s5 = inlined_call_operand.vmem [shape: f32[1,128], index: 5, kind: input, shape index: {}]
  %s6 = inlined_call_operand.vmem [shape: bf16[32,128], index: 6, kind: output, shape index: {}]
  %s7 = sld [smem:[#allocation0]]
  $region42: #{transformer_chatbot_forward.30} parent=0
    _
  %s9 = ssub.s32 1, %s7
  %s10 = scalar_select 0, %s9, %s7
  // Predicated region
  $region2: #{transformer_chatbot_forward.30} parent=0 // pred_check
    _
  $region3: #{transformer_chatbot_forward.30} parent=0 // pred_check_branch
    %12 = sbr.rel (0) target = $region5
  $region4: #{transformer_chatbot_forward.30} parent=0 // pred_region
    _
  $region5: #{transformer_chatbot_forward.30} parent=0 // pred_fallthru
    _
  // Predicated region
  $region6: #{transformer_chatbot_forward.30} parent=0 // pred_check
    _
  $region7: #{transformer_chatbot_forward.30} parent=0 // pred_check_branch
    %14 = sbr.rel (0) target = $region9
  $region8: #{transformer_chatbot_forward.30} parent=0 // pred_region
    _
  $region9: #{transformer_chatbot_forward.30} parent=0 // pred_fallthru
    _
  // Predicated region
  $region10: #{transformer_chatbot_forward.30} parent=0 // pred_check
    _
  $region11: #{transformer_chatbot_forward.30} parent=0 // pred_check_branch
    %16 = sbr.rel (0) target = $region13
  $region12: #{transformer_chatbot_forward.30} parent=0 // pred_region
    _
  $region13: #{transformer_chatbot_forward.30} parent=0 // pred_fallthru
    _
  // Predicated region
  $region14: #{transformer_chatbot_forward.30} parent=0 // pred_check
    _
  $region15: #{transformer_chatbot_forward.30} parent=0 // pred_check_branch
    %18 = sbr.rel (0) target = $region17
  $region16: #{transformer_chatbot_forward.30} parent=0 // pred_region
    _
  $region17: #{transformer_chatbot_forward.30} parent=0 // pred_fallthru
    _
  // Predicated region
  $region18: #{transformer_chatbot_forward.30} parent=0 // pred_check
    _
  $region19: #{transformer_chatbot_forward.30} parent=0 // pred_check_branch
    %20 = sbr.rel (0) target = $region21
  $region20: #{transformer_chatbot_forward.30} parent=0 // pred_region
    _
  $region21: #{transformer_chatbot_forward.30} parent=0 // pred_fallthru
    _
  // Predicated region
  $region22: #{transformer_chatbot_forward.30} parent=0 // pred_check
    _
  $region23: #{transformer_chatbot_forward.30} parent=0 // pred_check_branch
    %22 = sbr.rel (0) target = $region25
  $region24: #{transformer_chatbot_forward.30} parent=0 // pred_region
    _
  $region25: #{transformer_chatbot_forward.30} parent=0 // pred_fallthru
    _
  %p24 = scmp.eq.s32.totalorder 0, 0
  // Predicated region
  $region26: #{transformer_chatbot_forward.30} parent=0 // pred_check
    %p25 = pneg %p24
  $region27: #{transformer_chatbot_forward.30} parent=0 // pred_check_branch
    %27 = sbr.rel (%p25) target = $region29
  $region28: #{transformer_chatbot_forward.30} parent=0 // pred_region
    %28 = vst [vmem:[#allocation2] sm:$0xff] 0.0
    %29 = vst [vmem:[#allocation2 + $0x8] sm:$0xff] 0.0
    %30 = vst [vmem:[#allocation2 + $0x10] sm:$0xff] 0.0
    %31 = vst [vmem:[#allocation2 + $0x18] sm:$0xff] 0.0
  $region29: #{transformer_chatbot_forward.30} parent=0 // pred_fallthru
    _
  %v32 = vld [vmem:[#allocation2] sm:$0xff]
  %v33 = vld [vmem:[#allocation2 + $0x8] sm:$0xff]
  %v34 = vld [vmem:[#allocation2 + $0x10] sm:$0xff]
  %v35 = vld [vmem:[#allocation2 + $0x18] sm:$0xff]
  %v36 = vld [vmem:[%s0] sm:$0xff]
  %v37 = vld [vmem:[%s0 + $0x8] sm:$0xff]
  %v38 = vld [vmem:[%s0 + $0x10] sm:$0xff]
  %v39 = vld [vmem:[%s0 + $0x18] sm:$0xff]
  %v40 = vld [vmem:[%s1] sm:$0xf]
  %v41 = vld [vmem:[%s1 + $0x4] sm:$0xf]
  %v42 = vld [vmem:[%s1 + $0x8] sm:$0xf]
  %v43 = vld [vmem:[%s1 + $0xc] sm:$0xf]
  %v44 = vld [vmem:[%s1 + $0x10] sm:$0xf]
  %v45 = vld [vmem:[%s1 + $0x14] sm:$0xf]
  %v46 = vld [vmem:[%s1 + $0x18] sm:$0xf]
  %v47 = vld [vmem:[%s1 + $0x1c] sm:$0xf]
  %v48 = vld [vmem:[%s1 + $0x20] sm:$0xf]
  %v49 = vld [vmem:[%s1 + $0x24] sm:$0xf]
  %v50 = vld [vmem:[%s1 + $0x28] sm:$0xf]
  %v51 = vld [vmem:[%s1 + $0x2c] sm:$0xf]
  %v52 = vld [vmem:[%s1 + $0x30] sm:$0xf]
  %v53 = vld [vmem:[%s1 + $0x34] sm:$0xf]
  %v54 = vld [vmem:[%s1 + $0x38] sm:$0xf]
  %v55 = vld [vmem:[%s1 + $0x3c] sm:$0xf]
  %v56 = vld [vmem:[%s1 + $0x40] sm:$0xf]
  %v57 = vld [vmem:[%s1 + $0x44] sm:$0xf]
  %v58 = vld [vmem:[%s1 + $0x48] sm:$0xf]
  %v59 = vld [vmem:[%s1 + $0x4c] sm:$0xf]
  %v60 = vld [vmem:[%s1 + $0x50] sm:$0xf]
  %v61 = vld [vmem:[%s1 + $0x54] sm:$0xf]
  %v62 = vld [vmem:[%s1 + $0x58] sm:$0xf]
  %v63 = vld [vmem:[%s1 + $0x5c] sm:$0xf]
  %v64 = vld [vmem:[%s1 + $0x60] sm:$0xf]
  %v65 = vld [vmem:[%s1 + $0x64] sm:$0xf]
  %v66 = vld [vmem:[%s1 + $0x68] sm:$0xf]
  %v67 = vld [vmem:[%s1 + $0x6c] sm:$0xf]
  %v68 = vld [vmem:[%s1 + $0x70] sm:$0xf]
  %v69 = vld [vmem:[%s1 + $0x74] sm:$0xf]
  %v70 = vld [vmem:[%s1 + $0x78] sm:$0xf]
  %v71 = vld [vmem:[%s1 + $0x7c] sm:$0xf]
  %v76 = vunpack.c.l.b16 %v36
  %v77 = vunpack.c.h.b16 %v36
  %v78 = vunpack.c.l.b16 %v37
  %v79 = vunpack.c.h.b16 %v37
  %v80 = vunpack.c.l.b16 %v38
  %v81 = vunpack.c.h.b16 %v38
  %v82 = vunpack.c.l.b16 %v39
  %v83 = vunpack.c.h.b16 %v39
  %v84 = vpack.c.b16 %v78, %v76
  %v85 = vpack.c.b16 %v79, %v77
  %v86 = vpack.c.b16 %v82, %v80
  %v87 = vpack.c.b16 %v83, %v81
  %v124 = vunpack.c.l.b16 %v40
  %v125 = vunpack.c.l.b16 %v41
  %v126 = vunpack.c.l.b16 %v42
  %v127 = vunpack.c.l.b16 %v43
  %v128 = vunpack.c.l.b16 %v44
  %v129 = vunpack.c.l.b16 %v45
  %v130 = vunpack.c.l.b16 %v46
  %v131 = vunpack.c.l.b16 %v47
  %v132 = vunpack.c.l.b16 %v48
  %v133 = vunpack.c.l.b16 %v49
  %v134 = vunpack.c.l.b16 %v50
  %v135 = vunpack.c.l.b16 %v51
  %v136 = vunpack.c.l.b16 %v52
  %v137 = vunpack.c.l.b16 %v53
  %v138 = vunpack.c.l.b16 %v54
  %v139 = vunpack.c.l.b16 %v55
  %v140 = vunpack.c.l.b16 %v56
  %v141 = vunpack.c.l.b16 %v57
  %v142 = vunpack.c.l.b16 %v58
  %v143 = vunpack.c.l.b16 %v59
  %v144 = vunpack.c.l.b16 %v60
  %v145 = vunpack.c.l.b16 %v61
  %v146 = vunpack.c.l.b16 %v62
  %v147 = vunpack.c.l.b16 %v63
  %v148 = vunpack.c.l.b16 %v64
  %v149 = vunpack.c.l.b16 %v65
  %v150 = vunpack.c.l.b16 %v66
  %v151 = vunpack.c.l.b16 %v67
  %v152 = vunpack.c.l.b16 %v68
  %v153 = vunpack.c.l.b16 %v69
  %v154 = vunpack.c.l.b16 %v70
  %v155 = vunpack.c.l.b16 %v71
  %v156 = vpack.c.b16 %v125, %v124
  %v157 = vpack.c.b16 %v127, %v126
  %v158 = vpack.c.b16 %v129, %v128
  %v159 = vpack.c.b16 %v131, %v130
  %v160 = vpack.c.b16 %v133, %v132
  %v161 = vpack.c.b16 %v135, %v134
  %v162 = vpack.c.b16 %v137, %v136
  %v163 = vpack.c.b16 %v139, %v138
  %v164 = vpack.c.b16 %v141, %v140
  %v165 = vpack.c.b16 %v143, %v142
  %v166 = vpack.c.b16 %v145, %v144
  %v167 = vpack.c.b16 %v147, %v146
  %v168 = vpack.c.b16 %v149, %v148
  %v169 = vpack.c.b16 %v151, %v150
  %v170 = vpack.c.b16 %v153, %v152
  %v171 = vpack.c.b16 %v155, %v154
  %188 = vmatprep.subr.bf16.mxu0 0
  %189 = vmatpush1.bf16.msra.mxu0 %v156
  %190 = vmatprep.subr.bf16.mxu0 0
  %191 = vmatpush1.bf16.msra.mxu0 %v157
  %192 = vmatprep.subr.bf16.mxu0 0
  %193 = vmatpush1.bf16.msra.mxu0 %v158
  %194 = vmatprep.subr.bf16.mxu0 0
  %195 = vmatpush1.bf16.msra.mxu0 %v159
  %196 = vmatprep.subr.bf16.mxu0 0
  %197 = vmatpush1.bf16.msra.mxu0 %v160
  %198 = vmatprep.subr.bf16.mxu0 0
  %199 = vmatpush1.bf16.msra.mxu0 %v161
  %200 = vmatprep.subr.bf16.mxu0 0
  %201 = vmatpush1.bf16.msra.mxu0 %v162
  %202 = vmatprep.subr.bf16.mxu0 0
  %203 = vmatpush1.bf16.msra.mxu0 %v163
  %204 = vmatprep.subr.bf16.mxu0 0
  %205 = vmatpush1.bf16.msra.mxu0 %v164
  %206 = vmatprep.subr.bf16.mxu0 0
  %207 = vmatpush1.bf16.msra.mxu0 %v165
  %208 = vmatprep.subr.bf16.mxu0 0
  %209 = vmatpush1.bf16.msra.mxu0 %v166
  %210 = vmatprep.subr.bf16.mxu0 0
  %211 = vmatpush1.bf16.msra.mxu0 %v167
  %212 = vmatprep.subr.bf16.mxu0 0
  %213 = vmatpush1.bf16.msra.mxu0 %v168
  %214 = vmatprep.subr.bf16.mxu0 0
  %215 = vmatpush1.bf16.msra.mxu0 %v169
  %216 = vmatprep.subr.bf16.mxu0 0
  %217 = vmatpush1.bf16.msra.mxu0 %v170
  %218 = vmatprep.subr.bf16.mxu0 0
  %219 = vmatpush1.bf16.msra.mxu0 %v171
  %220 = vmatprep.mubr.bf16.mxu0 %v85
  %221 = vmatmul.mubr.bf16.gmra.mrb[0].mxu0 %v84
  %v222 = vpop.f32.mrb[0].mxu0
  %v223 = vadd.f32 0.0, %v222
  %v224 = vpop.f32.mrb[0].mxu0
  %v225 = vpop.f32.mrb[0].mxu0
  %v226 = vadd.f32 0.0, %v225
  %v227 = vpop.f32.mrb[0].mxu0
  %228 = vmatprep.mubr.bf16.mxu0 %v87
  %229 = vmatmul.mubr.bf16.gmra.mrb[0].mxu0 %v86
  %v230 = vpop.f32.mrb[0].mxu0
  %v231 = vadd.f32 0.0, %v230
  %v232 = vpop.f32.mrb[0].mxu0
  %v233 = vpop.f32.mrb[0].mxu0
  %v234 = vadd.f32 0.0, %v233
  %v235 = vpop.f32.mrb[0].mxu0
  %236 = vdwg.mxu0
  %v237 = vadd.f32 %v32, %v223
  %v238 = vadd.f32 %v33, %v226
  %v239 = vadd.f32 %v34, %v231
  %v240 = vadd.f32 %v35, %v234
  %241 = vst [vmem:[#allocation2] sm:$0xff] %v237
  %242 = vst [vmem:[#allocation2 + $0x8] sm:$0xff] %v238
  %243 = vst [vmem:[#allocation2 + $0x10] sm:$0xff] %v239
  %244 = vst [vmem:[#allocation2 + $0x18] sm:$0xff] %v240
  // Predicated region
  $region30: #{transformer_chatbot_forward.30} parent=0 // pred_check
    %p245 = pneg %p24
  $region31: #{transformer_chatbot_forward.30} parent=0 // pred_check_branch
    %247 = sbr.rel (%p245) target = $region33
  $region32: #{transformer_chatbot_forward.30} parent=0 // pred_region
    %v248 = vld [vmem:[#allocation2] sm:$0xff]
    %v249 = vld [vmem:[#allocation2 + $0x8] sm:$0xff]
    %v250 = vld [vmem:[#allocation2 + $0x10] sm:$0xff]
    %v251 = vld [vmem:[#allocation2 + $0x18] sm:$0xff]
    %v252 = vld [vmem:[%s2] sm:$0x1]
    %v254 = vlaneseq
    %v255 = vshrl.u32 %v254, 7
    %v256 = vsub.s32 0, %v255
    %v257 = vrot.slane %v252, %v256
    %v259 = vadd.f32 %v248, %v257
    %v260 = vadd.f32 %v249, %v257
    %v261 = vadd.f32 %v250, %v257
    %v262 = vadd.f32 %v251, %v257
    %v263 = vld [vmem:[%s3] sm:$0xf]
    %v264 = vld [vmem:[%s3 + $0x4] sm:$0xf]
    %v265 = vld [vmem:[%s3 + $0x8] sm:$0xf]
    %v266 = vld [vmem:[%s3 + $0xc] sm:$0xf]
    %v267 = vunpack.c.l.bf16 %v263
    %v268 = vunpack.c.l.bf16 %v264
    %v269 = vunpack.c.l.bf16 %v265
    %v270 = vunpack.c.l.bf16 %v266
    %v271 = vadd.f32 %v259, %v267
    %v272 = vadd.f32 %v260, %v268
    %v273 = vadd.f32 %v261, %v269
    %v274 = vadd.f32 %v262, %v270
    %v275 = vld [vmem:[%s4] sm:$0x1]
    %v276 = vld [vmem:[%s5] sm:$0x1]
    %277 = vadd.xlane.f32.xlu0 %v271
    %v278 = vpop.xlane.xlu0 %277
    %279 = vadd.xlane.f32.xlu0 %v272
    %v280 = vpop.xlane.xlu0 %279
    %281 = vadd.xlane.f32.xlu0 %v273
    %v282 = vpop.xlane.xlu0 %281
    %283 = vadd.xlane.f32.xlu0 %v274
    %v284 = vpop.xlane.xlu0 %283
    %v285 = vrcp.pop 128.0
    %v286 = vmul.f32 %v278, %v285
    %v287 = vmul.f32 %v280, %v285
    %v288 = vmul.f32 %v282, %v285
    %v289 = vmul.f32 %v284, %v285
    %v290 = vsub.f32 %v271, %v286
    %v291 = vsub.f32 %v272, %v287
    %v292 = vsub.f32 %v273, %v288
    %v293 = vsub.f32 %v274, %v289
    %v294 = vmul.f32 %v290, %v290
    %v295 = vmul.f32 %v291, %v291
    %v296 = vmul.f32 %v292, %v292
    %v297 = vmul.f32 %v293, %v293
    %298 = vadd.xlane.f32.xlu0 %v294
    %v299 = vpop.xlane.xlu0 %298
    %300 = vadd.xlane.f32.xlu0 %v295
    %v301 = vpop.xlane.xlu0 %300
    %302 = vadd.xlane.f32.xlu0 %v296
    %v303 = vpop.xlane.xlu0 %302
    %304 = vadd.xlane.f32.xlu0 %v297
    %v305 = vpop.xlane.xlu0 %304
    %v306 = vmul.f32 %v299, %v285
    %v307 = vmul.f32 %v301, %v285
    %v308 = vmul.f32 %v303, %v285
    %v309 = vmul.f32 %v305, %v285
    %v310 = vadd.f32 %v306, 1e-05
    %v311 = vadd.f32 %v307, 1e-05
    %v312 = vadd.f32 %v308, 1e-05
    %v313 = vadd.f32 %v309, 1e-05
    %v314 = vrsqrt.pop %v310
    %v315 = vrsqrt.pop %v311
    %v316 = vrsqrt.pop %v312
    %v317 = vrsqrt.pop %v313
    %v318 = vmul.f32 %v290, %v314
    %v319 = vmul.f32 %v291, %v315
    %v320 = vmul.f32 %v292, %v316
    %v321 = vmul.f32 %v293, %v317
    %v323 = vlaneseq
    %v324 = vshrl.u32 %v323, 7
    %v325 = vsub.s32 0, %v324
    %v326 = vrot.slane %v275, %v325
    %v328 = vmul.f32 %v318, %v326
    %v329 = vmul.f32 %v319, %v326
    %v330 = vmul.f32 %v320, %v326
    %v331 = vmul.f32 %v321, %v326
    %v333 = vlaneseq
    %v334 = vshrl.u32 %v333, 7
    %v335 = vsub.s32 0, %v334
    %v336 = vrot.slane %v276, %v335
    %v338 = vadd.f32 %v328, %v336
    %v339 = vadd.f32 %v329, %v336
    %v340 = vadd.f32 %v330, %v336
    %v341 = vadd.f32 %v331, %v336
    %v342 = vpack.c.bf16 %v339, %v338
    %v343 = vpack.c.bf16 %v341, %v340
    %v346 = vunpack.c.l.b16 %v342
    %v347 = vunpack.c.h.b16 %v342
    %v348 = vunpack.c.l.b16 %v343
    %v349 = vunpack.c.h.b16 %v343
    %v350 = vpack.c.b16 %v346, %v346
    %v351 = vpack.c.b16 %v347, %v347
    %v352 = vpack.c.b16 %v348, %v348
    %v353 = vpack.c.b16 %v349, %v349
    %358 = vst [vmem:[%s6] sm:$0xf] %v350
    %359 = vst [vmem:[%s6 + $0x4] sm:$0xf] %v351
    %360 = vst [vmem:[%s6 + $0x8] sm:$0xf] %v352
    %361 = vst [vmem:[%s6 + $0xc] sm:$0xf] %v353
  $region33: #{transformer_chatbot_forward.30} parent=0 // pred_fallthru
    _
  // Predicated region
  $region34: #{transformer_chatbot_forward.30} parent=0 // pred_check
    _
  $region35: #{transformer_chatbot_forward.30} parent=0 // pred_check_branch
    %363 = sbr.rel (0) target = $region37
  $region36: #{transformer_chatbot_forward.30} parent=0 // pred_region
    _
  $region37: #{transformer_chatbot_forward.30} parent=0 // pred_fallthru
    _
  // Predicated region
  $region38: #{transformer_chatbot_forward.30} parent=0 // pred_check
    _
  $region39: #{transformer_chatbot_forward.30} parent=0 // pred_check_branch
    %365 = sbr.rel (0) target = $region41
  $region40: #{transformer_chatbot_forward.30} parent=0 // pred_region
    _
  $region41: #{transformer_chatbot_forward.30} parent=0 // pred_fallthru
    _

// kernel: transformer_chatbot_forward.34
$region0: #{transformer_chatbot_forward.34}
  #allocation0 [shape = 'u32[]', space=smem, size = 0x4, offset = 0x4, fixed_abs, tag = 'smem constant byte address 0x4 - core index']
  #allocation1 [shape = 'u32[144,128]{1,0:T(1,128)}', space=vmem, size = 0x12000, scoped, tag = 'internal scratch']
  #allocation2 [shape = 'f32[32,128]{1,0:T(8,128)}', space=vmem, size = 0x4000, scoped, tag = 'scratch operand']
  %s0 = inlined_call_operand.vmem [shape: bf16[32,256], index: 0, kind: input, shape index: {}]
  %s1 = inlined_call_operand.vmem [shape: bf16[256,128], index: 1, kind: input, shape index: {}]
  %s2 = inlined_call_operand.vmem [shape: f32[1,128], index: 2, kind: input, shape index: {}]
  %s3 = inlined_call_operand.vmem [shape: bf16[32,128], index: 3, kind: input, shape index: {}]
  %s4 = inlined_call_operand.vmem [shape: f32[1,128], index: 4, kind: input, shape index: {}]
  %s5 = inlined_call_operand.vmem [shape: f32[1,128], index: 5, kind: input, shape index: {}]
  %s6 = inlined_call_operand.vmem [shape: f32[1,128], index: 6, kind: input, shape index: {}]
  %s7 = inlined_call_operand.vmem [shape: f32[1,128], index: 7, kind: input, shape index: {}]
  %s8 = inlined_call_operand.vmem [shape: bf16[32,128], index: 8, kind: output, shape index: {}]
  %s9 = sld [smem:[#allocation0]]
  $region50: #{transformer_chatbot_forward.34} parent=0
    _
  %s11 = ssub.s32 1, %s9
  %s12 = scalar_select 0, %s11, %s9
  // Predicated region
  $region2: #{transformer_chatbot_forward.34} parent=0 // pred_check
    _
  $region3: #{transformer_chatbot_forward.34} parent=0 // pred_check_branch
    %14 = sbr.rel (0) target = $region5
  $region4: #{transformer_chatbot_forward.34} parent=0 // pred_region
    _
  $region5: #{transformer_chatbot_forward.34} parent=0 // pred_fallthru
    _
  // Predicated region
  $region6: #{transformer_chatbot_forward.34} parent=0 // pred_check
    _
  $region7: #{transformer_chatbot_forward.34} parent=0 // pred_check_branch
    %16 = sbr.rel (0) target = $region9
  $region8: #{transformer_chatbot_forward.34} parent=0 // pred_region
    _
  $region9: #{transformer_chatbot_forward.34} parent=0 // pred_fallthru
    _
  // Predicated region
  $region10: #{transformer_chatbot_forward.34} parent=0 // pred_check
    _
  $region11: #{transformer_chatbot_forward.34} parent=0 // pred_check_branch
    %18 = sbr.rel (0) target = $region13
  $region12: #{transformer_chatbot_forward.34} parent=0 // pred_region
    _
  $region13: #{transformer_chatbot_forward.34} parent=0 // pred_fallthru
    _
  // Predicated region
  $region14: #{transformer_chatbot_forward.34} parent=0 // pred_check
    _
  $region15: #{transformer_chatbot_forward.34} parent=0 // pred_check_branch
    %20 = sbr.rel (0) target = $region17
  $region16: #{transformer_chatbot_forward.34} parent=0 // pred_region
    _
  $region17: #{transformer_chatbot_forward.34} parent=0 // pred_fallthru
    _
  // Predicated region
  $region18: #{transformer_chatbot_forward.34} parent=0 // pred_check
    _
  $region19: #{transformer_chatbot_forward.34} parent=0 // pred_check_branch
    %22 = sbr.rel (0) target = $region21
  $region20: #{transformer_chatbot_forward.34} parent=0 // pred_region
    _
  $region21: #{transformer_chatbot_forward.34} parent=0 // pred_fallthru
    _
  // Predicated region
  $region22: #{transformer_chatbot_forward.34} parent=0 // pred_check
    _
  $region23: #{transformer_chatbot_forward.34} parent=0 // pred_check_branch
    %24 = sbr.rel (0) target = $region25
  $region24: #{transformer_chatbot_forward.34} parent=0 // pred_region
    _
  $region25: #{transformer_chatbot_forward.34} parent=0 // pred_fallthru
    _
  // Predicated region
  $region26: #{transformer_chatbot_forward.34} parent=0 // pred_check
    _
  $region27: #{transformer_chatbot_forward.34} parent=0 // pred_check_branch
    %26 = sbr.rel (0) target = $region29
  $region28: #{transformer_chatbot_forward.34} parent=0 // pred_region
    _
  $region29: #{transformer_chatbot_forward.34} parent=0 // pred_fallthru
    _
  // Predicated region
  $region30: #{transformer_chatbot_forward.34} parent=0 // pred_check
    _
  $region31: #{transformer_chatbot_forward.34} parent=0 // pred_check_branch
    %28 = sbr.rel (0) target = $region33
  $region32: #{transformer_chatbot_forward.34} parent=0 // pred_region
    _
  $region33: #{transformer_chatbot_forward.34} parent=0 // pred_fallthru
    _
  %p30 = scmp.eq.s32.totalorder 0, 0
  // Predicated region
  $region34: #{transformer_chatbot_forward.34} parent=0 // pred_check
    %p31 = pneg %p30
  $region35: #{transformer_chatbot_forward.34} parent=0 // pred_check_branch
    %33 = sbr.rel (%p31) target = $region37
  $region36: #{transformer_chatbot_forward.34} parent=0 // pred_region
    %34 = vst [vmem:[#allocation2] sm:$0xff] 0.0
    %35 = vst [vmem:[#allocation2 + $0x8] sm:$0xff] 0.0
    %36 = vst [vmem:[#allocation2 + $0x10] sm:$0xff] 0.0
    %37 = vst [vmem:[#allocation2 + $0x18] sm:$0xff] 0.0
  $region37: #{transformer_chatbot_forward.34} parent=0 // pred_fallthru
    _
  %v38 = vld [vmem:[#allocation2] sm:$0xff]
  %v39 = vld [vmem:[#allocation2 + $0x8] sm:$0xff]
  %v40 = vld [vmem:[#allocation2 + $0x10] sm:$0xff]
  %v41 = vld [vmem:[#allocation2 + $0x18] sm:$0xff]
  %v42 = vld [vmem:[%s0] sm:$0xff]
  %v43 = vld [vmem:[%s0 + $0x8] sm:$0xff]
  %v44 = vld [vmem:[%s0 + $0x10] sm:$0xff]
  %v45 = vld [vmem:[%s0 + $0x18] sm:$0xff]
  %v46 = vld [vmem:[%s1] sm:$0xf]
  %v47 = vld [vmem:[%s1 + $0x4] sm:$0xf]
  %v48 = vld [vmem:[%s1 + $0x8] sm:$0xf]
  %v49 = vld [vmem:[%s1 + $0xc] sm:$0xf]
  %v50 = vld [vmem:[%s1 + $0x10] sm:$0xf]
  %v51 = vld [vmem:[%s1 + $0x14] sm:$0xf]
  %v52 = vld [vmem:[%s1 + $0x18] sm:$0xf]
  %v53 = vld [vmem:[%s1 + $0x1c] sm:$0xf]
  %v54 = vld [vmem:[%s1 + $0x20] sm:$0xf]
  %v55 = vld [vmem:[%s1 + $0x24] sm:$0xf]
  %v56 = vld [vmem:[%s1 + $0x28] sm:$0xf]
  %v57 = vld [vmem:[%s1 + $0x2c] sm:$0xf]
  %v58 = vld [vmem:[%s1 + $0x30] sm:$0xf]
  %v59 = vld [vmem:[%s1 + $0x34] sm:$0xf]
  %v60 = vld [vmem:[%s1 + $0x38] sm:$0xf]
  %v61 = vld [vmem:[%s1 + $0x3c] sm:$0xf]
  %v62 = vld [vmem:[%s1 + $0x40] sm:$0xf]
  %v63 = vld [vmem:[%s1 + $0x44] sm:$0xf]
  %v64 = vld [vmem:[%s1 + $0x48] sm:$0xf]
  %v65 = vld [vmem:[%s1 + $0x4c] sm:$0xf]
  %v66 = vld [vmem:[%s1 + $0x50] sm:$0xf]
  %v67 = vld [vmem:[%s1 + $0x54] sm:$0xf]
  %v68 = vld [vmem:[%s1 + $0x58] sm:$0xf]
  %v69 = vld [vmem:[%s1 + $0x5c] sm:$0xf]
  %v70 = vld [vmem:[%s1 + $0x60] sm:$0xf]
  %v71 = vld [vmem:[%s1 + $0x64] sm:$0xf]
  %v72 = vld [vmem:[%s1 + $0x68] sm:$0xf]
  %v73 = vld [vmem:[%s1 + $0x6c] sm:$0xf]
  %v74 = vld [vmem:[%s1 + $0x70] sm:$0xf]
  %v75 = vld [vmem:[%s1 + $0x74] sm:$0xf]
  %v76 = vld [vmem:[%s1 + $0x78] sm:$0xf]
  %v77 = vld [vmem:[%s1 + $0x7c] sm:$0xf]
  %v82 = vunpack.c.l.b16 %v42
  %v83 = vunpack.c.h.b16 %v42
  %v84 = vunpack.c.l.b16 %v43
  %v85 = vunpack.c.h.b16 %v43
  %v86 = vunpack.c.l.b16 %v44
  %v87 = vunpack.c.h.b16 %v44
  %v88 = vunpack.c.l.b16 %v45
  %v89 = vunpack.c.h.b16 %v45
  %v90 = vpack.c.b16 %v84, %v82
  %v91 = vpack.c.b16 %v85, %v83
  %v92 = vpack.c.b16 %v88, %v86
  %v93 = vpack.c.b16 %v89, %v87
  %v130 = vunpack.c.l.b16 %v46
  %v131 = vunpack.c.l.b16 %v47
  %v132 = vunpack.c.l.b16 %v48
  %v133 = vunpack.c.l.b16 %v49
  %v134 = vunpack.c.l.b16 %v50
  %v135 = vunpack.c.l.b16 %v51
  %v136 = vunpack.c.l.b16 %v52
  %v137 = vunpack.c.l.b16 %v53
  %v138 = vunpack.c.l.b16 %v54
  %v139 = vunpack.c.l.b16 %v55
  %v140 = vunpack.c.l.b16 %v56
  %v141 = vunpack.c.l.b16 %v57
  %v142 = vunpack.c.l.b16 %v58
  %v143 = vunpack.c.l.b16 %v59
  %v144 = vunpack.c.l.b16 %v60
  %v145 = vunpack.c.l.b16 %v61
  %v146 = vunpack.c.l.b16 %v62
  %v147 = vunpack.c.l.b16 %v63
  %v148 = vunpack.c.l.b16 %v64
  %v149 = vunpack.c.l.b16 %v65
  %v150 = vunpack.c.l.b16 %v66
  %v151 = vunpack.c.l.b16 %v67
  %v152 = vunpack.c.l.b16 %v68
  %v153 = vunpack.c.l.b16 %v69
  %v154 = vunpack.c.l.b16 %v70
  %v155 = vunpack.c.l.b16 %v71
  %v156 = vunpack.c.l.b16 %v72
  %v157 = vunpack.c.l.b16 %v73
  %v158 = vunpack.c.l.b16 %v74
  %v159 = vunpack.c.l.b16 %v75
  %v160 = vunpack.c.l.b16 %v76
  %v161 = vunpack.c.l.b16 %v77
  %v162 = vpack.c.b16 %v131, %v130
  %v163 = vpack.c.b16 %v133, %v132
  %v164 = vpack.c.b16 %v135, %v134
  %v165 = vpack.c.b16 %v137, %v136
  %v166 = vpack.c.b16 %v139, %v138
  %v167 = vpack.c.b16 %v141, %v140
  %v168 = vpack.c.b16 %v143, %v142
  %v169 = vpack.c.b16 %v145, %v144
  %v170 = vpack.c.b16 %v147, %v146
  %v171 = vpack.c.b16 %v149, %v148
  %v172 = vpack.c.b16 %v151, %v150
  %v173 = vpack.c.b16 %v153, %v152
  %v174 = vpack.c.b16 %v155, %v154
  %v175 = vpack.c.b16 %v157, %v156
  %v176 = vpack.c.b16 %v159, %v158
  %v177 = vpack.c.b16 %v161, %v160
  %194 = vmatprep.subr.bf16.mxu0 0
  %195 = vmatpush1.bf16.msra.mxu0 %v162
  %196 = vmatprep.subr.bf16.mxu0 0
  %197 = vmatpush1.bf16.msra.mxu0 %v163
  %198 = vmatprep.subr.bf16.mxu0 0
  %199 = vmatpush1.bf16.msra.mxu0 %v164
  %200 = vmatprep.subr.bf16.mxu0 0
  %201 = vmatpush1.bf16.msra.mxu0 %v165
  %202 = vmatprep.subr.bf16.mxu0 0
  %203 = vmatpush1.bf16.msra.mxu0 %v166
  %204 = vmatprep.subr.bf16.mxu0 0
  %205 = vmatpush1.bf16.msra.mxu0 %v167
  %206 = vmatprep.subr.bf16.mxu0 0
  %207 = vmatpush1.bf16.msra.mxu0 %v168
  %208 = vmatprep.subr.bf16.mxu0 0
  %209 = vmatpush1.bf16.msra.mxu0 %v169
  %210 = vmatprep.subr.bf16.mxu0 0
  %211 = vmatpush1.bf16.msra.mxu0 %v170
  %212 = vmatprep.subr.bf16.mxu0 0
  %213 = vmatpush1.bf16.msra.mxu0 %v171
  %214 = vmatprep.subr.bf16.mxu0 0
  %215 = vmatpush1.bf16.msra.mxu0 %v172
  %216 = vmatprep.subr.bf16.mxu0 0
  %217 = vmatpush1.bf16.msra.mxu0 %v173
  %218 = vmatprep.subr.bf16.mxu0 0
  %219 = vmatpush1.bf16.msra.mxu0 %v174
  %220 = vmatprep.subr.bf16.mxu0 0
  %221 = vmatpush1.bf16.msra.mxu0 %v175
  %222 = vmatprep.subr.bf16.mxu0 0
  %223 = vmatpush1.bf16.msra.mxu0 %v176
  %224 = vmatprep.subr.bf16.mxu0 0
  %225 = vmatpush1.bf16.msra.mxu0 %v177
  %226 = vmatprep.mubr.bf16.mxu0 %v91
  %227 = vmatmul.mubr.bf16.gmra.mrb[0].mxu0 %v90
  %v228 = vpop.f32.mrb[0].mxu0
  %v229 = vadd.f32 0.0, %v228
  %v230 = vpop.f32.mrb[0].mxu0
  %v231 = vpop.f32.mrb[0].mxu0
  %v232 = vadd.f32 0.0, %v231
  %v233 = vpop.f32.mrb[0].mxu0
  %234 = vmatprep.mubr.bf16.mxu0 %v93
  %235 = vmatmul.mubr.bf16.gmra.mrb[0].mxu0 %v92
  %v236 = vpop.f32.mrb[0].mxu0
  %v237 = vadd.f32 0.0, %v236
  %v238 = vpop.f32.mrb[0].mxu0
  %v239 = vpop.f32.mrb[0].mxu0
  %v240 = vadd.f32 0.0, %v239
  %v241 = vpop.f32.mrb[0].mxu0
  %242 = vdwg.mxu0
  %v243 = vadd.f32 %v38, %v229
  %v244 = vadd.f32 %v39, %v232
  %v245 = vadd.f32 %v40, %v237
  %v246 = vadd.f32 %v41, %v240
  %247 = vst [vmem:[#allocation2] sm:$0xff] %v243
  %248 = vst [vmem:[#allocation2 + $0x8] sm:$0xff] %v244
  %249 = vst [vmem:[#allocation2 + $0x10] sm:$0xff] %v245
  %250 = vst [vmem:[#allocation2 + $0x18] sm:$0xff] %v246
  // Predicated region
  $region38: #{transformer_chatbot_forward.34} parent=0 // pred_check
    %p251 = pneg %p30
  $region39: #{transformer_chatbot_forward.34} parent=0 // pred_check_branch
    %253 = sbr.rel (%p251) target = $region41
  $region40: #{transformer_chatbot_forward.34} parent=0 // pred_region
    %v254 = vld [vmem:[#allocation2] sm:$0xff]
    %v255 = vld [vmem:[#allocation2 + $0x8] sm:$0xff]
    %v256 = vld [vmem:[#allocation2 + $0x10] sm:$0xff]
    %v257 = vld [vmem:[#allocation2 + $0x18] sm:$0xff]
    %v258 = vld [vmem:[%s2] sm:$0x1]
    %v260 = vlaneseq
    %v261 = vshrl.u32 %v260, 7
    %v262 = vsub.s32 0, %v261
    %v263 = vrot.slane %v258, %v262
    %v265 = vadd.f32 %v254, %v263
    %v266 = vadd.f32 %v255, %v263
    %v267 = vadd.f32 %v256, %v263
    %v268 = vadd.f32 %v257, %v263
    %v269 = vld [vmem:[%s3] sm:$0xf]
    %v270 = vld [vmem:[%s3 + $0x4] sm:$0xf]
    %v271 = vld [vmem:[%s3 + $0x8] sm:$0xf]
    %v272 = vld [vmem:[%s3 + $0xc] sm:$0xf]
    %v273 = vunpack.c.l.bf16 %v269
    %v274 = vunpack.c.l.bf16 %v270
    %v275 = vunpack.c.l.bf16 %v271
    %v276 = vunpack.c.l.bf16 %v272
    %v277 = vadd.f32 %v265, %v273
    %v278 = vadd.f32 %v266, %v274
    %v279 = vadd.f32 %v267, %v275
    %v280 = vadd.f32 %v268, %v276
    %v281 = vld [vmem:[%s4] sm:$0x1]
    %v282 = vld [vmem:[%s5] sm:$0x1]
    %283 = vadd.xlane.f32.xlu0 %v277
    %v284 = vpop.xlane.xlu0 %283
    %285 = vadd.xlane.f32.xlu0 %v278
    %v286 = vpop.xlane.xlu0 %285
    %287 = vadd.xlane.f32.xlu0 %v279
    %v288 = vpop.xlane.xlu0 %287
    %289 = vadd.xlane.f32.xlu0 %v280
    %v290 = vpop.xlane.xlu0 %289
    %v291 = vrcp.pop 128.0
    %v292 = vmul.f32 %v284, %v291
    %v293 = vmul.f32 %v286, %v291
    %v294 = vmul.f32 %v288, %v291
    %v295 = vmul.f32 %v290, %v291
    %v296 = vsub.f32 %v277, %v292
    %v297 = vsub.f32 %v278, %v293
    %v298 = vsub.f32 %v279, %v294
    %v299 = vsub.f32 %v280, %v295
    %v300 = vmul.f32 %v296, %v296
    %v301 = vmul.f32 %v297, %v297
    %v302 = vmul.f32 %v298, %v298
    %v303 = vmul.f32 %v299, %v299
    %304 = vadd.xlane.f32.xlu0 %v300
    %v305 = vpop.xlane.xlu0 %304
    %306 = vadd.xlane.f32.xlu0 %v301
    %v307 = vpop.xlane.xlu0 %306
    %308 = vadd.xlane.f32.xlu0 %v302
    %v309 = vpop.xlane.xlu0 %308
    %310 = vadd.xlane.f32.xlu0 %v303
    %v311 = vpop.xlane.xlu0 %310
    %v312 = vmul.f32 %v305, %v291
    %v313 = vmul.f32 %v307, %v291
    %v314 = vmul.f32 %v309, %v291
    %v315 = vmul.f32 %v311, %v291
    %v316 = vadd.f32 %v312, 1e-05
    %v317 = vadd.f32 %v313, 1e-05
    %v318 = vadd.f32 %v314, 1e-05
    %v319 = vadd.f32 %v315, 1e-05
    %v320 = vrsqrt.pop %v316
    %v321 = vrsqrt.pop %v317
    %v322 = vrsqrt.pop %v318
    %v323 = vrsqrt.pop %v319
    %v324 = vmul.f32 %v296, %v320
    %v325 = vmul.f32 %v297, %v321
    %v326 = vmul.f32 %v298, %v322
    %v327 = vmul.f32 %v299, %v323
    %v329 = vlaneseq
    %v330 = vshrl.u32 %v329, 7
    %v331 = vsub.s32 0, %v330
    %v332 = vrot.slane %v281, %v331
    %v334 = vmul.f32 %v324, %v332
    %v335 = vmul.f32 %v325, %v332
    %v336 = vmul.f32 %v326, %v332
    %v337 = vmul.f32 %v327, %v332
    %v339 = vlaneseq
    %v340 = vshrl.u32 %v339, 7
    %v341 = vsub.s32 0, %v340
    %v342 = vrot.slane %v282, %v341
    %v344 = vadd.f32 %v334, %v342
    %v345 = vadd.f32 %v335, %v342
    %v346 = vadd.f32 %v336, %v342
    %v347 = vadd.f32 %v337, %v342
    %v348 = vld [vmem:[%s6] sm:$0x1]
    %v349 = vld [vmem:[%s7] sm:$0x1]
    %350 = vadd.xlane.f32.xlu0 %v344
    %v351 = vpop.xlane.xlu0 %350
    %352 = vadd.xlane.f32.xlu0 %v345
    %v353 = vpop.xlane.xlu0 %352
    %354 = vadd.xlane.f32.xlu0 %v346
    %v355 = vpop.xlane.xlu0 %354
    %356 = vadd.xlane.f32.xlu0 %v347
    %v357 = vpop.xlane.xlu0 %356
    %v358 = vmul.f32 %v351, %v291
    %v359 = vmul.f32 %v353, %v291
    %v360 = vmul.f32 %v355, %v291
    %v361 = vmul.f32 %v357, %v291
    %v362 = vsub.f32 %v344, %v358
    %v363 = vsub.f32 %v345, %v359
    %v364 = vsub.f32 %v346, %v360
    %v365 = vsub.f32 %v347, %v361
    %v366 = vmul.f32 %v362, %v362
    %v367 = vmul.f32 %v363, %v363
    %v368 = vmul.f32 %v364, %v364
    %v369 = vmul.f32 %v365, %v365
    %370 = vadd.xlane.f32.xlu0 %v366
    %v371 = vpop.xlane.xlu0 %370
    %372 = vadd.xlane.f32.xlu0 %v367
    %v373 = vpop.xlane.xlu0 %372
    %374 = vadd.xlane.f32.xlu0 %v368
    %v375 = vpop.xlane.xlu0 %374
    %376 = vadd.xlane.f32.xlu0 %v369
    %v377 = vpop.xlane.xlu0 %376
    %v378 = vmul.f32 %v371, %v291
    %v379 = vmul.f32 %v373, %v291
    %v380 = vmul.f32 %v375, %v291
    %v381 = vmul.f32 %v377, %v291
    %v382 = vadd.f32 %v378, 1e-05
    %v383 = vadd.f32 %v379, 1e-05
    %v384 = vadd.f32 %v380, 1e-05
    %v385 = vadd.f32 %v381, 1e-05
    %v386 = vrsqrt.pop %v382
    %v387 = vrsqrt.pop %v383
    %v388 = vrsqrt.pop %v384
    %v389 = vrsqrt.pop %v385
    %v390 = vmul.f32 %v362, %v386
    %v391 = vmul.f32 %v363, %v387
    %v392 = vmul.f32 %v364, %v388
    %v393 = vmul.f32 %v365, %v389
    %v395 = vlaneseq
    %v396 = vshrl.u32 %v395, 7
    %v397 = vsub.s32 0, %v396
    %v398 = vrot.slane %v348, %v397
    %v400 = vmul.f32 %v390, %v398
    %v401 = vmul.f32 %v391, %v398
    %v402 = vmul.f32 %v392, %v398
    %v403 = vmul.f32 %v393, %v398
    %v405 = vlaneseq
    %v406 = vshrl.u32 %v405, 7
    %v407 = vsub.s32 0, %v406
    %v408 = vrot.slane %v349, %v407
    %v410 = vadd.f32 %v400, %v408
    %v411 = vadd.f32 %v401, %v408
    %v412 = vadd.f32 %v402, %v408
    %v413 = vadd.f32 %v403, %v408
    %v414 = vpack.c.bf16 %v411, %v410
    %v415 = vpack.c.bf16 %v413, %v412
    %v418 = vunpack.c.l.b16 %v414
    %v419 = vunpack.c.h.b16 %v414
    %v420 = vunpack.c.l.b16 %v415
    %v421 = vunpack.c.h.b16 %v415
    %v422 = vpack.c.b16 %v418, %v418
    %v423 = vpack.c.b16 %v419, %v419
    %v424 = vpack.c.b16 %v420, %v420
    %v425 = vpack.c.b16 %v421, %v421
    %430 = vst [vmem:[%s8] sm:$0xf] %v422
    %431 = vst [vmem:[%s8 + $0x4] sm:$0xf] %v423
    %432 = vst [vmem:[%s8 + $0x8] sm:$0xf] %v424
    %433 = vst [vmem:[%s8 + $0xc] sm:$0xf] %v425
  $region41: #{transformer_chatbot_forward.34} parent=0 // pred_fallthru
    _
  // Predicated region
  $region42: #{transformer_chatbot_forward.34} parent=0 // pred_check
    _
  $region43: #{transformer_chatbot_forward.34} parent=0 // pred_check_branch
    %435 = sbr.rel (0) target = $region45
  $region44: #{transformer_chatbot_forward.34} parent=0 // pred_region
    _
  $region45: #{transformer_chatbot_forward.34} parent=0 // pred_fallthru
    _
  // Predicated region
  $region46: #{transformer_chatbot_forward.34} parent=0 // pred_check
    _
  $region47: #{transformer_chatbot_forward.34} parent=0 // pred_check_branch
    %437 = sbr.rel (0) target = $region49
  $region48: #{transformer_chatbot_forward.34} parent=0 // pred_region
    _
  $region49: #{transformer_chatbot_forward.34} parent=0 // pred_fallthru
    _

// kernel: transformer_chatbot_forward.38
$region0: #{transformer_chatbot_forward.38}
  #allocation0 [shape = 'u32[]', space=smem, size = 0x4, offset = 0x4, fixed_abs, tag = 'smem constant byte address 0x4 - core index']
  #allocation1 [shape = 'u32[144,128]{1,0:T(1,128)}', space=vmem, size = 0x12000, scoped, tag = 'internal scratch']
  #allocation2 [shape = 'f32[32,256]{1,0:T(8,128)}', space=vmem, size = 0x8000, scoped, tag = 'scratch operand']
  %s0 = inlined_call_operand.vmem [shape: bf16[32,128], index: 0, kind: input, shape index: {}]
  %s1 = inlined_call_operand.vmem [shape: bf16[128,256], index: 1, kind: input, shape index: {}]
  %s2 = inlined_call_operand.vmem [shape: f32[1,256], index: 2, kind: input, shape index: {}]
  %s3 = inlined_call_operand.vmem [shape: bf16[32,256], index: 3, kind: output, shape index: {}]
  %s4 = sld [smem:[#allocation0]]
  $region30: #{transformer_chatbot_forward.38} parent=0
    _
  %s6 = ssub.s32 1, %s4
  %s7 = scalar_select 0, %s6, %s4
  // Predicated region
  $region2: #{transformer_chatbot_forward.38} parent=0 // pred_check
    _
  $region3: #{transformer_chatbot_forward.38} parent=0 // pred_check_branch
    %9 = sbr.rel (0) target = $region5
  $region4: #{transformer_chatbot_forward.38} parent=0 // pred_region
    _
  $region5: #{transformer_chatbot_forward.38} parent=0 // pred_fallthru
    _
  // Predicated region
  $region6: #{transformer_chatbot_forward.38} parent=0 // pred_check
    _
  $region7: #{transformer_chatbot_forward.38} parent=0 // pred_check_branch
    %11 = sbr.rel (0) target = $region9
  $region8: #{transformer_chatbot_forward.38} parent=0 // pred_region
    _
  $region9: #{transformer_chatbot_forward.38} parent=0 // pred_fallthru
    _
  // Predicated region
  $region10: #{transformer_chatbot_forward.38} parent=0 // pred_check
    _
  $region11: #{transformer_chatbot_forward.38} parent=0 // pred_check_branch
    %13 = sbr.rel (0) target = $region13
  $region12: #{transformer_chatbot_forward.38} parent=0 // pred_region
    _
  $region13: #{transformer_chatbot_forward.38} parent=0 // pred_fallthru
    _
  %p15 = scmp.eq.s32.totalorder 0, 0
  // Predicated region
  $region14: #{transformer_chatbot_forward.38} parent=0 // pred_check
    %p16 = pneg %p15
  $region15: #{transformer_chatbot_forward.38} parent=0 // pred_check_branch
    %18 = sbr.rel (%p16) target = $region17
  $region16: #{transformer_chatbot_forward.38} parent=0 // pred_region
    %19 = vst [vmem:[#allocation2] sm:$0xff] 0.0
    %20 = vst [vmem:[#allocation2 + $0x8] sm:$0xff] 0.0
    %21 = vst [vmem:[#allocation2 + $0x10] sm:$0xff] 0.0
    %22 = vst [vmem:[#allocation2 + $0x18] sm:$0xff] 0.0
    %23 = vst [vmem:[#allocation2 + $0x20] sm:$0xff] 0.0
    %24 = vst [vmem:[#allocation2 + $0x28] sm:$0xff] 0.0
    %25 = vst [vmem:[#allocation2 + $0x30] sm:$0xff] 0.0
    %26 = vst [vmem:[#allocation2 + $0x38] sm:$0xff] 0.0
  $region17: #{transformer_chatbot_forward.38} parent=0 // pred_fallthru
    _
  %v27 = vld [vmem:[#allocation2] sm:$0xff]
  %v28 = vld [vmem:[#allocation2 + $0x8] sm:$0xff]
  %v29 = vld [vmem:[#allocation2 + $0x10] sm:$0xff]
  %v30 = vld [vmem:[#allocation2 + $0x18] sm:$0xff]
  %v31 = vld [vmem:[#allocation2 + $0x20] sm:$0xff]
  %v32 = vld [vmem:[#allocation2 + $0x28] sm:$0xff]
  %v33 = vld [vmem:[#allocation2 + $0x30] sm:$0xff]
  %v34 = vld [vmem:[#allocation2 + $0x38] sm:$0xff]
  %v35 = vld [vmem:[%s0] sm:$0xf]
  %v36 = vld [vmem:[%s0 + $0x4] sm:$0xf]
  %v37 = vld [vmem:[%s0 + $0x8] sm:$0xf]
  %v38 = vld [vmem:[%s0 + $0xc] sm:$0xf]
  %v39 = vld [vmem:[%s1] sm:$0xff]
  %v40 = vld [vmem:[%s1 + $0x8] sm:$0xff]
  %v41 = vld [vmem:[%s1 + $0x10] sm:$0xff]
  %v42 = vld [vmem:[%s1 + $0x18] sm:$0xff]
  %v43 = vld [vmem:[%s1 + $0x20] sm:$0xff]
  %v44 = vld [vmem:[%s1 + $0x28] sm:$0xff]
  %v45 = vld [vmem:[%s1 + $0x30] sm:$0xff]
  %v46 = vld [vmem:[%s1 + $0x38] sm:$0xff]
  %v47 = vld [vmem:[%s1 + $0x40] sm:$0xff]
  %v48 = vld [vmem:[%s1 + $0x48] sm:$0xff]
  %v49 = vld [vmem:[%s1 + $0x50] sm:$0xff]
  %v50 = vld [vmem:[%s1 + $0x58] sm:$0xff]
  %v51 = vld [vmem:[%s1 + $0x60] sm:$0xff]
  %v52 = vld [vmem:[%s1 + $0x68] sm:$0xff]
  %v53 = vld [vmem:[%s1 + $0x70] sm:$0xff]
  %v54 = vld [vmem:[%s1 + $0x78] sm:$0xff]
  %v59 = vunpack.c.l.b16 %v35
  %v60 = vunpack.c.l.b16 %v36
  %v61 = vunpack.c.l.b16 %v37
  %v62 = vunpack.c.l.b16 %v38
  %v63 = vpack.c.b16 %v60, %v59
  %v64 = vpack.c.b16 %v62, %v61
  %v83 = vunpack.c.l.b16 %v39
  %v84 = vunpack.c.h.b16 %v39
  %v85 = vunpack.c.l.b16 %v40
  %v86 = vunpack.c.h.b16 %v40
  %v87 = vunpack.c.l.b16 %v41
  %v88 = vunpack.c.h.b16 %v41
  %v89 = vunpack.c.l.b16 %v42
  %v90 = vunpack.c.h.b16 %v42
  %v91 = vunpack.c.l.b16 %v43
  %v92 = vunpack.c.h.b16 %v43
  %v93 = vunpack.c.l.b16 %v44
  %v94 = vunpack.c.h.b16 %v44
  %v95 = vunpack.c.l.b16 %v45
  %v96 = vunpack.c.h.b16 %v45
  %v97 = vunpack.c.l.b16 %v46
  %v98 = vunpack.c.h.b16 %v46
  %v99 = vunpack.c.l.b16 %v47
  %v100 = vunpack.c.h.b16 %v47
  %v101 = vunpack.c.l.b16 %v48
  %v102 = vunpack.c.h.b16 %v48
  %v103 = vunpack.c.l.b16 %v49
  %v104 = vunpack.c.h.b16 %v49
  %v105 = vunpack.c.l.b16 %v50
  %v106 = vunpack.c.h.b16 %v50
  %v107 = vunpack.c.l.b16 %v51
  %v108 = vunpack.c.h.b16 %v51
  %v109 = vunpack.c.l.b16 %v52
  %v110 = vunpack.c.h.b16 %v52
  %v111 = vunpack.c.l.b16 %v53
  %v112 = vunpack.c.h.b16 %v53
  %v113 = vunpack.c.l.b16 %v54
  %v114 = vunpack.c.h.b16 %v54
  %v115 = vpack.c.b16 %v85, %v83
  %v116 = vpack.c.b16 %v86, %v84
  %v117 = vpack.c.b16 %v89, %v87
  %v118 = vpack.c.b16 %v90, %v88
  %v119 = vpack.c.b16 %v93, %v91
  %v120 = vpack.c.b16 %v94, %v92
  %v121 = vpack.c.b16 %v97, %v95
  %v122 = vpack.c.b16 %v98, %v96
  %v123 = vpack.c.b16 %v101, %v99
  %v124 = vpack.c.b16 %v102, %v100
  %v125 = vpack.c.b16 %v105, %v103
  %v126 = vpack.c.b16 %v106, %v104
  %v127 = vpack.c.b16 %v109, %v107
  %v128 = vpack.c.b16 %v110, %v108
  %v129 = vpack.c.b16 %v113, %v111
  %v130 = vpack.c.b16 %v114, %v112
  %147 = vmatprep.subr.bf16.mxu0 %v116
  %148 = vmatpush1.bf16.msra.mxu0 %v115
  %149 = vmatprep.subr.bf16.mxu0 %v118
  %150 = vmatpush1.bf16.msra.mxu0 %v117
  %151 = vmatprep.subr.bf16.mxu0 %v120
  %152 = vmatpush1.bf16.msra.mxu0 %v119
  %153 = vmatprep.subr.bf16.mxu0 %v122
  %154 = vmatpush1.bf16.msra.mxu0 %v121
  %155 = vmatprep.subr.bf16.mxu0 %v124
  %156 = vmatpush1.bf16.msra.mxu0 %v123
  %157 = vmatprep.subr.bf16.mxu0 %v126
  %158 = vmatpush1.bf16.msra.mxu0 %v125
  %159 = vmatprep.subr.bf16.mxu0 %v128
  %160 = vmatpush1.bf16.msra.mxu0 %v127
  %161 = vmatprep.subr.bf16.mxu0 %v130
  %162 = vmatpush1.bf16.msra.mxu0 %v129
  %163 = vmatprep.subr.bf16.mxu0 0
  %164 = vmatpush1.bf16.msra.mxu0 0
  %165 = vmatprep.subr.bf16.mxu0 0
  %166 = vmatpush1.bf16.msra.mxu0 0
  %167 = vmatprep.subr.bf16.mxu0 0
  %168 = vmatpush1.bf16.msra.mxu0 0
  %169 = vmatprep.subr.bf16.mxu0 0
  %170 = vmatpush1.bf16.msra.mxu0 0
  %171 = vmatprep.subr.bf16.mxu0 0
  %172 = vmatpush1.bf16.msra.mxu0 0
  %173 = vmatprep.subr.bf16.mxu0 0
  %174 = vmatpush1.bf16.msra.mxu0 0
  %175 = vmatprep.subr.bf16.mxu0 0
  %176 = vmatpush1.bf16.msra.mxu0 0
  %177 = vmatprep.subr.bf16.mxu0 0
  %178 = vmatpush1.bf16.msra.mxu0 0
  %179 = vmatprep.mubr.bf16.mxu0 0
  %180 = vmatmul.mubr.bf16.gmra.mrb[0].mxu0 %v63
  %v181 = vpop.f32.mrb[0].mxu0
  %v182 = vadd.f32 0.0, %v181
  %v183 = vpop.f32.mrb[0].mxu0
  %v184 = vadd.f32 0.0, %v183
  %v185 = vpop.f32.mrb[0].mxu0
  %v186 = vadd.f32 0.0, %v185
  %v187 = vpop.f32.mrb[0].mxu0
  %v188 = vadd.f32 0.0, %v187
  %189 = vmatprep.mubr.bf16.mxu0 0
  %190 = vmatmul.mubr.bf16.gmra.mrb[0].mxu0 %v64
  %v191 = vpop.f32.mrb[0].mxu0
  %v192 = vadd.f32 0.0, %v191
  %v193 = vpop.f32.mrb[0].mxu0
  %v194 = vadd.f32 0.0, %v193
  %v195 = vpop.f32.mrb[0].mxu0
  %v196 = vadd.f32 0.0, %v195
  %v197 = vpop.f32.mrb[0].mxu0
  %v198 = vadd.f32 0.0, %v197
  %199 = vdwg.mxu0
  %v200 = vadd.f32 %v27, %v182
  %v201 = vadd.f32 %v28, %v184
  %v202 = vadd.f32 %v29, %v186
  %v203 = vadd.f32 %v30, %v188
  %v204 = vadd.f32 %v31, %v192
  %v205 = vadd.f32 %v32, %v194
  %v206 = vadd.f32 %v33, %v196
  %v207 = vadd.f32 %v34, %v198
  %208 = vst [vmem:[#allocation2] sm:$0xff] %v200
  %209 = vst [vmem:[#allocation2 + $0x8] sm:$0xff] %v201
  %210 = vst [vmem:[#allocation2 + $0x10] sm:$0xff] %v202
  %211 = vst [vmem:[#allocation2 + $0x18] sm:$0xff] %v203
  %212 = vst [vmem:[#allocation2 + $0x20] sm:$0xff] %v204
  %213 = vst [vmem:[#allocation2 + $0x28] sm:$0xff] %v205
  %214 = vst [vmem:[#allocation2 + $0x30] sm:$0xff] %v206
  %215 = vst [vmem:[#allocation2 + $0x38] sm:$0xff] %v207
  // Predicated region
  $region18: #{transformer_chatbot_forward.38} parent=0 // pred_check
    %p216 = pneg %p15
  $region19: #{transformer_chatbot_forward.38} parent=0 // pred_check_branch
    %218 = sbr.rel (%p216) target = $region21
  $region20: #{transformer_chatbot_forward.38} parent=0 // pred_region
    %v219 = vld [vmem:[#allocation2] sm:$0xff]
    %v220 = vld [vmem:[#allocation2 + $0x8] sm:$0xff]
    %v221 = vld [vmem:[#allocation2 + $0x10] sm:$0xff]
    %v222 = vld [vmem:[#allocation2 + $0x18] sm:$0xff]
    %v223 = vld [vmem:[#allocation2 + $0x20] sm:$0xff]
    %v224 = vld [vmem:[#allocation2 + $0x28] sm:$0xff]
    %v225 = vld [vmem:[#allocation2 + $0x30] sm:$0xff]
    %v226 = vld [vmem:[#allocation2 + $0x38] sm:$0xff]
    %v227 = vld [vmem:[%s2] sm:$0x3]
    %v229 = vlaneseq
    %v230 = vshrl.u32 %v229, 7
    %v231 = vsub.s32 0, %v230
    %v232 = vrot.slane %v227, %v231
    %v233 = vlaneseq
    %v234 = vshrl.u32 %v233, 7
    %v235 = vsub.s32 1, %v234
    %v236 = vrot.slane %v227, %v235
    %v239 = vadd.f32 %v219, %v232
    %v240 = vadd.f32 %v220, %v236
    %v241 = vadd.f32 %v221, %v232
    %v242 = vadd.f32 %v222, %v236
    %v243 = vadd.f32 %v223, %v232
    %v244 = vadd.f32 %v224, %v236
    %v245 = vadd.f32 %v225, %v232
    %v246 = vadd.f32 %v226, %v236
    %v247 = vpack.c.bf16 %v241, %v239
    %v248 = vpack.c.bf16 %v242, %v240
    %v249 = vpack.c.bf16 %v245, %v243
    %v250 = vpack.c.bf16 %v246, %v244
    %v255 = vunpack.c.l.b16 %v247
    %v256 = vunpack.c.l.b16 %v248
    %v257 = vunpack.c.h.b16 %v247
    %v258 = vunpack.c.h.b16 %v248
    %v259 = vunpack.c.l.b16 %v249
    %v260 = vunpack.c.l.b16 %v250
    %v261 = vunpack.c.h.b16 %v249
    %v262 = vunpack.c.h.b16 %v250
    %v263 = vpack.c.b16 %v256, %v255
    %v264 = vpack.c.b16 %v258, %v257
    %v265 = vpack.c.b16 %v260, %v259
    %v266 = vpack.c.b16 %v262, %v261
    %271 = vst [vmem:[%s3] sm:$0xff] %v263
    %272 = vst [vmem:[%s3 + $0x8] sm:$0xff] %v264
    %273 = vst [vmem:[%s3 + $0x10] sm:$0xff] %v265
    %274 = vst [vmem:[%s3 + $0x18] sm:$0xff] %v266
  $region21: #{transformer_chatbot_forward.38} parent=0 // pred_fallthru
    _
  // Predicated region
  $region22: #{transformer_chatbot_forward.38} parent=0 // pred_check
    _
  $region23: #{transformer_chatbot_forward.38} parent=0 // pred_check_branch
    %276 = sbr.rel (0) target = $region25
  $region24: #{transformer_chatbot_forward.38} parent=0 // pred_region
    _
  $region25: #{transformer_chatbot_forward.38} parent=0 // pred_fallthru
    _
  // Predicated region
  $region26: #{transformer_chatbot_forward.38} parent=0 // pred_check
    _
  $region27: #{transformer_chatbot_forward.38} parent=0 // pred_check_branch
    %278 = sbr.rel (0) target = $region29
  $region28: #{transformer_chatbot_forward.38} parent=0 // pred_region
    _
  $region29: #{transformer_chatbot_forward.38} parent=0 // pred_fallthru
    _

// kernel: transformer_chatbot_forward.49
$region0: #{transformer_chatbot_forward.49}
  #allocation0 [shape = 'u32[]', space=smem, size = 0x4, offset = 0x4, fixed_abs, tag = 'smem constant byte address 0x4 - core index']
  #allocation1 [shape = 'u32[144,128]{1,0:T(1,128)}', space=vmem, size = 0x12000, scoped, tag = 'internal scratch']
  #allocation2 [shape = 'f32[32,128]{1,0:T(8,128)}', space=vmem, size = 0x4000, scoped, tag = 'scratch operand']
  %s0 = inlined_call_operand.vmem [shape: bf16[32,128], index: 0, kind: input, shape index: {}]
  %s1 = inlined_call_operand.vmem [shape: bf16[128,128], index: 1, kind: input, shape index: {}]
  %s2 = inlined_call_operand.vmem [shape: f32[1,128], index: 2, kind: input, shape index: {}]
  %s3 = inlined_call_operand.hbm [shape: f32[32,128], index: 3, kind: output, shape index: {}]
  %s4 = sld [smem:[#allocation0]]
  $region30: #{transformer_chatbot_forward.49} parent=0
    _
  %s6 = ssub.s32 1, %s4
  %s7 = scalar_select 0, %s6, %s4
  $region1: #{transformer_chatbot_forward.49} parent=0
    #allocation3 [shape = 'u8[16384]{0}', space=vmem, size = 0x4000, scoped, tag = 'output window, operand 0, single buffered']
    #allocation4 [shape = 's32[1]{0}', space=sflag, size = 0x4, scoped, tag = 'scoped memory for transformer_chatbot_forward.49']
    %8 = vsyncpa [#allocation4], 0
    // Predicated region
    $region2: #{transformer_chatbot_forward.49} parent=1 // pred_check
      _
    $region3: #{transformer_chatbot_forward.49} parent=1 // pred_check_branch
      %10 = sbr.rel (0) target = $region5
    $region4: #{transformer_chatbot_forward.49} parent=1 // pred_region
      _
    $region5: #{transformer_chatbot_forward.49} parent=1 // pred_fallthru
      _
    // Predicated region
    $region6: #{transformer_chatbot_forward.49} parent=1 // pred_check
      _
    $region7: #{transformer_chatbot_forward.49} parent=1 // pred_check_branch
      %12 = sbr.rel (0) target = $region9
    $region8: #{transformer_chatbot_forward.49} parent=1 // pred_region
      _
    $region9: #{transformer_chatbot_forward.49} parent=1 // pred_fallthru
      _
    // Predicated region
    $region10: #{transformer_chatbot_forward.49} parent=1 // pred_check
      _
    $region11: #{transformer_chatbot_forward.49} parent=1 // pred_check_branch
      %14 = sbr.rel (0) target = $region13
    $region12: #{transformer_chatbot_forward.49} parent=1 // pred_region
      _
    $region13: #{transformer_chatbot_forward.49} parent=1 // pred_fallthru
      _
    %p16 = scmp.eq.s32.totalorder 0, 0
    // Predicated region
    $region14: #{transformer_chatbot_forward.49} parent=1 // pred_check
      %p17 = pneg %p16
    $region15: #{transformer_chatbot_forward.49} parent=1 // pred_check_branch
      %19 = sbr.rel (%p17) target = $region17
    $region16: #{transformer_chatbot_forward.49} parent=1 // pred_region
      %20 = vst [vmem:[#allocation2] sm:$0xff] 0.0
      %21 = vst [vmem:[#allocation2 + $0x8] sm:$0xff] 0.0
      %22 = vst [vmem:[#allocation2 + $0x10] sm:$0xff] 0.0
      %23 = vst [vmem:[#allocation2 + $0x18] sm:$0xff] 0.0
    $region17: #{transformer_chatbot_forward.49} parent=1 // pred_fallthru
      _
    %v24 = vld [vmem:[#allocation2] sm:$0xff]
    %v25 = vld [vmem:[#allocation2 + $0x8] sm:$0xff]
    %v26 = vld [vmem:[#allocation2 + $0x10] sm:$0xff]
    %v27 = vld [vmem:[#allocation2 + $0x18] sm:$0xff]
    %v28 = vld [vmem:[%s0] sm:$0xf]
    %v29 = vld [vmem:[%s0 + $0x4] sm:$0xf]
    %v30 = vld [vmem:[%s0 + $0x8] sm:$0xf]
    %v31 = vld [vmem:[%s0 + $0xc] sm:$0xf]
    %v32 = vld [vmem:[%s1] sm:$0xf]
    %v33 = vld [vmem:[%s1 + $0x4] sm:$0xf]
    %v34 = vld [vmem:[%s1 + $0x8] sm:$0xf]
    %v35 = vld [vmem:[%s1 + $0xc] sm:$0xf]
    %v36 = vld [vmem:[%s1 + $0x10] sm:$0xf]
    %v37 = vld [vmem:[%s1 + $0x14] sm:$0xf]
    %v38 = vld [vmem:[%s1 + $0x18] sm:$0xf]
    %v39 = vld [vmem:[%s1 + $0x1c] sm:$0xf]
    %v40 = vld [vmem:[%s1 + $0x20] sm:$0xf]
    %v41 = vld [vmem:[%s1 + $0x24] sm:$0xf]
    %v42 = vld [vmem:[%s1 + $0x28] sm:$0xf]
    %v43 = vld [vmem:[%s1 + $0x2c] sm:$0xf]
    %v44 = vld [vmem:[%s1 + $0x30] sm:$0xf]
    %v45 = vld [vmem:[%s1 + $0x34] sm:$0xf]
    %v46 = vld [vmem:[%s1 + $0x38] sm:$0xf]
    %v47 = vld [vmem:[%s1 + $0x3c] sm:$0xf]
    %v52 = vunpack.c.l.b16 %v28
    %v53 = vunpack.c.l.b16 %v29
    %v54 = vunpack.c.l.b16 %v30
    %v55 = vunpack.c.l.b16 %v31
    %v56 = vpack.c.b16 %v53, %v52
    %v57 = vpack.c.b16 %v55, %v54
    %v76 = vunpack.c.l.b16 %v32
    %v77 = vunpack.c.l.b16 %v33
    %v78 = vunpack.c.l.b16 %v34
    %v79 = vunpack.c.l.b16 %v35
    %v80 = vunpack.c.l.b16 %v36
    %v81 = vunpack.c.l.b16 %v37
    %v82 = vunpack.c.l.b16 %v38
    %v83 = vunpack.c.l.b16 %v39
    %v84 = vunpack.c.l.b16 %v40
    %v85 = vunpack.c.l.b16 %v41
    %v86 = vunpack.c.l.b16 %v42
    %v87 = vunpack.c.l.b16 %v43
    %v88 = vunpack.c.l.b16 %v44
    %v89 = vunpack.c.l.b16 %v45
    %v90 = vunpack.c.l.b16 %v46
    %v91 = vunpack.c.l.b16 %v47
    %v92 = vpack.c.b16 %v77, %v76
    %v93 = vpack.c.b16 %v79, %v78
    %v94 = vpack.c.b16 %v81, %v80
    %v95 = vpack.c.b16 %v83, %v82
    %v96 = vpack.c.b16 %v85, %v84
    %v97 = vpack.c.b16 %v87, %v86
    %v98 = vpack.c.b16 %v89, %v88
    %v99 = vpack.c.b16 %v91, %v90
    %108 = vmatprep.subr.bf16.mxu0 0
    %109 = vmatpush1.bf16.msra.mxu0 %v92
    %110 = vmatprep.subr.bf16.mxu0 0
    %111 = vmatpush1.bf16.msra.mxu0 %v93
    %112 = vmatprep.subr.bf16.mxu0 0
    %113 = vmatpush1.bf16.msra.mxu0 %v94
    %114 = vmatprep.subr.bf16.mxu0 0
    %115 = vmatpush1.bf16.msra.mxu0 %v95
    %116 = vmatprep.subr.bf16.mxu0 0
    %117 = vmatpush1.bf16.msra.mxu0 %v96
    %118 = vmatprep.subr.bf16.mxu0 0
    %119 = vmatpush1.bf16.msra.mxu0 %v97
    %120 = vmatprep.subr.bf16.mxu0 0
    %121 = vmatpush1.bf16.msra.mxu0 %v98
    %122 = vmatprep.subr.bf16.mxu0 0
    %123 = vmatpush1.bf16.msra.mxu0 %v99
    %124 = vmatprep.subr.bf16.mxu0 0
    %125 = vmatpush1.bf16.msra.mxu0 0
    %126 = vmatprep.subr.bf16.mxu0 0
    %127 = vmatpush1.bf16.msra.mxu0 0
    %128 = vmatprep.subr.bf16.mxu0 0
    %129 = vmatpush1.bf16.msra.mxu0 0
    %130 = vmatprep.subr.bf16.mxu0 0
    %131 = vmatpush1.bf16.msra.mxu0 0
    %132 = vmatprep.subr.bf16.mxu0 0
    %133 = vmatpush1.bf16.msra.mxu0 0
    %134 = vmatprep.subr.bf16.mxu0 0
    %135 = vmatpush1.bf16.msra.mxu0 0
    %136 = vmatprep.subr.bf16.mxu0 0
    %137 = vmatpush1.bf16.msra.mxu0 0
    %138 = vmatprep.subr.bf16.mxu0 0
    %139 = vmatpush1.bf16.msra.mxu0 0
    %140 = vmatprep.mubr.bf16.mxu0 0
    %141 = vmatmul.mubr.bf16.gmra.mrb[0].mxu0 %v56
    %v142 = vpop.f32.mrb[0].mxu0
    %v143 = vadd.f32 0.0, %v142
    %v144 = vpop.f32.mrb[0].mxu0
    %v145 = vpop.f32.mrb[0].mxu0
    %v146 = vadd.f32 0.0, %v145
    %v147 = vpop.f32.mrb[0].mxu0
    %148 = vmatprep.mubr.bf16.mxu0 0
    %149 = vmatmul.mubr.bf16.gmra.mrb[0].mxu0 %v57
    %v150 = vpop.f32.mrb[0].mxu0
    %v151 = vadd.f32 0.0, %v150
    %v152 = vpop.f32.mrb[0].mxu0
    %v153 = vpop.f32.mrb[0].mxu0
    %v154 = vadd.f32 0.0, %v153
    %v155 = vpop.f32.mrb[0].mxu0
    %156 = vdwg.mxu0
    %v157 = vadd.f32 %v24, %v143
    %v158 = vadd.f32 %v25, %v146
    %v159 = vadd.f32 %v26, %v151
    %v160 = vadd.f32 %v27, %v154
    %161 = vst [vmem:[#allocation2] sm:$0xff] %v157
    %162 = vst [vmem:[#allocation2 + $0x8] sm:$0xff] %v158
    %163 = vst [vmem:[#allocation2 + $0x10] sm:$0xff] %v159
    %164 = vst [vmem:[#allocation2 + $0x18] sm:$0xff] %v160
    // Predicated region
    $region18: #{transformer_chatbot_forward.49} parent=1 // pred_check
      %p165 = pneg %p16
    $region19: #{transformer_chatbot_forward.49} parent=1 // pred_check_branch
      %167 = sbr.rel (%p165) target = $region21
    $region20: #{transformer_chatbot_forward.49} parent=1 // pred_region
      %v168 = vld [vmem:[#allocation2] sm:$0xff]
      %v169 = vld [vmem:[#allocation2 + $0x8] sm:$0xff]
      %v170 = vld [vmem:[#allocation2 + $0x10] sm:$0xff]
      %v171 = vld [vmem:[#allocation2 + $0x18] sm:$0xff]
      %v172 = vld [vmem:[%s2] sm:$0x1]
      %v174 = vlaneseq
      %v175 = vshrl.u32 %v174, 7
      %v176 = vsub.s32 0, %v175
      %v177 = vrot.slane %v172, %v176
      %v179 = vadd.f32 %v168, %v177
      %v180 = vadd.f32 %v169, %v177
      %v181 = vadd.f32 %v170, %v177
      %v182 = vadd.f32 %v171, %v177
      %183 = vst [vmem:[#allocation3] sm:$0xff] %v179
      %184 = vst [vmem:[#allocation3 + $0x8] sm:$0xff] %v180
      %185 = vst [vmem:[#allocation3 + $0x10] sm:$0xff] %v181
      %186 = vst [vmem:[#allocation3 + $0x18] sm:$0xff] %v182
    $region21: #{transformer_chatbot_forward.49} parent=1 // pred_fallthru
      _
    // Predicated region
    $region22: #{transformer_chatbot_forward.49} parent=1 // pred_check
      _
    $region23: #{transformer_chatbot_forward.49} parent=1 // pred_check_branch
      %188 = sbr.rel (0) target = $region25
    $region24: #{transformer_chatbot_forward.49} parent=1 // pred_region
      %s190 = ssub.s32 512, 512
      %191 = vsyncadd [#allocation4], %s190
      %s192 = sshll.u32 [#allocation3], 4
      %s193 = int_to_ptr.vmem [resolvable:$true] %s192
      %198 = dma.vmem_to_hbm [thread:$0]  %s193, 512, %s3, [#allocation4], 128, 128, 8
    $region25: #{transformer_chatbot_forward.49} parent=1 // pred_fallthru
      _
    // Predicated region
    $region26: #{transformer_chatbot_forward.49} parent=1 // pred_check
      _
    $region27: #{transformer_chatbot_forward.49} parent=1 // pred_check_branch
      %200 = sbr.rel (0) target = $region29
    $region28: #{transformer_chatbot_forward.49} parent=1 // pred_region
      %201 = dma.done [#allocation4], 512
    $region29: #{transformer_chatbot_forward.49} parent=1 // pred_fallthru
      _
    %202 = vsyncpa [#allocation4], 1

</llo_original>
